<compile_context>
chip_gen: v5e
topology: v5e:2x2
jax: 0.10.0
libtpu: 0.0.40
codegen_flags: <defaults>
</compile_context>

<pallas_src>
import math
from functools import partial

import jax
import jax.numpy as jnp
from jax.experimental import pallas as pl
from jax.experimental.pallas import tpu as pltpu

# ----------------------------- configuration ---------------------------------
IMG_SIZE = 16
PATCH_SIZE = 4
IN_CHANS = 3
EMBED_DIM = 128
DEPTH = 2
NUM_HEADS = 4
MLP_RATIO = 4.0
TP_LOC = (0,)          # prune after block 0
TP_RATIO = 0.5
LN_EPS = 1e-6

# The final LayerNorm is fused into the last block's kernel; that fusion assumes the last
# block is not itself a pruning location (true for this config).
assert (DEPTH - 1) not in TP_LOC

N_BLK_W = 16           # number of per-block weight refs fed to the block kernels


# --------------------------- in-kernel helpers --------------------------------
def _layernorm(x, w, b, eps=LN_EPS):
    mu = jnp.mean(x, axis=-1, keepdims=True)
    xc = x - mu
    var = jnp.mean(xc * xc, axis=-1, keepdims=True)
    return xc * jax.lax.rsqrt(var + eps) * w + b


def _gelu(x):
    # exact (erf-based) GELU, matching torch.nn.GELU default
    return 0.5 * x * (1.0 + jax.lax.erf(x * (1.0 / math.sqrt(2.0))))


def _block_core(x, w, num_heads, valid_len):
    """One ViT block (pre-LN attention + MLP) on a (L_pad, D) f32 tile.

    Attention uses per-head weight matrices (stacked on a leading axis) so that every matmul
    is a clean 2-D MXU dot: no lane slicing of activations and no concatenate at the end
    (the head merge is folded into per-head projection matmuls accumulated in f32).
    Padded key columns (>= valid_len) are masked out of the softmax.
    """
    (ln1w, ln1b, wq, wk, wv, bq, bk, bv, wo, bo,
     ln2w, ln2b, fc1w, fc1b, fc2w, fc2b) = w
    L, D = x.shape
    hd = D // num_heads
    scale = hd ** -0.5
    bf16 = jnp.bfloat16

    xn = _layernorm(x, ln1w[...], ln1b[...])
    xn_b = xn.astype(bf16)

    key_mask = None
    if valid_len < L:
        col = jax.lax.broadcasted_iota(jnp.int32, (L, L), 1)
        key_mask = col < valid_len

    acc = jnp.zeros((L, D), jnp.float32)
    for h in range(num_heads):
        qh = jnp.dot(xn_b, wq[h], preferred_element_type=jnp.float32) + bq[h]
        kh = jnp.dot(xn_b, wk[h], preferred_element_type=jnp.float32) + bk[h]
        vh = jnp.dot(xn_b, wv[h], preferred_element_type=jnp.float32) + bv[h]
        # q @ k^T (contract last dims)
        s = jax.lax.dot_general(qh.astype(bf16), kh.astype(bf16),
                                (((1,), (1,)), ((), ())),
                                preferred_element_type=jnp.float32) * scale
        if key_mask is not None:
            s = jnp.where(key_mask, s, -1e30)
        s = s - jnp.max(s, axis=-1, keepdims=True)
        p = jnp.exp(s)
        p = p * pl.reciprocal(jnp.sum(p, axis=-1, keepdims=True), approx=True)
        oh = jnp.dot(p.astype(bf16), vh.astype(bf16), preferred_element_type=jnp.float32)
        # head merge folded into the per-head output projection
        acc = acc + jnp.dot(oh.astype(bf16), wo[h], preferred_element_type=jnp.float32)
    x = x + acc + bo[...]

    xn2 = _layernorm(x, ln2w[...], ln2b[...])
    h1 = _gelu(jnp.dot(xn2.astype(bf16), fc1w[...], preferred_element_type=jnp.float32)
               + fc1b[...])
    h2 = jnp.dot(h1.astype(bf16), fc2w[...], preferred_element_type=jnp.float32) + fc2b[...]
    return x + h2


# ------------------------------- kernels --------------------------------------
def embed_kernel(p_ref, w_ref, add_ref, o_ref):
    # patches (already padded + CLS placeholder row) @ W  +  precomputed additive term
    # (cls+pos for row 0, pos+bias for patch rows, zeros for pad rows).
    o_ref[...] = (jnp.dot(p_ref[...].astype(jnp.bfloat16), w_ref[...],
                          preferred_element_type=jnp.float32) + add_ref[...])


def block_plain_kernel(*refs, num_heads, valid_len):
    x_ref = refs[0]
    blk = refs[1:1 + N_BLK_W]
    o_ref = refs[1 + N_BLK_W]
    o_ref[...] = _block_core(x_ref[...], blk, num_heads, valid_len)


def block_norm_kernel(*refs, num_heads, valid_len):
    # ViT block with the stand-alone (final) LayerNorm fused into the epilogue.
    x_ref = refs[0]
    blk = refs[1:1 + N_BLK_W]
    nw, nb = refs[1 + N_BLK_W:3 + N_BLK_W]
    o_ref = refs[3 + N_BLK_W]
    out = _block_core(x_ref[...], blk, num_heads, valid_len)
    o_ref[...] = _layernorm(out, nw[...], nb[...])


def block_pred_kernel(*refs, num_heads, valid_len):
    # ViT block + score-predictor MLP + mid-LayerNorm fused into one kernel.
    x_ref = refs[0]
    blk = refs[1:1 + N_BLK_W]
    plnw, plnb, pw1, pb1, pw2, pb2, pw3, pb3 = refs[1 + N_BLK_W:9 + N_BLK_W]
    mnw, mnb = refs[9 + N_BLK_W:11 + N_BLK_W]
    o_ref, score_ref, mid_ref = refs[11 + N_BLK_W:14 + N_BLK_W]

    out = _block_core(x_ref[...], blk, num_heads, valid_len)
    o_ref[...] = out

    # --- score predictor (operates on the VMEM-resident block output) ---
    h = _layernorm(out, plnw[...], plnb[...])
    h = _gelu(jnp.dot(h.astype(jnp.bfloat16), pw1[...],
                      preferred_element_type=jnp.float32) + pb1[...])
    h = _gelu(jnp.dot(h.astype(jnp.bfloat16), pw2[...],
                      preferred_element_type=jnp.float32) + pb2[...])
    # final Linear(D/4 -> 1) as a VPU multiply + lane reduction (avoid an N=1 MXU matmul)
    score_ref[...] = jnp.sum(h * pw3[...], axis=-1, keepdims=True) + pb3[...]

    # --- mid-norm on every token; glue gathers the pruned rows (LayerNorm is per-row) ---
    mid_ref[...] = _layernorm(out, mnw[...], mnb[...])


# ------------------------------ call wrappers ----------------------------------
_CP = pltpu.CompilerParams(dimension_semantics=("parallel",))


def _tok_spec(L, F):
    return pl.BlockSpec((None, L, F), lambda i: (i, 0, 0))


def _rep_spec(arr):
    # Grid-invariant operand (constant index_map) -> Pallas only DMAs it once across the
    # tiny grid (block indices never change between steps), so no per-step weight traffic.
    nd = arr.ndim
    return pl.BlockSpec(arr.shape, lambda i, _nd=nd: (0,) * _nd)


def _wbytes(ws):
    return sum(int(w.size) * int(w.dtype.itemsize) for w in ws)


def _block_flops(B, L, D, HID, nh):
    hd = D // nh
    attn = nh * (2 * L * D * hd * 3 + 2 * L * L * hd * 2 + 2 * L * hd * D)
    mlp = 2 * L * D * HID * 2
    return int(B * (attn + mlp))


def _pad8(n):
    return ((n + 7) // 8) * 8


def embed_call(patches_pad, patch_w, add_term):
    B, Lp, P = patches_pad.shape
    D = patch_w.shape[1]
    cost = pl.CostEstimate(flops=int(2 * B * Lp * P * D), transcendentals=0,
                           bytes_accessed=int(B * (Lp * P + Lp * D) * 4
                                              + _wbytes([patch_w, add_term])))
    return pl.pallas_call(
        embed_kernel,
        out_shape=jax.ShapeDtypeStruct((B, Lp, D), jnp.float32),
        grid=(B,),
        in_specs=[_tok_spec(Lp, P), _rep_spec(patch_w), _rep_spec(add_term)],
        out_specs=_tok_spec(Lp, D),
        compiler_params=_CP,
        cost_estimate=cost,
    )(patches_pad, patch_w, add_term)


def _block_weight_list(blk):
    return [blk['ln1_w'], blk['ln1_b'],
            blk['wq'], blk['wk'], blk['wv'], blk['bq'], blk['bk'], blk['bv'],
            blk['wo'], blk['bo'],
            blk['ln2_w'], blk['ln2_b'],
            blk['fc1_w'], blk['fc1_b'], blk['fc2_w'], blk['fc2_b']]


def block_plain_call(x, blk_w, valid_len):
    B, L, D = x.shape
    HID = blk_w[12].shape[1]
    cost = pl.CostEstimate(flops=_block_flops(B, L, D, HID, NUM_HEADS),
                           transcendentals=int(B * L * (NUM_HEADS * L + HID)),
                           bytes_accessed=int(B * L * D * 4 * 2 + _wbytes(blk_w)))
    return pl.pallas_call(
        partial(block_plain_kernel, num_heads=NUM_HEADS, valid_len=valid_len),
        out_shape=jax.ShapeDtypeStruct((B, L, D), jnp.float32),
        grid=(B,),
        in_specs=[_tok_spec(L, D)] + [_rep_spec(w) for w in blk_w],
        out_specs=_tok_spec(L, D),
        compiler_params=_CP,
        cost_estimate=cost,
    )(x, *blk_w)


def block_norm_call(x, blk_w, norm_w, valid_len):
    B, L, D = x.shape
    weights = blk_w + list(norm_w)
    HID = blk_w[12].shape[1]
    cost = pl.CostEstimate(flops=_block_flops(B, L, D, HID, NUM_HEADS),
                           transcendentals=int(B * L * (NUM_HEADS * L + HID)),
                           bytes_accessed=int(B * L * D * 4 * 2 + _wbytes(weights)))
    return pl.pallas_call(
        partial(block_norm_kernel, num_heads=NUM_HEADS, valid_len=valid_len),
        out_shape=jax.ShapeDtypeStruct((B, L, D), jnp.float32),
        grid=(B,),
        in_specs=[_tok_spec(L, D)] + [_rep_spec(w) for w in weights],
        out_specs=_tok_spec(L, D),
        compiler_params=_CP,
        cost_estimate=cost,
    )(x, *weights)


def block_pred_call(x, blk_w, pred_p, mid_w, valid_len):
    B, L, D = x.shape
    pred_w = [pred_p['ln_w'], pred_p['ln_b'], pred_p['w1'], pred_p['b1'],
              pred_p['w2'], pred_p['b2'], pred_p['w3'], pred_p['b3']]
    weights = blk_w + pred_w + list(mid_w)
    HID = blk_w[12].shape[1]
    cost = pl.CostEstimate(
        flops=_block_flops(B, L, D, HID, NUM_HEADS) + int(2 * B * L * D * (D // 2)),
        transcendentals=int(B * L * (NUM_HEADS * L + HID + D)),
        bytes_accessed=int(B * L * D * 4 * 4 + _wbytes(weights)))
    out_shapes = (jax.ShapeDtypeStruct((B, L, D), jnp.float32),
                  jax.ShapeDtypeStruct((B, L, 1), jnp.float32),
                  jax.ShapeDtypeStruct((B, L, D), jnp.float32))
    out_specs = (_tok_spec(L, D), _tok_spec(L, 1), _tok_spec(L, D))
    return pl.pallas_call(
        partial(block_pred_kernel, num_heads=NUM_HEADS, valid_len=valid_len),
        out_shape=out_shapes,
        grid=(B,),
        in_specs=[_tok_spec(L, D)] + [_rep_spec(w) for w in weights],
        out_specs=out_specs,
        compiler_params=_CP,
        cost_estimate=cost,
    )(x, *weights)


# --------------------------- token pruning (JAX glue) --------------------------
def prune_token(x, pred_score, global_kept_index):
    # mirrors VisionTransformerTokenPruningV2.prune_token (eval path)
    B, Lx, C = x.shape
    L = Lx - 1
    keep_k = int(L * (1 - TP_RATIO))
    # NOTE: jnp.argsort is stable; torch.sort(descending=True) is not (ties may differ).
    sort_index = jnp.argsort(-pred_score, axis=1).astype(jnp.int32)
    keep_noncls_idx = sort_index[:, :keep_k] + 1
    kept_index = jnp.concatenate(
        [jnp.zeros((B, 1), dtype=keep_noncls_idx.dtype), keep_noncls_idx], axis=1)
    pruned_index = sort_index[:, keep_k:] + 1
    kept_x = jnp.take_along_axis(x, kept_index[:, :, None], axis=1)
    if global_kept_index is None:
        gk, gp = kept_index, pruned_index
    else:
        gk = jnp.take_along_axis(global_kept_index, kept_index, axis=1)
        gp = jnp.take_along_axis(global_kept_index, pruned_index, axis=1)
    return kept_x, pruned_index, gk, gp


# ------------------------------- parameters ------------------------------------
def _dense(key, shape, std=0.02):
    return std * jax.random.normal(key, shape, jnp.float32)


def init_params(key):
    D = EMBED_DIM
    H = NUM_HEADS
    hd = D // H
    HID = int(D * MLP_RATIO)
    P = IN_CHANS * PATCH_SIZE * PATCH_SIZE
    num_patches = (IMG_SIZE // PATCH_SIZE) ** 2
    keys = iter(jax.random.split(key, 64))
    bf16 = jnp.bfloat16

    params = {
        'patch_w': _dense(next(keys), (P, D)).astype(bf16),   # Conv2d weight, flattened (in,out)
        'patch_b': jnp.zeros((1, D), jnp.float32),
        'cls_token': 1e-6 * jax.random.normal(next(keys), (1, D), jnp.float32),
        'pos_embed': _dense(next(keys), (num_patches + 1, D)),
    }
    blocks = []
    for _ in range(DEPTH):
        qkv_w = _dense(next(keys), (D, 3 * D))
        qkv_b = jnp.zeros((3 * D,), jnp.float32)
        proj_w = _dense(next(keys), (D, D))
        blocks.append(dict(
            ln1_w=jnp.ones((1, D), jnp.float32), ln1_b=jnp.zeros((1, D), jnp.float32),
            # per-head weight stacks: (H, D, hd) for q/k/v, (H, hd, D) for the out-proj
            wq=qkv_w[:, 0:D].reshape(D, H, hd).transpose(1, 0, 2).astype(bf16),
            wk=qkv_w[:, D:2 * D].reshape(D, H, hd).transpose(1, 0, 2).astype(bf16),
            wv=qkv_w[:, 2 * D:3 * D].reshape(D, H, hd).transpose(1, 0, 2).astype(bf16),
            bq=qkv_b[0:D].reshape(H, 1, hd),
            bk=qkv_b[D:2 * D].reshape(H, 1, hd),
            bv=qkv_b[2 * D:3 * D].reshape(H, 1, hd),
            wo=proj_w.reshape(H, hd, D).astype(bf16),
            bo=jnp.zeros((1, D), jnp.float32),
            ln2_w=jnp.ones((1, D), jnp.float32), ln2_b=jnp.zeros((1, D), jnp.float32),
            fc1_w=_dense(next(keys), (D, HID)).astype(bf16),
            fc1_b=jnp.zeros((1, HID), jnp.float32),
            fc2_w=_dense(next(keys), (HID, D)).astype(bf16),
            fc2_b=jnp.zeros((1, D), jnp.float32),
        ))
    params['blocks'] = blocks

    preds = []
    for _ in range(len(TP_LOC)):
        preds.append(dict(
            ln_w=jnp.ones((1, D), jnp.float32), ln_b=jnp.zeros((1, D), jnp.float32),
            w1=_dense(next(keys), (D, D // 2)).astype(bf16),
            b1=jnp.zeros((1, D // 2), jnp.float32),
            w2=_dense(next(keys), (D // 2, D // 4)).astype(bf16),
            b2=jnp.zeros((1, D // 4), jnp.float32),
            w3=_dense(next(keys), (1, D // 4)),            # used as VPU row-weight
            b3=jnp.zeros((1, 1), jnp.float32),
        ))
    params['pred'] = preds
    params['mid_norm'] = [(jnp.ones((1, D), jnp.float32), jnp.zeros((1, D), jnp.float32))
                          for _ in TP_LOC]
    params['norm'] = (jnp.ones((1, D), jnp.float32), jnp.zeros((1, D), jnp.float32))
    return params


# --------------------------------- forward -------------------------------------
def forward(params, x):
    """x: (B, C, H, W) NCHW float32. Returns (token_list, policy_list) [as_encoder=True]."""
    B, C, H, W = x.shape
    hc, wc = H // PATCH_SIZE, W // PATCH_SIZE
    n_patch = hc * wc
    L0 = n_patch + 1
    L0_pad = _pad8(L0)
    D = EMBED_DIM

    # patch unfold in Conv2d-weight-compatible order (c, ph, pw); prepend a zero row for the
    # CLS token and pad the token axis to a multiple of 8 (padded rows stay zero / masked).
    patches = x.reshape(B, C, hc, PATCH_SIZE, wc, PATCH_SIZE)
    patches = patches.transpose(0, 2, 4, 1, 3, 5).reshape(B, n_patch,
                                                          C * PATCH_SIZE * PATCH_SIZE)
    patches = jnp.pad(patches, ((0, 0), (1, L0_pad - L0), (0, 0)))

    # additive term for the fused embed kernel: row0 = cls + pos[0], rows 1.. = pos + conv bias
    add_term = jnp.concatenate(
        [params['cls_token'] + params['pos_embed'][0:1],
         params['pos_embed'][1:] + params['patch_b']], axis=0)
    add_term = jnp.pad(add_term, ((0, L0_pad - L0), (0, 0)))

    xt = embed_call(patches, params['patch_w'], add_term)       # (B, L0_pad, D)
    valid = L0
    # pos_drop: dropout(p=0.0) -> identity at eval

    policy = None
    token_list, policy_list = [], []
    for i in range(DEPTH):
        blk_w = _block_weight_list(params['blocks'][i])
        if i == DEPTH - 1:
            # last block: final LayerNorm fused into the kernel epilogue
            out = block_norm_call(xt, blk_w, params['norm'], valid)
            token_list.append(out[:, :valid, :])
            policy_list.append(policy)
        elif i in TP_LOC:
            j = TP_LOC.index(i)
            full, scores, mid = block_pred_call(xt, blk_w, params['pred'][j],
                                                params['mid_norm'][j], valid)
            x_valid = full[:, :valid, :]
            pred_score = scores[:, 1:valid, 0]                   # (B, L_noncls)
            kept_x, pruned_index, policy, prune_policy = prune_token(x_valid, pred_score,
                                                                     policy)
            # mid-norm was computed per-token in-kernel; gather the pruned rows (LN is per-row)
            token_list.append(jnp.take_along_axis(mid[:, :valid, :],
                                                  pruned_index[:, :, None], axis=1))
            policy_list.append(prune_policy)
            valid = kept_x.shape[1]
            new_pad = _pad8(valid)
            if new_pad > valid:
                kept_x = jnp.pad(kept_x, ((0, 0), (0, new_pad - valid), (0, 0)))
            xt = kept_x
        else:
            xt = block_plain_call(xt, blk_w, valid)
    return token_list, policy_list
    # TODO(synk): training-mode (differentiable) pruning raises NotImplementedError in the
    #             reference and is intentionally not implemented.


# ----------------------------------- main ---------------------------------------
if __name__ == "__main__":
    key = jax.random.PRNGKey(0)
    pkey, xkey = jax.random.split(key)
    params = init_params(pkey)
    x = jax.random.normal(xkey, (2, IN_CHANS, IMG_SIZE, IMG_SIZE), jnp.float32)

    fwd = jax.jit(forward)
    token_list, policy_list = fwd(params, x)
    jax.block_until_ready(token_list)
    jax.block_until_ready(policy_list)

    # sanity on output shapes (depth=2, tp_loc=(0,), tp_ratio=0.5, 16 patches + cls)
    assert token_list[0].shape == (2, 8, EMBED_DIM)    # pruned tokens after block 0 (mid-norm)
    assert token_list[1].shape == (2, 9, EMBED_DIM)    # kept tokens after final norm
    assert policy_list[0].shape == (2, 8)
    assert policy_list[1].shape == (2, 9)
    assert all(bool(jnp.all(jnp.isfinite(t))) for t in token_list)
    print("KERNEL_OK")
</pallas_src>

<mosaic_0001>
module attributes {stable_mosaic.version = 11 : i64} {
  func.func @embed_kernel(%arg0: i32, %arg1: memref<1x24x48xf32, #tpu.memory_space<vmem>>, %arg2: memref<48x128xbf16, #tpu.memory_space<vmem>>, %arg3: memref<24x128xf32, #tpu.memory_space<vmem>>, %arg4: memref<1x24x128xf32, #tpu.memory_space<vmem>>) attributes {dimension_semantics = [#tpu.dimension_semantics<parallel>], iteration_bounds = array<i64: 2>, scalar_prefetch = 0 : i64, scratch_operands = 0 : i64, tpu.core_type = #tpu.core_type<tc>, window_params = [{transform_indices = @transform_0, window_bounds = array<i64: 1, 24, 48>}, {pipeline_mode = #tpu.pipeline_mode<synchronous>, transform_indices = @transform_1, window_bounds = array<i64: 48, 128>}, {pipeline_mode = #tpu.pipeline_mode<synchronous>, transform_indices = @transform_2, window_bounds = array<i64: 24, 128>}, {transform_indices = @transform_3, window_bounds = array<i64: 1, 24, 128>}]} {
    %c0 = arith.constant 0 : index
    %c0_0 = arith.constant 0 : index
    %c0_1 = arith.constant 0 : index
    %0 = vector.load %arg1[%c0, %c0_0, %c0_1] : memref<1x24x48xf32, #tpu.memory_space<vmem>>, vector<1x24x48xf32>
    %1 = vector.shape_cast %0 : vector<1x24x48xf32> to vector<24x48xf32>
    %2 = arith.truncf %1 : vector<24x48xf32> to vector<24x48xbf16>
    %c0_2 = arith.constant 0 : index
    %c0_3 = arith.constant 0 : index
    %3 = vector.load %arg2[%c0_2, %c0_3] : memref<48x128xbf16, #tpu.memory_space<vmem>>, vector<48x128xbf16>
    %cst = arith.constant dense<0.000000e+00> : vector<24x128xf32>
    %4 = tpu.matmul %2, %3, %cst {dimension_numbers = #tpu.dot_dimension_numbers<[1], [0], [0], [1], [0, 0, 1, 1], [], []>} : vector<24x48xbf16>, vector<48x128xbf16>, vector<24x128xf32> -> vector<24x128xf32>
    %c0_4 = arith.constant 0 : index
    %c0_5 = arith.constant 0 : index
    %5 = vector.load %arg3[%c0_4, %c0_5] : memref<24x128xf32, #tpu.memory_space<vmem>>, vector<24x128xf32>
    %6 = arith.addf %4, %5 : vector<24x128xf32>
    %c0_6 = arith.constant 0 : index
    %c0_7 = arith.constant 0 : index
    %c0_8 = arith.constant 0 : index
    %7 = vector.load %arg4[%c0_6, %c0_7, %c0_8] : memref<1x24x128xf32, #tpu.memory_space<vmem>>, vector<1x24x128xf32>
    %8 = vector.shape_cast %7 : vector<1x24x128xf32> to vector<24x128xf32>
    %9 = vector.shape_cast %6 : vector<24x128xf32> to vector<1x24x128xf32>
    tpu.vector_store %arg4[%c0_6, %c0_7, %c0_8], %9 {strides = array<i32>} : memref<1x24x128xf32, #tpu.memory_space<vmem>>, vector<1x24x128xf32>,
    return
  }
  func.func @transform_0(%arg0: i32) -> (i32, i32, i32) {
    %c0_i32 = arith.constant 0 : i32
    %c0_i32_0 = arith.constant 0 : i32
    %c0_i32_1 = arith.constant 0 : i32
    return %arg0, %c0_i32, %c0_i32_0 : i32, i32, i32
  }
  func.func @transform_1(%arg0: i32) -> (i32, i32) {
    %c0_i32 = arith.constant 0 : i32
    %c0_i32_0 = arith.constant 0 : i32
    %c0_i32_1 = arith.constant 0 : i32
    return %c0_i32, %c0_i32_0 : i32, i32
  }
  func.func @transform_2(%arg0: i32) -> (i32, i32) {
    %c0_i32 = arith.constant 0 : i32
    %c0_i32_0 = arith.constant 0 : i32
    %c0_i32_1 = arith.constant 0 : i32
    return %c0_i32, %c0_i32_0 : i32, i32
  }
  func.func @transform_3(%arg0: i32) -> (i32, i32, i32) {
    %c0_i32 = arith.constant 0 : i32
    %c0_i32_0 = arith.constant 0 : i32
    %c0_i32_1 = arith.constant 0 : i32
    return %arg0, %c0_i32, %c0_i32_0 : i32, i32, i32
  }
}

module attributes {stable_mosaic.version = 11 : i64} {
  func.func @block_pred_kernel(%arg0: i32, %arg1: memref<1x24x128xf32, #tpu.memory_space<vmem>>, %arg2: memref<1x128xf32, #tpu.memory_space<vmem>>, %arg3: memref<1x128xf32, #tpu.memory_space<vmem>>, %arg4: memref<4x128x32xbf16, #tpu.memory_space<vmem>>, %arg5: memref<4x128x32xbf16, #tpu.memory_space<vmem>>, %arg6: memref<4x128x32xbf16, #tpu.memory_space<vmem>>, %arg7: memref<4x1x32xf32, #tpu.memory_space<vmem>>, %arg8: memref<4x1x32xf32, #tpu.memory_space<vmem>>, %arg9: memref<4x1x32xf32, #tpu.memory_space<vmem>>, %arg10: memref<4x32x128xbf16, #tpu.memory_space<vmem>>, %arg11: memref<1x128xf32, #tpu.memory_space<vmem>>, %arg12: memref<1x128xf32, #tpu.memory_space<vmem>>, %arg13: memref<1x128xf32, #tpu.memory_space<vmem>>, %arg14: memref<128x512xbf16, #tpu.memory_space<vmem>>, %arg15: memref<1x512xf32, #tpu.memory_space<vmem>>, %arg16: memref<512x128xbf16, #tpu.memory_space<vmem>>, %arg17: memref<1x128xf32, #tpu.memory_space<vmem>>, %arg18: memref<1x128xf32, #tpu.memory_space<vmem>>, %arg19: memref<1x128xf32, #tpu.memory_space<vmem>>, %arg20: memref<128x64xbf16, #tpu.memory_space<vmem>>, %arg21: memref<1x64xf32, #tpu.memory_space<vmem>>, %arg22: memref<64x32xbf16, #tpu.memory_space<vmem>>, %arg23: memref<1x32xf32, #tpu.memory_space<vmem>>, %arg24: memref<1x32xf32, #tpu.memory_space<vmem>>, %arg25: memref<1x1xf32, #tpu.memory_space<vmem>>, %arg26: memref<1x128xf32, #tpu.memory_space<vmem>>, %arg27: memref<1x128xf32, #tpu.memory_space<vmem>>, %arg28: memref<1x24x128xf32, #tpu.memory_space<vmem>>, %arg29: memref<1x24x1xf32, #tpu.memory_space<vmem>>, %arg30: memref<1x24x128xf32, #tpu.memory_space<vmem>>) attributes {dimension_semantics = [#tpu.dimension_semantics<parallel>], iteration_bounds = array<i64: 2>, scalar_prefetch = 0 : i64, scratch_operands = 0 : i64, tpu.core_type = #tpu.core_type<tc>, window_params = [{transform_indices = @transform_0, window_bounds = array<i64: 1, 24, 128>}, {pipeline_mode = #tpu.pipeline_mode<synchronous>, transform_indices = @transform_1, window_bounds = array<i64: 1, 128>}, {pipeline_mode = #tpu.pipeline_mode<synchronous>, transform_indices = @transform_2, window_bounds = array<i64: 1, 128>}, {pipeline_mode = #tpu.pipeline_mode<synchronous>, transform_indices = @transform_3, window_bounds = array<i64: 4, 128, 32>}, {pipeline_mode = #tpu.pipeline_mode<synchronous>, transform_indices = @transform_4, window_bounds = array<i64: 4, 128, 32>}, {pipeline_mode = #tpu.pipeline_mode<synchronous>, transform_indices = @transform_5, window_bounds = array<i64: 4, 128, 32>}, {pipeline_mode = #tpu.pipeline_mode<synchronous>, transform_indices = @transform_6, window_bounds = array<i64: 4, 1, 32>}, {pipeline_mode = #tpu.pipeline_mode<synchronous>, transform_indices = @transform_7, window_bounds = array<i64: 4, 1, 32>}, {pipeline_mode = #tpu.pipeline_mode<synchronous>, transform_indices = @transform_8, window_bounds = array<i64: 4, 1, 32>}, {pipeline_mode = #tpu.pipeline_mode<synchronous>, transform_indices = @transform_9, window_bounds = array<i64: 4, 32, 128>}, {pipeline_mode = #tpu.pipeline_mode<synchronous>, transform_indices = @transform_10, window_bounds = array<i64: 1, 128>}, {pipeline_mode = #tpu.pipeline_mode<synchronous>, transform_indices = @transform_11, window_bounds = array<i64: 1, 128>}, {pipeline_mode = #tpu.pipeline_mode<synchronous>, transform_indices = @transform_12, window_bounds = array<i64: 1, 128>}, {pipeline_mode = #tpu.pipeline_mode<synchronous>, transform_indices = @transform_13, window_bounds = array<i64: 128, 512>}, {pipeline_mode = #tpu.pipeline_mode<synchronous>, transform_indices = @transform_14, window_bounds = array<i64: 1, 512>}, {pipeline_mode = #tpu.pipeline_mode<synchronous>, transform_indices = @transform_15, window_bounds = array<i64: 512, 128>}, {pipeline_mode = #tpu.pipeline_mode<synchronous>, transform_indices = @transform_16, window_bounds = array<i64: 1, 128>}, {pipeline_mode = #tpu.pipeline_mode<synchronous>, transform_indices = @transform_17, window_bounds = array<i64: 1, 128>}, {pipeline_mode = #tpu.pipeline_mode<synchronous>, transform_indices = @transform_18, window_bounds = array<i64: 1, 128>}, {pipeline_mode = #tpu.pipeline_mode<synchronous>, transform_indices = @transform_19, window_bounds = array<i64: 128, 64>}, {pipeline_mode = #tpu.pipeline_mode<synchronous>, transform_indices = @transform_20, window_bounds = array<i64: 1, 64>}, {pipeline_mode = #tpu.pipeline_mode<synchronous>, transform_indices = @transform_21, window_bounds = array<i64: 64, 32>}, {pipeline_mode = #tpu.pipeline_mode<synchronous>, transform_indices = @transform_22, window_bounds = array<i64: 1, 32>}, {pipeline_mode = #tpu.pipeline_mode<synchronous>, transform_indices = @transform_23, window_bounds = array<i64: 1, 32>}, {pipeline_mode = #tpu.pipeline_mode<synchronous>, transform_indices = @transform_24, window_bounds = array<i64: 1, 1>}, {pipeline_mode = #tpu.pipeline_mode<synchronous>, transform_indices = @transform_25, window_bounds = array<i64: 1, 128>}, {pipeline_mode = #tpu.pipeline_mode<synchronous>, transform_indices = @transform_26, window_bounds = array<i64: 1, 128>}, {transform_indices = @transform_27, window_bounds = array<i64: 1, 24, 128>}, {transform_indices = @transform_28, window_bounds = array<i64: 1, 24, 1>}, {transform_indices = @transform_29, window_bounds = array<i64: 1, 24, 128>}]} {
    %c0 = arith.constant 0 : index
    %c0_0 = arith.constant 0 : index
    %c0_1 = arith.constant 0 : index
    %0 = vector.load %arg1[%c0, %c0_0, %c0_1] : memref<1x24x128xf32, #tpu.memory_space<vmem>>, vector<1x24x128xf32>
    %1 = vector.shape_cast %0 : vector<1x24x128xf32> to vector<24x128xf32>
    %c0_2 = arith.constant 0 : index
    %c0_3 = arith.constant 0 : index
    %2 = vector.load %arg2[%c0_2, %c0_3] : memref<1x128xf32, #tpu.memory_space<vmem>>, vector<1x128xf32>
    %c0_4 = arith.constant 0 : index
    %c0_5 = arith.constant 0 : index
    %3 = vector.load %arg3[%c0_4, %c0_5] : memref<1x128xf32, #tpu.memory_space<vmem>>, vector<1x128xf32>
    %cst = arith.constant dense<0.000000e+00> : vector<24xf32>
    %4 = vector.multi_reduction <add>, %1, %cst [1] : vector<24x128xf32> to vector<24xf32>
    %5 = vector.shape_cast %4 : vector<24xf32> to vector<24x1xf32>
    %cst_6 = arith.constant 1.280000e+02 : f32
    %6 = vector.broadcast %cst_6 : f32 to vector<24x1xf32>
    %7 = arith.divf %5, %6 : vector<24x1xf32>
    %8 = vector.broadcast %7 : vector<24x1xf32> to vector<24x128xf32>
    %9 = arith.subf %1, %8 : vector<24x128xf32>
    %10 = arith.mulf %9, %9 : vector<24x128xf32>
    %cst_7 = arith.constant dense<0.000000e+00> : vector<24xf32>
    %11 = vector.multi_reduction <add>, %10, %cst_7 [1] : vector<24x128xf32> to vector<24xf32>
    %12 = vector.shape_cast %11 : vector<24xf32> to vector<24x1xf32>
    %cst_8 = arith.constant 1.280000e+02 : f32
    %13 = vector.broadcast %cst_8 : f32 to vector<24x1xf32>
    %14 = arith.divf %12, %13 : vector<24x1xf32>
    %cst_9 = arith.constant 9.99999997E-7 : f32
    %15 = vector.broadcast %cst_9 : f32 to vector<24x1xf32>
    %16 = arith.addf %14, %15 : vector<24x1xf32>
    %17 = math.rsqrt %16 : vector<24x1xf32>
    %18 = vector.broadcast %17 : vector<24x1xf32> to vector<24x128xf32>
    %19 = arith.mulf %9, %18 : vector<24x128xf32>
    %20 = vector.broadcast %2 : vector<1x128xf32> to vector<24x128xf32>
    %21 = arith.mulf %19, %20 : vector<24x128xf32>
    %22 = vector.broadcast %3 : vector<1x128xf32> to vector<24x128xf32>
    %23 = arith.addf %21, %22 : vector<24x128xf32>
    %24 = arith.truncf %23 : vector<24x128xf32> to vector<24x128xbf16>
    %25 = tpu.iota {dimensions = array<i32: 1>} : vector<24x24xi32>
    %c17_i32 = arith.constant 17 : i32
    %26 = vector.broadcast %c17_i32 : i32 to vector<24x24xi32>
    %27 = arith.cmpi slt, %25, %26 : vector<24x24xi32>
    %cst_10 = arith.constant 0.000000e+00 : f32
    %28 = vector.broadcast %cst_10 : f32 to vector<24x128xf32>
    %c0_11 = arith.constant 0 : index
    %c0_12 = arith.constant 0 : index
    %c0_13 = arith.constant 0 : index
    %29 = vector.load %arg4[%c0_11, %c0_12, %c0_13] : memref<4x128x32xbf16, #tpu.memory_space<vmem>>, vector<1x128x32xbf16>
    %30 = vector.shape_cast %29 : vector<1x128x32xbf16> to vector<128x32xbf16>
    %cst_14 = arith.constant dense<0.000000e+00> : vector<24x32xf32>
    %31 = tpu.matmul %24, %30, %cst_14 {dimension_numbers = #tpu.dot_dimension_numbers<[1], [0], [0], [1], [0, 0, 1, 1], [], []>} : vector<24x128xbf16>, vector<128x32xbf16>, vector<24x32xf32> -> vector<24x32xf32>
    %c0_15 = arith.constant 0 : index
    %c0_16 = arith.constant 0 : index
    %c0_17 = arith.constant 0 : index
    %32 = vector.load %arg7[%c0_15, %c0_16, %c0_17] : memref<4x1x32xf32, #tpu.memory_space<vmem>>, vector<1x1x32xf32>
    %33 = vector.shape_cast %32 : vector<1x1x32xf32> to vector<1x32xf32>
    %34 = vector.broadcast %33 : vector<1x32xf32> to vector<24x32xf32>
    %35 = arith.addf %31, %34 : vector<24x32xf32>
    %c0_18 = arith.constant 0 : index
    %c0_19 = arith.constant 0 : index
    %c0_20 = arith.constant 0 : index
    %36 = vector.load %arg5[%c0_18, %c0_19, %c0_20] : memref<4x128x32xbf16, #tpu.memory_space<vmem>>, vector<1x128x32xbf16>
    %37 = vector.shape_cast %36 : vector<1x128x32xbf16> to vector<128x32xbf16>
    %cst_21 = arith.constant dense<0.000000e+00> : vector<24x32xf32>
    %38 = tpu.matmul %24, %37, %cst_21 {dimension_numbers = #tpu.dot_dimension_numbers<[1], [0], [0], [1], [0, 0, 1, 1], [], []>} : vector<24x128xbf16>, vector<128x32xbf16>, vector<24x32xf32> -> vector<24x32xf32>
    %c0_22 = arith.constant 0 : index
    %c0_23 = arith.constant 0 : index
    %c0_24 = arith.constant 0 : index
    %39 = vector.load %arg8[%c0_22, %c0_23, %c0_24] : memref<4x1x32xf32, #tpu.memory_space<vmem>>, vector<1x1x32xf32>
    %40 = vector.shape_cast %39 : vector<1x1x32xf32> to vector<1x32xf32>
    %41 = vector.broadcast %40 : vector<1x32xf32> to vector<24x32xf32>
    %42 = arith.addf %38, %41 : vector<24x32xf32>
    %c0_25 = arith.constant 0 : index
    %c0_26 = arith.constant 0 : index
    %c0_27 = arith.constant 0 : index
    %43 = vector.load %arg6[%c0_25, %c0_26, %c0_27] : memref<4x128x32xbf16, #tpu.memory_space<vmem>>, vector<1x128x32xbf16>
    %44 = vector.shape_cast %43 : vector<1x128x32xbf16> to vector<128x32xbf16>
    %cst_28 = arith.constant dense<0.000000e+00> : vector<24x32xf32>
    %45 = tpu.matmul %24, %44, %cst_28 {dimension_numbers = #tpu.dot_dimension_numbers<[1], [0], [0], [1], [0, 0, 1, 1], [], []>} : vector<24x128xbf16>, vector<128x32xbf16>, vector<24x32xf32> -> vector<24x32xf32>
    %c0_29 = arith.constant 0 : index
    %c0_30 = arith.constant 0 : index
    %c0_31 = arith.constant 0 : index
    %46 = vector.load %arg9[%c0_29, %c0_30, %c0_31] : memref<4x1x32xf32, #tpu.memory_space<vmem>>, vector<1x1x32xf32>
    %47 = vector.shape_cast %46 : vector<1x1x32xf32> to vector<1x32xf32>
    %48 = vector.broadcast %47 : vector<1x32xf32> to vector<24x32xf32>
    %49 = arith.addf %45, %48 : vector<24x32xf32>
    %50 = arith.truncf %35 : vector<24x32xf32> to vector<24x32xbf16>
    %51 = arith.truncf %42 : vector<24x32xf32> to vector<24x32xbf16>
    %cst_32 = arith.constant dense<0.000000e+00> : vector<24x24xf32>
    %52 = tpu.matmul %50, %51, %cst_32 {dimension_numbers = #tpu.dot_dimension_numbers<[1], [1], [0], [0], [0, 0, 1, 0], [], []>} : vector<24x32xbf16>, vector<24x32xbf16>, vector<24x24xf32> -> vector<24x24xf32>
    %cst_33 = arith.constant 0.176776692 : f32
    %53 = vector.broadcast %cst_33 : f32 to vector<24x24xf32>
    %54 = arith.mulf %52, %53 : vector<24x24xf32>
    %cst_34 = arith.constant -1.000000e+30 : f32
    %55 = vector.broadcast %cst_34 : f32 to vector<24x24xf32>
    %56 = arith.select %27, %54, %55 : vector<24x24xi1>, vector<24x24xf32>
    %cst_35 = arith.constant dense<0xFF800000> : vector<24xf32>
    %57 = vector.multi_reduction <maximumf>, %56, %cst_35 [1] : vector<24x24xf32> to vector<24xf32>
    %58 = vector.shape_cast %57 : vector<24xf32> to vector<24x1xf32>
    %59 = vector.broadcast %58 : vector<24x1xf32> to vector<24x24xf32>
    %60 = arith.subf %56, %59 : vector<24x24xf32>
    %61 = math.exp %60 : vector<24x24xf32>
    %cst_36 = arith.constant dense<0.000000e+00> : vector<24xf32>
    %62 = vector.multi_reduction <add>, %61, %cst_36 [1] : vector<24x24xf32> to vector<24xf32>
    %63 = vector.shape_cast %62 : vector<24xf32> to vector<24x1xf32>
    %64 = tpu.reciprocal %63 {approx = true} : vector<24x1xf32> -> vector<24x1xf32>
    %65 = vector.broadcast %64 : vector<24x1xf32> to vector<24x24xf32>
    %66 = arith.mulf %61, %65 : vector<24x24xf32>
    %67 = arith.truncf %66 : vector<24x24xf32> to vector<24x24xbf16>
    %68 = arith.truncf %49 : vector<24x32xf32> to vector<24x32xbf16>
    %cst_37 = arith.constant dense<0.000000e+00> : vector<24x32xf32>
    %69 = tpu.matmul %67, %68, %cst_37 {dimension_numbers = #tpu.dot_dimension_numbers<[1], [0], [0], [1], [0, 0, 1, 1], [], []>} : vector<24x24xbf16>, vector<24x32xbf16>, vector<24x32xf32> -> vector<24x32xf32>
    %70 = arith.truncf %69 : vector<24x32xf32> to vector<24x32xbf16>
    %c0_38 = arith.constant 0 : index
    %c0_39 = arith.constant 0 : index
    %c0_40 = arith.constant 0 : index
    %71 = vector.load %arg10[%c0_38, %c0_39, %c0_40] : memref<4x32x128xbf16, #tpu.memory_space<vmem>>, vector<1x32x128xbf16>
    %72 = vector.shape_cast %71 : vector<1x32x128xbf16> to vector<32x128xbf16>
    %cst_41 = arith.constant dense<0.000000e+00> : vector<24x128xf32>
    %73 = tpu.matmul %70, %72, %cst_41 {dimension_numbers = #tpu.dot_dimension_numbers<[1], [0], [0], [1], [0, 0, 1, 1], [], []>} : vector<24x32xbf16>, vector<32x128xbf16>, vector<24x128xf32> -> vector<24x128xf32>
    %74 = arith.addf %28, %73 : vector<24x128xf32>
    %c1 = arith.constant 1 : index
    %c0_42 = arith.constant 0 : index
    %c0_43 = arith.constant 0 : index
    %75 = vector.load %arg4[%c1, %c0_42, %c0_43] : memref<4x128x32xbf16, #tpu.memory_space<vmem>>, vector<1x128x32xbf16>
    %76 = vector.shape_cast %75 : vector<1x128x32xbf16> to vector<128x32xbf16>
    %cst_44 = arith.constant dense<0.000000e+00> : vector<24x32xf32>
    %77 = tpu.matmul %24, %76, %cst_44 {dimension_numbers = #tpu.dot_dimension_numbers<[1], [0], [0], [1], [0, 0, 1, 1], [], []>} : vector<24x128xbf16>, vector<128x32xbf16>, vector<24x32xf32> -> vector<24x32xf32>
    %c1_45 = arith.constant 1 : index
    %c0_46 = arith.constant 0 : index
    %c0_47 = arith.constant 0 : index
    %78 = vector.load %arg7[%c1_45, %c0_46, %c0_47] : memref<4x1x32xf32, #tpu.memory_space<vmem>>, vector<1x1x32xf32>
    %79 = vector.shape_cast %78 : vector<1x1x32xf32> to vector<1x32xf32>
    %80 = vector.broadcast %79 : vector<1x32xf32> to vector<24x32xf32>
    %81 = arith.addf %77, %80 : vector<24x32xf32>
    %c1_48 = arith.constant 1 : index
    %c0_49 = arith.constant 0 : index
    %c0_50 = arith.constant 0 : index
    %82 = vector.load %arg5[%c1_48, %c0_49, %c0_50] : memref<4x128x32xbf16, #tpu.memory_space<vmem>>, vector<1x128x32xbf16>
    %83 = vector.shape_cast %82 : vector<1x128x32xbf16> to vector<128x32xbf16>
    %cst_51 = arith.constant dense<0.000000e+00> : vector<24x32xf32>
    %84 = tpu.matmul %24, %83, %cst_51 {dimension_numbers = #tpu.dot_dimension_numbers<[1], [0], [0], [1], [0, 0, 1, 1], [], []>} : vector<24x128xbf16>, vector<128x32xbf16>, vector<24x32xf32> -> vector<24x32xf32>
    %c1_52 = arith.constant 1 : index
    %c0_53 = arith.constant 0 : index
    %c0_54 = arith.constant 0 : index
    %85 = vector.load %arg8[%c1_52, %c0_53, %c0_54] : memref<4x1x32xf32, #tpu.memory_space<vmem>>, vector<1x1x32xf32>
    %86 = vector.shape_cast %85 : vector<1x1x32xf32> to vector<1x32xf32>
    %87 = vector.broadcast %86 : vector<1x32xf32> to vector<24x32xf32>
    %88 = arith.addf %84, %87 : vector<24x32xf32>
    %c1_55 = arith.constant 1 : index
    %c0_56 = arith.constant 0 : index
    %c0_57 = arith.constant 0 : index
    %89 = vector.load %arg6[%c1_55, %c0_56, %c0_57] : memref<4x128x32xbf16, #tpu.memory_space<vmem>>, vector<1x128x32xbf16>
    %90 = vector.shape_cast %89 : vector<1x128x32xbf16> to vector<128x32xbf16>
    %cst_58 = arith.constant dense<0.000000e+00> : vector<24x32xf32>
    %91 = tpu.matmul %24, %90, %cst_58 {dimension_numbers = #tpu.dot_dimension_numbers<[1], [0], [0], [1], [0, 0, 1, 1], [], []>} : vector<24x128xbf16>, vector<128x32xbf16>, vector<24x32xf32> -> vector<24x32xf32>
    %c1_59 = arith.constant 1 : index
    %c0_60 = arith.constant 0 : index
    %c0_61 = arith.constant 0 : index
    %92 = vector.load %arg9[%c1_59, %c0_60, %c0_61] : memref<4x1x32xf32, #tpu.memory_space<vmem>>, vector<1x1x32xf32>
    %93 = vector.shape_cast %92 : vector<1x1x32xf32> to vector<1x32xf32>
    %94 = vector.broadcast %93 : vector<1x32xf32> to vector<24x32xf32>
    %95 = arith.addf %91, %94 : vector<24x32xf32>
    %96 = arith.truncf %81 : vector<24x32xf32> to vector<24x32xbf16>
    %97 = arith.truncf %88 : vector<24x32xf32> to vector<24x32xbf16>
    %cst_62 = arith.constant dense<0.000000e+00> : vector<24x24xf32>
    %98 = tpu.matmul %96, %97, %cst_62 {dimension_numbers = #tpu.dot_dimension_numbers<[1], [1], [0], [0], [0, 0, 1, 0], [], []>} : vector<24x32xbf16>, vector<24x32xbf16>, vector<24x24xf32> -> vector<24x24xf32>
    %cst_63 = arith.constant 0.176776692 : f32
    %99 = vector.broadcast %cst_63 : f32 to vector<24x24xf32>
    %100 = arith.mulf %98, %99 : vector<24x24xf32>
    %cst_64 = arith.constant -1.000000e+30 : f32
    %101 = vector.broadcast %cst_64 : f32 to vector<24x24xf32>
    %102 = arith.select %27, %100, %101 : vector<24x24xi1>, vector<24x24xf32>
    %cst_65 = arith.constant dense<0xFF800000> : vector<24xf32>
    %103 = vector.multi_reduction <maximumf>, %102, %cst_65 [1] : vector<24x24xf32> to vector<24xf32>
    %104 = vector.shape_cast %103 : vector<24xf32> to vector<24x1xf32>
    %105 = vector.broadcast %104 : vector<24x1xf32> to vector<24x24xf32>
    %106 = arith.subf %102, %105 : vector<24x24xf32>
    %107 = math.exp %106 : vector<24x24xf32>
    %cst_66 = arith.constant dense<0.000000e+00> : vector<24xf32>
    %108 = vector.multi_reduction <add>, %107, %cst_66 [1] : vector<24x24xf32> to vector<24xf32>
    %109 = vector.shape_cast %108 : vector<24xf32> to vector<24x1xf32>
    %110 = tpu.reciprocal %109 {approx = true} : vector<24x1xf32> -> vector<24x1xf32>
    %111 = vector.broadcast %110 : vector<24x1xf32> to vector<24x24xf32>
    %112 = arith.mulf %107, %111 : vector<24x24xf32>
    %113 = arith.truncf %112 : vector<24x24xf32> to vector<24x24xbf16>
    %114 = arith.truncf %95 : vector<24x32xf32> to vector<24x32xbf16>
    %cst_67 = arith.constant dense<0.000000e+00> : vector<24x32xf32>
    %115 = tpu.matmul %113, %114, %cst_67 {dimension_numbers = #tpu.dot_dimension_numbers<[1], [0], [0], [1], [0, 0, 1, 1], [], []>} : vector<24x24xbf16>, vector<24x32xbf16>, vector<24x32xf32> -> vector<24x32xf32>
    %116 = arith.truncf %115 : vector<24x32xf32> to vector<24x32xbf16>
    %c1_68 = arith.constant 1 : index
    %c0_69 = arith.constant 0 : index
    %c0_70 = arith.constant 0 : index
    %117 = vector.load %arg10[%c1_68, %c0_69, %c0_70] : memref<4x32x128xbf16, #tpu.memory_space<vmem>>, vector<1x32x128xbf16>
    %118 = vector.shape_cast %117 : vector<1x32x128xbf16> to vector<32x128xbf16>
    %cst_71 = arith.constant dense<0.000000e+00> : vector<24x128xf32>
    %119 = tpu.matmul %116, %118, %cst_71 {dimension_numbers = #tpu.dot_dimension_numbers<[1], [0], [0], [1], [0, 0, 1, 1], [], []>} : vector<24x32xbf16>, vector<32x128xbf16>, vector<24x128xf32> -> vector<24x128xf32>
    %120 = arith.addf %74, %119 : vector<24x128xf32>
    %c2 = arith.constant 2 : index
    %c0_72 = arith.constant 0 : index
    %c0_73 = arith.constant 0 : index
    %121 = vector.load %arg4[%c2, %c0_72, %c0_73] : memref<4x128x32xbf16, #tpu.memory_space<vmem>>, vector<1x128x32xbf16>
    %122 = vector.shape_cast %121 : vector<1x128x32xbf16> to vector<128x32xbf16>
    %cst_74 = arith.constant dense<0.000000e+00> : vector<24x32xf32>
    %123 = tpu.matmul %24, %122, %cst_74 {dimension_numbers = #tpu.dot_dimension_numbers<[1], [0], [0], [1], [0, 0, 1, 1], [], []>} : vector<24x128xbf16>, vector<128x32xbf16>, vector<24x32xf32> -> vector<24x32xf32>
    %c2_75 = arith.constant 2 : index
    %c0_76 = arith.constant 0 : index
    %c0_77 = arith.constant 0 : index
    %124 = vector.load %arg7[%c2_75, %c0_76, %c0_77] : memref<4x1x32xf32, #tpu.memory_space<vmem>>, vector<1x1x32xf32>
    %125 = vector.shape_cast %124 : vector<1x1x32xf32> to vector<1x32xf32>
    %126 = vector.broadcast %125 : vector<1x32xf32> to vector<24x32xf32>
    %127 = arith.addf %123, %126 : vector<24x32xf32>
    %c2_78 = arith.constant 2 : index
    %c0_79 = arith.constant 0 : index
    %c0_80 = arith.constant 0 : index
    %128 = vector.load %arg5[%c2_78, %c0_79, %c0_80] : memref<4x128x32xbf16, #tpu.memory_space<vmem>>, vector<1x128x32xbf16>
    %129 = vector.shape_cast %128 : vector<1x128x32xbf16> to vector<128x32xbf16>
    %cst_81 = arith.constant dense<0.000000e+00> : vector<24x32xf32>
    %130 = tpu.matmul %24, %129, %cst_81 {dimension_numbers = #tpu.dot_dimension_numbers<[1], [0], [0], [1], [0, 0, 1, 1], [], []>} : vector<24x128xbf16>, vector<128x32xbf16>, vector<24x32xf32> -> vector<24x32xf32>
    %c2_82 = arith.constant 2 : index
    %c0_83 = arith.constant 0 : index
    %c0_84 = arith.constant 0 : index
    %131 = vector.load %arg8[%c2_82, %c0_83, %c0_84] : memref<4x1x32xf32, #tpu.memory_space<vmem>>, vector<1x1x32xf32>
    %132 = vector.shape_cast %131 : vector<1x1x32xf32> to vector<1x32xf32>
    %133 = vector.broadcast %132 : vector<1x32xf32> to vector<24x32xf32>
    %134 = arith.addf %130, %133 : vector<24x32xf32>
    %c2_85 = arith.constant 2 : index
    %c0_86 = arith.constant 0 : index
    %c0_87 = arith.constant 0 : index
    %135 = vector.load %arg6[%c2_85, %c0_86, %c0_87] : memref<4x128x32xbf16, #tpu.memory_space<vmem>>, vector<1x128x32xbf16>
    %136 = vector.shape_cast %135 : vector<1x128x32xbf16> to vector<128x32xbf16>
    %cst_88 = arith.constant dense<0.000000e+00> : vector<24x32xf32>
    %137 = tpu.matmul %24, %136, %cst_88 {dimension_numbers = #tpu.dot_dimension_numbers<[1], [0], [0], [1], [0, 0, 1, 1], [], []>} : vector<24x128xbf16>, vector<128x32xbf16>, vector<24x32xf32> -> vector<24x32xf32>
    %c2_89 = arith.constant 2 : index
    %c0_90 = arith.constant 0 : index
    %c0_91 = arith.constant 0 : index
    %138 = vector.load %arg9[%c2_89, %c0_90, %c0_91] : memref<4x1x32xf32, #tpu.memory_space<vmem>>, vector<1x1x32xf32>
    %139 = vector.shape_cast %138 : vector<1x1x32xf32> to vector<1x32xf32>
    %140 = vector.broadcast %139 : vector<1x32xf32> to vector<24x32xf32>
    %141 = arith.addf %137, %140 : vector<24x32xf32>
    %142 = arith.truncf %127 : vector<24x32xf32> to vector<24x32xbf16>
    %143 = arith.truncf %134 : vector<24x32xf32> to vector<24x32xbf16>
    %cst_92 = arith.constant dense<0.000000e+00> : vector<24x24xf32>
    %144 = tpu.matmul %142, %143, %cst_92 {dimension_numbers = #tpu.dot_dimension_numbers<[1], [1], [0], [0], [0, 0, 1, 0], [], []>} : vector<24x32xbf16>, vector<24x32xbf16>, vector<24x24xf32> -> vector<24x24xf32>
    %cst_93 = arith.constant 0.176776692 : f32
    %145 = vector.broadcast %cst_93 : f32 to vector<24x24xf32>
    %146 = arith.mulf %144, %145 : vector<24x24xf32>
    %cst_94 = arith.constant -1.000000e+30 : f32
    %147 = vector.broadcast %cst_94 : f32 to vector<24x24xf32>
    %148 = arith.select %27, %146, %147 : vector<24x24xi1>, vector<24x24xf32>
    %cst_95 = arith.constant dense<0xFF800000> : vector<24xf32>
    %149 = vector.multi_reduction <maximumf>, %148, %cst_95 [1] : vector<24x24xf32> to vector<24xf32>
    %150 = vector.shape_cast %149 : vector<24xf32> to vector<24x1xf32>
    %151 = vector.broadcast %150 : vector<24x1xf32> to vector<24x24xf32>
    %152 = arith.subf %148, %151 : vector<24x24xf32>
    %153 = math.exp %152 : vector<24x24xf32>
    %cst_96 = arith.constant dense<0.000000e+00> : vector<24xf32>
    %154 = vector.multi_reduction <add>, %153, %cst_96 [1] : vector<24x24xf32> to vector<24xf32>
    %155 = vector.shape_cast %154 : vector<24xf32> to vector<24x1xf32>
    %156 = tpu.reciprocal %155 {approx = true} : vector<24x1xf32> -> vector<24x1xf32>
    %157 = vector.broadcast %156 : vector<24x1xf32> to vector<24x24xf32>
    %158 = arith.mulf %153, %157 : vector<24x24xf32>
    %159 = arith.truncf %158 : vector<24x24xf32> to vector<24x24xbf16>
    %160 = arith.truncf %141 : vector<24x32xf32> to vector<24x32xbf16>
    %cst_97 = arith.constant dense<0.000000e+00> : vector<24x32xf32>
    %161 = tpu.matmul %159, %160, %cst_97 {dimension_numbers = #tpu.dot_dimension_numbers<[1], [0], [0], [1], [0, 0, 1, 1], [], []>} : vector<24x24xbf16>, vector<24x32xbf16>, vector<24x32xf32> -> vector<24x32xf32>
    %162 = arith.truncf %161 : vector<24x32xf32> to vector<24x32xbf16>
    %c2_98 = arith.constant 2 : index
    %c0_99 = arith.constant 0 : index
    %c0_100 = arith.constant 0 : index
    %163 = vector.load %arg10[%c2_98, %c0_99, %c0_100] : memref<4x32x128xbf16, #tpu.memory_space<vmem>>, vector<1x32x128xbf16>
    %164 = vector.shape_cast %163 : vector<1x32x128xbf16> to vector<32x128xbf16>
    %cst_101 = arith.constant dense<0.000000e+00> : vector<24x128xf32>
    %165 = tpu.matmul %162, %164, %cst_101 {dimension_numbers = #tpu.dot_dimension_numbers<[1], [0], [0], [1], [0, 0, 1, 1], [], []>} : vector<24x32xbf16>, vector<32x128xbf16>, vector<24x128xf32> -> vector<24x128xf32>
    %166 = arith.addf %120, %165 : vector<24x128xf32>
    %c3 = arith.constant 3 : index
    %c0_102 = arith.constant 0 : index
    %c0_103 = arith.constant 0 : index
    %167 = vector.load %arg4[%c3, %c0_102, %c0_103] : memref<4x128x32xbf16, #tpu.memory_space<vmem>>, vector<1x128x32xbf16>
    %168 = vector.shape_cast %167 : vector<1x128x32xbf16> to vector<128x32xbf16>
    %cst_104 = arith.constant dense<0.000000e+00> : vector<24x32xf32>
    %169 = tpu.matmul %24, %168, %cst_104 {dimension_numbers = #tpu.dot_dimension_numbers<[1], [0], [0], [1], [0, 0, 1, 1], [], []>} : vector<24x128xbf16>, vector<128x32xbf16>, vector<24x32xf32> -> vector<24x32xf32>
    %c3_105 = arith.constant 3 : index
    %c0_106 = arith.constant 0 : index
    %c0_107 = arith.constant 0 : index
    %170 = vector.load %arg7[%c3_105, %c0_106, %c0_107] : memref<4x1x32xf32, #tpu.memory_space<vmem>>, vector<1x1x32xf32>
    %171 = vector.shape_cast %170 : vector<1x1x32xf32> to vector<1x32xf32>
    %172 = vector.broadcast %171 : vector<1x32xf32> to vector<24x32xf32>
    %173 = arith.addf %169, %172 : vector<24x32xf32>
    %c3_108 = arith.constant 3 : index
    %c0_109 = arith.constant 0 : index
    %c0_110 = arith.constant 0 : index
    %174 = vector.load %arg5[%c3_108, %c0_109, %c0_110] : memref<4x128x32xbf16, #tpu.memory_space<vmem>>, vector<1x128x32xbf16>
    %175 = vector.shape_cast %174 : vector<1x128x32xbf16> to vector<128x32xbf16>
    %cst_111 = arith.constant dense<0.000000e+00> : vector<24x32xf32>
    %176 = tpu.matmul %24, %175, %cst_111 {dimension_numbers = #tpu.dot_dimension_numbers<[1], [0], [0], [1], [0, 0, 1, 1], [], []>} : vector<24x128xbf16>, vector<128x32xbf16>, vector<24x32xf32> -> vector<24x32xf32>
    %c3_112 = arith.constant 3 : index
    %c0_113 = arith.constant 0 : index
    %c0_114 = arith.constant 0 : index
    %177 = vector.load %arg8[%c3_112, %c0_113, %c0_114] : memref<4x1x32xf32, #tpu.memory_space<vmem>>, vector<1x1x32xf32>
    %178 = vector.shape_cast %177 : vector<1x1x32xf32> to vector<1x32xf32>
    %179 = vector.broadcast %178 : vector<1x32xf32> to vector<24x32xf32>
    %180 = arith.addf %176, %179 : vector<24x32xf32>
    %c3_115 = arith.constant 3 : index
    %c0_116 = arith.constant 0 : index
    %c0_117 = arith.constant 0 : index
    %181 = vector.load %arg6[%c3_115, %c0_116, %c0_117] : memref<4x128x32xbf16, #tpu.memory_space<vmem>>, vector<1x128x32xbf16>
    %182 = vector.shape_cast %181 : vector<1x128x32xbf16> to vector<128x32xbf16>
    %cst_118 = arith.constant dense<0.000000e+00> : vector<24x32xf32>
    %183 = tpu.matmul %24, %182, %cst_118 {dimension_numbers = #tpu.dot_dimension_numbers<[1], [0], [0], [1], [0, 0, 1, 1], [], []>} : vector<24x128xbf16>, vector<128x32xbf16>, vector<24x32xf32> -> vector<24x32xf32>
    %c3_119 = arith.constant 3 : index
    %c0_120 = arith.constant 0 : index
    %c0_121 = arith.constant 0 : index
    %184 = vector.load %arg9[%c3_119, %c0_120, %c0_121] : memref<4x1x32xf32, #tpu.memory_space<vmem>>, vector<1x1x32xf32>
    %185 = vector.shape_cast %184 : vector<1x1x32xf32> to vector<1x32xf32>
    %186 = vector.broadcast %185 : vector<1x32xf32> to vector<24x32xf32>
    %187 = arith.addf %183, %186 : vector<24x32xf32>
    %188 = arith.truncf %173 : vector<24x32xf32> to vector<24x32xbf16>
    %189 = arith.truncf %180 : vector<24x32xf32> to vector<24x32xbf16>
    %cst_122 = arith.constant dense<0.000000e+00> : vector<24x24xf32>
    %190 = tpu.matmul %188, %189, %cst_122 {dimension_numbers = #tpu.dot_dimension_numbers<[1], [1], [0], [0], [0, 0, 1, 0], [], []>} : vector<24x32xbf16>, vector<24x32xbf16>, vector<24x24xf32> -> vector<24x24xf32>
    %cst_123 = arith.constant 0.176776692 : f32
    %191 = vector.broadcast %cst_123 : f32 to vector<24x24xf32>
    %192 = arith.mulf %190, %191 : vector<24x24xf32>
    %cst_124 = arith.constant -1.000000e+30 : f32
    %193 = vector.broadcast %cst_124 : f32 to vector<24x24xf32>
    %194 = arith.select %27, %192, %193 : vector<24x24xi1>, vector<24x24xf32>
    %cst_125 = arith.constant dense<0xFF800000> : vector<24xf32>
    %195 = vector.multi_reduction <maximumf>, %194, %cst_125 [1] : vector<24x24xf32> to vector<24xf32>
    %196 = vector.shape_cast %195 : vector<24xf32> to vector<24x1xf32>
    %197 = vector.broadcast %196 : vector<24x1xf32> to vector<24x24xf32>
    %198 = arith.subf %194, %197 : vector<24x24xf32>
    %199 = math.exp %198 : vector<24x24xf32>
    %cst_126 = arith.constant dense<0.000000e+00> : vector<24xf32>
    %200 = vector.multi_reduction <add>, %199, %cst_126 [1] : vector<24x24xf32> to vector<24xf32>
    %201 = vector.shape_cast %200 : vector<24xf32> to vector<24x1xf32>
    %202 = tpu.reciprocal %201 {approx = true} : vector<24x1xf32> -> vector<24x1xf32>
    %203 = vector.broadcast %202 : vector<24x1xf32> to vector<24x24xf32>
    %204 = arith.mulf %199, %203 : vector<24x24xf32>
    %205 = arith.truncf %204 : vector<24x24xf32> to vector<24x24xbf16>
    %206 = arith.truncf %187 : vector<24x32xf32> to vector<24x32xbf16>
    %cst_127 = arith.constant dense<0.000000e+00> : vector<24x32xf32>
    %207 = tpu.matmul %205, %206, %cst_127 {dimension_numbers = #tpu.dot_dimension_numbers<[1], [0], [0], [1], [0, 0, 1, 1], [], []>} : vector<24x24xbf16>, vector<24x32xbf16>, vector<24x32xf32> -> vector<24x32xf32>
    %208 = arith.truncf %207 : vector<24x32xf32> to vector<24x32xbf16>
    %c3_128 = arith.constant 3 : index
    %c0_129 = arith.constant 0 : index
    %c0_130 = arith.constant 0 : index
    %209 = vector.load %arg10[%c3_128, %c0_129, %c0_130] : memref<4x32x128xbf16, #tpu.memory_space<vmem>>, vector<1x32x128xbf16>
    %210 = vector.shape_cast %209 : vector<1x32x128xbf16> to vector<32x128xbf16>
    %cst_131 = arith.constant dense<0.000000e+00> : vector<24x128xf32>
    %211 = tpu.matmul %208, %210, %cst_131 {dimension_numbers = #tpu.dot_dimension_numbers<[1], [0], [0], [1], [0, 0, 1, 1], [], []>} : vector<24x32xbf16>, vector<32x128xbf16>, vector<24x128xf32> -> vector<24x128xf32>
    %212 = arith.addf %166, %211 : vector<24x128xf32>
    %213 = arith.addf %1, %212 : vector<24x128xf32>
    %c0_132 = arith.constant 0 : index
    %c0_133 = arith.constant 0 : index
    %214 = vector.load %arg11[%c0_132, %c0_133] : memref<1x128xf32, #tpu.memory_space<vmem>>, vector<1x128xf32>
    %215 = vector.broadcast %214 : vector<1x128xf32> to vector<24x128xf32>
    %216 = arith.addf %213, %215 : vector<24x128xf32>
    %c0_134 = arith.constant 0 : index
    %c0_135 = arith.constant 0 : index
    %217 = vector.load %arg12[%c0_134, %c0_135] : memref<1x128xf32, #tpu.memory_space<vmem>>, vector<1x128xf32>
    %c0_136 = arith.constant 0 : index
    %c0_137 = arith.constant 0 : index
    %218 = vector.load %arg13[%c0_136, %c0_137] : memref<1x128xf32, #tpu.memory_space<vmem>>, vector<1x128xf32>
    %cst_138 = arith.constant dense<0.000000e+00> : vector<24xf32>
    %219 = vector.multi_reduction <add>, %216, %cst_138 [1] : vector<24x128xf32> to vector<24xf32>
    %220 = vector.shape_cast %219 : vector<24xf32> to vector<24x1xf32>
    %cst_139 = arith.constant 1.280000e+02 : f32
    %221 = vector.broadcast %cst_139 : f32 to vector<24x1xf32>
    %222 = arith.divf %220, %221 : vector<24x1xf32>
    %223 = vector.broadcast %222 : vector<24x1xf32> to vector<24x128xf32>
    %224 = arith.subf %216, %223 : vector<24x128xf32>
    %225 = arith.mulf %224, %224 : vector<24x128xf32>
    %cst_140 = arith.constant dense<0.000000e+00> : vector<24xf32>
    %226 = vector.multi_reduction <add>, %225, %cst_140 [1] : vector<24x128xf32> to vector<24xf32>
    %227 = vector.shape_cast %226 : vector<24xf32> to vector<24x1xf32>
    %cst_141 = arith.constant 1.280000e+02 : f32
    %228 = vector.broadcast %cst_141 : f32 to vector<24x1xf32>
    %229 = arith.divf %227, %228 : vector<24x1xf32>
    %cst_142 = arith.constant 9.99999997E-7 : f32
    %230 = vector.broadcast %cst_142 : f32 to vector<24x1xf32>
    %231 = arith.addf %229, %230 : vector<24x1xf32>
    %232 = math.rsqrt %231 : vector<24x1xf32>
    %233 = vector.broadcast %232 : vector<24x1xf32> to vector<24x128xf32>
    %234 = arith.mulf %224, %233 : vector<24x128xf32>
    %235 = vector.broadcast %217 : vector<1x128xf32> to vector<24x128xf32>
    %236 = arith.mulf %234, %235 : vector<24x128xf32>
    %237 = vector.broadcast %218 : vector<1x128xf32> to vector<24x128xf32>
    %238 = arith.addf %236, %237 : vector<24x128xf32>
    %239 = arith.truncf %238 : vector<24x128xf32> to vector<24x128xbf16>
    %c0_143 = arith.constant 0 : index
    %c0_144 = arith.constant 0 : index
    %240 = vector.load %arg14[%c0_143, %c0_144] : memref<128x512xbf16, #tpu.memory_space<vmem>>, vector<128x512xbf16>
    %cst_145 = arith.constant dense<0.000000e+00> : vector<24x512xf32>
    %241 = tpu.matmul %239, %240, %cst_145 {dimension_numbers = #tpu.dot_dimension_numbers<[1], [0], [0], [1], [0, 0, 1, 1], [], []>} : vector<24x128xbf16>, vector<128x512xbf16>, vector<24x512xf32> -> vector<24x512xf32>
    %c0_146 = arith.constant 0 : index
    %c0_147 = arith.constant 0 : index
    %242 = vector.load %arg15[%c0_146, %c0_147] : memref<1x512xf32, #tpu.memory_space<vmem>>, vector<1x512xf32>
    %243 = vector.broadcast %242 : vector<1x512xf32> to vector<24x512xf32>
    %244 = arith.addf %241, %243 : vector<24x512xf32>
    %cst_148 = arith.constant 5.000000e-01 : f32
    %245 = vector.broadcast %cst_148 : f32 to vector<24x512xf32>
    %246 = arith.mulf %245, %244 : vector<24x512xf32>
    %cst_149 = arith.constant 0.707106769 : f32
    %247 = vector.broadcast %cst_149 : f32 to vector<24x512xf32>
    %248 = arith.mulf %244, %247 : vector<24x512xf32>
    %249 = math.erf %248 : vector<24x512xf32>
    %cst_150 = arith.constant 1.000000e+00 : f32
    %250 = vector.broadcast %cst_150 : f32 to vector<24x512xf32>
    %251 = arith.addf %250, %249 : vector<24x512xf32>
    %252 = arith.mulf %246, %251 : vector<24x512xf32>
    %253 = arith.truncf %252 : vector<24x512xf32> to vector<24x512xbf16>
    %c0_151 = arith.constant 0 : index
    %c0_152 = arith.constant 0 : index
    %254 = vector.load %arg16[%c0_151, %c0_152] : memref<512x128xbf16, #tpu.memory_space<vmem>>, vector<512x128xbf16>
    %cst_153 = arith.constant dense<0.000000e+00> : vector<24x128xf32>
    %255 = tpu.matmul %253, %254, %cst_153 {dimension_numbers = #tpu.dot_dimension_numbers<[1], [0], [0], [1], [0, 0, 1, 1], [], []>} : vector<24x512xbf16>, vector<512x128xbf16>, vector<24x128xf32> -> vector<24x128xf32>
    %c0_154 = arith.constant 0 : index
    %c0_155 = arith.constant 0 : index
    %256 = vector.load %arg17[%c0_154, %c0_155] : memref<1x128xf32, #tpu.memory_space<vmem>>, vector<1x128xf32>
    %257 = vector.broadcast %256 : vector<1x128xf32> to vector<24x128xf32>
    %258 = arith.addf %255, %257 : vector<24x128xf32>
    %259 = arith.addf %216, %258 : vector<24x128xf32>
    %c0_156 = arith.constant 0 : index
    %c0_157 = arith.constant 0 : index
    %c0_158 = arith.constant 0 : index
    %260 = vector.load %arg28[%c0_156, %c0_157, %c0_158] : memref<1x24x128xf32, #tpu.memory_space<vmem>>, vector<1x24x128xf32>
    %261 = vector.shape_cast %260 : vector<1x24x128xf32> to vector<24x128xf32>
    %262 = vector.shape_cast %259 : vector<24x128xf32> to vector<1x24x128xf32>
    tpu.vector_store %arg28[%c0_156, %c0_157, %c0_158], %262 {strides = array<i32>} : memref<1x24x128xf32, #tpu.memory_space<vmem>>, vector<1x24x128xf32>,
    %c0_159 = arith.constant 0 : index
    %c0_160 = arith.constant 0 : index
    %263 = vector.load %arg18[%c0_159, %c0_160] : memref<1x128xf32, #tpu.memory_space<vmem>>, vector<1x128xf32>
    %c0_161 = arith.constant 0 : index
    %c0_162 = arith.constant 0 : index
    %264 = vector.load %arg19[%c0_161, %c0_162] : memref<1x128xf32, #tpu.memory_space<vmem>>, vector<1x128xf32>
    %cst_163 = arith.constant dense<0.000000e+00> : vector<24xf32>
    %265 = vector.multi_reduction <add>, %259, %cst_163 [1] : vector<24x128xf32> to vector<24xf32>
    %266 = vector.shape_cast %265 : vector<24xf32> to vector<24x1xf32>
    %cst_164 = arith.constant 1.280000e+02 : f32
    %267 = vector.broadcast %cst_164 : f32 to vector<24x1xf32>
    %268 = arith.divf %266, %267 : vector<24x1xf32>
    %269 = vector.broadcast %268 : vector<24x1xf32> to vector<24x128xf32>
    %270 = arith.subf %259, %269 : vector<24x128xf32>
    %271 = arith.mulf %270, %270 : vector<24x128xf32>
    %cst_165 = arith.constant dense<0.000000e+00> : vector<24xf32>
    %272 = vector.multi_reduction <add>, %271, %cst_165 [1] : vector<24x128xf32> to vector<24xf32>
    %273 = vector.shape_cast %272 : vector<24xf32> to vector<24x1xf32>
    %cst_166 = arith.constant 1.280000e+02 : f32
    %274 = vector.broadcast %cst_166 : f32 to vector<24x1xf32>
    %275 = arith.divf %273, %274 : vector<24x1xf32>
    %cst_167 = arith.constant 9.99999997E-7 : f32
    %276 = vector.broadcast %cst_167 : f32 to vector<24x1xf32>
    %277 = arith.addf %275, %276 : vector<24x1xf32>
    %278 = math.rsqrt %277 : vector<24x1xf32>
    %279 = vector.broadcast %278 : vector<24x1xf32> to vector<24x128xf32>
    %280 = arith.mulf %270, %279 : vector<24x128xf32>
    %281 = vector.broadcast %263 : vector<1x128xf32> to vector<24x128xf32>
    %282 = arith.mulf %280, %281 : vector<24x128xf32>
    %283 = vector.broadcast %264 : vector<1x128xf32> to vector<24x128xf32>
    %284 = arith.addf %282, %283 : vector<24x128xf32>
    %285 = arith.truncf %284 : vector<24x128xf32> to vector<24x128xbf16>
    %c0_168 = arith.constant 0 : index
    %c0_169 = arith.constant 0 : index
    %286 = vector.load %arg20[%c0_168, %c0_169] : memref<128x64xbf16, #tpu.memory_space<vmem>>, vector<128x64xbf16>
    %cst_170 = arith.constant dense<0.000000e+00> : vector<24x64xf32>
    %287 = tpu.matmul %285, %286, %cst_170 {dimension_numbers = #tpu.dot_dimension_numbers<[1], [0], [0], [1], [0, 0, 1, 1], [], []>} : vector<24x128xbf16>, vector<128x64xbf16>, vector<24x64xf32> -> vector<24x64xf32>
    %c0_171 = arith.constant 0 : index
    %c0_172 = arith.constant 0 : index
    %288 = vector.load %arg21[%c0_171, %c0_172] : memref<1x64xf32, #tpu.memory_space<vmem>>, vector<1x64xf32>
    %289 = vector.broadcast %288 : vector<1x64xf32> to vector<24x64xf32>
    %290 = arith.addf %287, %289 : vector<24x64xf32>
    %cst_173 = arith.constant 5.000000e-01 : f32
    %291 = vector.broadcast %cst_173 : f32 to vector<24x64xf32>
    %292 = arith.mulf %291, %290 : vector<24x64xf32>
    %cst_174 = arith.constant 0.707106769 : f32
    %293 = vector.broadcast %cst_174 : f32 to vector<24x64xf32>
    %294 = arith.mulf %290, %293 : vector<24x64xf32>
    %295 = math.erf %294 : vector<24x64xf32>
    %cst_175 = arith.constant 1.000000e+00 : f32
    %296 = vector.broadcast %cst_175 : f32 to vector<24x64xf32>
    %297 = arith.addf %296, %295 : vector<24x64xf32>
    %298 = arith.mulf %292, %297 : vector<24x64xf32>
    %299 = arith.truncf %298 : vector<24x64xf32> to vector<24x64xbf16>
    %c0_176 = arith.constant 0 : index
    %c0_177 = arith.constant 0 : index
    %300 = vector.load %arg22[%c0_176, %c0_177] : memref<64x32xbf16, #tpu.memory_space<vmem>>, vector<64x32xbf16>
    %cst_178 = arith.constant dense<0.000000e+00> : vector<24x32xf32>
    %301 = tpu.matmul %299, %300, %cst_178 {dimension_numbers = #tpu.dot_dimension_numbers<[1], [0], [0], [1], [0, 0, 1, 1], [], []>} : vector<24x64xbf16>, vector<64x32xbf16>, vector<24x32xf32> -> vector<24x32xf32>
    %c0_179 = arith.constant 0 : index
    %c0_180 = arith.constant 0 : index
    %302 = vector.load %arg23[%c0_179, %c0_180] : memref<1x32xf32, #tpu.memory_space<vmem>>, vector<1x32xf32>
    %303 = vector.broadcast %302 : vector<1x32xf32> to vector<24x32xf32>
    %304 = arith.addf %301, %303 : vector<24x32xf32>
    %cst_181 = arith.constant 5.000000e-01 : f32
    %305 = vector.broadcast %cst_181 : f32 to vector<24x32xf32>
    %306 = arith.mulf %305, %304 : vector<24x32xf32>
    %cst_182 = arith.constant 0.707106769 : f32
    %307 = vector.broadcast %cst_182 : f32 to vector<24x32xf32>
    %308 = arith.mulf %304, %307 : vector<24x32xf32>
    %309 = math.erf %308 : vector<24x32xf32>
    %cst_183 = arith.constant 1.000000e+00 : f32
    %310 = vector.broadcast %cst_183 : f32 to vector<24x32xf32>
    %311 = arith.addf %310, %309 : vector<24x32xf32>
    %312 = arith.mulf %306, %311 : vector<24x32xf32>
    %c0_184 = arith.constant 0 : index
    %c0_185 = arith.constant 0 : index
    %313 = vector.load %arg24[%c0_184, %c0_185] : memref<1x32xf32, #tpu.memory_space<vmem>>, vector<1x32xf32>
    %314 = vector.broadcast %313 : vector<1x32xf32> to vector<24x32xf32>
    %315 = arith.mulf %312, %314 : vector<24x32xf32>
    %cst_186 = arith.constant dense<0.000000e+00> : vector<24xf32>
    %316 = vector.multi_reduction <add>, %315, %cst_186 [1] : vector<24x32xf32> to vector<24xf32>
    %317 = vector.shape_cast %316 : vector<24xf32> to vector<24x1xf32>
    %c0_187 = arith.constant 0 : index
    %c0_188 = arith.constant 0 : index
    %318 = vector.load %arg25[%c0_187, %c0_188] : memref<1x1xf32, #tpu.memory_space<vmem>>, vector<1x1xf32>
    %319 = vector.broadcast %318 : vector<1x1xf32> to vector<24x1xf32>
    %320 = arith.addf %317, %319 : vector<24x1xf32>
    %c0_189 = arith.constant 0 : index
    %c0_190 = arith.constant 0 : index
    %c0_191 = arith.constant 0 : index
    %321 = vector.load %arg29[%c0_189, %c0_190, %c0_191] : memref<1x24x1xf32, #tpu.memory_space<vmem>>, vector<1x24x1xf32>
    %322 = vector.shape_cast %321 : vector<1x24x1xf32> to vector<24x1xf32>
    %323 = vector.shape_cast %320 : vector<24x1xf32> to vector<1x24x1xf32>
    tpu.vector_store %arg29[%c0_189, %c0_190, %c0_191], %323 {strides = array<i32>} : memref<1x24x1xf32, #tpu.memory_space<vmem>>, vector<1x24x1xf32>,
    %c0_192 = arith.constant 0 : index
    %c0_193 = arith.constant 0 : index
    %324 = vector.load %arg26[%c0_192, %c0_193] : memref<1x128xf32, #tpu.memory_space<vmem>>, vector<1x128xf32>
    %c0_194 = arith.constant 0 : index
    %c0_195 = arith.constant 0 : index
    %325 = vector.load %arg27[%c0_194, %c0_195] : memref<1x128xf32, #tpu.memory_space<vmem>>, vector<1x128xf32>
    %cst_196 = arith.constant dense<0.000000e+00> : vector<24xf32>
    %326 = vector.multi_reduction <add>, %259, %cst_196 [1] : vector<24x128xf32> to vector<24xf32>
    %327 = vector.shape_cast %326 : vector<24xf32> to vector<24x1xf32>
    %cst_197 = arith.constant 1.280000e+02 : f32
    %328 = vector.broadcast %cst_197 : f32 to vector<24x1xf32>
    %329 = arith.divf %327, %328 : vector<24x1xf32>
    %330 = vector.broadcast %329 : vector<24x1xf32> to vector<24x128xf32>
    %331 = arith.subf %259, %330 : vector<24x128xf32>
    %332 = arith.mulf %331, %331 : vector<24x128xf32>
    %cst_198 = arith.constant dense<0.000000e+00> : vector<24xf32>
    %333 = vector.multi_reduction <add>, %332, %cst_198 [1] : vector<24x128xf32> to vector<24xf32>
    %334 = vector.shape_cast %333 : vector<24xf32> to vector<24x1xf32>
    %cst_199 = arith.constant 1.280000e+02 : f32
    %335 = vector.broadcast %cst_199 : f32 to vector<24x1xf32>
    %336 = arith.divf %334, %335 : vector<24x1xf32>
    %cst_200 = arith.constant 9.99999997E-7 : f32
    %337 = vector.broadcast %cst_200 : f32 to vector<24x1xf32>
    %338 = arith.addf %336, %337 : vector<24x1xf32>
    %339 = math.rsqrt %338 : vector<24x1xf32>
    %340 = vector.broadcast %339 : vector<24x1xf32> to vector<24x128xf32>
    %341 = arith.mulf %331, %340 : vector<24x128xf32>
    %342 = vector.broadcast %324 : vector<1x128xf32> to vector<24x128xf32>
    %343 = arith.mulf %341, %342 : vector<24x128xf32>
    %344 = vector.broadcast %325 : vector<1x128xf32> to vector<24x128xf32>
    %345 = arith.addf %343, %344 : vector<24x128xf32>
    %c0_201 = arith.constant 0 : index
    %c0_202 = arith.constant 0 : index
    %c0_203 = arith.constant 0 : index
    %346 = vector.load %arg30[%c0_201, %c0_202, %c0_203] : memref<1x24x128xf32, #tpu.memory_space<vmem>>, vector<1x24x128xf32>
    %347 = vector.shape_cast %346 : vector<1x24x128xf32> to vector<24x128xf32>
    %348 = vector.shape_cast %345 : vector<24x128xf32> to vector<1x24x128xf32>
    tpu.vector_store %arg30[%c0_201, %c0_202, %c0_203], %348 {strides = array<i32>} : memref<1x24x128xf32, #tpu.memory_space<vmem>>, vector<1x24x128xf32>,
    return
  }
  func.func @transform_0(%arg0: i32) -> (i32, i32, i32) {
    %c0_i32 = arith.constant 0 : i32
    %c0_i32_0 = arith.constant 0 : i32
    %c0_i32_1 = arith.constant 0 : i32
    return %arg0, %c0_i32, %c0_i32_0 : i32, i32, i32
  }
  func.func @transform_1(%arg0: i32) -> (i32, i32) {
    %c0_i32 = arith.constant 0 : i32
    %c0_i32_0 = arith.constant 0 : i32
    %c0_i32_1 = arith.constant 0 : i32
    return %c0_i32, %c0_i32_0 : i32, i32
  }
  func.func @transform_2(%arg0: i32) -> (i32, i32) {
    %c0_i32 = arith.constant 0 : i32
    %c0_i32_0 = arith.constant 0 : i32
    %c0_i32_1 = arith.constant 0 : i32
    return %c0_i32, %c0_i32_0 : i32, i32
  }
  func.func @transform_3(%arg0: i32) -> (i32, i32, i32) {
    %c0_i32 = arith.constant 0 : i32
    %c0_i32_0 = arith.constant 0 : i32
    %c0_i32_1 = arith.constant 0 : i32
    %c0_i32_2 = arith.constant 0 : i32
    return %c0_i32, %c0_i32_0, %c0_i32_1 : i32, i32, i32
  }
  func.func @transform_4(%arg0: i32) -> (i32, i32, i32) {
    %c0_i32 = arith.constant 0 : i32
    %c0_i32_0 = arith.constant 0 : i32
    %c0_i32_1 = arith.constant 0 : i32
    %c0_i32_2 = arith.constant 0 : i32
    return %c0_i32, %c0_i32_0, %c0_i32_1 : i32, i32, i32
  }
  func.func @transform_5(%arg0: i32) -> (i32, i32, i32) {
    %c0_i32 = arith.constant 0 : i32
    %c0_i32_0 = arith.constant 0 : i32
    %c0_i32_1 = arith.constant 0 : i32
    %c0_i32_2 = arith.constant 0 : i32
    return %c0_i32, %c0_i32_0, %c0_i32_1 : i32, i32, i32
  }
  func.func @transform_6(%arg0: i32) -> (i32, i32, i32) {
    %c0_i32 = arith.constant 0 : i32
    %c0_i32_0 = arith.constant 0 : i32
    %c0_i32_1 = arith.constant 0 : i32
    %c0_i32_2 = arith.constant 0 : i32
    return %c0_i32, %c0_i32_0, %c0_i32_1 : i32, i32, i32
  }
  func.func @transform_7(%arg0: i32) -> (i32, i32, i32) {
    %c0_i32 = arith.constant 0 : i32
    %c0_i32_0 = arith.constant 0 : i32
    %c0_i32_1 = arith.constant 0 : i32
    %c0_i32_2 = arith.constant 0 : i32
    return %c0_i32, %c0_i32_0, %c0_i32_1 : i32, i32, i32
  }
  func.func @transform_8(%arg0: i32) -> (i32, i32, i32) {
    %c0_i32 = arith.constant 0 : i32
    %c0_i32_0 = arith.constant 0 : i32
    %c0_i32_1 = arith.constant 0 : i32
    %c0_i32_2 = arith.constant 0 : i32
    return %c0_i32, %c0_i32_0, %c0_i32_1 : i32, i32, i32
  }
  func.func @transform_9(%arg0: i32) -> (i32, i32, i32) {
    %c0_i32 = arith.constant 0 : i32
    %c0_i32_0 = arith.constant 0 : i32
    %c0_i32_1 = arith.constant 0 : i32
    %c0_i32_2 = arith.constant 0 : i32
    return %c0_i32, %c0_i32_0, %c0_i32_1 : i32, i32, i32
  }
  func.func @transform_10(%arg0: i32) -> (i32, i32) {
    %c0_i32 = arith.constant 0 : i32
    %c0_i32_0 = arith.constant 0 : i32
    %c0_i32_1 = arith.constant 0 : i32
    return %c0_i32, %c0_i32_0 : i32, i32
  }
  func.func @transform_11(%arg0: i32) -> (i32, i32) {
    %c0_i32 = arith.constant 0 : i32
    %c0_i32_0 = arith.constant 0 : i32
    %c0_i32_1 = arith.constant 0 : i32
    return %c0_i32, %c0_i32_0 : i32, i32
  }
  func.func @transform_12(%arg0: i32) -> (i32, i32) {
    %c0_i32 = arith.constant 0 : i32
    %c0_i32_0 = arith.constant 0 : i32
    %c0_i32_1 = arith.constant 0 : i32
    return %c0_i32, %c0_i32_0 : i32, i32
  }
  func.func @transform_13(%arg0: i32) -> (i32, i32) {
    %c0_i32 = arith.constant 0 : i32
    %c0_i32_0 = arith.constant 0 : i32
    %c0_i32_1 = arith.constant 0 : i32
    return %c0_i32, %c0_i32_0 : i32, i32
  }
  func.func @transform_14(%arg0: i32) -> (i32, i32) {
    %c0_i32 = arith.constant 0 : i32
    %c0_i32_0 = arith.constant 0 : i32
    %c0_i32_1 = arith.constant 0 : i32
    return %c0_i32, %c0_i32_0 : i32, i32
  }
  func.func @transform_15(%arg0: i32) -> (i32, i32) {
    %c0_i32 = arith.constant 0 : i32
    %c0_i32_0 = arith.constant 0 : i32
    %c0_i32_1 = arith.constant 0 : i32
    return %c0_i32, %c0_i32_0 : i32, i32
  }
  func.func @transform_16(%arg0: i32) -> (i32, i32) {
    %c0_i32 = arith.constant 0 : i32
    %c0_i32_0 = arith.constant 0 : i32
    %c0_i32_1 = arith.constant 0 : i32
    return %c0_i32, %c0_i32_0 : i32, i32
  }
  func.func @transform_17(%arg0: i32) -> (i32, i32) {
    %c0_i32 = arith.constant 0 : i32
    %c0_i32_0 = arith.constant 0 : i32
    %c0_i32_1 = arith.constant 0 : i32
    return %c0_i32, %c0_i32_0 : i32, i32
  }
  func.func @transform_18(%arg0: i32) -> (i32, i32) {
    %c0_i32 = arith.constant 0 : i32
    %c0_i32_0 = arith.constant 0 : i32
    %c0_i32_1 = arith.constant 0 : i32
    return %c0_i32, %c0_i32_0 : i32, i32
  }
  func.func @transform_19(%arg0: i32) -> (i32, i32) {
    %c0_i32 = arith.constant 0 : i32
    %c0_i32_0 = arith.constant 0 : i32
    %c0_i32_1 = arith.constant 0 : i32
    return %c0_i32, %c0_i32_0 : i32, i32
  }
  func.func @transform_20(%arg0: i32) -> (i32, i32) {
    %c0_i32 = arith.constant 0 : i32
    %c0_i32_0 = arith.constant 0 : i32
    %c0_i32_1 = arith.constant 0 : i32
    return %c0_i32, %c0_i32_0 : i32, i32
  }
  func.func @transform_21(%arg0: i32) -> (i32, i32) {
    %c0_i32 = arith.constant 0 : i32
    %c0_i32_0 = arith.constant 0 : i32
    %c0_i32_1 = arith.constant 0 : i32
    return %c0_i32, %c0_i32_0 : i32, i32
  }
  func.func @transform_22(%arg0: i32) -> (i32, i32) {
    %c0_i32 = arith.constant 0 : i32
    %c0_i32_0 = arith.constant 0 : i32
    %c0_i32_1 = arith.constant 0 : i32
    return %c0_i32, %c0_i32_0 : i32, i32
  }
  func.func @transform_23(%arg0: i32) -> (i32, i32) {
    %c0_i32 = arith.constant 0 : i32
    %c0_i32_0 = arith.constant 0 : i32
    %c0_i32_1 = arith.constant 0 : i32
    return %c0_i32, %c0_i32_0 : i32, i32
  }
  func.func @transform_24(%arg0: i32) -> (i32, i32) {
    %c0_i32 = arith.constant 0 : i32
    %c0_i32_0 = arith.constant 0 : i32
    %c0_i32_1 = arith.constant 0 : i32
    return %c0_i32, %c0_i32_0 : i32, i32
  }
  func.func @transform_25(%arg0: i32) -> (i32, i32) {
    %c0_i32 = arith.constant 0 : i32
    %c0_i32_0 = arith.constant 0 : i32
    %c0_i32_1 = arith.constant 0 : i32
    return %c0_i32, %c0_i32_0 : i32, i32
  }
  func.func @transform_26(%arg0: i32) -> (i32, i32) {
    %c0_i32 = arith.constant 0 : i32
    %c0_i32_0 = arith.constant 0 : i32
    %c0_i32_1 = arith.constant 0 : i32
    return %c0_i32, %c0_i32_0 : i32, i32
  }
  func.func @transform_27(%arg0: i32) -> (i32, i32, i32) {
    %c0_i32 = arith.constant 0 : i32
    %c0_i32_0 = arith.constant 0 : i32
    %c0_i32_1 = arith.constant 0 : i32
    return %arg0, %c0_i32, %c0_i32_0 : i32, i32, i32
  }
  func.func @transform_28(%arg0: i32) -> (i32, i32, i32) {
    %c0_i32 = arith.constant 0 : i32
    %c0_i32_0 = arith.constant 0 : i32
    %c0_i32_1 = arith.constant 0 : i32
    return %arg0, %c0_i32, %c0_i32_0 : i32, i32, i32
  }
  func.func @transform_29(%arg0: i32) -> (i32, i32, i32) {
    %c0_i32 = arith.constant 0 : i32
    %c0_i32_0 = arith.constant 0 : i32
    %c0_i32_1 = arith.constant 0 : i32
    return %arg0, %c0_i32, %c0_i32_0 : i32, i32, i32
  }
}

module attributes {stable_mosaic.version = 11 : i64} {
  func.func @block_norm_kernel(%arg0: i32, %arg1: memref<1x16x128xf32, #tpu.memory_space<vmem>>, %arg2: memref<1x128xf32, #tpu.memory_space<vmem>>, %arg3: memref<1x128xf32, #tpu.memory_space<vmem>>, %arg4: memref<4x128x32xbf16, #tpu.memory_space<vmem>>, %arg5: memref<4x128x32xbf16, #tpu.memory_space<vmem>>, %arg6: memref<4x128x32xbf16, #tpu.memory_space<vmem>>, %arg7: memref<4x1x32xf32, #tpu.memory_space<vmem>>, %arg8: memref<4x1x32xf32, #tpu.memory_space<vmem>>, %arg9: memref<4x1x32xf32, #tpu.memory_space<vmem>>, %arg10: memref<4x32x128xbf16, #tpu.memory_space<vmem>>, %arg11: memref<1x128xf32, #tpu.memory_space<vmem>>, %arg12: memref<1x128xf32, #tpu.memory_space<vmem>>, %arg13: memref<1x128xf32, #tpu.memory_space<vmem>>, %arg14: memref<128x512xbf16, #tpu.memory_space<vmem>>, %arg15: memref<1x512xf32, #tpu.memory_space<vmem>>, %arg16: memref<512x128xbf16, #tpu.memory_space<vmem>>, %arg17: memref<1x128xf32, #tpu.memory_space<vmem>>, %arg18: memref<1x128xf32, #tpu.memory_space<vmem>>, %arg19: memref<1x128xf32, #tpu.memory_space<vmem>>, %arg20: memref<1x16x128xf32, #tpu.memory_space<vmem>>) attributes {dimension_semantics = [#tpu.dimension_semantics<parallel>], iteration_bounds = array<i64: 2>, scalar_prefetch = 0 : i64, scratch_operands = 0 : i64, tpu.core_type = #tpu.core_type<tc>, window_params = [{transform_indices = @transform_0, window_bounds = array<i64: 1, 16, 128>}, {pipeline_mode = #tpu.pipeline_mode<synchronous>, transform_indices = @transform_1, window_bounds = array<i64: 1, 128>}, {pipeline_mode = #tpu.pipeline_mode<synchronous>, transform_indices = @transform_2, window_bounds = array<i64: 1, 128>}, {pipeline_mode = #tpu.pipeline_mode<synchronous>, transform_indices = @transform_3, window_bounds = array<i64: 4, 128, 32>}, {pipeline_mode = #tpu.pipeline_mode<synchronous>, transform_indices = @transform_4, window_bounds = array<i64: 4, 128, 32>}, {pipeline_mode = #tpu.pipeline_mode<synchronous>, transform_indices = @transform_5, window_bounds = array<i64: 4, 128, 32>}, {pipeline_mode = #tpu.pipeline_mode<synchronous>, transform_indices = @transform_6, window_bounds = array<i64: 4, 1, 32>}, {pipeline_mode = #tpu.pipeline_mode<synchronous>, transform_indices = @transform_7, window_bounds = array<i64: 4, 1, 32>}, {pipeline_mode = #tpu.pipeline_mode<synchronous>, transform_indices = @transform_8, window_bounds = array<i64: 4, 1, 32>}, {pipeline_mode = #tpu.pipeline_mode<synchronous>, transform_indices = @transform_9, window_bounds = array<i64: 4, 32, 128>}, {pipeline_mode = #tpu.pipeline_mode<synchronous>, transform_indices = @transform_10, window_bounds = array<i64: 1, 128>}, {pipeline_mode = #tpu.pipeline_mode<synchronous>, transform_indices = @transform_11, window_bounds = array<i64: 1, 128>}, {pipeline_mode = #tpu.pipeline_mode<synchronous>, transform_indices = @transform_12, window_bounds = array<i64: 1, 128>}, {pipeline_mode = #tpu.pipeline_mode<synchronous>, transform_indices = @transform_13, window_bounds = array<i64: 128, 512>}, {pipeline_mode = #tpu.pipeline_mode<synchronous>, transform_indices = @transform_14, window_bounds = array<i64: 1, 512>}, {pipeline_mode = #tpu.pipeline_mode<synchronous>, transform_indices = @transform_15, window_bounds = array<i64: 512, 128>}, {pipeline_mode = #tpu.pipeline_mode<synchronous>, transform_indices = @transform_16, window_bounds = array<i64: 1, 128>}, {pipeline_mode = #tpu.pipeline_mode<synchronous>, transform_indices = @transform_17, window_bounds = array<i64: 1, 128>}, {pipeline_mode = #tpu.pipeline_mode<synchronous>, transform_indices = @transform_18, window_bounds = array<i64: 1, 128>}, {transform_indices = @transform_19, window_bounds = array<i64: 1, 16, 128>}]} {
    %c0 = arith.constant 0 : index
    %c0_0 = arith.constant 0 : index
    %c0_1 = arith.constant 0 : index
    %0 = vector.load %arg1[%c0, %c0_0, %c0_1] : memref<1x16x128xf32, #tpu.memory_space<vmem>>, vector<1x16x128xf32>
    %1 = vector.shape_cast %0 : vector<1x16x128xf32> to vector<16x128xf32>
    %c0_2 = arith.constant 0 : index
    %c0_3 = arith.constant 0 : index
    %2 = vector.load %arg2[%c0_2, %c0_3] : memref<1x128xf32, #tpu.memory_space<vmem>>, vector<1x128xf32>
    %c0_4 = arith.constant 0 : index
    %c0_5 = arith.constant 0 : index
    %3 = vector.load %arg3[%c0_4, %c0_5] : memref<1x128xf32, #tpu.memory_space<vmem>>, vector<1x128xf32>
    %cst = arith.constant dense<0.000000e+00> : vector<16xf32>
    %4 = vector.multi_reduction <add>, %1, %cst [1] : vector<16x128xf32> to vector<16xf32>
    %5 = vector.shape_cast %4 : vector<16xf32> to vector<16x1xf32>
    %cst_6 = arith.constant 1.280000e+02 : f32
    %6 = vector.broadcast %cst_6 : f32 to vector<16x1xf32>
    %7 = arith.divf %5, %6 : vector<16x1xf32>
    %8 = vector.broadcast %7 : vector<16x1xf32> to vector<16x128xf32>
    %9 = arith.subf %1, %8 : vector<16x128xf32>
    %10 = arith.mulf %9, %9 : vector<16x128xf32>
    %cst_7 = arith.constant dense<0.000000e+00> : vector<16xf32>
    %11 = vector.multi_reduction <add>, %10, %cst_7 [1] : vector<16x128xf32> to vector<16xf32>
    %12 = vector.shape_cast %11 : vector<16xf32> to vector<16x1xf32>
    %cst_8 = arith.constant 1.280000e+02 : f32
    %13 = vector.broadcast %cst_8 : f32 to vector<16x1xf32>
    %14 = arith.divf %12, %13 : vector<16x1xf32>
    %cst_9 = arith.constant 9.99999997E-7 : f32
    %15 = vector.broadcast %cst_9 : f32 to vector<16x1xf32>
    %16 = arith.addf %14, %15 : vector<16x1xf32>
    %17 = math.rsqrt %16 : vector<16x1xf32>
    %18 = vector.broadcast %17 : vector<16x1xf32> to vector<16x128xf32>
    %19 = arith.mulf %9, %18 : vector<16x128xf32>
    %20 = vector.broadcast %2 : vector<1x128xf32> to vector<16x128xf32>
    %21 = arith.mulf %19, %20 : vector<16x128xf32>
    %22 = vector.broadcast %3 : vector<1x128xf32> to vector<16x128xf32>
    %23 = arith.addf %21, %22 : vector<16x128xf32>
    %24 = arith.truncf %23 : vector<16x128xf32> to vector<16x128xbf16>
    %25 = tpu.iota {dimensions = array<i32: 1>} : vector<16x16xi32>
    %c9_i32 = arith.constant 9 : i32
    %26 = vector.broadcast %c9_i32 : i32 to vector<16x16xi32>
    %27 = arith.cmpi slt, %25, %26 : vector<16x16xi32>
    %cst_10 = arith.constant 0.000000e+00 : f32
    %28 = vector.broadcast %cst_10 : f32 to vector<16x128xf32>
    %c0_11 = arith.constant 0 : index
    %c0_12 = arith.constant 0 : index
    %c0_13 = arith.constant 0 : index
    %29 = vector.load %arg4[%c0_11, %c0_12, %c0_13] : memref<4x128x32xbf16, #tpu.memory_space<vmem>>, vector<1x128x32xbf16>
    %30 = vector.shape_cast %29 : vector<1x128x32xbf16> to vector<128x32xbf16>
    %cst_14 = arith.constant dense<0.000000e+00> : vector<16x32xf32>
    %31 = tpu.matmul %24, %30, %cst_14 {dimension_numbers = #tpu.dot_dimension_numbers<[1], [0], [0], [1], [0, 0, 1, 1], [], []>} : vector<16x128xbf16>, vector<128x32xbf16>, vector<16x32xf32> -> vector<16x32xf32>
    %c0_15 = arith.constant 0 : index
    %c0_16 = arith.constant 0 : index
    %c0_17 = arith.constant 0 : index
    %32 = vector.load %arg7[%c0_15, %c0_16, %c0_17] : memref<4x1x32xf32, #tpu.memory_space<vmem>>, vector<1x1x32xf32>
    %33 = vector.shape_cast %32 : vector<1x1x32xf32> to vector<1x32xf32>
    %34 = vector.broadcast %33 : vector<1x32xf32> to vector<16x32xf32>
    %35 = arith.addf %31, %34 : vector<16x32xf32>
    %c0_18 = arith.constant 0 : index
    %c0_19 = arith.constant 0 : index
    %c0_20 = arith.constant 0 : index
    %36 = vector.load %arg5[%c0_18, %c0_19, %c0_20] : memref<4x128x32xbf16, #tpu.memory_space<vmem>>, vector<1x128x32xbf16>
    %37 = vector.shape_cast %36 : vector<1x128x32xbf16> to vector<128x32xbf16>
    %cst_21 = arith.constant dense<0.000000e+00> : vector<16x32xf32>
    %38 = tpu.matmul %24, %37, %cst_21 {dimension_numbers = #tpu.dot_dimension_numbers<[1], [0], [0], [1], [0, 0, 1, 1], [], []>} : vector<16x128xbf16>, vector<128x32xbf16>, vector<16x32xf32> -> vector<16x32xf32>
    %c0_22 = arith.constant 0 : index
    %c0_23 = arith.constant 0 : index
    %c0_24 = arith.constant 0 : index
    %39 = vector.load %arg8[%c0_22, %c0_23, %c0_24] : memref<4x1x32xf32, #tpu.memory_space<vmem>>, vector<1x1x32xf32>
    %40 = vector.shape_cast %39 : vector<1x1x32xf32> to vector<1x32xf32>
    %41 = vector.broadcast %40 : vector<1x32xf32> to vector<16x32xf32>
    %42 = arith.addf %38, %41 : vector<16x32xf32>
    %c0_25 = arith.constant 0 : index
    %c0_26 = arith.constant 0 : index
    %c0_27 = arith.constant 0 : index
    %43 = vector.load %arg6[%c0_25, %c0_26, %c0_27] : memref<4x128x32xbf16, #tpu.memory_space<vmem>>, vector<1x128x32xbf16>
    %44 = vector.shape_cast %43 : vector<1x128x32xbf16> to vector<128x32xbf16>
    %cst_28 = arith.constant dense<0.000000e+00> : vector<16x32xf32>
    %45 = tpu.matmul %24, %44, %cst_28 {dimension_numbers = #tpu.dot_dimension_numbers<[1], [0], [0], [1], [0, 0, 1, 1], [], []>} : vector<16x128xbf16>, vector<128x32xbf16>, vector<16x32xf32> -> vector<16x32xf32>
    %c0_29 = arith.constant 0 : index
    %c0_30 = arith.constant 0 : index
    %c0_31 = arith.constant 0 : index
    %46 = vector.load %arg9[%c0_29, %c0_30, %c0_31] : memref<4x1x32xf32, #tpu.memory_space<vmem>>, vector<1x1x32xf32>
    %47 = vector.shape_cast %46 : vector<1x1x32xf32> to vector<1x32xf32>
    %48 = vector.broadcast %47 : vector<1x32xf32> to vector<16x32xf32>
    %49 = arith.addf %45, %48 : vector<16x32xf32>
    %50 = arith.truncf %35 : vector<16x32xf32> to vector<16x32xbf16>
    %51 = arith.truncf %42 : vector<16x32xf32> to vector<16x32xbf16>
    %cst_32 = arith.constant dense<0.000000e+00> : vector<16x16xf32>
    %52 = tpu.matmul %50, %51, %cst_32 {dimension_numbers = #tpu.dot_dimension_numbers<[1], [1], [0], [0], [0, 0, 1, 0], [], []>} : vector<16x32xbf16>, vector<16x32xbf16>, vector<16x16xf32> -> vector<16x16xf32>
    %cst_33 = arith.constant 0.176776692 : f32
    %53 = vector.broadcast %cst_33 : f32 to vector<16x16xf32>
    %54 = arith.mulf %52, %53 : vector<16x16xf32>
    %cst_34 = arith.constant -1.000000e+30 : f32
    %55 = vector.broadcast %cst_34 : f32 to vector<16x16xf32>
    %56 = arith.select %27, %54, %55 : vector<16x16xi1>, vector<16x16xf32>
    %cst_35 = arith.constant dense<0xFF800000> : vector<16xf32>
    %57 = vector.multi_reduction <maximumf>, %56, %cst_35 [1] : vector<16x16xf32> to vector<16xf32>
    %58 = vector.shape_cast %57 : vector<16xf32> to vector<16x1xf32>
    %59 = vector.broadcast %58 : vector<16x1xf32> to vector<16x16xf32>
    %60 = arith.subf %56, %59 : vector<16x16xf32>
    %61 = math.exp %60 : vector<16x16xf32>
    %cst_36 = arith.constant dense<0.000000e+00> : vector<16xf32>
    %62 = vector.multi_reduction <add>, %61, %cst_36 [1] : vector<16x16xf32> to vector<16xf32>
    %63 = vector.shape_cast %62 : vector<16xf32> to vector<16x1xf32>
    %64 = tpu.reciprocal %63 {approx = true} : vector<16x1xf32> -> vector<16x1xf32>
    %65 = vector.broadcast %64 : vector<16x1xf32> to vector<16x16xf32>
    %66 = arith.mulf %61, %65 : vector<16x16xf32>
    %67 = arith.truncf %66 : vector<16x16xf32> to vector<16x16xbf16>
    %68 = arith.truncf %49 : vector<16x32xf32> to vector<16x32xbf16>
    %cst_37 = arith.constant dense<0.000000e+00> : vector<16x32xf32>
    %69 = tpu.matmul %67, %68, %cst_37 {dimension_numbers = #tpu.dot_dimension_numbers<[1], [0], [0], [1], [0, 0, 1, 1], [], []>} : vector<16x16xbf16>, vector<16x32xbf16>, vector<16x32xf32> -> vector<16x32xf32>
    %70 = arith.truncf %69 : vector<16x32xf32> to vector<16x32xbf16>
    %c0_38 = arith.constant 0 : index
    %c0_39 = arith.constant 0 : index
    %c0_40 = arith.constant 0 : index
    %71 = vector.load %arg10[%c0_38, %c0_39, %c0_40] : memref<4x32x128xbf16, #tpu.memory_space<vmem>>, vector<1x32x128xbf16>
    %72 = vector.shape_cast %71 : vector<1x32x128xbf16> to vector<32x128xbf16>
    %cst_41 = arith.constant dense<0.000000e+00> : vector<16x128xf32>
    %73 = tpu.matmul %70, %72, %cst_41 {dimension_numbers = #tpu.dot_dimension_numbers<[1], [0], [0], [1], [0, 0, 1, 1], [], []>} : vector<16x32xbf16>, vector<32x128xbf16>, vector<16x128xf32> -> vector<16x128xf32>
    %74 = arith.addf %28, %73 : vector<16x128xf32>
    %c1 = arith.constant 1 : index
    %c0_42 = arith.constant 0 : index
    %c0_43 = arith.constant 0 : index
    %75 = vector.load %arg4[%c1, %c0_42, %c0_43] : memref<4x128x32xbf16, #tpu.memory_space<vmem>>, vector<1x128x32xbf16>
    %76 = vector.shape_cast %75 : vector<1x128x32xbf16> to vector<128x32xbf16>
    %cst_44 = arith.constant dense<0.000000e+00> : vector<16x32xf32>
    %77 = tpu.matmul %24, %76, %cst_44 {dimension_numbers = #tpu.dot_dimension_numbers<[1], [0], [0], [1], [0, 0, 1, 1], [], []>} : vector<16x128xbf16>, vector<128x32xbf16>, vector<16x32xf32> -> vector<16x32xf32>
    %c1_45 = arith.constant 1 : index
    %c0_46 = arith.constant 0 : index
    %c0_47 = arith.constant 0 : index
    %78 = vector.load %arg7[%c1_45, %c0_46, %c0_47] : memref<4x1x32xf32, #tpu.memory_space<vmem>>, vector<1x1x32xf32>
    %79 = vector.shape_cast %78 : vector<1x1x32xf32> to vector<1x32xf32>
    %80 = vector.broadcast %79 : vector<1x32xf32> to vector<16x32xf32>
    %81 = arith.addf %77, %80 : vector<16x32xf32>
    %c1_48 = arith.constant 1 : index
    %c0_49 = arith.constant 0 : index
    %c0_50 = arith.constant 0 : index
    %82 = vector.load %arg5[%c1_48, %c0_49, %c0_50] : memref<4x128x32xbf16, #tpu.memory_space<vmem>>, vector<1x128x32xbf16>
    %83 = vector.shape_cast %82 : vector<1x128x32xbf16> to vector<128x32xbf16>
    %cst_51 = arith.constant dense<0.000000e+00> : vector<16x32xf32>
    %84 = tpu.matmul %24, %83, %cst_51 {dimension_numbers = #tpu.dot_dimension_numbers<[1], [0], [0], [1], [0, 0, 1, 1], [], []>} : vector<16x128xbf16>, vector<128x32xbf16>, vector<16x32xf32> -> vector<16x32xf32>
    %c1_52 = arith.constant 1 : index
    %c0_53 = arith.constant 0 : index
    %c0_54 = arith.constant 0 : index
    %85 = vector.load %arg8[%c1_52, %c0_53, %c0_54] : memref<4x1x32xf32, #tpu.memory_space<vmem>>, vector<1x1x32xf32>
    %86 = vector.shape_cast %85 : vector<1x1x32xf32> to vector<1x32xf32>
    %87 = vector.broadcast %86 : vector<1x32xf32> to vector<16x32xf32>
    %88 = arith.addf %84, %87 : vector<16x32xf32>
    %c1_55 = arith.constant 1 : index
    %c0_56 = arith.constant 0 : index
    %c0_57 = arith.constant 0 : index
    %89 = vector.load %arg6[%c1_55, %c0_56, %c0_57] : memref<4x128x32xbf16, #tpu.memory_space<vmem>>, vector<1x128x32xbf16>
    %90 = vector.shape_cast %89 : vector<1x128x32xbf16> to vector<128x32xbf16>
    %cst_58 = arith.constant dense<0.000000e+00> : vector<16x32xf32>
    %91 = tpu.matmul %24, %90, %cst_58 {dimension_numbers = #tpu.dot_dimension_numbers<[1], [0], [0], [1], [0, 0, 1, 1], [], []>} : vector<16x128xbf16>, vector<128x32xbf16>, vector<16x32xf32> -> vector<16x32xf32>
    %c1_59 = arith.constant 1 : index
    %c0_60 = arith.constant 0 : index
    %c0_61 = arith.constant 0 : index
    %92 = vector.load %arg9[%c1_59, %c0_60, %c0_61] : memref<4x1x32xf32, #tpu.memory_space<vmem>>, vector<1x1x32xf32>
    %93 = vector.shape_cast %92 : vector<1x1x32xf32> to vector<1x32xf32>
    %94 = vector.broadcast %93 : vector<1x32xf32> to vector<16x32xf32>
    %95 = arith.addf %91, %94 : vector<16x32xf32>
    %96 = arith.truncf %81 : vector<16x32xf32> to vector<16x32xbf16>
    %97 = arith.truncf %88 : vector<16x32xf32> to vector<16x32xbf16>
    %cst_62 = arith.constant dense<0.000000e+00> : vector<16x16xf32>
    %98 = tpu.matmul %96, %97, %cst_62 {dimension_numbers = #tpu.dot_dimension_numbers<[1], [1], [0], [0], [0, 0, 1, 0], [], []>} : vector<16x32xbf16>, vector<16x32xbf16>, vector<16x16xf32> -> vector<16x16xf32>
    %cst_63 = arith.constant 0.176776692 : f32
    %99 = vector.broadcast %cst_63 : f32 to vector<16x16xf32>
    %100 = arith.mulf %98, %99 : vector<16x16xf32>
    %cst_64 = arith.constant -1.000000e+30 : f32
    %101 = vector.broadcast %cst_64 : f32 to vector<16x16xf32>
    %102 = arith.select %27, %100, %101 : vector<16x16xi1>, vector<16x16xf32>
    %cst_65 = arith.constant dense<0xFF800000> : vector<16xf32>
    %103 = vector.multi_reduction <maximumf>, %102, %cst_65 [1] : vector<16x16xf32> to vector<16xf32>
    %104 = vector.shape_cast %103 : vector<16xf32> to vector<16x1xf32>
    %105 = vector.broadcast %104 : vector<16x1xf32> to vector<16x16xf32>
    %106 = arith.subf %102, %105 : vector<16x16xf32>
    %107 = math.exp %106 : vector<16x16xf32>
    %cst_66 = arith.constant dense<0.000000e+00> : vector<16xf32>
    %108 = vector.multi_reduction <add>, %107, %cst_66 [1] : vector<16x16xf32> to vector<16xf32>
    %109 = vector.shape_cast %108 : vector<16xf32> to vector<16x1xf32>
    %110 = tpu.reciprocal %109 {approx = true} : vector<16x1xf32> -> vector<16x1xf32>
    %111 = vector.broadcast %110 : vector<16x1xf32> to vector<16x16xf32>
    %112 = arith.mulf %107, %111 : vector<16x16xf32>
    %113 = arith.truncf %112 : vector<16x16xf32> to vector<16x16xbf16>
    %114 = arith.truncf %95 : vector<16x32xf32> to vector<16x32xbf16>
    %cst_67 = arith.constant dense<0.000000e+00> : vector<16x32xf32>
    %115 = tpu.matmul %113, %114, %cst_67 {dimension_numbers = #tpu.dot_dimension_numbers<[1], [0], [0], [1], [0, 0, 1, 1], [], []>} : vector<16x16xbf16>, vector<16x32xbf16>, vector<16x32xf32> -> vector<16x32xf32>
    %116 = arith.truncf %115 : vector<16x32xf32> to vector<16x32xbf16>
    %c1_68 = arith.constant 1 : index
    %c0_69 = arith.constant 0 : index
    %c0_70 = arith.constant 0 : index
    %117 = vector.load %arg10[%c1_68, %c0_69, %c0_70] : memref<4x32x128xbf16, #tpu.memory_space<vmem>>, vector<1x32x128xbf16>
    %118 = vector.shape_cast %117 : vector<1x32x128xbf16> to vector<32x128xbf16>
    %cst_71 = arith.constant dense<0.000000e+00> : vector<16x128xf32>
    %119 = tpu.matmul %116, %118, %cst_71 {dimension_numbers = #tpu.dot_dimension_numbers<[1], [0], [0], [1], [0, 0, 1, 1], [], []>} : vector<16x32xbf16>, vector<32x128xbf16>, vector<16x128xf32> -> vector<16x128xf32>
    %120 = arith.addf %74, %119 : vector<16x128xf32>
    %c2 = arith.constant 2 : index
    %c0_72 = arith.constant 0 : index
    %c0_73 = arith.constant 0 : index
    %121 = vector.load %arg4[%c2, %c0_72, %c0_73] : memref<4x128x32xbf16, #tpu.memory_space<vmem>>, vector<1x128x32xbf16>
    %122 = vector.shape_cast %121 : vector<1x128x32xbf16> to vector<128x32xbf16>
    %cst_74 = arith.constant dense<0.000000e+00> : vector<16x32xf32>
    %123 = tpu.matmul %24, %122, %cst_74 {dimension_numbers = #tpu.dot_dimension_numbers<[1], [0], [0], [1], [0, 0, 1, 1], [], []>} : vector<16x128xbf16>, vector<128x32xbf16>, vector<16x32xf32> -> vector<16x32xf32>
    %c2_75 = arith.constant 2 : index
    %c0_76 = arith.constant 0 : index
    %c0_77 = arith.constant 0 : index
    %124 = vector.load %arg7[%c2_75, %c0_76, %c0_77] : memref<4x1x32xf32, #tpu.memory_space<vmem>>, vector<1x1x32xf32>
    %125 = vector.shape_cast %124 : vector<1x1x32xf32> to vector<1x32xf32>
    %126 = vector.broadcast %125 : vector<1x32xf32> to vector<16x32xf32>
    %127 = arith.addf %123, %126 : vector<16x32xf32>
    %c2_78 = arith.constant 2 : index
    %c0_79 = arith.constant 0 : index
    %c0_80 = arith.constant 0 : index
    %128 = vector.load %arg5[%c2_78, %c0_79, %c0_80] : memref<4x128x32xbf16, #tpu.memory_space<vmem>>, vector<1x128x32xbf16>
    %129 = vector.shape_cast %128 : vector<1x128x32xbf16> to vector<128x32xbf16>
    %cst_81 = arith.constant dense<0.000000e+00> : vector<16x32xf32>
    %130 = tpu.matmul %24, %129, %cst_81 {dimension_numbers = #tpu.dot_dimension_numbers<[1], [0], [0], [1], [0, 0, 1, 1], [], []>} : vector<16x128xbf16>, vector<128x32xbf16>, vector<16x32xf32> -> vector<16x32xf32>
    %c2_82 = arith.constant 2 : index
    %c0_83 = arith.constant 0 : index
    %c0_84 = arith.constant 0 : index
    %131 = vector.load %arg8[%c2_82, %c0_83, %c0_84] : memref<4x1x32xf32, #tpu.memory_space<vmem>>, vector<1x1x32xf32>
    %132 = vector.shape_cast %131 : vector<1x1x32xf32> to vector<1x32xf32>
    %133 = vector.broadcast %132 : vector<1x32xf32> to vector<16x32xf32>
    %134 = arith.addf %130, %133 : vector<16x32xf32>
    %c2_85 = arith.constant 2 : index
    %c0_86 = arith.constant 0 : index
    %c0_87 = arith.constant 0 : index
    %135 = vector.load %arg6[%c2_85, %c0_86, %c0_87] : memref<4x128x32xbf16, #tpu.memory_space<vmem>>, vector<1x128x32xbf16>
    %136 = vector.shape_cast %135 : vector<1x128x32xbf16> to vector<128x32xbf16>
    %cst_88 = arith.constant dense<0.000000e+00> : vector<16x32xf32>
    %137 = tpu.matmul %24, %136, %cst_88 {dimension_numbers = #tpu.dot_dimension_numbers<[1], [0], [0], [1], [0, 0, 1, 1], [], []>} : vector<16x128xbf16>, vector<128x32xbf16>, vector<16x32xf32> -> vector<16x32xf32>
    %c2_89 = arith.constant 2 : index
    %c0_90 = arith.constant 0 : index
    %c0_91 = arith.constant 0 : index
    %138 = vector.load %arg9[%c2_89, %c0_90, %c0_91] : memref<4x1x32xf32, #tpu.memory_space<vmem>>, vector<1x1x32xf32>
    %139 = vector.shape_cast %138 : vector<1x1x32xf32> to vector<1x32xf32>
    %140 = vector.broadcast %139 : vector<1x32xf32> to vector<16x32xf32>
    %141 = arith.addf %137, %140 : vector<16x32xf32>
    %142 = arith.truncf %127 : vector<16x32xf32> to vector<16x32xbf16>
    %143 = arith.truncf %134 : vector<16x32xf32> to vector<16x32xbf16>
    %cst_92 = arith.constant dense<0.000000e+00> : vector<16x16xf32>
    %144 = tpu.matmul %142, %143, %cst_92 {dimension_numbers = #tpu.dot_dimension_numbers<[1], [1], [0], [0], [0, 0, 1, 0], [], []>} : vector<16x32xbf16>, vector<16x32xbf16>, vector<16x16xf32> -> vector<16x16xf32>
    %cst_93 = arith.constant 0.176776692 : f32
    %145 = vector.broadcast %cst_93 : f32 to vector<16x16xf32>
    %146 = arith.mulf %144, %145 : vector<16x16xf32>
    %cst_94 = arith.constant -1.000000e+30 : f32
    %147 = vector.broadcast %cst_94 : f32 to vector<16x16xf32>
    %148 = arith.select %27, %146, %147 : vector<16x16xi1>, vector<16x16xf32>
    %cst_95 = arith.constant dense<0xFF800000> : vector<16xf32>
    %149 = vector.multi_reduction <maximumf>, %148, %cst_95 [1] : vector<16x16xf32> to vector<16xf32>
    %150 = vector.shape_cast %149 : vector<16xf32> to vector<16x1xf32>
    %151 = vector.broadcast %150 : vector<16x1xf32> to vector<16x16xf32>
    %152 = arith.subf %148, %151 : vector<16x16xf32>
    %153 = math.exp %152 : vector<16x16xf32>
    %cst_96 = arith.constant dense<0.000000e+00> : vector<16xf32>
    %154 = vector.multi_reduction <add>, %153, %cst_96 [1] : vector<16x16xf32> to vector<16xf32>
    %155 = vector.shape_cast %154 : vector<16xf32> to vector<16x1xf32>
    %156 = tpu.reciprocal %155 {approx = true} : vector<16x1xf32> -> vector<16x1xf32>
    %157 = vector.broadcast %156 : vector<16x1xf32> to vector<16x16xf32>
    %158 = arith.mulf %153, %157 : vector<16x16xf32>
    %159 = arith.truncf %158 : vector<16x16xf32> to vector<16x16xbf16>
    %160 = arith.truncf %141 : vector<16x32xf32> to vector<16x32xbf16>
    %cst_97 = arith.constant dense<0.000000e+00> : vector<16x32xf32>
    %161 = tpu.matmul %159, %160, %cst_97 {dimension_numbers = #tpu.dot_dimension_numbers<[1], [0], [0], [1], [0, 0, 1, 1], [], []>} : vector<16x16xbf16>, vector<16x32xbf16>, vector<16x32xf32> -> vector<16x32xf32>
    %162 = arith.truncf %161 : vector<16x32xf32> to vector<16x32xbf16>
    %c2_98 = arith.constant 2 : index
    %c0_99 = arith.constant 0 : index
    %c0_100 = arith.constant 0 : index
    %163 = vector.load %arg10[%c2_98, %c0_99, %c0_100] : memref<4x32x128xbf16, #tpu.memory_space<vmem>>, vector<1x32x128xbf16>
    %164 = vector.shape_cast %163 : vector<1x32x128xbf16> to vector<32x128xbf16>
    %cst_101 = arith.constant dense<0.000000e+00> : vector<16x128xf32>
    %165 = tpu.matmul %162, %164, %cst_101 {dimension_numbers = #tpu.dot_dimension_numbers<[1], [0], [0], [1], [0, 0, 1, 1], [], []>} : vector<16x32xbf16>, vector<32x128xbf16>, vector<16x128xf32> -> vector<16x128xf32>
    %166 = arith.addf %120, %165 : vector<16x128xf32>
    %c3 = arith.constant 3 : index
    %c0_102 = arith.constant 0 : index
    %c0_103 = arith.constant 0 : index
    %167 = vector.load %arg4[%c3, %c0_102, %c0_103] : memref<4x128x32xbf16, #tpu.memory_space<vmem>>, vector<1x128x32xbf16>
    %168 = vector.shape_cast %167 : vector<1x128x32xbf16> to vector<128x32xbf16>
    %cst_104 = arith.constant dense<0.000000e+00> : vector<16x32xf32>
    %169 = tpu.matmul %24, %168, %cst_104 {dimension_numbers = #tpu.dot_dimension_numbers<[1], [0], [0], [1], [0, 0, 1, 1], [], []>} : vector<16x128xbf16>, vector<128x32xbf16>, vector<16x32xf32> -> vector<16x32xf32>
    %c3_105 = arith.constant 3 : index
    %c0_106 = arith.constant 0 : index
    %c0_107 = arith.constant 0 : index
    %170 = vector.load %arg7[%c3_105, %c0_106, %c0_107] : memref<4x1x32xf32, #tpu.memory_space<vmem>>, vector<1x1x32xf32>
    %171 = vector.shape_cast %170 : vector<1x1x32xf32> to vector<1x32xf32>
    %172 = vector.broadcast %171 : vector<1x32xf32> to vector<16x32xf32>
    %173 = arith.addf %169, %172 : vector<16x32xf32>
    %c3_108 = arith.constant 3 : index
    %c0_109 = arith.constant 0 : index
    %c0_110 = arith.constant 0 : index
    %174 = vector.load %arg5[%c3_108, %c0_109, %c0_110] : memref<4x128x32xbf16, #tpu.memory_space<vmem>>, vector<1x128x32xbf16>
    %175 = vector.shape_cast %174 : vector<1x128x32xbf16> to vector<128x32xbf16>
    %cst_111 = arith.constant dense<0.000000e+00> : vector<16x32xf32>
    %176 = tpu.matmul %24, %175, %cst_111 {dimension_numbers = #tpu.dot_dimension_numbers<[1], [0], [0], [1], [0, 0, 1, 1], [], []>} : vector<16x128xbf16>, vector<128x32xbf16>, vector<16x32xf32> -> vector<16x32xf32>
    %c3_112 = arith.constant 3 : index
    %c0_113 = arith.constant 0 : index
    %c0_114 = arith.constant 0 : index
    %177 = vector.load %arg8[%c3_112, %c0_113, %c0_114] : memref<4x1x32xf32, #tpu.memory_space<vmem>>, vector<1x1x32xf32>
    %178 = vector.shape_cast %177 : vector<1x1x32xf32> to vector<1x32xf32>
    %179 = vector.broadcast %178 : vector<1x32xf32> to vector<16x32xf32>
    %180 = arith.addf %176, %179 : vector<16x32xf32>
    %c3_115 = arith.constant 3 : index
    %c0_116 = arith.constant 0 : index
    %c0_117 = arith.constant 0 : index
    %181 = vector.load %arg6[%c3_115, %c0_116, %c0_117] : memref<4x128x32xbf16, #tpu.memory_space<vmem>>, vector<1x128x32xbf16>
    %182 = vector.shape_cast %181 : vector<1x128x32xbf16> to vector<128x32xbf16>
    %cst_118 = arith.constant dense<0.000000e+00> : vector<16x32xf32>
    %183 = tpu.matmul %24, %182, %cst_118 {dimension_numbers = #tpu.dot_dimension_numbers<[1], [0], [0], [1], [0, 0, 1, 1], [], []>} : vector<16x128xbf16>, vector<128x32xbf16>, vector<16x32xf32> -> vector<16x32xf32>
    %c3_119 = arith.constant 3 : index
    %c0_120 = arith.constant 0 : index
    %c0_121 = arith.constant 0 : index
    %184 = vector.load %arg9[%c3_119, %c0_120, %c0_121] : memref<4x1x32xf32, #tpu.memory_space<vmem>>, vector<1x1x32xf32>
    %185 = vector.shape_cast %184 : vector<1x1x32xf32> to vector<1x32xf32>
    %186 = vector.broadcast %185 : vector<1x32xf32> to vector<16x32xf32>
    %187 = arith.addf %183, %186 : vector<16x32xf32>
    %188 = arith.truncf %173 : vector<16x32xf32> to vector<16x32xbf16>
    %189 = arith.truncf %180 : vector<16x32xf32> to vector<16x32xbf16>
    %cst_122 = arith.constant dense<0.000000e+00> : vector<16x16xf32>
    %190 = tpu.matmul %188, %189, %cst_122 {dimension_numbers = #tpu.dot_dimension_numbers<[1], [1], [0], [0], [0, 0, 1, 0], [], []>} : vector<16x32xbf16>, vector<16x32xbf16>, vector<16x16xf32> -> vector<16x16xf32>
    %cst_123 = arith.constant 0.176776692 : f32
    %191 = vector.broadcast %cst_123 : f32 to vector<16x16xf32>
    %192 = arith.mulf %190, %191 : vector<16x16xf32>
    %cst_124 = arith.constant -1.000000e+30 : f32
    %193 = vector.broadcast %cst_124 : f32 to vector<16x16xf32>
    %194 = arith.select %27, %192, %193 : vector<16x16xi1>, vector<16x16xf32>
    %cst_125 = arith.constant dense<0xFF800000> : vector<16xf32>
    %195 = vector.multi_reduction <maximumf>, %194, %cst_125 [1] : vector<16x16xf32> to vector<16xf32>
    %196 = vector.shape_cast %195 : vector<16xf32> to vector<16x1xf32>
    %197 = vector.broadcast %196 : vector<16x1xf32> to vector<16x16xf32>
    %198 = arith.subf %194, %197 : vector<16x16xf32>
    %199 = math.exp %198 : vector<16x16xf32>
    %cst_126 = arith.constant dense<0.000000e+00> : vector<16xf32>
    %200 = vector.multi_reduction <add>, %199, %cst_126 [1] : vector<16x16xf32> to vector<16xf32>
    %201 = vector.shape_cast %200 : vector<16xf32> to vector<16x1xf32>
    %202 = tpu.reciprocal %201 {approx = true} : vector<16x1xf32> -> vector<16x1xf32>
    %203 = vector.broadcast %202 : vector<16x1xf32> to vector<16x16xf32>
    %204 = arith.mulf %199, %203 : vector<16x16xf32>
    %205 = arith.truncf %204 : vector<16x16xf32> to vector<16x16xbf16>
    %206 = arith.truncf %187 : vector<16x32xf32> to vector<16x32xbf16>
    %cst_127 = arith.constant dense<0.000000e+00> : vector<16x32xf32>
    %207 = tpu.matmul %205, %206, %cst_127 {dimension_numbers = #tpu.dot_dimension_numbers<[1], [0], [0], [1], [0, 0, 1, 1], [], []>} : vector<16x16xbf16>, vector<16x32xbf16>, vector<16x32xf32> -> vector<16x32xf32>
    %208 = arith.truncf %207 : vector<16x32xf32> to vector<16x32xbf16>
    %c3_128 = arith.constant 3 : index
    %c0_129 = arith.constant 0 : index
    %c0_130 = arith.constant 0 : index
    %209 = vector.load %arg10[%c3_128, %c0_129, %c0_130] : memref<4x32x128xbf16, #tpu.memory_space<vmem>>, vector<1x32x128xbf16>
    %210 = vector.shape_cast %209 : vector<1x32x128xbf16> to vector<32x128xbf16>
    %cst_131 = arith.constant dense<0.000000e+00> : vector<16x128xf32>
    %211 = tpu.matmul %208, %210, %cst_131 {dimension_numbers = #tpu.dot_dimension_numbers<[1], [0], [0], [1], [0, 0, 1, 1], [], []>} : vector<16x32xbf16>, vector<32x128xbf16>, vector<16x128xf32> -> vector<16x128xf32>
    %212 = arith.addf %166, %211 : vector<16x128xf32>
    %213 = arith.addf %1, %212 : vector<16x128xf32>
    %c0_132 = arith.constant 0 : index
    %c0_133 = arith.constant 0 : index
    %214 = vector.load %arg11[%c0_132, %c0_133] : memref<1x128xf32, #tpu.memory_space<vmem>>, vector<1x128xf32>
    %215 = vector.broadcast %214 : vector<1x128xf32> to vector<16x128xf32>
    %216 = arith.addf %213, %215 : vector<16x128xf32>
    %c0_134 = arith.constant 0 : index
    %c0_135 = arith.constant 0 : index
    %217 = vector.load %arg12[%c0_134, %c0_135] : memref<1x128xf32, #tpu.memory_space<vmem>>, vector<1x128xf32>
    %c0_136 = arith.constant 0 : index
    %c0_137 = arith.constant 0 : index
    %218 = vector.load %arg13[%c0_136, %c0_137] : memref<1x128xf32, #tpu.memory_space<vmem>>, vector<1x128xf32>
    %cst_138 = arith.constant dense<0.000000e+00> : vector<16xf32>
    %219 = vector.multi_reduction <add>, %216, %cst_138 [1] : vector<16x128xf32> to vector<16xf32>
    %220 = vector.shape_cast %219 : vector<16xf32> to vector<16x1xf32>
    %cst_139 = arith.constant 1.280000e+02 : f32
    %221 = vector.broadcast %cst_139 : f32 to vector<16x1xf32>
    %222 = arith.divf %220, %221 : vector<16x1xf32>
    %223 = vector.broadcast %222 : vector<16x1xf32> to vector<16x128xf32>
    %224 = arith.subf %216, %223 : vector<16x128xf32>
    %225 = arith.mulf %224, %224 : vector<16x128xf32>
    %cst_140 = arith.constant dense<0.000000e+00> : vector<16xf32>
    %226 = vector.multi_reduction <add>, %225, %cst_140 [1] : vector<16x128xf32> to vector<16xf32>
    %227 = vector.shape_cast %226 : vector<16xf32> to vector<16x1xf32>
    %cst_141 = arith.constant 1.280000e+02 : f32
    %228 = vector.broadcast %cst_141 : f32 to vector<16x1xf32>
    %229 = arith.divf %227, %228 : vector<16x1xf32>
    %cst_142 = arith.constant 9.99999997E-7 : f32
    %230 = vector.broadcast %cst_142 : f32 to vector<16x1xf32>
    %231 = arith.addf %229, %230 : vector<16x1xf32>
    %232 = math.rsqrt %231 : vector<16x1xf32>
    %233 = vector.broadcast %232 : vector<16x1xf32> to vector<16x128xf32>
    %234 = arith.mulf %224, %233 : vector<16x128xf32>
    %235 = vector.broadcast %217 : vector<1x128xf32> to vector<16x128xf32>
    %236 = arith.mulf %234, %235 : vector<16x128xf32>
    %237 = vector.broadcast %218 : vector<1x128xf32> to vector<16x128xf32>
    %238 = arith.addf %236, %237 : vector<16x128xf32>
    %239 = arith.truncf %238 : vector<16x128xf32> to vector<16x128xbf16>
    %c0_143 = arith.constant 0 : index
    %c0_144 = arith.constant 0 : index
    %240 = vector.load %arg14[%c0_143, %c0_144] : memref<128x512xbf16, #tpu.memory_space<vmem>>, vector<128x512xbf16>
    %cst_145 = arith.constant dense<0.000000e+00> : vector<16x512xf32>
    %241 = tpu.matmul %239, %240, %cst_145 {dimension_numbers = #tpu.dot_dimension_numbers<[1], [0], [0], [1], [0, 0, 1, 1], [], []>} : vector<16x128xbf16>, vector<128x512xbf16>, vector<16x512xf32> -> vector<16x512xf32>
    %c0_146 = arith.constant 0 : index
    %c0_147 = arith.constant 0 : index
    %242 = vector.load %arg15[%c0_146, %c0_147] : memref<1x512xf32, #tpu.memory_space<vmem>>, vector<1x512xf32>
    %243 = vector.broadcast %242 : vector<1x512xf32> to vector<16x512xf32>
    %244 = arith.addf %241, %243 : vector<16x512xf32>
    %cst_148 = arith.constant 5.000000e-01 : f32
    %245 = vector.broadcast %cst_148 : f32 to vector<16x512xf32>
    %246 = arith.mulf %245, %244 : vector<16x512xf32>
    %cst_149 = arith.constant 0.707106769 : f32
    %247 = vector.broadcast %cst_149 : f32 to vector<16x512xf32>
    %248 = arith.mulf %244, %247 : vector<16x512xf32>
    %249 = math.erf %248 : vector<16x512xf32>
    %cst_150 = arith.constant 1.000000e+00 : f32
    %250 = vector.broadcast %cst_150 : f32 to vector<16x512xf32>
    %251 = arith.addf %250, %249 : vector<16x512xf32>
    %252 = arith.mulf %246, %251 : vector<16x512xf32>
    %253 = arith.truncf %252 : vector<16x512xf32> to vector<16x512xbf16>
    %c0_151 = arith.constant 0 : index
    %c0_152 = arith.constant 0 : index
    %254 = vector.load %arg16[%c0_151, %c0_152] : memref<512x128xbf16, #tpu.memory_space<vmem>>, vector<512x128xbf16>
    %cst_153 = arith.constant dense<0.000000e+00> : vector<16x128xf32>
    %255 = tpu.matmul %253, %254, %cst_153 {dimension_numbers = #tpu.dot_dimension_numbers<[1], [0], [0], [1], [0, 0, 1, 1], [], []>} : vector<16x512xbf16>, vector<512x128xbf16>, vector<16x128xf32> -> vector<16x128xf32>
    %c0_154 = arith.constant 0 : index
    %c0_155 = arith.constant 0 : index
    %256 = vector.load %arg17[%c0_154, %c0_155] : memref<1x128xf32, #tpu.memory_space<vmem>>, vector<1x128xf32>
    %257 = vector.broadcast %256 : vector<1x128xf32> to vector<16x128xf32>
    %258 = arith.addf %255, %257 : vector<16x128xf32>
    %259 = arith.addf %216, %258 : vector<16x128xf32>
    %c0_156 = arith.constant 0 : index
    %c0_157 = arith.constant 0 : index
    %260 = vector.load %arg18[%c0_156, %c0_157] : memref<1x128xf32, #tpu.memory_space<vmem>>, vector<1x128xf32>
    %c0_158 = arith.constant 0 : index
    %c0_159 = arith.constant 0 : index
    %261 = vector.load %arg19[%c0_158, %c0_159] : memref<1x128xf32, #tpu.memory_space<vmem>>, vector<1x128xf32>
    %cst_160 = arith.constant dense<0.000000e+00> : vector<16xf32>
    %262 = vector.multi_reduction <add>, %259, %cst_160 [1] : vector<16x128xf32> to vector<16xf32>
    %263 = vector.shape_cast %262 : vector<16xf32> to vector<16x1xf32>
    %cst_161 = arith.constant 1.280000e+02 : f32
    %264 = vector.broadcast %cst_161 : f32 to vector<16x1xf32>
    %265 = arith.divf %263, %264 : vector<16x1xf32>
    %266 = vector.broadcast %265 : vector<16x1xf32> to vector<16x128xf32>
    %267 = arith.subf %259, %266 : vector<16x128xf32>
    %268 = arith.mulf %267, %267 : vector<16x128xf32>
    %cst_162 = arith.constant dense<0.000000e+00> : vector<16xf32>
    %269 = vector.multi_reduction <add>, %268, %cst_162 [1] : vector<16x128xf32> to vector<16xf32>
    %270 = vector.shape_cast %269 : vector<16xf32> to vector<16x1xf32>
    %cst_163 = arith.constant 1.280000e+02 : f32
    %271 = vector.broadcast %cst_163 : f32 to vector<16x1xf32>
    %272 = arith.divf %270, %271 : vector<16x1xf32>
    %cst_164 = arith.constant 9.99999997E-7 : f32
    %273 = vector.broadcast %cst_164 : f32 to vector<16x1xf32>
    %274 = arith.addf %272, %273 : vector<16x1xf32>
    %275 = math.rsqrt %274 : vector<16x1xf32>
    %276 = vector.broadcast %275 : vector<16x1xf32> to vector<16x128xf32>
    %277 = arith.mulf %267, %276 : vector<16x128xf32>
    %278 = vector.broadcast %260 : vector<1x128xf32> to vector<16x128xf32>
    %279 = arith.mulf %277, %278 : vector<16x128xf32>
    %280 = vector.broadcast %261 : vector<1x128xf32> to vector<16x128xf32>
    %281 = arith.addf %279, %280 : vector<16x128xf32>
    %c0_165 = arith.constant 0 : index
    %c0_166 = arith.constant 0 : index
    %c0_167 = arith.constant 0 : index
    %282 = vector.load %arg20[%c0_165, %c0_166, %c0_167] : memref<1x16x128xf32, #tpu.memory_space<vmem>>, vector<1x16x128xf32>
    %283 = vector.shape_cast %282 : vector<1x16x128xf32> to vector<16x128xf32>
    %284 = vector.shape_cast %281 : vector<16x128xf32> to vector<1x16x128xf32>
    tpu.vector_store %arg20[%c0_165, %c0_166, %c0_167], %284 {strides = array<i32>} : memref<1x16x128xf32, #tpu.memory_space<vmem>>, vector<1x16x128xf32>,
    return
  }
  func.func @transform_0(%arg0: i32) -> (i32, i32, i32) {
    %c0_i32 = arith.constant 0 : i32
    %c0_i32_0 = arith.constant 0 : i32
    %c0_i32_1 = arith.constant 0 : i32
    return %arg0, %c0_i32, %c0_i32_0 : i32, i32, i32
  }
  func.func @transform_1(%arg0: i32) -> (i32, i32) {
    %c0_i32 = arith.constant 0 : i32
    %c0_i32_0 = arith.constant 0 : i32
    %c0_i32_1 = arith.constant 0 : i32
    return %c0_i32, %c0_i32_0 : i32, i32
  }
  func.func @transform_2(%arg0: i32) -> (i32, i32) {
    %c0_i32 = arith.constant 0 : i32
    %c0_i32_0 = arith.constant 0 : i32
    %c0_i32_1 = arith.constant 0 : i32
    return %c0_i32, %c0_i32_0 : i32, i32
  }
  func.func @transform_3(%arg0: i32) -> (i32, i32, i32) {
    %c0_i32 = arith.constant 0 : i32
    %c0_i32_0 = arith.constant 0 : i32
    %c0_i32_1 = arith.constant 0 : i32
    %c0_i32_2 = arith.constant 0 : i32
    return %c0_i32, %c0_i32_0, %c0_i32_1 : i32, i32, i32
  }
  func.func @transform_4(%arg0: i32) -> (i32, i32, i32) {
    %c0_i32 = arith.constant 0 : i32
    %c0_i32_0 = arith.constant 0 : i32
    %c0_i32_1 = arith.constant 0 : i32
    %c0_i32_2 = arith.constant 0 : i32
    return %c0_i32, %c0_i32_0, %c0_i32_1 : i32, i32, i32
  }
  func.func @transform_5(%arg0: i32) -> (i32, i32, i32) {
    %c0_i32 = arith.constant 0 : i32
    %c0_i32_0 = arith.constant 0 : i32
    %c0_i32_1 = arith.constant 0 : i32
    %c0_i32_2 = arith.constant 0 : i32
    return %c0_i32, %c0_i32_0, %c0_i32_1 : i32, i32, i32
  }
  func.func @transform_6(%arg0: i32) -> (i32, i32, i32) {
    %c0_i32 = arith.constant 0 : i32
    %c0_i32_0 = arith.constant 0 : i32
    %c0_i32_1 = arith.constant 0 : i32
    %c0_i32_2 = arith.constant 0 : i32
    return %c0_i32, %c0_i32_0, %c0_i32_1 : i32, i32, i32
  }
  func.func @transform_7(%arg0: i32) -> (i32, i32, i32) {
    %c0_i32 = arith.constant 0 : i32
    %c0_i32_0 = arith.constant 0 : i32
    %c0_i32_1 = arith.constant 0 : i32
    %c0_i32_2 = arith.constant 0 : i32
    return %c0_i32, %c0_i32_0, %c0_i32_1 : i32, i32, i32
  }
  func.func @transform_8(%arg0: i32) -> (i32, i32, i32) {
    %c0_i32 = arith.constant 0 : i32
    %c0_i32_0 = arith.constant 0 : i32
    %c0_i32_1 = arith.constant 0 : i32
    %c0_i32_2 = arith.constant 0 : i32
    return %c0_i32, %c0_i32_0, %c0_i32_1 : i32, i32, i32
  }
  func.func @transform_9(%arg0: i32) -> (i32, i32, i32) {
    %c0_i32 = arith.constant 0 : i32
    %c0_i32_0 = arith.constant 0 : i32
    %c0_i32_1 = arith.constant 0 : i32
    %c0_i32_2 = arith.constant 0 : i32
    return %c0_i32, %c0_i32_0, %c0_i32_1 : i32, i32, i32
  }
  func.func @transform_10(%arg0: i32) -> (i32, i32) {
    %c0_i32 = arith.constant 0 : i32
    %c0_i32_0 = arith.constant 0 : i32
    %c0_i32_1 = arith.constant 0 : i32
    return %c0_i32, %c0_i32_0 : i32, i32
  }
  func.func @transform_11(%arg0: i32) -> (i32, i32) {
    %c0_i32 = arith.constant 0 : i32
    %c0_i32_0 = arith.constant 0 : i32
    %c0_i32_1 = arith.constant 0 : i32
    return %c0_i32, %c0_i32_0 : i32, i32
  }
  func.func @transform_12(%arg0: i32) -> (i32, i32) {
    %c0_i32 = arith.constant 0 : i32
    %c0_i32_0 = arith.constant 0 : i32
    %c0_i32_1 = arith.constant 0 : i32
    return %c0_i32, %c0_i32_0 : i32, i32
  }
  func.func @transform_13(%arg0: i32) -> (i32, i32) {
    %c0_i32 = arith.constant 0 : i32
    %c0_i32_0 = arith.constant 0 : i32
    %c0_i32_1 = arith.constant 0 : i32
    return %c0_i32, %c0_i32_0 : i32, i32
  }
  func.func @transform_14(%arg0: i32) -> (i32, i32) {
    %c0_i32 = arith.constant 0 : i32
    %c0_i32_0 = arith.constant 0 : i32
    %c0_i32_1 = arith.constant 0 : i32
    return %c0_i32, %c0_i32_0 : i32, i32
  }
  func.func @transform_15(%arg0: i32) -> (i32, i32) {
    %c0_i32 = arith.constant 0 : i32
    %c0_i32_0 = arith.constant 0 : i32
    %c0_i32_1 = arith.constant 0 : i32
    return %c0_i32, %c0_i32_0 : i32, i32
  }
  func.func @transform_16(%arg0: i32) -> (i32, i32) {
    %c0_i32 = arith.constant 0 : i32
    %c0_i32_0 = arith.constant 0 : i32
    %c0_i32_1 = arith.constant 0 : i32
    return %c0_i32, %c0_i32_0 : i32, i32
  }
  func.func @transform_17(%arg0: i32) -> (i32, i32) {
    %c0_i32 = arith.constant 0 : i32
    %c0_i32_0 = arith.constant 0 : i32
    %c0_i32_1 = arith.constant 0 : i32
    return %c0_i32, %c0_i32_0 : i32, i32
  }
  func.func @transform_18(%arg0: i32) -> (i32, i32) {
    %c0_i32 = arith.constant 0 : i32
    %c0_i32_0 = arith.constant 0 : i32
    %c0_i32_1 = arith.constant 0 : i32
    return %c0_i32, %c0_i32_0 : i32, i32
  }
  func.func @transform_19(%arg0: i32) -> (i32, i32, i32) {
    %c0_i32 = arith.constant 0 : i32
    %c0_i32_0 = arith.constant 0 : i32
    %c0_i32_1 = arith.constant 0 : i32
    return %arg0, %c0_i32, %c0_i32_0 : i32, i32, i32
  }
}

</mosaic_0001>

<llo_original>
// kernel: forward.3
$region0: #{forward.3}
  #allocation0 [shape = 'u32[]', space=smem, size = 0x4, offset = 0x4, fixed_abs, tag = 'smem constant byte address 0x4 - core index']
  #allocation1 [shape = 'u32[72,128]{1,0:T(1,128)}', space=vmem, size = 0x9000, scoped, tag = 'internal scratch']
  %s0 = inlined_call_operand.vmem [shape: f32[2,24,48], index: 0, kind: input, shape index: {}]
  %s1 = inlined_call_operand.vmem [shape: bf16[48,128], index: 1, kind: input, shape index: {}]
  %s2 = inlined_call_operand.vmem [shape: f32[24,128], index: 2, kind: input, shape index: {}]
  %s3 = inlined_call_operand.vmem [shape: f32[2,24,128], index: 3, kind: output, shape index: {}]
  %s4 = sld [smem:[#allocation0]]
  $region45: #{forward.3} parent=0
    _
  %s6 = ssub.s32 1, %s4
  %s7 = scalar_select 0, %s6, %s4
  loop: start=0, step=1, limit=4
  $region2: #{forward.3} parent=0 // loop_pre_header
    _
  $region3: #{forward.3} parent=0 // loop_header
    %s9 = sphi 0, %s13
    %p10 = scmp.ge.s32.totalorder %s9, 4
    %s19 = sphi 0, %s21
    %s22 = sphi 0, %s19
    %s23 = sphi 0, %s22
    %s39 = sphi 0, %s23
    %s43 = sphi 0, %s43
    %s45 = sphi 0, %s43
    %s46 = sphi 0, %s45
    %s60 = sphi 0, %s46
    %s64 = sphi 0, %s64
    %s66 = sphi 0, %s64
    %s67 = sphi 0, %s66
    %s81 = sphi 0, %s67
    %s87 = sphi 0, %s89
    %s90 = sphi 0, %s87
    %s91 = sphi 0, %s90
    %s107 = sphi 0, %s91
  $region4: #{forward.3} parent=0 // loop_header_branch
    %12 = sbr.rel (%p10) target = $region8
  $region5: #{forward.3} parent=0 // loop_body
    %s14 = ssub.s32 %s9, 1
    %s15 = ssub.s32 %s9, 2
    %s16 = sadd.s32 %s9, 1
    %s17 = ssub.s32 %s9, %s16
    %p18 = scmp.eq.s32.totalorder %s17, 0
    %s20 = sadd.s32 %s19, 1
    %s21 = scalar_select %p18, %s19, %s20
    %p24 = pneg %p18
    %p25 = scmp.eq.s32.totalorder %s9, 1
    %p26 = por %p24, %p25
    %p27 = scmp.ne.s32.totalorder %s19, %s22
    %p28 = scmp.eq.s32.totalorder %s9, 0
    %p29 = por %p27, %p28
    %p30 = scmp.ne.s32.totalorder %s19, %s22
    %p31 = scmp.eq.s32.totalorder %s14, 1
    %p32 = por %p30, %p31
    %p33 = scmp.ne.s32.totalorder %s22, %s23
    %p34 = scmp.eq.s32.totalorder %s14, 0
    %p35 = por %p33, %p34
    %p36 = scmp.ne.s32.totalorder %s22, %s23
    %p37 = scmp.eq.s32.totalorder %s15, 1
    %p38 = por %p36, %p37
    %p40 = scmp.ne.s32.totalorder %s23, %s39
    %p41 = scmp.eq.s32.totalorder %s15, 0
    %p42 = por %p40, %p41
    %s44 = sadd.s32 %s43, 1
    %p47 = scmp.eq.s32.totalorder %s9, 1
    %p48 = scmp.ne.s32.totalorder %s43, %s45
    %p49 = scmp.eq.s32.totalorder %s9, 0
    %p50 = por %p48, %p49
    %p51 = scmp.ne.s32.totalorder %s43, %s45
    %p52 = scmp.eq.s32.totalorder %s14, 1
    %p53 = por %p51, %p52
    %p54 = scmp.ne.s32.totalorder %s45, %s46
    %p55 = scmp.eq.s32.totalorder %s14, 0
    %p56 = por %p54, %p55
    %p57 = scmp.ne.s32.totalorder %s45, %s46
    %p58 = scmp.eq.s32.totalorder %s15, 1
    %p59 = por %p57, %p58
    %p61 = scmp.ne.s32.totalorder %s46, %s60
    %p62 = scmp.eq.s32.totalorder %s15, 0
    %p63 = por %p61, %p62
    %s65 = sadd.s32 %s64, 1
    %p68 = scmp.eq.s32.totalorder %s9, 1
    %p69 = scmp.ne.s32.totalorder %s64, %s66
    %p70 = scmp.eq.s32.totalorder %s9, 0
    %p71 = por %p69, %p70
    %p72 = scmp.ne.s32.totalorder %s64, %s66
    %p73 = scmp.eq.s32.totalorder %s14, 1
    %p74 = por %p72, %p73
    %p75 = scmp.ne.s32.totalorder %s66, %s67
    %p76 = scmp.eq.s32.totalorder %s14, 0
    %p77 = por %p75, %p76
    %p78 = scmp.ne.s32.totalorder %s66, %s67
    %p79 = scmp.eq.s32.totalorder %s15, 1
    %p80 = por %p78, %p79
    %p82 = scmp.ne.s32.totalorder %s67, %s81
    %p83 = scmp.eq.s32.totalorder %s15, 0
    %p84 = por %p82, %p83
    %s85 = ssub.s32 %s9, %s16
    %p86 = scmp.eq.s32.totalorder %s85, 0
    %s88 = sadd.s32 %s87, 1
    %s89 = scalar_select %p86, %s87, %s88
    %p92 = pneg %p86
    %p93 = scmp.eq.s32.totalorder %s9, 1
    %p94 = por %p92, %p93
    %p95 = scmp.ne.s32.totalorder %s87, %s90
    %p96 = scmp.eq.s32.totalorder %s9, 0
    %p97 = por %p95, %p96
    %p98 = scmp.ne.s32.totalorder %s87, %s90
    %p99 = scmp.eq.s32.totalorder %s14, 1
    %p100 = por %p98, %p99
    %p101 = scmp.ne.s32.totalorder %s90, %s91
    %p102 = scmp.eq.s32.totalorder %s14, 0
    %p103 = por %p101, %p102
    %p104 = scmp.ne.s32.totalorder %s90, %s91
    %p105 = scmp.eq.s32.totalorder %s15, 1
    %p106 = por %p104, %p105
    %p108 = scmp.ne.s32.totalorder %s91, %s107
    %p109 = scmp.eq.s32.totalorder %s15, 0
    %p110 = por %p108, %p109
    %p111 = scmp.le.s32.totalorder 1, %s9
    %p112 = scmp.lt.s32.totalorder %s9, 3
    %p113 = pnand %p111, %p112
    %p114 = pneg %p113
    // Predicated region
    $region9: #{forward.3} parent=5 // pred_check
      _
    $region10: #{forward.3} parent=5 // pred_check_branch
      %116 = sbr.rel (%p113) target = $region12
    $region11: #{forward.3} parent=5 // pred_region
      %s117 = ssub.s32 %s9, 1
      // Predicated region
      $region13: #{forward.3} parent=11 // pred_check
        %p118 = pneg %p56
      $region14: #{forward.3} parent=11 // pred_check_branch
        %120 = sbr.rel (%p118) target = $region16
      $region15: #{forward.3} parent=11 // pred_region
        _
      $region16: #{forward.3} parent=11 // pred_fallthru
        _
      // Predicated region
      $region17: #{forward.3} parent=11 // pred_check
        %p121 = pneg %p77
      $region18: #{forward.3} parent=11 // pred_check_branch
        %123 = sbr.rel (%p121) target = $region20
      $region19: #{forward.3} parent=11 // pred_region
        _
      $region20: #{forward.3} parent=11 // pred_fallthru
        _
    $region12: #{forward.3} parent=5 // pred_fallthru
      _
    %p124 = scmp.lt.s32.totalorder %s9, 2
    // Predicated region
    $region21: #{forward.3} parent=5 // pred_check
      %p125 = pneg %p124
    $region22: #{forward.3} parent=5 // pred_check_branch
      %127 = sbr.rel (%p125) target = $region24
    $region23: #{forward.3} parent=5 // pred_region
      // Predicated region
      $region25: #{forward.3} parent=23 // pred_check
        %p128 = pneg %p29
      $region26: #{forward.3} parent=23 // pred_check_branch
        %130 = sbr.rel (%p128) target = $region28
      $region27: #{forward.3} parent=23 // pred_region
        %p131 = scmp.lt.s32.totalorder %s9, 1
        %s132 = scalar_select %p131, %s9, 1
        %s133 = smul.addr %s132, 3
        %s134 = smul.addr %s133, 8
        %s135 = scalar_lea.vmem %s0, %s134
      $region28: #{forward.3} parent=23 // pred_fallthru
        _
    $region24: #{forward.3} parent=5 // pred_fallthru
      _
    %p136 = scmp.le.s32.totalorder 1, %s9
    %p137 = scmp.lt.s32.totalorder %s9, 3
    %p138 = pnand %p136, %p137
    %p139 = pneg %p138
    // Predicated region
    $region29: #{forward.3} parent=5 // pred_check
      _
    $region30: #{forward.3} parent=5 // pred_check_branch
      %141 = sbr.rel (%p138) target = $region32
    $region31: #{forward.3} parent=5 // pred_region
      %s142 = ssub.s32 %s9, 1
      %p143 = scmp.lt.s32.totalorder %s14, 1
      %s144 = scalar_select %p143, %s14, 1
      %s145 = smul.addr %s144, 3
      %s146 = smul.addr %s145, 8
      %s147 = scalar_lea.vmem %s0, %s146
      %p148 = pneg %p35
      %p149 = pneg %p32
      %p150 = pneg %p56
      %p151 = pneg %p53
      %p152 = pneg %p77
      %p153 = pneg %p74
      %p154 = pneg %p103
      %p155 = pneg %p100
      %p156 = scmp.lt.s32.totalorder %s14, 1
      %s157 = scalar_select %p156, %s14, 1
      %s158 = smul.addr %s157, 3
      %s159 = smul.addr %s158, 8
      %s160 = scalar_lea.vmem %s3, %s159
      %p161 = scmp.lt.s32.totalorder %s14, 1
      %s162 = scalar_select %p161, %s14, 1
      %s163 = smul.addr %s162, 3
      %s164 = smul.addr %s163, 8
      %s165 = scalar_lea.vmem %s0, %s164
      %p166 = scmp.lt.s32.totalorder %s14, 1
      %s167 = scalar_select %p166, %s14, 1
      %s168 = smul.addr %s167, 3
      %s169 = smul.addr %s168, 8
      %s170 = scalar_lea.vmem %s3, %s169
      %v172 = vld [vmem:[%s165] sm:$0xff]
      %v173 = vld [vmem:[%s165 + $0x8] sm:$0xff]
      %v174 = vld [vmem:[%s165 + $0x10] sm:$0xff]
      %v175 = vpack.c.bf16 %v173, %v172
      %v176 = vpack.c.bf16 %v174, %v174
      %v177 = vld [vmem:[%s1] sm:$0xf]
      %v178 = vld [vmem:[%s1 + $0x4] sm:$0xf]
      %v179 = vld [vmem:[%s1 + $0x8] sm:$0xf]
      %v180 = vld [vmem:[%s1 + $0xc] sm:$0xf]
      %v181 = vld [vmem:[%s1 + $0x10] sm:$0xf]
      %v182 = vld [vmem:[%s1 + $0x14] sm:$0xf]
      %v183 = vld [vmem:[%s2] sm:$0xff]
      %v184 = vld [vmem:[%s2 + $0x8] sm:$0xff]
      %v185 = vld [vmem:[%s2 + $0x10] sm:$0xff]
      %v192 = vunpack.c.l.b16 %v177
      %v193 = vunpack.c.l.b16 %v178
      %v194 = vunpack.c.l.b16 %v179
      %v195 = vunpack.c.l.b16 %v180
      %v196 = vunpack.c.l.b16 %v181
      %v197 = vunpack.c.l.b16 %v182
      %v198 = vpack.c.b16 %v193, %v192
      %v199 = vpack.c.b16 %v195, %v194
      %v200 = vpack.c.b16 %v197, %v196
      %vm204 = vcmask 392192
      %v206 = vsel %vm204, %v175, 0
      %v209 = vsel %vm204, %v176, 0
      %211 = vmatpush.bf16.msra.mxu0 0
      %212 = vmatpush.bf16.msra.mxu0 0
      %213 = vmatpush.bf16.msra.mxu0 0
      %214 = vmatpush.bf16.msra.mxu0 0
      %215 = vmatpush.bf16.msra.mxu0 0
      %216 = vmatpush.bf16.msra.mxu0 %v200
      %217 = vmatpush.bf16.msra.mxu0 %v199
      %218 = vmatpush.bf16.msra.mxu0 %v198
      %219 = vmatmul.bf16.gmra.mxu0 %v206
      %v220 = vpop.f32.mrf.mxu0
      %v221 = vadd.f32 %v183, %v220
      %v222 = vpop.f32.mrf.mxu0
      %v223 = vadd.f32 %v184, %v222
      %224 = vmatmul.bf16.gmra.mxu0 %v209
      %v225 = vpop.f32.mrf.mxu0
      %v226 = vadd.f32 %v185, %v225
      %v227 = vpop.f32.mrf.mxu0
      %228 = vdwg.mxu0
      %229 = vst [vmem:[%s170] sm:$0xff] %v221
      %230 = vst [vmem:[%s170 + $0x8] sm:$0xff] %v223
      %231 = vst [vmem:[%s170 + $0x10] sm:$0xff] %v226
      %p232 = scmp.lt.s32.totalorder %s14, 1
      %s233 = scalar_select %p232, %s14, 1
      %s234 = smul.addr %s233, 3
      %s235 = smul.addr %s234, 8
      %s236 = scalar_lea.vmem %s3, %s235
      // Predicated region
      $region33: #{forward.3} parent=31 // pred_check
        %p237 = pneg %p100
      $region34: #{forward.3} parent=31 // pred_check_branch
        %239 = sbr.rel (%p237) target = $region36
      $region35: #{forward.3} parent=31 // pred_region
        _
      $region36: #{forward.3} parent=31 // pred_fallthru
        _
    $region32: #{forward.3} parent=5 // pred_fallthru
      _
    %p240 = scmp.le.s32.totalorder 2, %s9
    // Predicated region
    $region37: #{forward.3} parent=5 // pred_check
      %p241 = pneg %p240
    $region38: #{forward.3} parent=5 // pred_check_branch
      %243 = sbr.rel (%p241) target = $region40
    $region39: #{forward.3} parent=5 // pred_region
      %s244 = ssub.s32 %s9, 2
      // Predicated region
      $region41: #{forward.3} parent=39 // pred_check
        %p245 = pneg %p106
      $region42: #{forward.3} parent=39 // pred_check_branch
        %247 = sbr.rel (%p245) target = $region44
      $region43: #{forward.3} parent=39 // pred_region
        %p248 = scmp.lt.s32.totalorder %s15, 1
        %s249 = scalar_select %p248, %s15, 1
        %s250 = smul.addr %s249, 3
        %s251 = smul.addr %s250, 8
        %s252 = scalar_lea.vmem %s3, %s251
      $region44: #{forward.3} parent=39 // pred_fallthru
        _
    $region40: #{forward.3} parent=5 // pred_fallthru
      _
  $region6: #{forward.3} parent=0 // loop_footer
    %s13 = sadd.s32 1, %s9
  $region7: #{forward.3} parent=0 // loop_footer_branch
    %8 = sbr.rel target = $region3
  $region8: #{forward.3} parent=0 // loop_exit
    _

// kernel: forward.4
$region0: #{forward.4}
  #allocation0 [shape = 'u32[]', space=smem, size = 0x4, offset = 0x4, fixed_abs, tag = 'smem constant byte address 0x4 - core index']
  #allocation1 [shape = 'u32[72,128]{1,0:T(1,128)}', space=vmem, size = 0x9000, scoped, tag = 'internal scratch']
  #allocation2 [shape = 'f32[1,1]{1,0:T(1,128)S(1)}', space=vmem, size = 0x200, scoped, tag = 'scoped memory for forward.4']
  %s0 = inlined_call_operand.smem [shape: u32[30], index: -1, kind: input, shape index: {}]
  %s1 = sld [smem:[%s0]]
  %s2 = scalar_lea.smem %s0, 1
  %s3 = sld [smem:[%s2]]
  %s4 = scalar_lea.smem %s0, 2
  %s5 = sld [smem:[%s4]]
  %s6 = scalar_lea.smem %s0, 3
  %s7 = sld [smem:[%s6]]
  %s8 = scalar_lea.smem %s0, 4
  %s9 = sld [smem:[%s8]]
  %s10 = scalar_lea.smem %s0, 5
  %s11 = sld [smem:[%s10]]
  %s12 = scalar_lea.smem %s0, 6
  %s13 = sld [smem:[%s12]]
  %s14 = scalar_lea.smem %s0, 7
  %s15 = sld [smem:[%s14]]
  %s16 = scalar_lea.smem %s0, 8
  %s17 = sld [smem:[%s16]]
  %s18 = scalar_lea.smem %s0, 9
  %s19 = sld [smem:[%s18]]
  %s20 = scalar_lea.smem %s0, 10
  %s21 = sld [smem:[%s20]]
  %s22 = scalar_lea.smem %s0, 11
  %s23 = sld [smem:[%s22]]
  %s24 = scalar_lea.smem %s0, 12
  %s25 = sld [smem:[%s24]]
  %s26 = scalar_lea.smem %s0, 13
  %s27 = sld [smem:[%s26]]
  %s28 = scalar_lea.smem %s0, 14
  %s29 = sld [smem:[%s28]]
  %s30 = scalar_lea.smem %s0, 15
  %s31 = sld [smem:[%s30]]
  %s32 = scalar_lea.smem %s0, 16
  %s33 = sld [smem:[%s32]]
  %s34 = scalar_lea.smem %s0, 17
  %s35 = sld [smem:[%s34]]
  %s36 = scalar_lea.smem %s0, 18
  %s37 = sld [smem:[%s36]]
  %s38 = scalar_lea.smem %s0, 19
  %s39 = sld [smem:[%s38]]
  %s40 = scalar_lea.smem %s0, 20
  %s41 = sld [smem:[%s40]]
  %s42 = scalar_lea.smem %s0, 21
  %s43 = sld [smem:[%s42]]
  %s44 = scalar_lea.smem %s0, 22
  %s45 = sld [smem:[%s44]]
  %s46 = scalar_lea.smem %s0, 23
  %s47 = sld [smem:[%s46]]
  %s48 = scalar_lea.smem %s0, 24
  %s49 = sld [smem:[%s48]]
  %s50 = scalar_lea.smem %s0, 25
  %s51 = sld [smem:[%s50]]
  %s52 = scalar_lea.smem %s0, 26
  %s53 = sld [smem:[%s52]]
  %s54 = scalar_lea.smem %s0, 27
  %s55 = sld [smem:[%s54]]
  %s56 = scalar_lea.smem %s0, 28
  %s57 = sld [smem:[%s56]]
  %s58 = scalar_lea.smem %s0, 29
  %s59 = sld [smem:[%s58]]
  %60 = xla_tuple %s55, %s57, %s59
  %s61 = sld [smem:[#allocation0]]
  $region157: #{forward.4} parent=0
    _
  %s63 = ssub.s32 1, %s61
  %s64 = scalar_select 0, %s63, %s61
  %v65 = vstv %s49
  %66 = vst [vmem:[#allocation2] sm:$0x1] %v65
  loop: start=0, step=1, limit=4
  $region2: #{forward.4} parent=0 // loop_pre_header
    _
  $region3: #{forward.4} parent=0 // loop_header
    %s68 = sphi 0, %s72
    %p69 = scmp.ge.s32.totalorder %s68, 4
    %s78 = sphi 0, %s80
    %s81 = sphi 0, %s78
    %s82 = sphi 0, %s81
    %s98 = sphi 0, %s82
    %s102 = sphi 0, %s102
    %s104 = sphi 0, %s102
    %s105 = sphi 0, %s104
    %s119 = sphi 0, %s105
    %s123 = sphi 0, %s123
    %s125 = sphi 0, %s123
    %s126 = sphi 0, %s125
    %s140 = sphi 0, %s126
    %s144 = sphi 0, %s144
    %s146 = sphi 0, %s144
    %s147 = sphi 0, %s146
    %s161 = sphi 0, %s147
    %s165 = sphi 0, %s165
    %s167 = sphi 0, %s165
    %s168 = sphi 0, %s167
    %s182 = sphi 0, %s168
    %s186 = sphi 0, %s186
    %s188 = sphi 0, %s186
    %s189 = sphi 0, %s188
    %s203 = sphi 0, %s189
    %s207 = sphi 0, %s207
    %s209 = sphi 0, %s207
    %s210 = sphi 0, %s209
    %s224 = sphi 0, %s210
    %s228 = sphi 0, %s228
    %s230 = sphi 0, %s228
    %s231 = sphi 0, %s230
    %s245 = sphi 0, %s231
    %s249 = sphi 0, %s249
    %s251 = sphi 0, %s249
    %s252 = sphi 0, %s251
    %s266 = sphi 0, %s252
    %s270 = sphi 0, %s270
    %s272 = sphi 0, %s270
    %s273 = sphi 0, %s272
    %s287 = sphi 0, %s273
    %s291 = sphi 0, %s291
    %s293 = sphi 0, %s291
    %s294 = sphi 0, %s293
    %s308 = sphi 0, %s294
    %s312 = sphi 0, %s312
    %s314 = sphi 0, %s312
    %s315 = sphi 0, %s314
    %s329 = sphi 0, %s315
    %s333 = sphi 0, %s333
    %s335 = sphi 0, %s333
    %s336 = sphi 0, %s335
    %s350 = sphi 0, %s336
    %s354 = sphi 0, %s354
    %s356 = sphi 0, %s354
    %s357 = sphi 0, %s356
    %s371 = sphi 0, %s357
    %s375 = sphi 0, %s375
    %s377 = sphi 0, %s375
    %s378 = sphi 0, %s377
    %s392 = sphi 0, %s378
    %s396 = sphi 0, %s396
    %s398 = sphi 0, %s396
    %s399 = sphi 0, %s398
    %s413 = sphi 0, %s399
    %s417 = sphi 0, %s417
    %s419 = sphi 0, %s417
    %s420 = sphi 0, %s419
    %s434 = sphi 0, %s420
    %s438 = sphi 0, %s438
    %s440 = sphi 0, %s438
    %s441 = sphi 0, %s440
    %s455 = sphi 0, %s441
    %s459 = sphi 0, %s459
    %s461 = sphi 0, %s459
    %s462 = sphi 0, %s461
    %s476 = sphi 0, %s462
    %s480 = sphi 0, %s480
    %s482 = sphi 0, %s480
    %s483 = sphi 0, %s482
    %s497 = sphi 0, %s483
    %s501 = sphi 0, %s501
    %s503 = sphi 0, %s501
    %s504 = sphi 0, %s503
    %s518 = sphi 0, %s504
    %s522 = sphi 0, %s522
    %s524 = sphi 0, %s522
    %s525 = sphi 0, %s524
    %s539 = sphi 0, %s525
    %s543 = sphi 0, %s543
    %s545 = sphi 0, %s543
    %s546 = sphi 0, %s545
    %s560 = sphi 0, %s546
    %s564 = sphi 0, %s564
    %s566 = sphi 0, %s564
    %s567 = sphi 0, %s566
    %s581 = sphi 0, %s567
    %s585 = sphi 0, %s585
    %s587 = sphi 0, %s585
    %s588 = sphi 0, %s587
    %s602 = sphi 0, %s588
    %s606 = sphi 0, %s606
    %s608 = sphi 0, %s606
    %s609 = sphi 0, %s608
    %s623 = sphi 0, %s609
    %s627 = sphi 0, %s627
    %s629 = sphi 0, %s627
    %s630 = sphi 0, %s629
    %s644 = sphi 0, %s630
    %s650 = sphi 0, %s652
    %s653 = sphi 0, %s650
    %s654 = sphi 0, %s653
    %s670 = sphi 0, %s654
    %s676 = sphi 0, %s678
    %s679 = sphi 0, %s676
    %s680 = sphi 0, %s679
    %s696 = sphi 0, %s680
    %s702 = sphi 0, %s704
    %s705 = sphi 0, %s702
    %s706 = sphi 0, %s705
    %s722 = sphi 0, %s706
  $region4: #{forward.4} parent=0 // loop_header_branch
    %71 = sbr.rel (%p69) target = $region8
  $region5: #{forward.4} parent=0 // loop_body
    %s73 = ssub.s32 %s68, 1
    %s74 = ssub.s32 %s68, 2
    %s75 = sadd.s32 %s68, 1
    %s76 = ssub.s32 %s68, %s75
    %p77 = scmp.eq.s32.totalorder %s76, 0
    %s79 = sadd.s32 %s78, 1
    %s80 = scalar_select %p77, %s78, %s79
    %p83 = pneg %p77
    %p84 = scmp.eq.s32.totalorder %s68, 1
    %p85 = por %p83, %p84
    %p86 = scmp.ne.s32.totalorder %s78, %s81
    %p87 = scmp.eq.s32.totalorder %s68, 0
    %p88 = por %p86, %p87
    %p89 = scmp.ne.s32.totalorder %s78, %s81
    %p90 = scmp.eq.s32.totalorder %s73, 1
    %p91 = por %p89, %p90
    %p92 = scmp.ne.s32.totalorder %s81, %s82
    %p93 = scmp.eq.s32.totalorder %s73, 0
    %p94 = por %p92, %p93
    %p95 = scmp.ne.s32.totalorder %s81, %s82
    %p96 = scmp.eq.s32.totalorder %s74, 1
    %p97 = por %p95, %p96
    %p99 = scmp.ne.s32.totalorder %s82, %s98
    %p100 = scmp.eq.s32.totalorder %s74, 0
    %p101 = por %p99, %p100
    %s103 = sadd.s32 %s102, 1
    %p106 = scmp.eq.s32.totalorder %s68, 1
    %p107 = scmp.ne.s32.totalorder %s102, %s104
    %p108 = scmp.eq.s32.totalorder %s68, 0
    %p109 = por %p107, %p108
    %p110 = scmp.ne.s32.totalorder %s102, %s104
    %p111 = scmp.eq.s32.totalorder %s73, 1
    %p112 = por %p110, %p111
    %p113 = scmp.ne.s32.totalorder %s104, %s105
    %p114 = scmp.eq.s32.totalorder %s73, 0
    %p115 = por %p113, %p114
    %p116 = scmp.ne.s32.totalorder %s104, %s105
    %p117 = scmp.eq.s32.totalorder %s74, 1
    %p118 = por %p116, %p117
    %p120 = scmp.ne.s32.totalorder %s105, %s119
    %p121 = scmp.eq.s32.totalorder %s74, 0
    %p122 = por %p120, %p121
    %s124 = sadd.s32 %s123, 1
    %p127 = scmp.eq.s32.totalorder %s68, 1
    %p128 = scmp.ne.s32.totalorder %s123, %s125
    %p129 = scmp.eq.s32.totalorder %s68, 0
    %p130 = por %p128, %p129
    %p131 = scmp.ne.s32.totalorder %s123, %s125
    %p132 = scmp.eq.s32.totalorder %s73, 1
    %p133 = por %p131, %p132
    %p134 = scmp.ne.s32.totalorder %s125, %s126
    %p135 = scmp.eq.s32.totalorder %s73, 0
    %p136 = por %p134, %p135
    %p137 = scmp.ne.s32.totalorder %s125, %s126
    %p138 = scmp.eq.s32.totalorder %s74, 1
    %p139 = por %p137, %p138
    %p141 = scmp.ne.s32.totalorder %s126, %s140
    %p142 = scmp.eq.s32.totalorder %s74, 0
    %p143 = por %p141, %p142
    %s145 = sadd.s32 %s144, 1
    %p148 = scmp.eq.s32.totalorder %s68, 1
    %p149 = scmp.ne.s32.totalorder %s144, %s146
    %p150 = scmp.eq.s32.totalorder %s68, 0
    %p151 = por %p149, %p150
    %p152 = scmp.ne.s32.totalorder %s144, %s146
    %p153 = scmp.eq.s32.totalorder %s73, 1
    %p154 = por %p152, %p153
    %p155 = scmp.ne.s32.totalorder %s146, %s147
    %p156 = scmp.eq.s32.totalorder %s73, 0
    %p157 = por %p155, %p156
    %p158 = scmp.ne.s32.totalorder %s146, %s147
    %p159 = scmp.eq.s32.totalorder %s74, 1
    %p160 = por %p158, %p159
    %p162 = scmp.ne.s32.totalorder %s147, %s161
    %p163 = scmp.eq.s32.totalorder %s74, 0
    %p164 = por %p162, %p163
    %s166 = sadd.s32 %s165, 1
    %p169 = scmp.eq.s32.totalorder %s68, 1
    %p170 = scmp.ne.s32.totalorder %s165, %s167
    %p171 = scmp.eq.s32.totalorder %s68, 0
    %p172 = por %p170, %p171
    %p173 = scmp.ne.s32.totalorder %s165, %s167
    %p174 = scmp.eq.s32.totalorder %s73, 1
    %p175 = por %p173, %p174
    %p176 = scmp.ne.s32.totalorder %s167, %s168
    %p177 = scmp.eq.s32.totalorder %s73, 0
    %p178 = por %p176, %p177
    %p179 = scmp.ne.s32.totalorder %s167, %s168
    %p180 = scmp.eq.s32.totalorder %s74, 1
    %p181 = por %p179, %p180
    %p183 = scmp.ne.s32.totalorder %s168, %s182
    %p184 = scmp.eq.s32.totalorder %s74, 0
    %p185 = por %p183, %p184
    %s187 = sadd.s32 %s186, 1
    %p190 = scmp.eq.s32.totalorder %s68, 1
    %p191 = scmp.ne.s32.totalorder %s186, %s188
    %p192 = scmp.eq.s32.totalorder %s68, 0
    %p193 = por %p191, %p192
    %p194 = scmp.ne.s32.totalorder %s186, %s188
    %p195 = scmp.eq.s32.totalorder %s73, 1
    %p196 = por %p194, %p195
    %p197 = scmp.ne.s32.totalorder %s188, %s189
    %p198 = scmp.eq.s32.totalorder %s73, 0
    %p199 = por %p197, %p198
    %p200 = scmp.ne.s32.totalorder %s188, %s189
    %p201 = scmp.eq.s32.totalorder %s74, 1
    %p202 = por %p200, %p201
    %p204 = scmp.ne.s32.totalorder %s189, %s203
    %p205 = scmp.eq.s32.totalorder %s74, 0
    %p206 = por %p204, %p205
    %s208 = sadd.s32 %s207, 1
    %p211 = scmp.eq.s32.totalorder %s68, 1
    %p212 = scmp.ne.s32.totalorder %s207, %s209
    %p213 = scmp.eq.s32.totalorder %s68, 0
    %p214 = por %p212, %p213
    %p215 = scmp.ne.s32.totalorder %s207, %s209
    %p216 = scmp.eq.s32.totalorder %s73, 1
    %p217 = por %p215, %p216
    %p218 = scmp.ne.s32.totalorder %s209, %s210
    %p219 = scmp.eq.s32.totalorder %s73, 0
    %p220 = por %p218, %p219
    %p221 = scmp.ne.s32.totalorder %s209, %s210
    %p222 = scmp.eq.s32.totalorder %s74, 1
    %p223 = por %p221, %p222
    %p225 = scmp.ne.s32.totalorder %s210, %s224
    %p226 = scmp.eq.s32.totalorder %s74, 0
    %p227 = por %p225, %p226
    %s229 = sadd.s32 %s228, 1
    %p232 = scmp.eq.s32.totalorder %s68, 1
    %p233 = scmp.ne.s32.totalorder %s228, %s230
    %p234 = scmp.eq.s32.totalorder %s68, 0
    %p235 = por %p233, %p234
    %p236 = scmp.ne.s32.totalorder %s228, %s230
    %p237 = scmp.eq.s32.totalorder %s73, 1
    %p238 = por %p236, %p237
    %p239 = scmp.ne.s32.totalorder %s230, %s231
    %p240 = scmp.eq.s32.totalorder %s73, 0
    %p241 = por %p239, %p240
    %p242 = scmp.ne.s32.totalorder %s230, %s231
    %p243 = scmp.eq.s32.totalorder %s74, 1
    %p244 = por %p242, %p243
    %p246 = scmp.ne.s32.totalorder %s231, %s245
    %p247 = scmp.eq.s32.totalorder %s74, 0
    %p248 = por %p246, %p247
    %s250 = sadd.s32 %s249, 1
    %p253 = scmp.eq.s32.totalorder %s68, 1
    %p254 = scmp.ne.s32.totalorder %s249, %s251
    %p255 = scmp.eq.s32.totalorder %s68, 0
    %p256 = por %p254, %p255
    %p257 = scmp.ne.s32.totalorder %s249, %s251
    %p258 = scmp.eq.s32.totalorder %s73, 1
    %p259 = por %p257, %p258
    %p260 = scmp.ne.s32.totalorder %s251, %s252
    %p261 = scmp.eq.s32.totalorder %s73, 0
    %p262 = por %p260, %p261
    %p263 = scmp.ne.s32.totalorder %s251, %s252
    %p264 = scmp.eq.s32.totalorder %s74, 1
    %p265 = por %p263, %p264
    %p267 = scmp.ne.s32.totalorder %s252, %s266
    %p268 = scmp.eq.s32.totalorder %s74, 0
    %p269 = por %p267, %p268
    %s271 = sadd.s32 %s270, 1
    %p274 = scmp.eq.s32.totalorder %s68, 1
    %p275 = scmp.ne.s32.totalorder %s270, %s272
    %p276 = scmp.eq.s32.totalorder %s68, 0
    %p277 = por %p275, %p276
    %p278 = scmp.ne.s32.totalorder %s270, %s272
    %p279 = scmp.eq.s32.totalorder %s73, 1
    %p280 = por %p278, %p279
    %p281 = scmp.ne.s32.totalorder %s272, %s273
    %p282 = scmp.eq.s32.totalorder %s73, 0
    %p283 = por %p281, %p282
    %p284 = scmp.ne.s32.totalorder %s272, %s273
    %p285 = scmp.eq.s32.totalorder %s74, 1
    %p286 = por %p284, %p285
    %p288 = scmp.ne.s32.totalorder %s273, %s287
    %p289 = scmp.eq.s32.totalorder %s74, 0
    %p290 = por %p288, %p289
    %s292 = sadd.s32 %s291, 1
    %p295 = scmp.eq.s32.totalorder %s68, 1
    %p296 = scmp.ne.s32.totalorder %s291, %s293
    %p297 = scmp.eq.s32.totalorder %s68, 0
    %p298 = por %p296, %p297
    %p299 = scmp.ne.s32.totalorder %s291, %s293
    %p300 = scmp.eq.s32.totalorder %s73, 1
    %p301 = por %p299, %p300
    %p302 = scmp.ne.s32.totalorder %s293, %s294
    %p303 = scmp.eq.s32.totalorder %s73, 0
    %p304 = por %p302, %p303
    %p305 = scmp.ne.s32.totalorder %s293, %s294
    %p306 = scmp.eq.s32.totalorder %s74, 1
    %p307 = por %p305, %p306
    %p309 = scmp.ne.s32.totalorder %s294, %s308
    %p310 = scmp.eq.s32.totalorder %s74, 0
    %p311 = por %p309, %p310
    %s313 = sadd.s32 %s312, 1
    %p316 = scmp.eq.s32.totalorder %s68, 1
    %p317 = scmp.ne.s32.totalorder %s312, %s314
    %p318 = scmp.eq.s32.totalorder %s68, 0
    %p319 = por %p317, %p318
    %p320 = scmp.ne.s32.totalorder %s312, %s314
    %p321 = scmp.eq.s32.totalorder %s73, 1
    %p322 = por %p320, %p321
    %p323 = scmp.ne.s32.totalorder %s314, %s315
    %p324 = scmp.eq.s32.totalorder %s73, 0
    %p325 = por %p323, %p324
    %p326 = scmp.ne.s32.totalorder %s314, %s315
    %p327 = scmp.eq.s32.totalorder %s74, 1
    %p328 = por %p326, %p327
    %p330 = scmp.ne.s32.totalorder %s315, %s329
    %p331 = scmp.eq.s32.totalorder %s74, 0
    %p332 = por %p330, %p331
    %s334 = sadd.s32 %s333, 1
    %p337 = scmp.eq.s32.totalorder %s68, 1
    %p338 = scmp.ne.s32.totalorder %s333, %s335
    %p339 = scmp.eq.s32.totalorder %s68, 0
    %p340 = por %p338, %p339
    %p341 = scmp.ne.s32.totalorder %s333, %s335
    %p342 = scmp.eq.s32.totalorder %s73, 1
    %p343 = por %p341, %p342
    %p344 = scmp.ne.s32.totalorder %s335, %s336
    %p345 = scmp.eq.s32.totalorder %s73, 0
    %p346 = por %p344, %p345
    %p347 = scmp.ne.s32.totalorder %s335, %s336
    %p348 = scmp.eq.s32.totalorder %s74, 1
    %p349 = por %p347, %p348
    %p351 = scmp.ne.s32.totalorder %s336, %s350
    %p352 = scmp.eq.s32.totalorder %s74, 0
    %p353 = por %p351, %p352
    %s355 = sadd.s32 %s354, 1
    %p358 = scmp.eq.s32.totalorder %s68, 1
    %p359 = scmp.ne.s32.totalorder %s354, %s356
    %p360 = scmp.eq.s32.totalorder %s68, 0
    %p361 = por %p359, %p360
    %p362 = scmp.ne.s32.totalorder %s354, %s356
    %p363 = scmp.eq.s32.totalorder %s73, 1
    %p364 = por %p362, %p363
    %p365 = scmp.ne.s32.totalorder %s356, %s357
    %p366 = scmp.eq.s32.totalorder %s73, 0
    %p367 = por %p365, %p366
    %p368 = scmp.ne.s32.totalorder %s356, %s357
    %p369 = scmp.eq.s32.totalorder %s74, 1
    %p370 = por %p368, %p369
    %p372 = scmp.ne.s32.totalorder %s357, %s371
    %p373 = scmp.eq.s32.totalorder %s74, 0
    %p374 = por %p372, %p373
    %s376 = sadd.s32 %s375, 1
    %p379 = scmp.eq.s32.totalorder %s68, 1
    %p380 = scmp.ne.s32.totalorder %s375, %s377
    %p381 = scmp.eq.s32.totalorder %s68, 0
    %p382 = por %p380, %p381
    %p383 = scmp.ne.s32.totalorder %s375, %s377
    %p384 = scmp.eq.s32.totalorder %s73, 1
    %p385 = por %p383, %p384
    %p386 = scmp.ne.s32.totalorder %s377, %s378
    %p387 = scmp.eq.s32.totalorder %s73, 0
    %p388 = por %p386, %p387
    %p389 = scmp.ne.s32.totalorder %s377, %s378
    %p390 = scmp.eq.s32.totalorder %s74, 1
    %p391 = por %p389, %p390
    %p393 = scmp.ne.s32.totalorder %s378, %s392
    %p394 = scmp.eq.s32.totalorder %s74, 0
    %p395 = por %p393, %p394
    %s397 = sadd.s32 %s396, 1
    %p400 = scmp.eq.s32.totalorder %s68, 1
    %p401 = scmp.ne.s32.totalorder %s396, %s398
    %p402 = scmp.eq.s32.totalorder %s68, 0
    %p403 = por %p401, %p402
    %p404 = scmp.ne.s32.totalorder %s396, %s398
    %p405 = scmp.eq.s32.totalorder %s73, 1
    %p406 = por %p404, %p405
    %p407 = scmp.ne.s32.totalorder %s398, %s399
    %p408 = scmp.eq.s32.totalorder %s73, 0
    %p409 = por %p407, %p408
    %p410 = scmp.ne.s32.totalorder %s398, %s399
    %p411 = scmp.eq.s32.totalorder %s74, 1
    %p412 = por %p410, %p411
    %p414 = scmp.ne.s32.totalorder %s399, %s413
    %p415 = scmp.eq.s32.totalorder %s74, 0
    %p416 = por %p414, %p415
    %s418 = sadd.s32 %s417, 1
    %p421 = scmp.eq.s32.totalorder %s68, 1
    %p422 = scmp.ne.s32.totalorder %s417, %s419
    %p423 = scmp.eq.s32.totalorder %s68, 0
    %p424 = por %p422, %p423
    %p425 = scmp.ne.s32.totalorder %s417, %s419
    %p426 = scmp.eq.s32.totalorder %s73, 1
    %p427 = por %p425, %p426
    %p428 = scmp.ne.s32.totalorder %s419, %s420
    %p429 = scmp.eq.s32.totalorder %s73, 0
    %p430 = por %p428, %p429
    %p431 = scmp.ne.s32.totalorder %s419, %s420
    %p432 = scmp.eq.s32.totalorder %s74, 1
    %p433 = por %p431, %p432
    %p435 = scmp.ne.s32.totalorder %s420, %s434
    %p436 = scmp.eq.s32.totalorder %s74, 0
    %p437 = por %p435, %p436
    %s439 = sadd.s32 %s438, 1
    %p442 = scmp.eq.s32.totalorder %s68, 1
    %p443 = scmp.ne.s32.totalorder %s438, %s440
    %p444 = scmp.eq.s32.totalorder %s68, 0
    %p445 = por %p443, %p444
    %p446 = scmp.ne.s32.totalorder %s438, %s440
    %p447 = scmp.eq.s32.totalorder %s73, 1
    %p448 = por %p446, %p447
    %p449 = scmp.ne.s32.totalorder %s440, %s441
    %p450 = scmp.eq.s32.totalorder %s73, 0
    %p451 = por %p449, %p450
    %p452 = scmp.ne.s32.totalorder %s440, %s441
    %p453 = scmp.eq.s32.totalorder %s74, 1
    %p454 = por %p452, %p453
    %p456 = scmp.ne.s32.totalorder %s441, %s455
    %p457 = scmp.eq.s32.totalorder %s74, 0
    %p458 = por %p456, %p457
    %s460 = sadd.s32 %s459, 1
    %p463 = scmp.eq.s32.totalorder %s68, 1
    %p464 = scmp.ne.s32.totalorder %s459, %s461
    %p465 = scmp.eq.s32.totalorder %s68, 0
    %p466 = por %p464, %p465
    %p467 = scmp.ne.s32.totalorder %s459, %s461
    %p468 = scmp.eq.s32.totalorder %s73, 1
    %p469 = por %p467, %p468
    %p470 = scmp.ne.s32.totalorder %s461, %s462
    %p471 = scmp.eq.s32.totalorder %s73, 0
    %p472 = por %p470, %p471
    %p473 = scmp.ne.s32.totalorder %s461, %s462
    %p474 = scmp.eq.s32.totalorder %s74, 1
    %p475 = por %p473, %p474
    %p477 = scmp.ne.s32.totalorder %s462, %s476
    %p478 = scmp.eq.s32.totalorder %s74, 0
    %p479 = por %p477, %p478
    %s481 = sadd.s32 %s480, 1
    %p484 = scmp.eq.s32.totalorder %s68, 1
    %p485 = scmp.ne.s32.totalorder %s480, %s482
    %p486 = scmp.eq.s32.totalorder %s68, 0
    %p487 = por %p485, %p486
    %p488 = scmp.ne.s32.totalorder %s480, %s482
    %p489 = scmp.eq.s32.totalorder %s73, 1
    %p490 = por %p488, %p489
    %p491 = scmp.ne.s32.totalorder %s482, %s483
    %p492 = scmp.eq.s32.totalorder %s73, 0
    %p493 = por %p491, %p492
    %p494 = scmp.ne.s32.totalorder %s482, %s483
    %p495 = scmp.eq.s32.totalorder %s74, 1
    %p496 = por %p494, %p495
    %p498 = scmp.ne.s32.totalorder %s483, %s497
    %p499 = scmp.eq.s32.totalorder %s74, 0
    %p500 = por %p498, %p499
    %s502 = sadd.s32 %s501, 1
    %p505 = scmp.eq.s32.totalorder %s68, 1
    %p506 = scmp.ne.s32.totalorder %s501, %s503
    %p507 = scmp.eq.s32.totalorder %s68, 0
    %p508 = por %p506, %p507
    %p509 = scmp.ne.s32.totalorder %s501, %s503
    %p510 = scmp.eq.s32.totalorder %s73, 1
    %p511 = por %p509, %p510
    %p512 = scmp.ne.s32.totalorder %s503, %s504
    %p513 = scmp.eq.s32.totalorder %s73, 0
    %p514 = por %p512, %p513
    %p515 = scmp.ne.s32.totalorder %s503, %s504
    %p516 = scmp.eq.s32.totalorder %s74, 1
    %p517 = por %p515, %p516
    %p519 = scmp.ne.s32.totalorder %s504, %s518
    %p520 = scmp.eq.s32.totalorder %s74, 0
    %p521 = por %p519, %p520
    %s523 = sadd.s32 %s522, 1
    %p526 = scmp.eq.s32.totalorder %s68, 1
    %p527 = scmp.ne.s32.totalorder %s522, %s524
    %p528 = scmp.eq.s32.totalorder %s68, 0
    %p529 = por %p527, %p528
    %p530 = scmp.ne.s32.totalorder %s522, %s524
    %p531 = scmp.eq.s32.totalorder %s73, 1
    %p532 = por %p530, %p531
    %p533 = scmp.ne.s32.totalorder %s524, %s525
    %p534 = scmp.eq.s32.totalorder %s73, 0
    %p535 = por %p533, %p534
    %p536 = scmp.ne.s32.totalorder %s524, %s525
    %p537 = scmp.eq.s32.totalorder %s74, 1
    %p538 = por %p536, %p537
    %p540 = scmp.ne.s32.totalorder %s525, %s539
    %p541 = scmp.eq.s32.totalorder %s74, 0
    %p542 = por %p540, %p541
    %s544 = sadd.s32 %s543, 1
    %p547 = scmp.eq.s32.totalorder %s68, 1
    %p548 = scmp.ne.s32.totalorder %s543, %s545
    %p549 = scmp.eq.s32.totalorder %s68, 0
    %p550 = por %p548, %p549
    %p551 = scmp.ne.s32.totalorder %s543, %s545
    %p552 = scmp.eq.s32.totalorder %s73, 1
    %p553 = por %p551, %p552
    %p554 = scmp.ne.s32.totalorder %s545, %s546
    %p555 = scmp.eq.s32.totalorder %s73, 0
    %p556 = por %p554, %p555
    %p557 = scmp.ne.s32.totalorder %s545, %s546
    %p558 = scmp.eq.s32.totalorder %s74, 1
    %p559 = por %p557, %p558
    %p561 = scmp.ne.s32.totalorder %s546, %s560
    %p562 = scmp.eq.s32.totalorder %s74, 0
    %p563 = por %p561, %p562
    %s565 = sadd.s32 %s564, 1
    %p568 = scmp.eq.s32.totalorder %s68, 1
    %p569 = scmp.ne.s32.totalorder %s564, %s566
    %p570 = scmp.eq.s32.totalorder %s68, 0
    %p571 = por %p569, %p570
    %p572 = scmp.ne.s32.totalorder %s564, %s566
    %p573 = scmp.eq.s32.totalorder %s73, 1
    %p574 = por %p572, %p573
    %p575 = scmp.ne.s32.totalorder %s566, %s567
    %p576 = scmp.eq.s32.totalorder %s73, 0
    %p577 = por %p575, %p576
    %p578 = scmp.ne.s32.totalorder %s566, %s567
    %p579 = scmp.eq.s32.totalorder %s74, 1
    %p580 = por %p578, %p579
    %p582 = scmp.ne.s32.totalorder %s567, %s581
    %p583 = scmp.eq.s32.totalorder %s74, 0
    %p584 = por %p582, %p583
    %s586 = sadd.s32 %s585, 1
    %p589 = scmp.eq.s32.totalorder %s68, 1
    %p590 = scmp.ne.s32.totalorder %s585, %s587
    %p591 = scmp.eq.s32.totalorder %s68, 0
    %p592 = por %p590, %p591
    %p593 = scmp.ne.s32.totalorder %s585, %s587
    %p594 = scmp.eq.s32.totalorder %s73, 1
    %p595 = por %p593, %p594
    %p596 = scmp.ne.s32.totalorder %s587, %s588
    %p597 = scmp.eq.s32.totalorder %s73, 0
    %p598 = por %p596, %p597
    %p599 = scmp.ne.s32.totalorder %s587, %s588
    %p600 = scmp.eq.s32.totalorder %s74, 1
    %p601 = por %p599, %p600
    %p603 = scmp.ne.s32.totalorder %s588, %s602
    %p604 = scmp.eq.s32.totalorder %s74, 0
    %p605 = por %p603, %p604
    %s607 = sadd.s32 %s606, 1
    %p610 = scmp.eq.s32.totalorder %s68, 1
    %p611 = scmp.ne.s32.totalorder %s606, %s608
    %p612 = scmp.eq.s32.totalorder %s68, 0
    %p613 = por %p611, %p612
    %p614 = scmp.ne.s32.totalorder %s606, %s608
    %p615 = scmp.eq.s32.totalorder %s73, 1
    %p616 = por %p614, %p615
    %p617 = scmp.ne.s32.totalorder %s608, %s609
    %p618 = scmp.eq.s32.totalorder %s73, 0
    %p619 = por %p617, %p618
    %p620 = scmp.ne.s32.totalorder %s608, %s609
    %p621 = scmp.eq.s32.totalorder %s74, 1
    %p622 = por %p620, %p621
    %p624 = scmp.ne.s32.totalorder %s609, %s623
    %p625 = scmp.eq.s32.totalorder %s74, 0
    %p626 = por %p624, %p625
    %s628 = sadd.s32 %s627, 1
    %p631 = scmp.eq.s32.totalorder %s68, 1
    %p632 = scmp.ne.s32.totalorder %s627, %s629
    %p633 = scmp.eq.s32.totalorder %s68, 0
    %p634 = por %p632, %p633
    %p635 = scmp.ne.s32.totalorder %s627, %s629
    %p636 = scmp.eq.s32.totalorder %s73, 1
    %p637 = por %p635, %p636
    %p638 = scmp.ne.s32.totalorder %s629, %s630
    %p639 = scmp.eq.s32.totalorder %s73, 0
    %p640 = por %p638, %p639
    %p641 = scmp.ne.s32.totalorder %s629, %s630
    %p642 = scmp.eq.s32.totalorder %s74, 1
    %p643 = por %p641, %p642
    %p645 = scmp.ne.s32.totalorder %s630, %s644
    %p646 = scmp.eq.s32.totalorder %s74, 0
    %p647 = por %p645, %p646
    %s648 = ssub.s32 %s68, %s75
    %p649 = scmp.eq.s32.totalorder %s648, 0
    %s651 = sadd.s32 %s650, 1
    %s652 = scalar_select %p649, %s650, %s651
    %p655 = pneg %p649
    %p656 = scmp.eq.s32.totalorder %s68, 1
    %p657 = por %p655, %p656
    %p658 = scmp.ne.s32.totalorder %s650, %s653
    %p659 = scmp.eq.s32.totalorder %s68, 0
    %p660 = por %p658, %p659
    %p661 = scmp.ne.s32.totalorder %s650, %s653
    %p662 = scmp.eq.s32.totalorder %s73, 1
    %p663 = por %p661, %p662
    %p664 = scmp.ne.s32.totalorder %s653, %s654
    %p665 = scmp.eq.s32.totalorder %s73, 0
    %p666 = por %p664, %p665
    %p667 = scmp.ne.s32.totalorder %s653, %s654
    %p668 = scmp.eq.s32.totalorder %s74, 1
    %p669 = por %p667, %p668
    %p671 = scmp.ne.s32.totalorder %s654, %s670
    %p672 = scmp.eq.s32.totalorder %s74, 0
    %p673 = por %p671, %p672
    %s674 = ssub.s32 %s68, %s75
    %p675 = scmp.eq.s32.totalorder %s674, 0
    %s677 = sadd.s32 %s676, 1
    %s678 = scalar_select %p675, %s676, %s677
    %p681 = pneg %p675
    %p682 = scmp.eq.s32.totalorder %s68, 1
    %p683 = por %p681, %p682
    %p684 = scmp.ne.s32.totalorder %s676, %s679
    %p685 = scmp.eq.s32.totalorder %s68, 0
    %p686 = por %p684, %p685
    %p687 = scmp.ne.s32.totalorder %s676, %s679
    %p688 = scmp.eq.s32.totalorder %s73, 1
    %p689 = por %p687, %p688
    %p690 = scmp.ne.s32.totalorder %s679, %s680
    %p691 = scmp.eq.s32.totalorder %s73, 0
    %p692 = por %p690, %p691
    %p693 = scmp.ne.s32.totalorder %s679, %s680
    %p694 = scmp.eq.s32.totalorder %s74, 1
    %p695 = por %p693, %p694
    %p697 = scmp.ne.s32.totalorder %s680, %s696
    %p698 = scmp.eq.s32.totalorder %s74, 0
    %p699 = por %p697, %p698
    %s700 = ssub.s32 %s68, %s75
    %p701 = scmp.eq.s32.totalorder %s700, 0
    %s703 = sadd.s32 %s702, 1
    %s704 = scalar_select %p701, %s702, %s703
    %p707 = pneg %p701
    %p708 = scmp.eq.s32.totalorder %s68, 1
    %p709 = por %p707, %p708
    %p710 = scmp.ne.s32.totalorder %s702, %s705
    %p711 = scmp.eq.s32.totalorder %s68, 0
    %p712 = por %p710, %p711
    %p713 = scmp.ne.s32.totalorder %s702, %s705
    %p714 = scmp.eq.s32.totalorder %s73, 1
    %p715 = por %p713, %p714
    %p716 = scmp.ne.s32.totalorder %s705, %s706
    %p717 = scmp.eq.s32.totalorder %s73, 0
    %p718 = por %p716, %p717
    %p719 = scmp.ne.s32.totalorder %s705, %s706
    %p720 = scmp.eq.s32.totalorder %s74, 1
    %p721 = por %p719, %p720
    %p723 = scmp.ne.s32.totalorder %s706, %s722
    %p724 = scmp.eq.s32.totalorder %s74, 0
    %p725 = por %p723, %p724
    %p726 = scmp.le.s32.totalorder 1, %s68
    %p727 = scmp.lt.s32.totalorder %s68, 3
    %p728 = pnand %p726, %p727
    %p729 = pneg %p728
    // Predicated region
    $region9: #{forward.4} parent=5 // pred_check
      _
    $region10: #{forward.4} parent=5 // pred_check_branch
      %731 = sbr.rel (%p728) target = $region12
    $region11: #{forward.4} parent=5 // pred_region
      %s732 = ssub.s32 %s68, 1
      // Predicated region
      $region13: #{forward.4} parent=11 // pred_check
        %p733 = pneg %p115
      $region14: #{forward.4} parent=11 // pred_check_branch
        %735 = sbr.rel (%p733) target = $region16
      $region15: #{forward.4} parent=11 // pred_region
        _
      $region16: #{forward.4} parent=11 // pred_fallthru
        _
      // Predicated region
      $region17: #{forward.4} parent=11 // pred_check
        %p736 = pneg %p136
      $region18: #{forward.4} parent=11 // pred_check_branch
        %738 = sbr.rel (%p736) target = $region20
      $region19: #{forward.4} parent=11 // pred_region
        _
      $region20: #{forward.4} parent=11 // pred_fallthru
        _
      // Predicated region
      $region21: #{forward.4} parent=11 // pred_check
        %p739 = pneg %p157
      $region22: #{forward.4} parent=11 // pred_check_branch
        %741 = sbr.rel (%p739) target = $region24
      $region23: #{forward.4} parent=11 // pred_region
        _
      $region24: #{forward.4} parent=11 // pred_fallthru
        _
      // Predicated region
      $region25: #{forward.4} parent=11 // pred_check
        %p742 = pneg %p178
      $region26: #{forward.4} parent=11 // pred_check_branch
        %744 = sbr.rel (%p742) target = $region28
      $region27: #{forward.4} parent=11 // pred_region
        _
      $region28: #{forward.4} parent=11 // pred_fallthru
        _
      // Predicated region
      $region29: #{forward.4} parent=11 // pred_check
        %p745 = pneg %p199
      $region30: #{forward.4} parent=11 // pred_check_branch
        %747 = sbr.rel (%p745) target = $region32
      $region31: #{forward.4} parent=11 // pred_region
        _
      $region32: #{forward.4} parent=11 // pred_fallthru
        _
      // Predicated region
      $region33: #{forward.4} parent=11 // pred_check
        %p748 = pneg %p220
      $region34: #{forward.4} parent=11 // pred_check_branch
        %750 = sbr.rel (%p748) target = $region36
      $region35: #{forward.4} parent=11 // pred_region
        _
      $region36: #{forward.4} parent=11 // pred_fallthru
        _
      // Predicated region
      $region37: #{forward.4} parent=11 // pred_check
        %p751 = pneg %p241
      $region38: #{forward.4} parent=11 // pred_check_branch
        %753 = sbr.rel (%p751) target = $region40
      $region39: #{forward.4} parent=11 // pred_region
        _
      $region40: #{forward.4} parent=11 // pred_fallthru
        _
      // Predicated region
      $region41: #{forward.4} parent=11 // pred_check
        %p754 = pneg %p262
      $region42: #{forward.4} parent=11 // pred_check_branch
        %756 = sbr.rel (%p754) target = $region44
      $region43: #{forward.4} parent=11 // pred_region
        _
      $region44: #{forward.4} parent=11 // pred_fallthru
        _
      // Predicated region
      $region45: #{forward.4} parent=11 // pred_check
        %p757 = pneg %p283
      $region46: #{forward.4} parent=11 // pred_check_branch
        %759 = sbr.rel (%p757) target = $region48
      $region47: #{forward.4} parent=11 // pred_region
        _
      $region48: #{forward.4} parent=11 // pred_fallthru
        _
      // Predicated region
      $region49: #{forward.4} parent=11 // pred_check
        %p760 = pneg %p304
      $region50: #{forward.4} parent=11 // pred_check_branch
        %762 = sbr.rel (%p760) target = $region52
      $region51: #{forward.4} parent=11 // pred_region
        _
      $region52: #{forward.4} parent=11 // pred_fallthru
        _
      // Predicated region
      $region53: #{forward.4} parent=11 // pred_check
        %p763 = pneg %p325
      $region54: #{forward.4} parent=11 // pred_check_branch
        %765 = sbr.rel (%p763) target = $region56
      $region55: #{forward.4} parent=11 // pred_region
        _
      $region56: #{forward.4} parent=11 // pred_fallthru
        _
      // Predicated region
      $region57: #{forward.4} parent=11 // pred_check
        %p766 = pneg %p346
      $region58: #{forward.4} parent=11 // pred_check_branch
        %768 = sbr.rel (%p766) target = $region60
      $region59: #{forward.4} parent=11 // pred_region
        _
      $region60: #{forward.4} parent=11 // pred_fallthru
        _
      // Predicated region
      $region61: #{forward.4} parent=11 // pred_check
        %p769 = pneg %p367
      $region62: #{forward.4} parent=11 // pred_check_branch
        %771 = sbr.rel (%p769) target = $region64
      $region63: #{forward.4} parent=11 // pred_region
        _
      $region64: #{forward.4} parent=11 // pred_fallthru
        _
      // Predicated region
      $region65: #{forward.4} parent=11 // pred_check
        %p772 = pneg %p388
      $region66: #{forward.4} parent=11 // pred_check_branch
        %774 = sbr.rel (%p772) target = $region68
      $region67: #{forward.4} parent=11 // pred_region
        _
      $region68: #{forward.4} parent=11 // pred_fallthru
        _
      // Predicated region
      $region69: #{forward.4} parent=11 // pred_check
        %p775 = pneg %p409
      $region70: #{forward.4} parent=11 // pred_check_branch
        %777 = sbr.rel (%p775) target = $region72
      $region71: #{forward.4} parent=11 // pred_region
        _
      $region72: #{forward.4} parent=11 // pred_fallthru
        _
      // Predicated region
      $region73: #{forward.4} parent=11 // pred_check
        %p778 = pneg %p430
      $region74: #{forward.4} parent=11 // pred_check_branch
        %780 = sbr.rel (%p778) target = $region76
      $region75: #{forward.4} parent=11 // pred_region
        _
      $region76: #{forward.4} parent=11 // pred_fallthru
        _
      // Predicated region
      $region77: #{forward.4} parent=11 // pred_check
        %p781 = pneg %p451
      $region78: #{forward.4} parent=11 // pred_check_branch
        %783 = sbr.rel (%p781) target = $region80
      $region79: #{forward.4} parent=11 // pred_region
        _
      $region80: #{forward.4} parent=11 // pred_fallthru
        _
      // Predicated region
      $region81: #{forward.4} parent=11 // pred_check
        %p784 = pneg %p472
      $region82: #{forward.4} parent=11 // pred_check_branch
        %786 = sbr.rel (%p784) target = $region84
      $region83: #{forward.4} parent=11 // pred_region
        _
      $region84: #{forward.4} parent=11 // pred_fallthru
        _
      // Predicated region
      $region85: #{forward.4} parent=11 // pred_check
        %p787 = pneg %p493
      $region86: #{forward.4} parent=11 // pred_check_branch
        %789 = sbr.rel (%p787) target = $region88
      $region87: #{forward.4} parent=11 // pred_region
        _
      $region88: #{forward.4} parent=11 // pred_fallthru
        _
      // Predicated region
      $region89: #{forward.4} parent=11 // pred_check
        %p790 = pneg %p514
      $region90: #{forward.4} parent=11 // pred_check_branch
        %792 = sbr.rel (%p790) target = $region92
      $region91: #{forward.4} parent=11 // pred_region
        _
      $region92: #{forward.4} parent=11 // pred_fallthru
        _
      // Predicated region
      $region93: #{forward.4} parent=11 // pred_check
        %p793 = pneg %p535
      $region94: #{forward.4} parent=11 // pred_check_branch
        %795 = sbr.rel (%p793) target = $region96
      $region95: #{forward.4} parent=11 // pred_region
        _
      $region96: #{forward.4} parent=11 // pred_fallthru
        _
      // Predicated region
      $region97: #{forward.4} parent=11 // pred_check
        %p796 = pneg %p556
      $region98: #{forward.4} parent=11 // pred_check_branch
        %798 = sbr.rel (%p796) target = $region100
      $region99: #{forward.4} parent=11 // pred_region
        _
      $region100: #{forward.4} parent=11 // pred_fallthru
        _
      // Predicated region
      $region101: #{forward.4} parent=11 // pred_check
        %p799 = pneg %p577
      $region102: #{forward.4} parent=11 // pred_check_branch
        %801 = sbr.rel (%p799) target = $region104
      $region103: #{forward.4} parent=11 // pred_region
        _
      $region104: #{forward.4} parent=11 // pred_fallthru
        _
      // Predicated region
      $region105: #{forward.4} parent=11 // pred_check
        %p802 = pneg %p598
      $region106: #{forward.4} parent=11 // pred_check_branch
        %804 = sbr.rel (%p802) target = $region108
      $region107: #{forward.4} parent=11 // pred_region
        _
      $region108: #{forward.4} parent=11 // pred_fallthru
        _
      // Predicated region
      $region109: #{forward.4} parent=11 // pred_check
        %p805 = pneg %p619
      $region110: #{forward.4} parent=11 // pred_check_branch
        %807 = sbr.rel (%p805) target = $region112
      $region111: #{forward.4} parent=11 // pred_region
        _
      $region112: #{forward.4} parent=11 // pred_fallthru
        _
      // Predicated region
      $region113: #{forward.4} parent=11 // pred_check
        %p808 = pneg %p640
      $region114: #{forward.4} parent=11 // pred_check_branch
        %810 = sbr.rel (%p808) target = $region116
      $region115: #{forward.4} parent=11 // pred_region
        _
      $region116: #{forward.4} parent=11 // pred_fallthru
        _
    $region12: #{forward.4} parent=5 // pred_fallthru
      _
    %p811 = scmp.lt.s32.totalorder %s68, 2
    // Predicated region
    $region117: #{forward.4} parent=5 // pred_check
      %p812 = pneg %p811
    $region118: #{forward.4} parent=5 // pred_check_branch
      %814 = sbr.rel (%p812) target = $region120
    $region119: #{forward.4} parent=5 // pred_region
      // Predicated region
      $region121: #{forward.4} parent=119 // pred_check
        %p815 = pneg %p88
      $region122: #{forward.4} parent=119 // pred_check_branch
        %817 = sbr.rel (%p815) target = $region124
      $region123: #{forward.4} parent=119 // pred_region
        %p818 = scmp.lt.s32.totalorder %s68, 1
        %s819 = scalar_select %p818, %s68, 1
        %s820 = smul.addr %s819, 3
        %s821 = smul.addr %s820, 8
        %s822 = scalar_lea.vmem %s1, %s821
      $region124: #{forward.4} parent=119 // pred_fallthru
        _
    $region120: #{forward.4} parent=5 // pred_fallthru
      _
    %p823 = scmp.le.s32.totalorder 1, %s68
    %p824 = scmp.lt.s32.totalorder %s68, 3
    %p825 = pnand %p823, %p824
    %p826 = pneg %p825
    // Predicated region
    $region125: #{forward.4} parent=5 // pred_check
      _
    $region126: #{forward.4} parent=5 // pred_check_branch
      %828 = sbr.rel (%p825) target = $region128
    $region127: #{forward.4} parent=5 // pred_region
      %s829 = ssub.s32 %s68, 1
      %p830 = scmp.lt.s32.totalorder %s73, 1
      %s831 = scalar_select %p830, %s73, 1
      %s832 = smul.addr %s831, 3
      %s833 = smul.addr %s832, 8
      %s834 = scalar_lea.vmem %s1, %s833
      %p835 = pneg %p94
      %p836 = pneg %p91
      %p837 = pneg %p115
      %p838 = pneg %p112
      %p839 = pneg %p136
      %p840 = pneg %p133
      %p841 = pneg %p157
      %p842 = pneg %p154
      %p843 = pneg %p178
      %p844 = pneg %p175
      %p845 = pneg %p199
      %p846 = pneg %p196
      %p847 = pneg %p220
      %p848 = pneg %p217
      %p849 = pneg %p241
      %p850 = pneg %p238
      %p851 = pneg %p262
      %p852 = pneg %p259
      %p853 = pneg %p283
      %p854 = pneg %p280
      %p855 = pneg %p304
      %p856 = pneg %p301
      %p857 = pneg %p325
      %p858 = pneg %p322
      %p859 = pneg %p346
      %p860 = pneg %p343
      %p861 = pneg %p367
      %p862 = pneg %p364
      %p863 = pneg %p388
      %p864 = pneg %p385
      %p865 = pneg %p409
      %p866 = pneg %p406
      %p867 = pneg %p430
      %p868 = pneg %p427
      %p869 = pneg %p451
      %p870 = pneg %p448
      %p871 = pneg %p472
      %p872 = pneg %p469
      %p873 = pneg %p493
      %p874 = pneg %p490
      %p875 = pneg %p514
      %p876 = pneg %p511
      %p877 = pneg %p535
      %p878 = pneg %p532
      %p879 = pneg %p556
      %p880 = pneg %p553
      %p881 = pneg %p577
      %p882 = pneg %p574
      %p883 = pneg %p598
      %p884 = pneg %p595
      %p885 = pneg %p619
      %p886 = pneg %p616
      %p887 = pneg %p640
      %p888 = pneg %p637
      %p889 = pneg %p666
      %p890 = pneg %p663
      %p891 = scmp.lt.s32.totalorder %s73, 1
      %s892 = scalar_select %p891, %s73, 1
      %s893 = smul.addr %s892, 3
      %s894 = smul.addr %s893, 8
      %s895 = scalar_lea.vmem %s55, %s894
      %p896 = pneg %p692
      %p897 = pneg %p689
      %p898 = scmp.lt.s32.totalorder %s73, 1
      %s899 = scalar_select %p898, %s73, 1
      %s900 = smul.addr %s899, 3
      %s901 = smul.addr %s900, 8
      %s902 = scalar_lea.vmem %s57, %s901
      %p903 = pneg %p718
      %p904 = pneg %p715
      %p905 = scmp.lt.s32.totalorder %s73, 1
      %s906 = scalar_select %p905, %s73, 1
      %s907 = smul.addr %s906, 3
      %s908 = smul.addr %s907, 8
      %s909 = scalar_lea.vmem %s59, %s908
      %p910 = scmp.lt.s32.totalorder %s73, 1
      %s911 = scalar_select %p910, %s73, 1
      %s912 = smul.addr %s911, 3
      %s913 = smul.addr %s912, 8
      %s914 = scalar_lea.vmem %s1, %s913
      %p915 = scmp.lt.s32.totalorder %s73, 1
      %s916 = scalar_select %p915, %s73, 1
      %s917 = smul.addr %s916, 3
      %s918 = smul.addr %s917, 8
      %s919 = scalar_lea.vmem %s55, %s918
      %p920 = scmp.lt.s32.totalorder %s73, 1
      %s921 = scalar_select %p920, %s73, 1
      %s922 = smul.addr %s921, 3
      %s923 = smul.addr %s922, 8
      %s924 = scalar_lea.vmem %s57, %s923
      %p925 = scmp.lt.s32.totalorder %s73, 1
      %s926 = scalar_select %p925, %s73, 1
      %s927 = smul.addr %s926, 3
      %s928 = smul.addr %s927, 8
      %s929 = scalar_lea.vmem %s59, %s928
      %v931 = vld [vmem:[%s914] sm:$0xff]
      %v932 = vld [vmem:[%s914 + $0x8] sm:$0xff]
      %v933 = vld [vmem:[%s914 + $0x10] sm:$0xff]
      %v934 = vld [vmem:[%s3] sm:$0x1]
      %v935 = vld [vmem:[%s5] sm:$0x1]
      %936 = vadd.xlane.f32.xlu0 %v931
      %v937 = vpop.xlane.xlu0 %936
      %938 = vadd.xlane.f32.xlu0 %v932
      %v939 = vpop.xlane.xlu0 %938
      %940 = vadd.xlane.f32.xlu0 %v933
      %v941 = vpop.xlane.xlu0 %940
      %v942 = vrcp.pop 128.0
      %v943 = vmul.f32 128.0, %v942
      %v944 = vsub.f32 1.0, %v943
      %v945 = vmul.f32 %v942, %v944
      %v946 = vadd.f32 %v942, %v945
      %vm947 = vweird.f32 %v942
      %v948 = vsel %vm947, %v942, %v946
      %v949 = vmul.f32 %v937, %v948
      %v950 = vmul.f32 %v939, %v948
      %v951 = vmul.f32 %v941, %v948
      %v952 = vsub.f32 %v931, %v949
      %v953 = vsub.f32 %v932, %v950
      %v954 = vsub.f32 %v933, %v951
      %v955 = vmul.f32 %v952, %v952
      %v956 = vmul.f32 %v953, %v953
      %v957 = vmul.f32 %v954, %v954
      %958 = vadd.xlane.f32.xlu0 %v955
      %v959 = vpop.xlane.xlu0 %958
      %960 = vadd.xlane.f32.xlu0 %v956
      %v961 = vpop.xlane.xlu0 %960
      %962 = vadd.xlane.f32.xlu0 %v957
      %v963 = vpop.xlane.xlu0 %962
      %v964 = vmul.f32 %v959, %v948
      %v965 = vmul.f32 %v961, %v948
      %v966 = vmul.f32 %v963, %v948
      %v967 = vadd.f32 %v964, 1e-06
      %v968 = vadd.f32 %v965, 1e-06
      %v969 = vadd.f32 %v966, 1e-06
      %v970 = vrsqrt.pop %v967
      %v971 = vmul.f32 %v970, %v967
      %v972 = vmul.f32 %v971, %v970
      %v973 = vmul.f32 0.5, %v972
      %v974 = vsub.f32 1.5, %v973
      %v975 = vmul.f32 %v970, %v974
      %vm976 = vweird.f32 %v967
      %vm977 = vweird.f32 %v970
      %vm978 = vmor %vm976, %vm977
      %v979 = vsel %vm978, %v970, %v975
      %v980 = vrsqrt.pop %v968
      %v981 = vmul.f32 %v980, %v968
      %v982 = vmul.f32 %v981, %v980
      %v983 = vmul.f32 0.5, %v982
      %v984 = vsub.f32 1.5, %v983
      %v985 = vmul.f32 %v980, %v984
      %vm986 = vweird.f32 %v968
      %vm987 = vweird.f32 %v980
      %vm988 = vmor %vm986, %vm987
      %v989 = vsel %vm988, %v980, %v985
      %v990 = vrsqrt.pop %v969
      %v991 = vmul.f32 %v990, %v969
      %v992 = vmul.f32 %v991, %v990
      %v993 = vmul.f32 0.5, %v992
      %v994 = vsub.f32 1.5, %v993
      %v995 = vmul.f32 %v990, %v994
      %vm996 = vweird.f32 %v969
      %vm997 = vweird.f32 %v990
      %vm998 = vmor %vm996, %vm997
      %v999 = vsel %vm998, %v990, %v995
      %v1000 = vmul.f32 %v952, %v979
      %v1001 = vmul.f32 %v953, %v989
      %v1002 = vmul.f32 %v954, %v999
      %v1004 = vperm.slane %v934, 0
      %v1006 = vmul.f32 %v1000, %v1004
      %v1007 = vmul.f32 %v1001, %v1004
      %v1008 = vmul.f32 %v1002, %v1004
      %v1010 = vperm.slane %v935, 0
      %v1012 = vadd.f32 %v1006, %v1010
      %v1013 = vadd.f32 %v1007, %v1010
      %v1014 = vadd.f32 %v1008, %v1010
      %v1015 = vpack.c.bf16 %v1013, %v1012
      %v1016 = vpack.c.bf16 %v1014, %v1014
      %v1017 = vlaneseq
      %v1018 = vand.u32 %v1017, 127
      %vm1019 = vcmp.lt.s32.totalorder %v1018, 17
      %v1020 = vld [vmem:[%s7] sm:$0xf]
      %v1021 = vld [vmem:[%s7 + $0x4] sm:$0xf]
      %v1022 = vld [vmem:[%s7 + $0x8] sm:$0xf]
      %v1023 = vld [vmem:[%s7 + $0xc] sm:$0xf]
      %v1024 = vld [vmem:[%s7 + $0x10] sm:$0xf]
      %v1025 = vld [vmem:[%s7 + $0x14] sm:$0xf]
      %v1026 = vld [vmem:[%s7 + $0x18] sm:$0xf]
      %v1027 = vld [vmem:[%s7 + $0x1c] sm:$0xf]
      %v1028 = vld [vmem:[%s7 + $0x20] sm:$0xf]
      %v1029 = vld [vmem:[%s7 + $0x24] sm:$0xf]
      %v1030 = vld [vmem:[%s7 + $0x28] sm:$0xf]
      %v1031 = vld [vmem:[%s7 + $0x2c] sm:$0xf]
      %v1032 = vld [vmem:[%s7 + $0x30] sm:$0xf]
      %v1033 = vld [vmem:[%s7 + $0x34] sm:$0xf]
      %v1034 = vld [vmem:[%s7 + $0x38] sm:$0xf]
      %v1035 = vld [vmem:[%s7 + $0x3c] sm:$0xf]
      %v1036 = vld [vmem:[%s13] sm:$0x1]
      %v1038 = vperm.slane %v1036, 0
      %v1056 = vunpack.c.l.b16 %v1020
      %v1057 = vunpack.c.l.b16 %v1021
      %v1058 = vunpack.c.l.b16 %v1022
      %v1059 = vunpack.c.l.b16 %v1023
      %v1060 = vunpack.c.l.b16 %v1024
      %v1061 = vunpack.c.l.b16 %v1025
      %v1062 = vunpack.c.l.b16 %v1026
      %v1063 = vunpack.c.l.b16 %v1027
      %v1064 = vunpack.c.l.b16 %v1028
      %v1065 = vunpack.c.l.b16 %v1029
      %v1066 = vunpack.c.l.b16 %v1030
      %v1067 = vunpack.c.l.b16 %v1031
      %v1068 = vunpack.c.l.b16 %v1032
      %v1069 = vunpack.c.l.b16 %v1033
      %v1070 = vunpack.c.l.b16 %v1034
      %v1071 = vunpack.c.l.b16 %v1035
      %v1072 = vpack.c.b16 %v1057, %v1056
      %v1073 = vpack.c.b16 %v1059, %v1058
      %v1074 = vpack.c.b16 %v1061, %v1060
      %v1075 = vpack.c.b16 %v1063, %v1062
      %v1076 = vpack.c.b16 %v1065, %v1064
      %v1077 = vpack.c.b16 %v1067, %v1066
      %v1078 = vpack.c.b16 %v1069, %v1068
      %v1079 = vpack.c.b16 %v1071, %v1070
      %1088 = vmatpush.bf16.msra.mxu0 %v1079
      %1089 = vmatpush.bf16.msra.mxu0 %v1078
      %1090 = vmatpush.bf16.msra.mxu0 %v1077
      %1091 = vmatpush.bf16.msra.mxu0 %v1076
      %1092 = vmatpush.bf16.msra.mxu0 %v1075
      %1093 = vmatpush.bf16.msra.mxu0 %v1074
      %1094 = vmatpush.bf16.msra.mxu0 %v1073
      %1095 = vmatpush.bf16.msra.mxu0 %v1072
      %1096 = vmatmul.bf16.gmra.mxu0 %v1015
      %v1097 = vpop.f32.mrf.mxu0
      %v1098 = vadd.f32 %v1038, %v1097
      %v1099 = vpop.f32.mrf.mxu0
      %v1100 = vadd.f32 %v1038, %v1099
      %1101 = vmatmul.bf16.gmra.mxu0 %v1016
      %v1102 = vpop.f32.mrf.mxu0
      %v1103 = vadd.f32 %v1038, %v1102
      %v1104 = vpop.f32.mrf.mxu0
      %1105 = vdwg.mxu0
      %v1106 = vld [vmem:[%s9] sm:$0xf]
      %v1107 = vld [vmem:[%s9 + $0x4] sm:$0xf]
      %v1108 = vld [vmem:[%s9 + $0x8] sm:$0xf]
      %v1109 = vld [vmem:[%s9 + $0xc] sm:$0xf]
      %v1110 = vld [vmem:[%s9 + $0x10] sm:$0xf]
      %v1111 = vld [vmem:[%s9 + $0x14] sm:$0xf]
      %v1112 = vld [vmem:[%s9 + $0x18] sm:$0xf]
      %v1113 = vld [vmem:[%s9 + $0x1c] sm:$0xf]
      %v1114 = vld [vmem:[%s9 + $0x20] sm:$0xf]
      %v1115 = vld [vmem:[%s9 + $0x24] sm:$0xf]
      %v1116 = vld [vmem:[%s9 + $0x28] sm:$0xf]
      %v1117 = vld [vmem:[%s9 + $0x2c] sm:$0xf]
      %v1118 = vld [vmem:[%s9 + $0x30] sm:$0xf]
      %v1119 = vld [vmem:[%s9 + $0x34] sm:$0xf]
      %v1120 = vld [vmem:[%s9 + $0x38] sm:$0xf]
      %v1121 = vld [vmem:[%s9 + $0x3c] sm:$0xf]
      %v1122 = vld [vmem:[%s15] sm:$0x1]
      %v1124 = vperm.slane %v1122, 0
      %v1142 = vunpack.c.l.b16 %v1106
      %v1143 = vunpack.c.l.b16 %v1107
      %v1144 = vunpack.c.l.b16 %v1108
      %v1145 = vunpack.c.l.b16 %v1109
      %v1146 = vunpack.c.l.b16 %v1110
      %v1147 = vunpack.c.l.b16 %v1111
      %v1148 = vunpack.c.l.b16 %v1112
      %v1149 = vunpack.c.l.b16 %v1113
      %v1150 = vunpack.c.l.b16 %v1114
      %v1151 = vunpack.c.l.b16 %v1115
      %v1152 = vunpack.c.l.b16 %v1116
      %v1153 = vunpack.c.l.b16 %v1117
      %v1154 = vunpack.c.l.b16 %v1118
      %v1155 = vunpack.c.l.b16 %v1119
      %v1156 = vunpack.c.l.b16 %v1120
      %v1157 = vunpack.c.l.b16 %v1121
      %v1158 = vpack.c.b16 %v1143, %v1142
      %v1159 = vpack.c.b16 %v1145, %v1144
      %v1160 = vpack.c.b16 %v1147, %v1146
      %v1161 = vpack.c.b16 %v1149, %v1148
      %v1162 = vpack.c.b16 %v1151, %v1150
      %v1163 = vpack.c.b16 %v1153, %v1152
      %v1164 = vpack.c.b16 %v1155, %v1154
      %v1165 = vpack.c.b16 %v1157, %v1156
      %1174 = vmatpush.bf16.msra.mxu0 %v1165
      %1175 = vmatpush.bf16.msra.mxu0 %v1164
      %1176 = vmatpush.bf16.msra.mxu0 %v1163
      %1177 = vmatpush.bf16.msra.mxu0 %v1162
      %1178 = vmatpush.bf16.msra.mxu0 %v1161
      %1179 = vmatpush.bf16.msra.mxu0 %v1160
      %1180 = vmatpush.bf16.msra.mxu0 %v1159
      %1181 = vmatpush.bf16.msra.mxu0 %v1158
      %1182 = vmatmul.bf16.gmra.mxu0 %v1015
      %v1183 = vpop.f32.mrf.mxu0
      %v1184 = vadd.f32 %v1124, %v1183
      %v1185 = vpop.f32.mrf.mxu0
      %v1186 = vadd.f32 %v1124, %v1185
      %1187 = vmatmul.bf16.gmra.mxu0 %v1016
      %v1188 = vpop.f32.mrf.mxu0
      %v1189 = vadd.f32 %v1124, %v1188
      %v1190 = vpop.f32.mrf.mxu0
      %1191 = vdwg.mxu0
      %v1192 = vld [vmem:[%s11] sm:$0xf]
      %v1193 = vld [vmem:[%s11 + $0x4] sm:$0xf]
      %v1194 = vld [vmem:[%s11 + $0x8] sm:$0xf]
      %v1195 = vld [vmem:[%s11 + $0xc] sm:$0xf]
      %v1196 = vld [vmem:[%s11 + $0x10] sm:$0xf]
      %v1197 = vld [vmem:[%s11 + $0x14] sm:$0xf]
      %v1198 = vld [vmem:[%s11 + $0x18] sm:$0xf]
      %v1199 = vld [vmem:[%s11 + $0x1c] sm:$0xf]
      %v1200 = vld [vmem:[%s11 + $0x20] sm:$0xf]
      %v1201 = vld [vmem:[%s11 + $0x24] sm:$0xf]
      %v1202 = vld [vmem:[%s11 + $0x28] sm:$0xf]
      %v1203 = vld [vmem:[%s11 + $0x2c] sm:$0xf]
      %v1204 = vld [vmem:[%s11 + $0x30] sm:$0xf]
      %v1205 = vld [vmem:[%s11 + $0x34] sm:$0xf]
      %v1206 = vld [vmem:[%s11 + $0x38] sm:$0xf]
      %v1207 = vld [vmem:[%s11 + $0x3c] sm:$0xf]
      %v1208 = vld [vmem:[%s17] sm:$0x1]
      %v1210 = vperm.slane %v1208, 0
      %v1228 = vunpack.c.l.b16 %v1192
      %v1229 = vunpack.c.l.b16 %v1193
      %v1230 = vunpack.c.l.b16 %v1194
      %v1231 = vunpack.c.l.b16 %v1195
      %v1232 = vunpack.c.l.b16 %v1196
      %v1233 = vunpack.c.l.b16 %v1197
      %v1234 = vunpack.c.l.b16 %v1198
      %v1235 = vunpack.c.l.b16 %v1199
      %v1236 = vunpack.c.l.b16 %v1200
      %v1237 = vunpack.c.l.b16 %v1201
      %v1238 = vunpack.c.l.b16 %v1202
      %v1239 = vunpack.c.l.b16 %v1203
      %v1240 = vunpack.c.l.b16 %v1204
      %v1241 = vunpack.c.l.b16 %v1205
      %v1242 = vunpack.c.l.b16 %v1206
      %v1243 = vunpack.c.l.b16 %v1207
      %v1244 = vpack.c.b16 %v1229, %v1228
      %v1245 = vpack.c.b16 %v1231, %v1230
      %v1246 = vpack.c.b16 %v1233, %v1232
      %v1247 = vpack.c.b16 %v1235, %v1234
      %v1248 = vpack.c.b16 %v1237, %v1236
      %v1249 = vpack.c.b16 %v1239, %v1238
      %v1250 = vpack.c.b16 %v1241, %v1240
      %v1251 = vpack.c.b16 %v1243, %v1242
      %1260 = vmatpush.bf16.msra.mxu0 %v1251
      %1261 = vmatpush.bf16.msra.mxu0 %v1250
      %1262 = vmatpush.bf16.msra.mxu0 %v1249
      %1263 = vmatpush.bf16.msra.mxu0 %v1248
      %1264 = vmatpush.bf16.msra.mxu0 %v1247
      %1265 = vmatpush.bf16.msra.mxu0 %v1246
      %1266 = vmatpush.bf16.msra.mxu0 %v1245
      %1267 = vmatpush.bf16.msra.mxu0 %v1244
      %1268 = vmatmul.bf16.gmra.mxu0 %v1015
      %v1269 = vpop.f32.mrf.mxu0
      %v1270 = vadd.f32 %v1210, %v1269
      %v1271 = vpop.f32.mrf.mxu0
      %v1272 = vadd.f32 %v1210, %v1271
      %1273 = vmatmul.bf16.gmra.mxu0 %v1016
      %v1274 = vpop.f32.mrf.mxu0
      %v1275 = vadd.f32 %v1210, %v1274
      %v1276 = vpop.f32.mrf.mxu0
      %1277 = vdwg.mxu0
      %v1278 = vpack.c.bf16 %v1100, %v1098
      %v1279 = vpack.c.bf16 %v1103, %v1103
      %v1280 = vpack.c.bf16 %v1186, %v1184
      %v1281 = vpack.c.bf16 %v1189, %v1189
      %vm1282 = vcmask 261120
      %v1284 = vsel %vm1282, %v1278, 0
      %v1287 = vsel %vm1282, %v1279, 0
      %v1290 = vsel %vm1282, %v1280, 0
      %v1293 = vsel %vm1282, %v1281, 0
      %1295 = vmatpush.bf16.xpose.msra.mxu0 0
      %1296 = vmatpush.bf16.xpose.msra.mxu0 0
      %1297 = vmatpush.bf16.xpose.msra.mxu0 0
      %1298 = vmatpush.bf16.xpose.msra.mxu0 0
      %1299 = vmatpush.bf16.xpose.msra.mxu0 0
      %1300 = vmatpush.bf16.xpose.msra.mxu0 0
      %1301 = vmatpush.bf16.xpose.msra.mxu0 %v1293
      %1302 = vmatpush.bf16.xpose.msra.mxu0 %v1290
      %1303 = vmatmul.bf16.gmra.mxu0 %v1284
      %v1304 = vpop.f32.mrf.mxu0
      %v1305 = vadd.f32 0.0, %v1304
      %v1306 = vpop.f32.mrf.mxu0
      %v1307 = vadd.f32 0.0, %v1306
      %1308 = vmatmul.bf16.gmra.mxu0 %v1287
      %v1309 = vpop.f32.mrf.mxu0
      %v1310 = vadd.f32 0.0, %v1309
      %v1311 = vpop.f32.mrf.mxu0
      %1312 = vdwg.mxu0
      %v1313 = vmul.f32 %v1305, 0.17677669
      %v1314 = vmul.f32 %v1307, 0.17677669
      %v1315 = vmul.f32 %v1310, 0.17677669
      %v1316 = vsel %vm1019, %v1313, -1e+30
      %v1317 = vsel %vm1019, %v1314, -1e+30
      %v1318 = vsel %vm1019, %v1315, -1e+30
      %vm1319 = vcmask 195584
      %v1320 = vsel %vm1319, %v1316, -inf
      %1321 = vmax.xlane.f32.xlu0 %v1320
      %v1322 = vpop.xlane.xlu0 %1321
      %v1323 = vsel %vm1319, %v1317, -inf
      %1324 = vmax.xlane.f32.xlu0 %v1323
      %v1325 = vpop.xlane.xlu0 %1324
      %v1326 = vsel %vm1319, %v1318, -inf
      %1327 = vmax.xlane.f32.xlu0 %v1326
      %v1328 = vpop.xlane.xlu0 %1327
      %v1329 = vsub.f32 %v1316, %v1322
      %v1330 = vsub.f32 %v1317, %v1325
      %v1331 = vsub.f32 %v1318, %v1328
      %v1332 = vmul.f32 %v1329, 1.442695
      %v1333 = vpow.pop %v1332
      %v1334 = vmul.f32 %v1330, 1.442695
      %v1335 = vpow.pop %v1334
      %v1336 = vmul.f32 %v1331, 1.442695
      %v1337 = vpow.pop %v1336
      %v1338 = vsel %vm1319, %v1333, 0.0
      %1339 = vadd.xlane.f32.xlu0 %v1338
      %v1340 = vpop.xlane.xlu0 %1339
      %v1341 = vsel %vm1319, %v1335, 0.0
      %1342 = vadd.xlane.f32.xlu0 %v1341
      %v1343 = vpop.xlane.xlu0 %1342
      %v1344 = vsel %vm1319, %v1337, 0.0
      %1345 = vadd.xlane.f32.xlu0 %v1344
      %v1346 = vpop.xlane.xlu0 %1345
      %v1347 = vrcp.pop %v1340
      %v1348 = vrcp.pop %v1343
      %v1349 = vrcp.pop %v1346
      %v1350 = vmul.f32 %v1333, %v1347
      %v1351 = vmul.f32 %v1335, %v1348
      %v1352 = vmul.f32 %v1337, %v1349
      %v1353 = vpack.c.bf16 %v1351, %v1350
      %v1354 = vpack.c.bf16 %v1352, %v1352
      %v1355 = vpack.c.bf16 %v1272, %v1270
      %v1356 = vpack.c.bf16 %v1275, %v1275
      %v1358 = vsel %vm1319, %v1353, 0
      %v1361 = vsel %vm1319, %v1354, 0
      %vm1363 = vcmask 1043456
      %v1365 = vsel %vm1363, %v1356, 0
      %1367 = vmatpush.bf16.msra.mxu0 0
      %1368 = vmatpush.bf16.msra.mxu0 0
      %1369 = vmatpush.bf16.msra.mxu0 0
      %1370 = vmatpush.bf16.msra.mxu0 0
      %1371 = vmatpush.bf16.msra.mxu0 0
      %1372 = vmatpush.bf16.msra.mxu0 0
      %1373 = vmatpush.bf16.msra.mxu0 %v1365
      %1374 = vmatpush.bf16.msra.mxu0 %v1355
      %1375 = vmatmul.bf16.gmra.mxu0 %v1358
      %v1376 = vpop.f32.mrf.mxu0
      %v1377 = vadd.f32 0.0, %v1376
      %v1378 = vpop.f32.mrf.mxu0
      %v1379 = vadd.f32 0.0, %v1378
      %1380 = vmatmul.bf16.gmra.mxu0 %v1361
      %v1381 = vpop.f32.mrf.mxu0
      %v1382 = vadd.f32 0.0, %v1381
      %v1383 = vpop.f32.mrf.mxu0
      %1384 = vdwg.mxu0
      %v1385 = vpack.c.bf16 %v1379, %v1377
      %v1386 = vpack.c.bf16 %v1382, %v1382
      %v1387 = vld [vmem:[%s19] sm:$0xf]
      %v1388 = vld [vmem:[%s19 + $0x4] sm:$0xf]
      %v1389 = vld [vmem:[%s19 + $0x8] sm:$0xf]
      %v1390 = vld [vmem:[%s19 + $0xc] sm:$0xf]
      %s1391 = scalar_lea.vmem %s7, 64
      %v1392 = vld [vmem:[%s1391] sm:$0xf]
      %v1393 = vld [vmem:[%s1391 + $0x4] sm:$0xf]
      %v1394 = vld [vmem:[%s1391 + $0x8] sm:$0xf]
      %v1395 = vld [vmem:[%s1391 + $0xc] sm:$0xf]
      %v1396 = vld [vmem:[%s1391 + $0x10] sm:$0xf]
      %v1397 = vld [vmem:[%s1391 + $0x14] sm:$0xf]
      %v1398 = vld [vmem:[%s1391 + $0x18] sm:$0xf]
      %v1399 = vld [vmem:[%s1391 + $0x1c] sm:$0xf]
      %v1400 = vld [vmem:[%s1391 + $0x20] sm:$0xf]
      %v1401 = vld [vmem:[%s1391 + $0x24] sm:$0xf]
      %v1402 = vld [vmem:[%s1391 + $0x28] sm:$0xf]
      %v1403 = vld [vmem:[%s1391 + $0x2c] sm:$0xf]
      %v1404 = vld [vmem:[%s1391 + $0x30] sm:$0xf]
      %v1405 = vld [vmem:[%s1391 + $0x34] sm:$0xf]
      %v1406 = vld [vmem:[%s1391 + $0x38] sm:$0xf]
      %v1407 = vld [vmem:[%s1391 + $0x3c] sm:$0xf]
      %s1408 = scalar_lea.vmem %s13, 1
      %v1409 = vld [vmem:[%s1408] sm:$0x1]
      %v1411 = vperm.slane %v1409, 0
      %v1429 = vunpack.c.l.b16 %v1392
      %v1430 = vunpack.c.l.b16 %v1393
      %v1431 = vunpack.c.l.b16 %v1394
      %v1432 = vunpack.c.l.b16 %v1395
      %v1433 = vunpack.c.l.b16 %v1396
      %v1434 = vunpack.c.l.b16 %v1397
      %v1435 = vunpack.c.l.b16 %v1398
      %v1436 = vunpack.c.l.b16 %v1399
      %v1437 = vunpack.c.l.b16 %v1400
      %v1438 = vunpack.c.l.b16 %v1401
      %v1439 = vunpack.c.l.b16 %v1402
      %v1440 = vunpack.c.l.b16 %v1403
      %v1441 = vunpack.c.l.b16 %v1404
      %v1442 = vunpack.c.l.b16 %v1405
      %v1443 = vunpack.c.l.b16 %v1406
      %v1444 = vunpack.c.l.b16 %v1407
      %v1445 = vpack.c.b16 %v1430, %v1429
      %v1446 = vpack.c.b16 %v1432, %v1431
      %v1447 = vpack.c.b16 %v1434, %v1433
      %v1448 = vpack.c.b16 %v1436, %v1435
      %v1449 = vpack.c.b16 %v1438, %v1437
      %v1450 = vpack.c.b16 %v1440, %v1439
      %v1451 = vpack.c.b16 %v1442, %v1441
      %v1452 = vpack.c.b16 %v1444, %v1443
      %1461 = vmatpush.bf16.msra.mxu0 %v1452
      %1462 = vmatpush.bf16.msra.mxu0 %v1451
      %1463 = vmatpush.bf16.msra.mxu0 %v1450
      %1464 = vmatpush.bf16.msra.mxu0 %v1449
      %1465 = vmatpush.bf16.msra.mxu0 %v1448
      %1466 = vmatpush.bf16.msra.mxu0 %v1447
      %1467 = vmatpush.bf16.msra.mxu0 %v1446
      %1468 = vmatpush.bf16.msra.mxu0 %v1445
      %1469 = vmatmul.bf16.gmra.mxu0 %v1015
      %v1470 = vpop.f32.mrf.mxu0
      %v1471 = vadd.f32 %v1411, %v1470
      %v1472 = vpop.f32.mrf.mxu0
      %v1473 = vadd.f32 %v1411, %v1472
      %1474 = vmatmul.bf16.gmra.mxu0 %v1016
      %v1475 = vpop.f32.mrf.mxu0
      %v1476 = vadd.f32 %v1411, %v1475
      %v1477 = vpop.f32.mrf.mxu0
      %1478 = vdwg.mxu0
      %s1479 = scalar_lea.vmem %s9, 64
      %v1480 = vld [vmem:[%s1479] sm:$0xf]
      %v1481 = vld [vmem:[%s1479 + $0x4] sm:$0xf]
      %v1482 = vld [vmem:[%s1479 + $0x8] sm:$0xf]
      %v1483 = vld [vmem:[%s1479 + $0xc] sm:$0xf]
      %v1484 = vld [vmem:[%s1479 + $0x10] sm:$0xf]
      %v1485 = vld [vmem:[%s1479 + $0x14] sm:$0xf]
      %v1486 = vld [vmem:[%s1479 + $0x18] sm:$0xf]
      %v1487 = vld [vmem:[%s1479 + $0x1c] sm:$0xf]
      %v1488 = vld [vmem:[%s1479 + $0x20] sm:$0xf]
      %v1489 = vld [vmem:[%s1479 + $0x24] sm:$0xf]
      %v1490 = vld [vmem:[%s1479 + $0x28] sm:$0xf]
      %v1491 = vld [vmem:[%s1479 + $0x2c] sm:$0xf]
      %v1492 = vld [vmem:[%s1479 + $0x30] sm:$0xf]
      %v1493 = vld [vmem:[%s1479 + $0x34] sm:$0xf]
      %v1494 = vld [vmem:[%s1479 + $0x38] sm:$0xf]
      %v1495 = vld [vmem:[%s1479 + $0x3c] sm:$0xf]
      %s1496 = scalar_lea.vmem %s15, 1
      %v1497 = vld [vmem:[%s1496] sm:$0x1]
      %v1499 = vperm.slane %v1497, 0
      %v1517 = vunpack.c.l.b16 %v1480
      %v1518 = vunpack.c.l.b16 %v1481
      %v1519 = vunpack.c.l.b16 %v1482
      %v1520 = vunpack.c.l.b16 %v1483
      %v1521 = vunpack.c.l.b16 %v1484
      %v1522 = vunpack.c.l.b16 %v1485
      %v1523 = vunpack.c.l.b16 %v1486
      %v1524 = vunpack.c.l.b16 %v1487
      %v1525 = vunpack.c.l.b16 %v1488
      %v1526 = vunpack.c.l.b16 %v1489
      %v1527 = vunpack.c.l.b16 %v1490
      %v1528 = vunpack.c.l.b16 %v1491
      %v1529 = vunpack.c.l.b16 %v1492
      %v1530 = vunpack.c.l.b16 %v1493
      %v1531 = vunpack.c.l.b16 %v1494
      %v1532 = vunpack.c.l.b16 %v1495
      %v1533 = vpack.c.b16 %v1518, %v1517
      %v1534 = vpack.c.b16 %v1520, %v1519
      %v1535 = vpack.c.b16 %v1522, %v1521
      %v1536 = vpack.c.b16 %v1524, %v1523
      %v1537 = vpack.c.b16 %v1526, %v1525
      %v1538 = vpack.c.b16 %v1528, %v1527
      %v1539 = vpack.c.b16 %v1530, %v1529
      %v1540 = vpack.c.b16 %v1532, %v1531
      %1549 = vmatpush.bf16.msra.mxu0 %v1540
      %1550 = vmatpush.bf16.msra.mxu0 %v1539
      %1551 = vmatpush.bf16.msra.mxu0 %v1538
      %1552 = vmatpush.bf16.msra.mxu0 %v1537
      %1553 = vmatpush.bf16.msra.mxu0 %v1536
      %1554 = vmatpush.bf16.msra.mxu0 %v1535
      %1555 = vmatpush.bf16.msra.mxu0 %v1534
      %1556 = vmatpush.bf16.msra.mxu0 %v1533
      %1557 = vmatmul.bf16.gmra.mxu0 %v1015
      %v1558 = vpop.f32.mrf.mxu0
      %v1559 = vadd.f32 %v1499, %v1558
      %v1560 = vpop.f32.mrf.mxu0
      %v1561 = vadd.f32 %v1499, %v1560
      %1562 = vmatmul.bf16.gmra.mxu0 %v1016
      %v1563 = vpop.f32.mrf.mxu0
      %v1564 = vadd.f32 %v1499, %v1563
      %v1565 = vpop.f32.mrf.mxu0
      %1566 = vdwg.mxu0
      %s1567 = scalar_lea.vmem %s11, 64
      %v1568 = vld [vmem:[%s1567] sm:$0xf]
      %v1569 = vld [vmem:[%s1567 + $0x4] sm:$0xf]
      %v1570 = vld [vmem:[%s1567 + $0x8] sm:$0xf]
      %v1571 = vld [vmem:[%s1567 + $0xc] sm:$0xf]
      %v1572 = vld [vmem:[%s1567 + $0x10] sm:$0xf]
      %v1573 = vld [vmem:[%s1567 + $0x14] sm:$0xf]
      %v1574 = vld [vmem:[%s1567 + $0x18] sm:$0xf]
      %v1575 = vld [vmem:[%s1567 + $0x1c] sm:$0xf]
      %v1576 = vld [vmem:[%s1567 + $0x20] sm:$0xf]
      %v1577 = vld [vmem:[%s1567 + $0x24] sm:$0xf]
      %v1578 = vld [vmem:[%s1567 + $0x28] sm:$0xf]
      %v1579 = vld [vmem:[%s1567 + $0x2c] sm:$0xf]
      %v1580 = vld [vmem:[%s1567 + $0x30] sm:$0xf]
      %v1581 = vld [vmem:[%s1567 + $0x34] sm:$0xf]
      %v1582 = vld [vmem:[%s1567 + $0x38] sm:$0xf]
      %v1583 = vld [vmem:[%s1567 + $0x3c] sm:$0xf]
      %s1584 = scalar_lea.vmem %s17, 1
      %v1585 = vld [vmem:[%s1584] sm:$0x1]
      %v1587 = vperm.slane %v1585, 0
      %v1605 = vunpack.c.l.b16 %v1568
      %v1606 = vunpack.c.l.b16 %v1569
      %v1607 = vunpack.c.l.b16 %v1570
      %v1608 = vunpack.c.l.b16 %v1571
      %v1609 = vunpack.c.l.b16 %v1572
      %v1610 = vunpack.c.l.b16 %v1573
      %v1611 = vunpack.c.l.b16 %v1574
      %v1612 = vunpack.c.l.b16 %v1575
      %v1613 = vunpack.c.l.b16 %v1576
      %v1614 = vunpack.c.l.b16 %v1577
      %v1615 = vunpack.c.l.b16 %v1578
      %v1616 = vunpack.c.l.b16 %v1579
      %v1617 = vunpack.c.l.b16 %v1580
      %v1618 = vunpack.c.l.b16 %v1581
      %v1619 = vunpack.c.l.b16 %v1582
      %v1620 = vunpack.c.l.b16 %v1583
      %v1621 = vpack.c.b16 %v1606, %v1605
      %v1622 = vpack.c.b16 %v1608, %v1607
      %v1623 = vpack.c.b16 %v1610, %v1609
      %v1624 = vpack.c.b16 %v1612, %v1611
      %v1625 = vpack.c.b16 %v1614, %v1613
      %v1626 = vpack.c.b16 %v1616, %v1615
      %v1627 = vpack.c.b16 %v1618, %v1617
      %v1628 = vpack.c.b16 %v1620, %v1619
      %1637 = vmatpush.bf16.msra.mxu0 %v1628
      %1638 = vmatpush.bf16.msra.mxu0 %v1627
      %1639 = vmatpush.bf16.msra.mxu0 %v1626
      %1640 = vmatpush.bf16.msra.mxu0 %v1625
      %1641 = vmatpush.bf16.msra.mxu0 %v1624
      %1642 = vmatpush.bf16.msra.mxu0 %v1623
      %1643 = vmatpush.bf16.msra.mxu0 %v1622
      %1644 = vmatpush.bf16.msra.mxu0 %v1621
      %1645 = vmatmul.bf16.gmra.mxu0 %v1015
      %v1646 = vpop.f32.mrf.mxu0
      %v1647 = vadd.f32 %v1587, %v1646
      %v1648 = vpop.f32.mrf.mxu0
      %v1649 = vadd.f32 %v1587, %v1648
      %1650 = vmatmul.bf16.gmra.mxu0 %v1016
      %v1651 = vpop.f32.mrf.mxu0
      %v1652 = vadd.f32 %v1587, %v1651
      %v1653 = vpop.f32.mrf.mxu0
      %1654 = vdwg.mxu0
      %v1655 = vpack.c.bf16 %v1473, %v1471
      %v1656 = vpack.c.bf16 %v1476, %v1476
      %v1657 = vpack.c.bf16 %v1561, %v1559
      %v1658 = vpack.c.bf16 %v1564, %v1564
      %v1660 = vsel %vm1282, %v1655, 0
      %v1663 = vsel %vm1282, %v1656, 0
      %v1666 = vsel %vm1282, %v1657, 0
      %v1669 = vsel %vm1282, %v1658, 0
      %1671 = vmatpush.bf16.xpose.msra.mxu0 0
      %1672 = vmatpush.bf16.xpose.msra.mxu0 0
      %1673 = vmatpush.bf16.xpose.msra.mxu0 0
      %1674 = vmatpush.bf16.xpose.msra.mxu0 0
      %1675 = vmatpush.bf16.xpose.msra.mxu0 0
      %1676 = vmatpush.bf16.xpose.msra.mxu0 0
      %1677 = vmatpush.bf16.xpose.msra.mxu0 %v1669
      %1678 = vmatpush.bf16.xpose.msra.mxu0 %v1666
      %1679 = vmatmul.bf16.gmra.mxu0 %v1660
      %v1680 = vpop.f32.mrf.mxu0
      %v1681 = vadd.f32 0.0, %v1680
      %v1682 = vpop.f32.mrf.mxu0
      %v1683 = vadd.f32 0.0, %v1682
      %1684 = vmatmul.bf16.gmra.mxu0 %v1663
      %v1685 = vpop.f32.mrf.mxu0
      %v1686 = vadd.f32 0.0, %v1685
      %v1687 = vpop.f32.mrf.mxu0
      %1688 = vdwg.mxu0
      %v1689 = vmul.f32 %v1681, 0.17677669
      %v1690 = vmul.f32 %v1683, 0.17677669
      %v1691 = vmul.f32 %v1686, 0.17677669
      %v1692 = vsel %vm1019, %v1689, -1e+30
      %v1693 = vsel %vm1019, %v1690, -1e+30
      %v1694 = vsel %vm1019, %v1691, -1e+30
      %v1695 = vsel %vm1319, %v1692, -inf
      %1696 = vmax.xlane.f32.xlu0 %v1695
      %v1697 = vpop.xlane.xlu0 %1696
      %v1698 = vsel %vm1319, %v1693, -inf
      %1699 = vmax.xlane.f32.xlu0 %v1698
      %v1700 = vpop.xlane.xlu0 %1699
      %v1701 = vsel %vm1319, %v1694, -inf
      %1702 = vmax.xlane.f32.xlu0 %v1701
      %v1703 = vpop.xlane.xlu0 %1702
      %v1704 = vsub.f32 %v1692, %v1697
      %v1705 = vsub.f32 %v1693, %v1700
      %v1706 = vsub.f32 %v1694, %v1703
      %v1707 = vmul.f32 %v1704, 1.442695
      %v1708 = vpow.pop %v1707
      %v1709 = vmul.f32 %v1705, 1.442695
      %v1710 = vpow.pop %v1709
      %v1711 = vmul.f32 %v1706, 1.442695
      %v1712 = vpow.pop %v1711
      %v1713 = vsel %vm1319, %v1708, 0.0
      %1714 = vadd.xlane.f32.xlu0 %v1713
      %v1715 = vpop.xlane.xlu0 %1714
      %v1716 = vsel %vm1319, %v1710, 0.0
      %1717 = vadd.xlane.f32.xlu0 %v1716
      %v1718 = vpop.xlane.xlu0 %1717
      %v1719 = vsel %vm1319, %v1712, 0.0
      %1720 = vadd.xlane.f32.xlu0 %v1719
      %v1721 = vpop.xlane.xlu0 %1720
      %v1722 = vrcp.pop %v1715
      %v1723 = vrcp.pop %v1718
      %v1724 = vrcp.pop %v1721
      %v1725 = vmul.f32 %v1708, %v1722
      %v1726 = vmul.f32 %v1710, %v1723
      %v1727 = vmul.f32 %v1712, %v1724
      %v1728 = vpack.c.bf16 %v1726, %v1725
      %v1729 = vpack.c.bf16 %v1727, %v1727
      %v1730 = vpack.c.bf16 %v1649, %v1647
      %v1731 = vpack.c.bf16 %v1652, %v1652
      %v1733 = vsel %vm1319, %v1728, 0
      %v1736 = vsel %vm1319, %v1729, 0
      %v1739 = vsel %vm1363, %v1731, 0
      %1741 = vmatpush.bf16.msra.mxu0 0
      %1742 = vmatpush.bf16.msra.mxu0 0
      %1743 = vmatpush.bf16.msra.mxu0 0
      %1744 = vmatpush.bf16.msra.mxu0 0
      %1745 = vmatpush.bf16.msra.mxu0 0
      %1746 = vmatpush.bf16.msra.mxu0 0
      %1747 = vmatpush.bf16.msra.mxu0 %v1739
      %1748 = vmatpush.bf16.msra.mxu0 %v1730
      %1749 = vmatmul.bf16.gmra.mxu0 %v1733
      %v1750 = vpop.f32.mrf.mxu0
      %v1751 = vadd.f32 0.0, %v1750
      %v1752 = vpop.f32.mrf.mxu0
      %v1753 = vadd.f32 0.0, %v1752
      %1754 = vmatmul.bf16.gmra.mxu0 %v1736
      %v1755 = vpop.f32.mrf.mxu0
      %v1756 = vadd.f32 0.0, %v1755
      %v1757 = vpop.f32.mrf.mxu0
      %1758 = vdwg.mxu0
      %v1759 = vpack.c.bf16 %v1753, %v1751
      %v1760 = vpack.c.bf16 %v1756, %v1756
      %s1761 = scalar_lea.vmem %s19, 16
      %v1762 = vld [vmem:[%s1761] sm:$0xf]
      %v1763 = vld [vmem:[%s1761 + $0x4] sm:$0xf]
      %v1764 = vld [vmem:[%s1761 + $0x8] sm:$0xf]
      %v1765 = vld [vmem:[%s1761 + $0xc] sm:$0xf]
      %v1770 = vunpack.c.l.b16 %v1762
      %v1771 = vunpack.c.l.b16 %v1763
      %v1772 = vunpack.c.l.b16 %v1764
      %v1773 = vunpack.c.l.b16 %v1765
      %v1774 = vpack.c.b16 %v1771, %v1770
      %v1775 = vpack.c.b16 %v1773, %v1772
      %v1779 = vsel %vm1282, %v1759, 0
      %v1782 = vsel %vm1282, %v1760, 0
      %1784 = vmatpush.bf16.msra.mxu0 0
      %1785 = vmatpush.bf16.msra.mxu0 0
      %1786 = vmatpush.bf16.msra.mxu0 0
      %1787 = vmatpush.bf16.msra.mxu0 0
      %1788 = vmatpush.bf16.msra.mxu0 0
      %1789 = vmatpush.bf16.msra.mxu0 0
      %1790 = vmatpush.bf16.msra.mxu0 %v1775
      %1791 = vmatpush.bf16.msra.mxu0 %v1774
      %1792 = vmatmul.bf16.gmra.mxu0 %v1779
      %v1793 = vpop.f32.mrf.mxu0
      %v1794 = vadd.f32 0.0, %v1793
      %v1795 = vpop.f32.mrf.mxu0
      %v1796 = vadd.f32 0.0, %v1795
      %1797 = vmatmul.bf16.gmra.mxu0 %v1782
      %v1798 = vpop.f32.mrf.mxu0
      %v1799 = vadd.f32 0.0, %v1798
      %v1800 = vpop.f32.mrf.mxu0
      %1801 = vdwg.mxu0
      %v1806 = vunpack.c.l.b16 %v1387
      %v1807 = vunpack.c.l.b16 %v1388
      %v1808 = vunpack.c.l.b16 %v1389
      %v1809 = vunpack.c.l.b16 %v1390
      %v1810 = vpack.c.b16 %v1807, %v1806
      %v1811 = vpack.c.b16 %v1809, %v1808
      %v1815 = vsel %vm1282, %v1385, 0
      %v1818 = vsel %vm1282, %v1386, 0
      %1820 = vmatpush.bf16.msra.mxu0 0
      %1821 = vmatpush.bf16.msra.mxu0 0
      %1822 = vmatpush.bf16.msra.mxu0 0
      %1823 = vmatpush.bf16.msra.mxu0 0
      %1824 = vmatpush.bf16.msra.mxu0 0
      %1825 = vmatpush.bf16.msra.mxu0 0
      %1826 = vmatpush.bf16.msra.mxu0 %v1811
      %1827 = vmatpush.bf16.msra.mxu0 %v1810
      %1828 = vmatmul.bf16.gmra.mxu0 %v1815
      %v1829 = vpop.f32.mrf.mxu0
      %v1830 = vadd.f32 %v1794, %v1829
      %v1831 = vpop.f32.mrf.mxu0
      %v1832 = vadd.f32 %v1796, %v1831
      %1833 = vmatmul.bf16.gmra.mxu0 %v1818
      %v1834 = vpop.f32.mrf.mxu0
      %v1835 = vadd.f32 %v1799, %v1834
      %v1836 = vpop.f32.mrf.mxu0
      %1837 = vdwg.mxu0
      %s1838 = scalar_lea.vmem %s7, 128
      %v1839 = vld [vmem:[%s1838] sm:$0xf]
      %v1840 = vld [vmem:[%s1838 + $0x4] sm:$0xf]
      %v1841 = vld [vmem:[%s1838 + $0x8] sm:$0xf]
      %v1842 = vld [vmem:[%s1838 + $0xc] sm:$0xf]
      %v1843 = vld [vmem:[%s1838 + $0x10] sm:$0xf]
      %v1844 = vld [vmem:[%s1838 + $0x14] sm:$0xf]
      %v1845 = vld [vmem:[%s1838 + $0x18] sm:$0xf]
      %v1846 = vld [vmem:[%s1838 + $0x1c] sm:$0xf]
      %v1847 = vld [vmem:[%s1838 + $0x20] sm:$0xf]
      %v1848 = vld [vmem:[%s1838 + $0x24] sm:$0xf]
      %v1849 = vld [vmem:[%s1838 + $0x28] sm:$0xf]
      %v1850 = vld [vmem:[%s1838 + $0x2c] sm:$0xf]
      %v1851 = vld [vmem:[%s1838 + $0x30] sm:$0xf]
      %v1852 = vld [vmem:[%s1838 + $0x34] sm:$0xf]
      %v1853 = vld [vmem:[%s1838 + $0x38] sm:$0xf]
      %v1854 = vld [vmem:[%s1838 + $0x3c] sm:$0xf]
      %s1855 = scalar_lea.vmem %s13, 2
      %v1856 = vld [vmem:[%s1855] sm:$0x1]
      %v1858 = vperm.slane %v1856, 0
      %v1876 = vunpack.c.l.b16 %v1839
      %v1877 = vunpack.c.l.b16 %v1840
      %v1878 = vunpack.c.l.b16 %v1841
      %v1879 = vunpack.c.l.b16 %v1842
      %v1880 = vunpack.c.l.b16 %v1843
      %v1881 = vunpack.c.l.b16 %v1844
      %v1882 = vunpack.c.l.b16 %v1845
      %v1883 = vunpack.c.l.b16 %v1846
      %v1884 = vunpack.c.l.b16 %v1847
      %v1885 = vunpack.c.l.b16 %v1848
      %v1886 = vunpack.c.l.b16 %v1849
      %v1887 = vunpack.c.l.b16 %v1850
      %v1888 = vunpack.c.l.b16 %v1851
      %v1889 = vunpack.c.l.b16 %v1852
      %v1890 = vunpack.c.l.b16 %v1853
      %v1891 = vunpack.c.l.b16 %v1854
      %v1892 = vpack.c.b16 %v1877, %v1876
      %v1893 = vpack.c.b16 %v1879, %v1878
      %v1894 = vpack.c.b16 %v1881, %v1880
      %v1895 = vpack.c.b16 %v1883, %v1882
      %v1896 = vpack.c.b16 %v1885, %v1884
      %v1897 = vpack.c.b16 %v1887, %v1886
      %v1898 = vpack.c.b16 %v1889, %v1888
      %v1899 = vpack.c.b16 %v1891, %v1890
      %1908 = vmatpush.bf16.msra.mxu0 %v1899
      %1909 = vmatpush.bf16.msra.mxu0 %v1898
      %1910 = vmatpush.bf16.msra.mxu0 %v1897
      %1911 = vmatpush.bf16.msra.mxu0 %v1896
      %1912 = vmatpush.bf16.msra.mxu0 %v1895
      %1913 = vmatpush.bf16.msra.mxu0 %v1894
      %1914 = vmatpush.bf16.msra.mxu0 %v1893
      %1915 = vmatpush.bf16.msra.mxu0 %v1892
      %1916 = vmatmul.bf16.gmra.mxu0 %v1015
      %v1917 = vpop.f32.mrf.mxu0
      %v1918 = vadd.f32 %v1858, %v1917
      %v1919 = vpop.f32.mrf.mxu0
      %v1920 = vadd.f32 %v1858, %v1919
      %1921 = vmatmul.bf16.gmra.mxu0 %v1016
      %v1922 = vpop.f32.mrf.mxu0
      %v1923 = vadd.f32 %v1858, %v1922
      %v1924 = vpop.f32.mrf.mxu0
      %1925 = vdwg.mxu0
      %s1926 = scalar_lea.vmem %s9, 128
      %v1927 = vld [vmem:[%s1926] sm:$0xf]
      %v1928 = vld [vmem:[%s1926 + $0x4] sm:$0xf]
      %v1929 = vld [vmem:[%s1926 + $0x8] sm:$0xf]
      %v1930 = vld [vmem:[%s1926 + $0xc] sm:$0xf]
      %v1931 = vld [vmem:[%s1926 + $0x10] sm:$0xf]
      %v1932 = vld [vmem:[%s1926 + $0x14] sm:$0xf]
      %v1933 = vld [vmem:[%s1926 + $0x18] sm:$0xf]
      %v1934 = vld [vmem:[%s1926 + $0x1c] sm:$0xf]
      %v1935 = vld [vmem:[%s1926 + $0x20] sm:$0xf]
      %v1936 = vld [vmem:[%s1926 + $0x24] sm:$0xf]
      %v1937 = vld [vmem:[%s1926 + $0x28] sm:$0xf]
      %v1938 = vld [vmem:[%s1926 + $0x2c] sm:$0xf]
      %v1939 = vld [vmem:[%s1926 + $0x30] sm:$0xf]
      %v1940 = vld [vmem:[%s1926 + $0x34] sm:$0xf]
      %v1941 = vld [vmem:[%s1926 + $0x38] sm:$0xf]
      %v1942 = vld [vmem:[%s1926 + $0x3c] sm:$0xf]
      %s1943 = scalar_lea.vmem %s15, 2
      %v1944 = vld [vmem:[%s1943] sm:$0x1]
      %v1946 = vperm.slane %v1944, 0
      %v1964 = vunpack.c.l.b16 %v1927
      %v1965 = vunpack.c.l.b16 %v1928
      %v1966 = vunpack.c.l.b16 %v1929
      %v1967 = vunpack.c.l.b16 %v1930
      %v1968 = vunpack.c.l.b16 %v1931
      %v1969 = vunpack.c.l.b16 %v1932
      %v1970 = vunpack.c.l.b16 %v1933
      %v1971 = vunpack.c.l.b16 %v1934
      %v1972 = vunpack.c.l.b16 %v1935
      %v1973 = vunpack.c.l.b16 %v1936
      %v1974 = vunpack.c.l.b16 %v1937
      %v1975 = vunpack.c.l.b16 %v1938
      %v1976 = vunpack.c.l.b16 %v1939
      %v1977 = vunpack.c.l.b16 %v1940
      %v1978 = vunpack.c.l.b16 %v1941
      %v1979 = vunpack.c.l.b16 %v1942
      %v1980 = vpack.c.b16 %v1965, %v1964
      %v1981 = vpack.c.b16 %v1967, %v1966
      %v1982 = vpack.c.b16 %v1969, %v1968
      %v1983 = vpack.c.b16 %v1971, %v1970
      %v1984 = vpack.c.b16 %v1973, %v1972
      %v1985 = vpack.c.b16 %v1975, %v1974
      %v1986 = vpack.c.b16 %v1977, %v1976
      %v1987 = vpack.c.b16 %v1979, %v1978
      %1996 = vmatpush.bf16.msra.mxu0 %v1987
      %1997 = vmatpush.bf16.msra.mxu0 %v1986
      %1998 = vmatpush.bf16.msra.mxu0 %v1985
      %1999 = vmatpush.bf16.msra.mxu0 %v1984
      %2000 = vmatpush.bf16.msra.mxu0 %v1983
      %2001 = vmatpush.bf16.msra.mxu0 %v1982
      %2002 = vmatpush.bf16.msra.mxu0 %v1981
      %2003 = vmatpush.bf16.msra.mxu0 %v1980
      %2004 = vmatmul.bf16.gmra.mxu0 %v1015
      %v2005 = vpop.f32.mrf.mxu0
      %v2006 = vadd.f32 %v1946, %v2005
      %v2007 = vpop.f32.mrf.mxu0
      %v2008 = vadd.f32 %v1946, %v2007
      %2009 = vmatmul.bf16.gmra.mxu0 %v1016
      %v2010 = vpop.f32.mrf.mxu0
      %v2011 = vadd.f32 %v1946, %v2010
      %v2012 = vpop.f32.mrf.mxu0
      %2013 = vdwg.mxu0
      %s2014 = scalar_lea.vmem %s11, 128
      %v2015 = vld [vmem:[%s2014] sm:$0xf]
      %v2016 = vld [vmem:[%s2014 + $0x4] sm:$0xf]
      %v2017 = vld [vmem:[%s2014 + $0x8] sm:$0xf]
      %v2018 = vld [vmem:[%s2014 + $0xc] sm:$0xf]
      %v2019 = vld [vmem:[%s2014 + $0x10] sm:$0xf]
      %v2020 = vld [vmem:[%s2014 + $0x14] sm:$0xf]
      %v2021 = vld [vmem:[%s2014 + $0x18] sm:$0xf]
      %v2022 = vld [vmem:[%s2014 + $0x1c] sm:$0xf]
      %v2023 = vld [vmem:[%s2014 + $0x20] sm:$0xf]
      %v2024 = vld [vmem:[%s2014 + $0x24] sm:$0xf]
      %v2025 = vld [vmem:[%s2014 + $0x28] sm:$0xf]
      %v2026 = vld [vmem:[%s2014 + $0x2c] sm:$0xf]
      %v2027 = vld [vmem:[%s2014 + $0x30] sm:$0xf]
      %v2028 = vld [vmem:[%s2014 + $0x34] sm:$0xf]
      %v2029 = vld [vmem:[%s2014 + $0x38] sm:$0xf]
      %v2030 = vld [vmem:[%s2014 + $0x3c] sm:$0xf]
      %s2031 = scalar_lea.vmem %s17, 2
      %v2032 = vld [vmem:[%s2031] sm:$0x1]
      %v2034 = vperm.slane %v2032, 0
      %v2052 = vunpack.c.l.b16 %v2015
      %v2053 = vunpack.c.l.b16 %v2016
      %v2054 = vunpack.c.l.b16 %v2017
      %v2055 = vunpack.c.l.b16 %v2018
      %v2056 = vunpack.c.l.b16 %v2019
      %v2057 = vunpack.c.l.b16 %v2020
      %v2058 = vunpack.c.l.b16 %v2021
      %v2059 = vunpack.c.l.b16 %v2022
      %v2060 = vunpack.c.l.b16 %v2023
      %v2061 = vunpack.c.l.b16 %v2024
      %v2062 = vunpack.c.l.b16 %v2025
      %v2063 = vunpack.c.l.b16 %v2026
      %v2064 = vunpack.c.l.b16 %v2027
      %v2065 = vunpack.c.l.b16 %v2028
      %v2066 = vunpack.c.l.b16 %v2029
      %v2067 = vunpack.c.l.b16 %v2030
      %v2068 = vpack.c.b16 %v2053, %v2052
      %v2069 = vpack.c.b16 %v2055, %v2054
      %v2070 = vpack.c.b16 %v2057, %v2056
      %v2071 = vpack.c.b16 %v2059, %v2058
      %v2072 = vpack.c.b16 %v2061, %v2060
      %v2073 = vpack.c.b16 %v2063, %v2062
      %v2074 = vpack.c.b16 %v2065, %v2064
      %v2075 = vpack.c.b16 %v2067, %v2066
      %2084 = vmatpush.bf16.msra.mxu0 %v2075
      %2085 = vmatpush.bf16.msra.mxu0 %v2074
      %2086 = vmatpush.bf16.msra.mxu0 %v2073
      %2087 = vmatpush.bf16.msra.mxu0 %v2072
      %2088 = vmatpush.bf16.msra.mxu0 %v2071
      %2089 = vmatpush.bf16.msra.mxu0 %v2070
      %2090 = vmatpush.bf16.msra.mxu0 %v2069
      %2091 = vmatpush.bf16.msra.mxu0 %v2068
      %2092 = vmatmul.bf16.gmra.mxu0 %v1015
      %v2093 = vpop.f32.mrf.mxu0
      %v2094 = vadd.f32 %v2034, %v2093
      %v2095 = vpop.f32.mrf.mxu0
      %v2096 = vadd.f32 %v2034, %v2095
      %2097 = vmatmul.bf16.gmra.mxu0 %v1016
      %v2098 = vpop.f32.mrf.mxu0
      %v2099 = vadd.f32 %v2034, %v2098
      %v2100 = vpop.f32.mrf.mxu0
      %2101 = vdwg.mxu0
      %v2102 = vpack.c.bf16 %v1920, %v1918
      %v2103 = vpack.c.bf16 %v1923, %v1923
      %v2104 = vpack.c.bf16 %v2008, %v2006
      %v2105 = vpack.c.bf16 %v2011, %v2011
      %v2107 = vsel %vm1282, %v2102, 0
      %v2110 = vsel %vm1282, %v2103, 0
      %v2113 = vsel %vm1282, %v2104, 0
      %v2116 = vsel %vm1282, %v2105, 0
      %2118 = vmatpush.bf16.xpose.msra.mxu0 0
      %2119 = vmatpush.bf16.xpose.msra.mxu0 0
      %2120 = vmatpush.bf16.xpose.msra.mxu0 0
      %2121 = vmatpush.bf16.xpose.msra.mxu0 0
      %2122 = vmatpush.bf16.xpose.msra.mxu0 0
      %2123 = vmatpush.bf16.xpose.msra.mxu0 0
      %2124 = vmatpush.bf16.xpose.msra.mxu0 %v2116
      %2125 = vmatpush.bf16.xpose.msra.mxu0 %v2113
      %2126 = vmatmul.bf16.gmra.mxu0 %v2107
      %v2127 = vpop.f32.mrf.mxu0
      %v2128 = vadd.f32 0.0, %v2127
      %v2129 = vpop.f32.mrf.mxu0
      %v2130 = vadd.f32 0.0, %v2129
      %2131 = vmatmul.bf16.gmra.mxu0 %v2110
      %v2132 = vpop.f32.mrf.mxu0
      %v2133 = vadd.f32 0.0, %v2132
      %v2134 = vpop.f32.mrf.mxu0
      %2135 = vdwg.mxu0
      %v2136 = vmul.f32 %v2128, 0.17677669
      %v2137 = vmul.f32 %v2130, 0.17677669
      %v2138 = vmul.f32 %v2133, 0.17677669
      %v2139 = vsel %vm1019, %v2136, -1e+30
      %v2140 = vsel %vm1019, %v2137, -1e+30
      %v2141 = vsel %vm1019, %v2138, -1e+30
      %v2142 = vsel %vm1319, %v2139, -inf
      %2143 = vmax.xlane.f32.xlu0 %v2142
      %v2144 = vpop.xlane.xlu0 %2143
      %v2145 = vsel %vm1319, %v2140, -inf
      %2146 = vmax.xlane.f32.xlu0 %v2145
      %v2147 = vpop.xlane.xlu0 %2146
      %v2148 = vsel %vm1319, %v2141, -inf
      %2149 = vmax.xlane.f32.xlu0 %v2148
      %v2150 = vpop.xlane.xlu0 %2149
      %v2151 = vsub.f32 %v2139, %v2144
      %v2152 = vsub.f32 %v2140, %v2147
      %v2153 = vsub.f32 %v2141, %v2150
      %v2154 = vmul.f32 %v2151, 1.442695
      %v2155 = vpow.pop %v2154
      %v2156 = vmul.f32 %v2152, 1.442695
      %v2157 = vpow.pop %v2156
      %v2158 = vmul.f32 %v2153, 1.442695
      %v2159 = vpow.pop %v2158
      %v2160 = vsel %vm1319, %v2155, 0.0
      %2161 = vadd.xlane.f32.xlu0 %v2160
      %v2162 = vpop.xlane.xlu0 %2161
      %v2163 = vsel %vm1319, %v2157, 0.0
      %2164 = vadd.xlane.f32.xlu0 %v2163
      %v2165 = vpop.xlane.xlu0 %2164
      %v2166 = vsel %vm1319, %v2159, 0.0
      %2167 = vadd.xlane.f32.xlu0 %v2166
      %v2168 = vpop.xlane.xlu0 %2167
      %v2169 = vrcp.pop %v2162
      %v2170 = vrcp.pop %v2165
      %v2171 = vrcp.pop %v2168
      %v2172 = vmul.f32 %v2155, %v2169
      %v2173 = vmul.f32 %v2157, %v2170
      %v2174 = vmul.f32 %v2159, %v2171
      %v2175 = vpack.c.bf16 %v2173, %v2172
      %v2176 = vpack.c.bf16 %v2174, %v2174
      %v2177 = vpack.c.bf16 %v2096, %v2094
      %v2178 = vpack.c.bf16 %v2099, %v2099
      %v2180 = vsel %vm1319, %v2175, 0
      %v2183 = vsel %vm1319, %v2176, 0
      %v2186 = vsel %vm1363, %v2178, 0
      %2188 = vmatpush.bf16.msra.mxu0 0
      %2189 = vmatpush.bf16.msra.mxu0 0
      %2190 = vmatpush.bf16.msra.mxu0 0
      %2191 = vmatpush.bf16.msra.mxu0 0
      %2192 = vmatpush.bf16.msra.mxu0 0
      %2193 = vmatpush.bf16.msra.mxu0 0
      %2194 = vmatpush.bf16.msra.mxu0 %v2186
      %2195 = vmatpush.bf16.msra.mxu0 %v2177
      %2196 = vmatmul.bf16.gmra.mxu0 %v2180
      %v2197 = vpop.f32.mrf.mxu0
      %v2198 = vadd.f32 0.0, %v2197
      %v2199 = vpop.f32.mrf.mxu0
      %v2200 = vadd.f32 0.0, %v2199
      %2201 = vmatmul.bf16.gmra.mxu0 %v2183
      %v2202 = vpop.f32.mrf.mxu0
      %v2203 = vadd.f32 0.0, %v2202
      %v2204 = vpop.f32.mrf.mxu0
      %2205 = vdwg.mxu0
      %v2206 = vpack.c.bf16 %v2200, %v2198
      %v2207 = vpack.c.bf16 %v2203, %v2203
      %s2208 = scalar_lea.vmem %s19, 32
      %v2209 = vld [vmem:[%s2208] sm:$0xf]
      %v2210 = vld [vmem:[%s2208 + $0x4] sm:$0xf]
      %v2211 = vld [vmem:[%s2208 + $0x8] sm:$0xf]
      %v2212 = vld [vmem:[%s2208 + $0xc] sm:$0xf]
      %v2217 = vunpack.c.l.b16 %v2209
      %v2218 = vunpack.c.l.b16 %v2210
      %v2219 = vunpack.c.l.b16 %v2211
      %v2220 = vunpack.c.l.b16 %v2212
      %v2221 = vpack.c.b16 %v2218, %v2217
      %v2222 = vpack.c.b16 %v2220, %v2219
      %v2226 = vsel %vm1282, %v2206, 0
      %v2229 = vsel %vm1282, %v2207, 0
      %2231 = vmatpush.bf16.msra.mxu0 0
      %2232 = vmatpush.bf16.msra.mxu0 0
      %2233 = vmatpush.bf16.msra.mxu0 0
      %2234 = vmatpush.bf16.msra.mxu0 0
      %2235 = vmatpush.bf16.msra.mxu0 0
      %2236 = vmatpush.bf16.msra.mxu0 0
      %2237 = vmatpush.bf16.msra.mxu0 %v2222
      %2238 = vmatpush.bf16.msra.mxu0 %v2221
      %2239 = vmatmul.bf16.gmra.mxu0 %v2226
      %v2240 = vpop.f32.mrf.mxu0
      %v2241 = vadd.f32 0.0, %v2240
      %v2242 = vpop.f32.mrf.mxu0
      %v2243 = vadd.f32 0.0, %v2242
      %2244 = vmatmul.bf16.gmra.mxu0 %v2229
      %v2245 = vpop.f32.mrf.mxu0
      %v2246 = vadd.f32 0.0, %v2245
      %v2247 = vpop.f32.mrf.mxu0
      %2248 = vdwg.mxu0
      %v2249 = vadd.f32 %v1830, %v2241
      %v2250 = vadd.f32 %v1832, %v2243
      %v2251 = vadd.f32 %v1835, %v2246
      %s2252 = scalar_lea.vmem %s7, 192
      %v2253 = vld [vmem:[%s2252] sm:$0xf]
      %v2254 = vld [vmem:[%s2252 + $0x4] sm:$0xf]
      %v2255 = vld [vmem:[%s2252 + $0x8] sm:$0xf]
      %v2256 = vld [vmem:[%s2252 + $0xc] sm:$0xf]
      %v2257 = vld [vmem:[%s2252 + $0x10] sm:$0xf]
      %v2258 = vld [vmem:[%s2252 + $0x14] sm:$0xf]
      %v2259 = vld [vmem:[%s2252 + $0x18] sm:$0xf]
      %v2260 = vld [vmem:[%s2252 + $0x1c] sm:$0xf]
      %v2261 = vld [vmem:[%s2252 + $0x20] sm:$0xf]
      %v2262 = vld [vmem:[%s2252 + $0x24] sm:$0xf]
      %v2263 = vld [vmem:[%s2252 + $0x28] sm:$0xf]
      %v2264 = vld [vmem:[%s2252 + $0x2c] sm:$0xf]
      %v2265 = vld [vmem:[%s2252 + $0x30] sm:$0xf]
      %v2266 = vld [vmem:[%s2252 + $0x34] sm:$0xf]
      %v2267 = vld [vmem:[%s2252 + $0x38] sm:$0xf]
      %v2268 = vld [vmem:[%s2252 + $0x3c] sm:$0xf]
      %s2269 = scalar_lea.vmem %s13, 3
      %v2270 = vld [vmem:[%s2269] sm:$0x1]
      %v2272 = vperm.slane %v2270, 0
      %v2290 = vunpack.c.l.b16 %v2253
      %v2291 = vunpack.c.l.b16 %v2254
      %v2292 = vunpack.c.l.b16 %v2255
      %v2293 = vunpack.c.l.b16 %v2256
      %v2294 = vunpack.c.l.b16 %v2257
      %v2295 = vunpack.c.l.b16 %v2258
      %v2296 = vunpack.c.l.b16 %v2259
      %v2297 = vunpack.c.l.b16 %v2260
      %v2298 = vunpack.c.l.b16 %v2261
      %v2299 = vunpack.c.l.b16 %v2262
      %v2300 = vunpack.c.l.b16 %v2263
      %v2301 = vunpack.c.l.b16 %v2264
      %v2302 = vunpack.c.l.b16 %v2265
      %v2303 = vunpack.c.l.b16 %v2266
      %v2304 = vunpack.c.l.b16 %v2267
      %v2305 = vunpack.c.l.b16 %v2268
      %v2306 = vpack.c.b16 %v2291, %v2290
      %v2307 = vpack.c.b16 %v2293, %v2292
      %v2308 = vpack.c.b16 %v2295, %v2294
      %v2309 = vpack.c.b16 %v2297, %v2296
      %v2310 = vpack.c.b16 %v2299, %v2298
      %v2311 = vpack.c.b16 %v2301, %v2300
      %v2312 = vpack.c.b16 %v2303, %v2302
      %v2313 = vpack.c.b16 %v2305, %v2304
      %2322 = vmatpush.bf16.msra.mxu0 %v2313
      %2323 = vmatpush.bf16.msra.mxu0 %v2312
      %2324 = vmatpush.bf16.msra.mxu0 %v2311
      %2325 = vmatpush.bf16.msra.mxu0 %v2310
      %2326 = vmatpush.bf16.msra.mxu0 %v2309
      %2327 = vmatpush.bf16.msra.mxu0 %v2308
      %2328 = vmatpush.bf16.msra.mxu0 %v2307
      %2329 = vmatpush.bf16.msra.mxu0 %v2306
      %2330 = vmatmul.bf16.gmra.mxu0 %v1015
      %v2331 = vpop.f32.mrf.mxu0
      %v2332 = vadd.f32 %v2272, %v2331
      %v2333 = vpop.f32.mrf.mxu0
      %v2334 = vadd.f32 %v2272, %v2333
      %2335 = vmatmul.bf16.gmra.mxu0 %v1016
      %v2336 = vpop.f32.mrf.mxu0
      %v2337 = vadd.f32 %v2272, %v2336
      %v2338 = vpop.f32.mrf.mxu0
      %2339 = vdwg.mxu0
      %s2340 = scalar_lea.vmem %s9, 192
      %v2341 = vld [vmem:[%s2340] sm:$0xf]
      %v2342 = vld [vmem:[%s2340 + $0x4] sm:$0xf]
      %v2343 = vld [vmem:[%s2340 + $0x8] sm:$0xf]
      %v2344 = vld [vmem:[%s2340 + $0xc] sm:$0xf]
      %v2345 = vld [vmem:[%s2340 + $0x10] sm:$0xf]
      %v2346 = vld [vmem:[%s2340 + $0x14] sm:$0xf]
      %v2347 = vld [vmem:[%s2340 + $0x18] sm:$0xf]
      %v2348 = vld [vmem:[%s2340 + $0x1c] sm:$0xf]
      %v2349 = vld [vmem:[%s2340 + $0x20] sm:$0xf]
      %v2350 = vld [vmem:[%s2340 + $0x24] sm:$0xf]
      %v2351 = vld [vmem:[%s2340 + $0x28] sm:$0xf]
      %v2352 = vld [vmem:[%s2340 + $0x2c] sm:$0xf]
      %v2353 = vld [vmem:[%s2340 + $0x30] sm:$0xf]
      %v2354 = vld [vmem:[%s2340 + $0x34] sm:$0xf]
      %v2355 = vld [vmem:[%s2340 + $0x38] sm:$0xf]
      %v2356 = vld [vmem:[%s2340 + $0x3c] sm:$0xf]
      %s2357 = scalar_lea.vmem %s15, 3
      %v2358 = vld [vmem:[%s2357] sm:$0x1]
      %v2360 = vperm.slane %v2358, 0
      %v2378 = vunpack.c.l.b16 %v2341
      %v2379 = vunpack.c.l.b16 %v2342
      %v2380 = vunpack.c.l.b16 %v2343
      %v2381 = vunpack.c.l.b16 %v2344
      %v2382 = vunpack.c.l.b16 %v2345
      %v2383 = vunpack.c.l.b16 %v2346
      %v2384 = vunpack.c.l.b16 %v2347
      %v2385 = vunpack.c.l.b16 %v2348
      %v2386 = vunpack.c.l.b16 %v2349
      %v2387 = vunpack.c.l.b16 %v2350
      %v2388 = vunpack.c.l.b16 %v2351
      %v2389 = vunpack.c.l.b16 %v2352
      %v2390 = vunpack.c.l.b16 %v2353
      %v2391 = vunpack.c.l.b16 %v2354
      %v2392 = vunpack.c.l.b16 %v2355
      %v2393 = vunpack.c.l.b16 %v2356
      %v2394 = vpack.c.b16 %v2379, %v2378
      %v2395 = vpack.c.b16 %v2381, %v2380
      %v2396 = vpack.c.b16 %v2383, %v2382
      %v2397 = vpack.c.b16 %v2385, %v2384
      %v2398 = vpack.c.b16 %v2387, %v2386
      %v2399 = vpack.c.b16 %v2389, %v2388
      %v2400 = vpack.c.b16 %v2391, %v2390
      %v2401 = vpack.c.b16 %v2393, %v2392
      %2410 = vmatpush.bf16.msra.mxu0 %v2401
      %2411 = vmatpush.bf16.msra.mxu0 %v2400
      %2412 = vmatpush.bf16.msra.mxu0 %v2399
      %2413 = vmatpush.bf16.msra.mxu0 %v2398
      %2414 = vmatpush.bf16.msra.mxu0 %v2397
      %2415 = vmatpush.bf16.msra.mxu0 %v2396
      %2416 = vmatpush.bf16.msra.mxu0 %v2395
      %2417 = vmatpush.bf16.msra.mxu0 %v2394
      %2418 = vmatmul.bf16.gmra.mxu0 %v1015
      %v2419 = vpop.f32.mrf.mxu0
      %v2420 = vadd.f32 %v2360, %v2419
      %v2421 = vpop.f32.mrf.mxu0
      %v2422 = vadd.f32 %v2360, %v2421
      %2423 = vmatmul.bf16.gmra.mxu0 %v1016
      %v2424 = vpop.f32.mrf.mxu0
      %v2425 = vadd.f32 %v2360, %v2424
      %v2426 = vpop.f32.mrf.mxu0
      %2427 = vdwg.mxu0
      %s2428 = scalar_lea.vmem %s11, 192
      %v2429 = vld [vmem:[%s2428] sm:$0xf]
      %v2430 = vld [vmem:[%s2428 + $0x4] sm:$0xf]
      %v2431 = vld [vmem:[%s2428 + $0x8] sm:$0xf]
      %v2432 = vld [vmem:[%s2428 + $0xc] sm:$0xf]
      %v2433 = vld [vmem:[%s2428 + $0x10] sm:$0xf]
      %v2434 = vld [vmem:[%s2428 + $0x14] sm:$0xf]
      %v2435 = vld [vmem:[%s2428 + $0x18] sm:$0xf]
      %v2436 = vld [vmem:[%s2428 + $0x1c] sm:$0xf]
      %v2437 = vld [vmem:[%s2428 + $0x20] sm:$0xf]
      %v2438 = vld [vmem:[%s2428 + $0x24] sm:$0xf]
      %v2439 = vld [vmem:[%s2428 + $0x28] sm:$0xf]
      %v2440 = vld [vmem:[%s2428 + $0x2c] sm:$0xf]
      %v2441 = vld [vmem:[%s2428 + $0x30] sm:$0xf]
      %v2442 = vld [vmem:[%s2428 + $0x34] sm:$0xf]
      %v2443 = vld [vmem:[%s2428 + $0x38] sm:$0xf]
      %v2444 = vld [vmem:[%s2428 + $0x3c] sm:$0xf]
      %s2445 = scalar_lea.vmem %s17, 3
      %v2446 = vld [vmem:[%s2445] sm:$0x1]
      %v2448 = vperm.slane %v2446, 0
      %v2466 = vunpack.c.l.b16 %v2429
      %v2467 = vunpack.c.l.b16 %v2430
      %v2468 = vunpack.c.l.b16 %v2431
      %v2469 = vunpack.c.l.b16 %v2432
      %v2470 = vunpack.c.l.b16 %v2433
      %v2471 = vunpack.c.l.b16 %v2434
      %v2472 = vunpack.c.l.b16 %v2435
      %v2473 = vunpack.c.l.b16 %v2436
      %v2474 = vunpack.c.l.b16 %v2437
      %v2475 = vunpack.c.l.b16 %v2438
      %v2476 = vunpack.c.l.b16 %v2439
      %v2477 = vunpack.c.l.b16 %v2440
      %v2478 = vunpack.c.l.b16 %v2441
      %v2479 = vunpack.c.l.b16 %v2442
      %v2480 = vunpack.c.l.b16 %v2443
      %v2481 = vunpack.c.l.b16 %v2444
      %v2482 = vpack.c.b16 %v2467, %v2466
      %v2483 = vpack.c.b16 %v2469, %v2468
      %v2484 = vpack.c.b16 %v2471, %v2470
      %v2485 = vpack.c.b16 %v2473, %v2472
      %v2486 = vpack.c.b16 %v2475, %v2474
      %v2487 = vpack.c.b16 %v2477, %v2476
      %v2488 = vpack.c.b16 %v2479, %v2478
      %v2489 = vpack.c.b16 %v2481, %v2480
      %2498 = vmatpush.bf16.msra.mxu0 %v2489
      %2499 = vmatpush.bf16.msra.mxu0 %v2488
      %2500 = vmatpush.bf16.msra.mxu0 %v2487
      %2501 = vmatpush.bf16.msra.mxu0 %v2486
      %2502 = vmatpush.bf16.msra.mxu0 %v2485
      %2503 = vmatpush.bf16.msra.mxu0 %v2484
      %2504 = vmatpush.bf16.msra.mxu0 %v2483
      %2505 = vmatpush.bf16.msra.mxu0 %v2482
      %2506 = vmatmul.bf16.gmra.mxu0 %v1015
      %v2507 = vpop.f32.mrf.mxu0
      %v2508 = vadd.f32 %v2448, %v2507
      %v2509 = vpop.f32.mrf.mxu0
      %v2510 = vadd.f32 %v2448, %v2509
      %2511 = vmatmul.bf16.gmra.mxu0 %v1016
      %v2512 = vpop.f32.mrf.mxu0
      %v2513 = vadd.f32 %v2448, %v2512
      %v2514 = vpop.f32.mrf.mxu0
      %2515 = vdwg.mxu0
      %v2516 = vpack.c.bf16 %v2334, %v2332
      %v2517 = vpack.c.bf16 %v2337, %v2337
      %v2518 = vpack.c.bf16 %v2422, %v2420
      %v2519 = vpack.c.bf16 %v2425, %v2425
      %v2521 = vsel %vm1282, %v2516, 0
      %v2524 = vsel %vm1282, %v2517, 0
      %v2527 = vsel %vm1282, %v2518, 0
      %v2530 = vsel %vm1282, %v2519, 0
      %2532 = vmatpush.bf16.xpose.msra.mxu0 0
      %2533 = vmatpush.bf16.xpose.msra.mxu0 0
      %2534 = vmatpush.bf16.xpose.msra.mxu0 0
      %2535 = vmatpush.bf16.xpose.msra.mxu0 0
      %2536 = vmatpush.bf16.xpose.msra.mxu0 0
      %2537 = vmatpush.bf16.xpose.msra.mxu0 0
      %2538 = vmatpush.bf16.xpose.msra.mxu0 %v2530
      %2539 = vmatpush.bf16.xpose.msra.mxu0 %v2527
      %2540 = vmatmul.bf16.gmra.mxu0 %v2521
      %v2541 = vpop.f32.mrf.mxu0
      %v2542 = vadd.f32 0.0, %v2541
      %v2543 = vpop.f32.mrf.mxu0
      %v2544 = vadd.f32 0.0, %v2543
      %2545 = vmatmul.bf16.gmra.mxu0 %v2524
      %v2546 = vpop.f32.mrf.mxu0
      %v2547 = vadd.f32 0.0, %v2546
      %v2548 = vpop.f32.mrf.mxu0
      %2549 = vdwg.mxu0
      %v2550 = vmul.f32 %v2542, 0.17677669
      %v2551 = vmul.f32 %v2544, 0.17677669
      %v2552 = vmul.f32 %v2547, 0.17677669
      %v2553 = vsel %vm1019, %v2550, -1e+30
      %v2554 = vsel %vm1019, %v2551, -1e+30
      %v2555 = vsel %vm1019, %v2552, -1e+30
      %v2556 = vsel %vm1319, %v2553, -inf
      %2557 = vmax.xlane.f32.xlu0 %v2556
      %v2558 = vpop.xlane.xlu0 %2557
      %v2559 = vsel %vm1319, %v2554, -inf
      %2560 = vmax.xlane.f32.xlu0 %v2559
      %v2561 = vpop.xlane.xlu0 %2560
      %v2562 = vsel %vm1319, %v2555, -inf
      %2563 = vmax.xlane.f32.xlu0 %v2562
      %v2564 = vpop.xlane.xlu0 %2563
      %v2565 = vsub.f32 %v2553, %v2558
      %v2566 = vsub.f32 %v2554, %v2561
      %v2567 = vsub.f32 %v2555, %v2564
      %v2568 = vmul.f32 %v2565, 1.442695
      %v2569 = vpow.pop %v2568
      %v2570 = vmul.f32 %v2566, 1.442695
      %v2571 = vpow.pop %v2570
      %v2572 = vmul.f32 %v2567, 1.442695
      %v2573 = vpow.pop %v2572
      %v2574 = vsel %vm1319, %v2569, 0.0
      %2575 = vadd.xlane.f32.xlu0 %v2574
      %v2576 = vpop.xlane.xlu0 %2575
      %v2577 = vsel %vm1319, %v2571, 0.0
      %2578 = vadd.xlane.f32.xlu0 %v2577
      %v2579 = vpop.xlane.xlu0 %2578
      %v2580 = vsel %vm1319, %v2573, 0.0
      %2581 = vadd.xlane.f32.xlu0 %v2580
      %v2582 = vpop.xlane.xlu0 %2581
      %v2583 = vrcp.pop %v2576
      %v2584 = vrcp.pop %v2579
      %v2585 = vrcp.pop %v2582
      %v2586 = vmul.f32 %v2569, %v2583
      %v2587 = vmul.f32 %v2571, %v2584
      %v2588 = vmul.f32 %v2573, %v2585
      %v2589 = vpack.c.bf16 %v2587, %v2586
      %v2590 = vpack.c.bf16 %v2588, %v2588
      %v2591 = vpack.c.bf16 %v2510, %v2508
      %v2592 = vpack.c.bf16 %v2513, %v2513
      %v2594 = vsel %vm1319, %v2589, 0
      %v2597 = vsel %vm1319, %v2590, 0
      %v2600 = vsel %vm1363, %v2592, 0
      %2602 = vmatpush.bf16.msra.mxu0 0
      %2603 = vmatpush.bf16.msra.mxu0 0
      %2604 = vmatpush.bf16.msra.mxu0 0
      %2605 = vmatpush.bf16.msra.mxu0 0
      %2606 = vmatpush.bf16.msra.mxu0 0
      %2607 = vmatpush.bf16.msra.mxu0 0
      %2608 = vmatpush.bf16.msra.mxu0 %v2600
      %2609 = vmatpush.bf16.msra.mxu0 %v2591
      %2610 = vmatmul.bf16.gmra.mxu0 %v2594
      %v2611 = vpop.f32.mrf.mxu0
      %v2612 = vadd.f32 0.0, %v2611
      %v2613 = vpop.f32.mrf.mxu0
      %v2614 = vadd.f32 0.0, %v2613
      %2615 = vmatmul.bf16.gmra.mxu0 %v2597
      %v2616 = vpop.f32.mrf.mxu0
      %v2617 = vadd.f32 0.0, %v2616
      %v2618 = vpop.f32.mrf.mxu0
      %2619 = vdwg.mxu0
      %v2620 = vpack.c.bf16 %v2614, %v2612
      %v2621 = vpack.c.bf16 %v2617, %v2617
      %s2622 = scalar_lea.vmem %s19, 48
      %v2623 = vld [vmem:[%s2622] sm:$0xf]
      %v2624 = vld [vmem:[%s2622 + $0x4] sm:$0xf]
      %v2625 = vld [vmem:[%s2622 + $0x8] sm:$0xf]
      %v2626 = vld [vmem:[%s2622 + $0xc] sm:$0xf]
      %v2631 = vunpack.c.l.b16 %v2623
      %v2632 = vunpack.c.l.b16 %v2624
      %v2633 = vunpack.c.l.b16 %v2625
      %v2634 = vunpack.c.l.b16 %v2626
      %v2635 = vpack.c.b16 %v2632, %v2631
      %v2636 = vpack.c.b16 %v2634, %v2633
      %v2640 = vsel %vm1282, %v2620, 0
      %v2643 = vsel %vm1282, %v2621, 0
      %2645 = vmatpush.bf16.msra.mxu0 0
      %2646 = vmatpush.bf16.msra.mxu0 0
      %2647 = vmatpush.bf16.msra.mxu0 0
      %2648 = vmatpush.bf16.msra.mxu0 0
      %2649 = vmatpush.bf16.msra.mxu0 0
      %2650 = vmatpush.bf16.msra.mxu0 0
      %2651 = vmatpush.bf16.msra.mxu0 %v2636
      %2652 = vmatpush.bf16.msra.mxu0 %v2635
      %2653 = vmatmul.bf16.gmra.mxu0 %v2640
      %v2654 = vpop.f32.mrf.mxu0
      %v2655 = vadd.f32 0.0, %v2654
      %v2656 = vpop.f32.mrf.mxu0
      %v2657 = vadd.f32 0.0, %v2656
      %2658 = vmatmul.bf16.gmra.mxu0 %v2643
      %v2659 = vpop.f32.mrf.mxu0
      %v2660 = vadd.f32 0.0, %v2659
      %v2661 = vpop.f32.mrf.mxu0
      %2662 = vdwg.mxu0
      %v2663 = vadd.f32 %v2249, %v2655
      %v2664 = vadd.f32 %v2250, %v2657
      %v2665 = vadd.f32 %v2251, %v2660
      %v2666 = vadd.f32 %v931, %v2663
      %v2667 = vadd.f32 %v932, %v2664
      %v2668 = vadd.f32 %v933, %v2665
      %v2669 = vld [vmem:[%s21] sm:$0x1]
      %v2671 = vperm.slane %v2669, 0
      %v2673 = vadd.f32 %v2666, %v2671
      %v2674 = vadd.f32 %v2667, %v2671
      %v2675 = vadd.f32 %v2668, %v2671
      %v2676 = vld [vmem:[%s23] sm:$0x1]
      %v2677 = vld [vmem:[%s25] sm:$0x1]
      %2678 = vadd.xlane.f32.xlu0 %v2673
      %v2679 = vpop.xlane.xlu0 %2678
      %2680 = vadd.xlane.f32.xlu0 %v2674
      %v2681 = vpop.xlane.xlu0 %2680
      %2682 = vadd.xlane.f32.xlu0 %v2675
      %v2683 = vpop.xlane.xlu0 %2682
      %v2684 = vmul.f32 %v2679, %v948
      %v2685 = vmul.f32 %v2681, %v948
      %v2686 = vmul.f32 %v2683, %v948
      %v2687 = vsub.f32 %v2673, %v2684
      %v2688 = vsub.f32 %v2674, %v2685
      %v2689 = vsub.f32 %v2675, %v2686
      %v2690 = vmul.f32 %v2687, %v2687
      %v2691 = vmul.f32 %v2688, %v2688
      %v2692 = vmul.f32 %v2689, %v2689
      %2693 = vadd.xlane.f32.xlu0 %v2690
      %v2694 = vpop.xlane.xlu0 %2693
      %2695 = vadd.xlane.f32.xlu0 %v2691
      %v2696 = vpop.xlane.xlu0 %2695
      %2697 = vadd.xlane.f32.xlu0 %v2692
      %v2698 = vpop.xlane.xlu0 %2697
      %v2699 = vmul.f32 %v2694, %v948
      %v2700 = vmul.f32 %v2696, %v948
      %v2701 = vmul.f32 %v2698, %v948
      %v2702 = vadd.f32 %v2699, 1e-06
      %v2703 = vadd.f32 %v2700, 1e-06
      %v2704 = vadd.f32 %v2701, 1e-06
      %v2705 = vrsqrt.pop %v2702
      %v2706 = vmul.f32 %v2705, %v2702
      %v2707 = vmul.f32 %v2706, %v2705
      %v2708 = vmul.f32 0.5, %v2707
      %v2709 = vsub.f32 1.5, %v2708
      %v2710 = vmul.f32 %v2705, %v2709
      %vm2711 = vweird.f32 %v2702
      %vm2712 = vweird.f32 %v2705
      %vm2713 = vmor %vm2711, %vm2712
      %v2714 = vsel %vm2713, %v2705, %v2710
      %v2715 = vrsqrt.pop %v2703
      %v2716 = vmul.f32 %v2715, %v2703
      %v2717 = vmul.f32 %v2716, %v2715
      %v2718 = vmul.f32 0.5, %v2717
      %v2719 = vsub.f32 1.5, %v2718
      %v2720 = vmul.f32 %v2715, %v2719
      %vm2721 = vweird.f32 %v2703
      %vm2722 = vweird.f32 %v2715
      %vm2723 = vmor %vm2721, %vm2722
      %v2724 = vsel %vm2723, %v2715, %v2720
      %v2725 = vrsqrt.pop %v2704
      %v2726 = vmul.f32 %v2725, %v2704
      %v2727 = vmul.f32 %v2726, %v2725
      %v2728 = vmul.f32 0.5, %v2727
      %v2729 = vsub.f32 1.5, %v2728
      %v2730 = vmul.f32 %v2725, %v2729
      %vm2731 = vweird.f32 %v2704
      %vm2732 = vweird.f32 %v2725
      %vm2733 = vmor %vm2731, %vm2732
      %v2734 = vsel %vm2733, %v2725, %v2730
      %v2735 = vmul.f32 %v2687, %v2714
      %v2736 = vmul.f32 %v2688, %v2724
      %v2737 = vmul.f32 %v2689, %v2734
      %v2739 = vperm.slane %v2676, 0
      %v2741 = vmul.f32 %v2735, %v2739
      %v2742 = vmul.f32 %v2736, %v2739
      %v2743 = vmul.f32 %v2737, %v2739
      %v2745 = vperm.slane %v2677, 0
      %v2747 = vadd.f32 %v2741, %v2745
      %v2748 = vadd.f32 %v2742, %v2745
      %v2749 = vadd.f32 %v2743, %v2745
      %v2750 = vpack.c.bf16 %v2748, %v2747
      %v2751 = vpack.c.bf16 %v2749, %v2749
      %v2752 = vld [vmem:[%s27] sm:$0xff]
      %v2753 = vld [vmem:[%s27 + $0x8] sm:$0xff]
      %v2754 = vld [vmem:[%s27 + $0x10] sm:$0xff]
      %v2755 = vld [vmem:[%s27 + $0x18] sm:$0xff]
      %v2756 = vld [vmem:[%s27 + $0x20] sm:$0xff]
      %v2757 = vld [vmem:[%s27 + $0x28] sm:$0xff]
      %v2758 = vld [vmem:[%s27 + $0x30] sm:$0xff]
      %v2759 = vld [vmem:[%s27 + $0x38] sm:$0xff]
      %v2760 = vld [vmem:[%s27 + $0x40] sm:$0xff]
      %v2761 = vld [vmem:[%s27 + $0x48] sm:$0xff]
      %v2762 = vld [vmem:[%s27 + $0x50] sm:$0xff]
      %v2763 = vld [vmem:[%s27 + $0x58] sm:$0xff]
      %v2764 = vld [vmem:[%s27 + $0x60] sm:$0xff]
      %v2765 = vld [vmem:[%s27 + $0x68] sm:$0xff]
      %v2766 = vld [vmem:[%s27 + $0x70] sm:$0xff]
      %v2767 = vld [vmem:[%s27 + $0x78] sm:$0xff]
      %v2768 = vld [vmem:[%s27 + $0x80] sm:$0xff]
      %v2769 = vld [vmem:[%s27 + $0x88] sm:$0xff]
      %v2770 = vld [vmem:[%s27 + $0x90] sm:$0xff]
      %v2771 = vld [vmem:[%s27 + $0x98] sm:$0xff]
      %v2772 = vld [vmem:[%s27 + $0xa0] sm:$0xff]
      %v2773 = vld [vmem:[%s27 + $0xa8] sm:$0xff]
      %v2774 = vld [vmem:[%s27 + $0xb0] sm:$0xff]
      %v2775 = vld [vmem:[%s27 + $0xb8] sm:$0xff]
      %v2776 = vld [vmem:[%s27 + $0xc0] sm:$0xff]
      %v2777 = vld [vmem:[%s27 + $0xc8] sm:$0xff]
      %v2778 = vld [vmem:[%s27 + $0xd0] sm:$0xff]
      %v2779 = vld [vmem:[%s27 + $0xd8] sm:$0xff]
      %v2780 = vld [vmem:[%s27 + $0xe0] sm:$0xff]
      %v2781 = vld [vmem:[%s27 + $0xe8] sm:$0xff]
      %v2782 = vld [vmem:[%s27 + $0xf0] sm:$0xff]
      %v2783 = vld [vmem:[%s27 + $0xf8] sm:$0xff]
      %v2784 = vld [vmem:[%s29] sm:$0xf]
      %v2786 = vperm.slane %v2784, 0
      %v2787 = vperm.slane %v2784, 1
      %v2788 = vperm.slane %v2784, 2
      %v2789 = vperm.slane %v2784, 3
      %v2826 = vunpack.c.l.b16 %v2752
      %v2827 = vunpack.c.h.b16 %v2752
      %v2828 = vunpack.c.l.b16 %v2753
      %v2829 = vunpack.c.h.b16 %v2753
      %v2830 = vunpack.c.l.b16 %v2754
      %v2831 = vunpack.c.h.b16 %v2754
      %v2832 = vunpack.c.l.b16 %v2755
      %v2833 = vunpack.c.h.b16 %v2755
      %v2834 = vunpack.c.l.b16 %v2756
      %v2835 = vunpack.c.h.b16 %v2756
      %v2836 = vunpack.c.l.b16 %v2757
      %v2837 = vunpack.c.h.b16 %v2757
      %v2838 = vunpack.c.l.b16 %v2758
      %v2839 = vunpack.c.h.b16 %v2758
      %v2840 = vunpack.c.l.b16 %v2759
      %v2841 = vunpack.c.h.b16 %v2759
      %v2842 = vunpack.c.l.b16 %v2760
      %v2843 = vunpack.c.h.b16 %v2760
      %v2844 = vunpack.c.l.b16 %v2761
      %v2845 = vunpack.c.h.b16 %v2761
      %v2846 = vunpack.c.l.b16 %v2762
      %v2847 = vunpack.c.h.b16 %v2762
      %v2848 = vunpack.c.l.b16 %v2763
      %v2849 = vunpack.c.h.b16 %v2763
      %v2850 = vunpack.c.l.b16 %v2764
      %v2851 = vunpack.c.h.b16 %v2764
      %v2852 = vunpack.c.l.b16 %v2765
      %v2853 = vunpack.c.h.b16 %v2765
      %v2854 = vunpack.c.l.b16 %v2766
      %v2855 = vunpack.c.h.b16 %v2766
      %v2856 = vunpack.c.l.b16 %v2767
      %v2857 = vunpack.c.h.b16 %v2767
      %v2858 = vunpack.c.l.b16 %v2768
      %v2859 = vunpack.c.h.b16 %v2768
      %v2860 = vunpack.c.l.b16 %v2769
      %v2861 = vunpack.c.h.b16 %v2769
      %v2862 = vunpack.c.l.b16 %v2770
      %v2863 = vunpack.c.h.b16 %v2770
      %v2864 = vunpack.c.l.b16 %v2771
      %v2865 = vunpack.c.h.b16 %v2771
      %v2866 = vunpack.c.l.b16 %v2772
      %v2867 = vunpack.c.h.b16 %v2772
      %v2868 = vunpack.c.l.b16 %v2773
      %v2869 = vunpack.c.h.b16 %v2773
      %v2870 = vunpack.c.l.b16 %v2774
      %v2871 = vunpack.c.h.b16 %v2774
      %v2872 = vunpack.c.l.b16 %v2775
      %v2873 = vunpack.c.h.b16 %v2775
      %v2874 = vunpack.c.l.b16 %v2776
      %v2875 = vunpack.c.h.b16 %v2776
      %v2876 = vunpack.c.l.b16 %v2777
      %v2877 = vunpack.c.h.b16 %v2777
      %v2878 = vunpack.c.l.b16 %v2778
      %v2879 = vunpack.c.h.b16 %v2778
      %v2880 = vunpack.c.l.b16 %v2779
      %v2881 = vunpack.c.h.b16 %v2779
      %v2882 = vunpack.c.l.b16 %v2780
      %v2883 = vunpack.c.h.b16 %v2780
      %v2884 = vunpack.c.l.b16 %v2781
      %v2885 = vunpack.c.h.b16 %v2781
      %v2886 = vunpack.c.l.b16 %v2782
      %v2887 = vunpack.c.h.b16 %v2782
      %v2888 = vunpack.c.l.b16 %v2783
      %v2889 = vunpack.c.h.b16 %v2783
      %v2890 = vpack.c.b16 %v2830, %v2826
      %v2891 = vpack.c.b16 %v2831, %v2827
      %v2892 = vpack.c.b16 %v2832, %v2828
      %v2893 = vpack.c.b16 %v2833, %v2829
      %v2894 = vpack.c.b16 %v2838, %v2834
      %v2895 = vpack.c.b16 %v2839, %v2835
      %v2896 = vpack.c.b16 %v2840, %v2836
      %v2897 = vpack.c.b16 %v2841, %v2837
      %v2898 = vpack.c.b16 %v2846, %v2842
      %v2899 = vpack.c.b16 %v2847, %v2843
      %v2900 = vpack.c.b16 %v2848, %v2844
      %v2901 = vpack.c.b16 %v2849, %v2845
      %v2902 = vpack.c.b16 %v2854, %v2850
      %v2903 = vpack.c.b16 %v2855, %v2851
      %v2904 = vpack.c.b16 %v2856, %v2852
      %v2905 = vpack.c.b16 %v2857, %v2853
      %v2906 = vpack.c.b16 %v2862, %v2858
      %v2907 = vpack.c.b16 %v2863, %v2859
      %v2908 = vpack.c.b16 %v2864, %v2860
      %v2909 = vpack.c.b16 %v2865, %v2861
      %v2910 = vpack.c.b16 %v2870, %v2866
      %v2911 = vpack.c.b16 %v2871, %v2867
      %v2912 = vpack.c.b16 %v2872, %v2868
      %v2913 = vpack.c.b16 %v2873, %v2869
      %v2914 = vpack.c.b16 %v2878, %v2874
      %v2915 = vpack.c.b16 %v2879, %v2875
      %v2916 = vpack.c.b16 %v2880, %v2876
      %v2917 = vpack.c.b16 %v2881, %v2877
      %v2918 = vpack.c.b16 %v2886, %v2882
      %v2919 = vpack.c.b16 %v2887, %v2883
      %v2920 = vpack.c.b16 %v2888, %v2884
      %v2921 = vpack.c.b16 %v2889, %v2885
      %2954 = vmatpush.bf16.msra.mxu0 %v2918
      %2955 = vmatpush.bf16.msra.mxu0 %v2914
      %2956 = vmatpush.bf16.msra.mxu0 %v2910
      %2957 = vmatpush.bf16.msra.mxu0 %v2906
      %2958 = vmatpush.bf16.msra.mxu0 %v2902
      %2959 = vmatpush.bf16.msra.mxu0 %v2898
      %2960 = vmatpush.bf16.msra.mxu0 %v2894
      %2961 = vmatpush.bf16.msra.mxu0 %v2890
      %2962 = vmatmul.bf16.gmra.mxu0 %v2750
      %v2963 = vpop.f32.mrf.mxu0
      %v2964 = vadd.f32 %v2786, %v2963
      %v2965 = vpop.f32.mrf.mxu0
      %v2966 = vadd.f32 %v2786, %v2965
      %2967 = vmatmul.bf16.gmra.mxu0 %v2751
      %v2968 = vpop.f32.mrf.mxu0
      %v2969 = vadd.f32 %v2786, %v2968
      %v2970 = vpop.f32.mrf.mxu0
      %2971 = vdwg.mxu0
      %2972 = vmatpush.bf16.msra.mxu0 %v2919
      %2973 = vmatpush.bf16.msra.mxu0 %v2915
      %2974 = vmatpush.bf16.msra.mxu0 %v2911
      %2975 = vmatpush.bf16.msra.mxu0 %v2907
      %2976 = vmatpush.bf16.msra.mxu0 %v2903
      %2977 = vmatpush.bf16.msra.mxu0 %v2899
      %2978 = vmatpush.bf16.msra.mxu0 %v2895
      %2979 = vmatpush.bf16.msra.mxu0 %v2891
      %2980 = vmatmul.bf16.gmra.mxu0 %v2750
      %v2981 = vpop.f32.mrf.mxu0
      %v2982 = vadd.f32 %v2787, %v2981
      %v2983 = vpop.f32.mrf.mxu0
      %v2984 = vadd.f32 %v2787, %v2983
      %2985 = vmatmul.bf16.gmra.mxu0 %v2751
      %v2986 = vpop.f32.mrf.mxu0
      %v2987 = vadd.f32 %v2787, %v2986
      %v2988 = vpop.f32.mrf.mxu0
      %2989 = vdwg.mxu0
      %2990 = vmatpush.bf16.msra.mxu0 %v2920
      %2991 = vmatpush.bf16.msra.mxu0 %v2916
      %2992 = vmatpush.bf16.msra.mxu0 %v2912
      %2993 = vmatpush.bf16.msra.mxu0 %v2908
      %2994 = vmatpush.bf16.msra.mxu0 %v2904
      %2995 = vmatpush.bf16.msra.mxu0 %v2900
      %2996 = vmatpush.bf16.msra.mxu0 %v2896
      %2997 = vmatpush.bf16.msra.mxu0 %v2892
      %2998 = vmatmul.bf16.gmra.mxu0 %v2750
      %v2999 = vpop.f32.mrf.mxu0
      %v3000 = vadd.f32 %v2788, %v2999
      %v3001 = vpop.f32.mrf.mxu0
      %v3002 = vadd.f32 %v2788, %v3001
      %3003 = vmatmul.bf16.gmra.mxu0 %v2751
      %v3004 = vpop.f32.mrf.mxu0
      %v3005 = vadd.f32 %v2788, %v3004
      %v3006 = vpop.f32.mrf.mxu0
      %3007 = vdwg.mxu0
      %3008 = vmatpush.bf16.msra.mxu0 %v2921
      %3009 = vmatpush.bf16.msra.mxu0 %v2917
      %3010 = vmatpush.bf16.msra.mxu0 %v2913
      %3011 = vmatpush.bf16.msra.mxu0 %v2909
      %3012 = vmatpush.bf16.msra.mxu0 %v2905
      %3013 = vmatpush.bf16.msra.mxu0 %v2901
      %3014 = vmatpush.bf16.msra.mxu0 %v2897
      %3015 = vmatpush.bf16.msra.mxu0 %v2893
      %3016 = vmatmul.bf16.gmra.mxu0 %v2750
      %v3017 = vpop.f32.mrf.mxu0
      %v3018 = vadd.f32 %v2789, %v3017
      %v3019 = vpop.f32.mrf.mxu0
      %v3020 = vadd.f32 %v2789, %v3019
      %3021 = vmatmul.bf16.gmra.mxu0 %v2751
      %v3022 = vpop.f32.mrf.mxu0
      %v3023 = vadd.f32 %v2789, %v3022
      %v3024 = vpop.f32.mrf.mxu0
      %3025 = vdwg.mxu0
      %v3026 = vmul.f32 %v2964, 0.5
      %v3027 = vmul.f32 %v2982, 0.5
      %v3028 = vmul.f32 %v3000, 0.5
      %v3029 = vmul.f32 %v3018, 0.5
      %v3030 = vmul.f32 %v2966, 0.5
      %v3031 = vmul.f32 %v2984, 0.5
      %v3032 = vmul.f32 %v3002, 0.5
      %v3033 = vmul.f32 %v3020, 0.5
      %v3034 = vmul.f32 %v2969, 0.5
      %v3035 = vmul.f32 %v2987, 0.5
      %v3036 = vmul.f32 %v3005, 0.5
      %v3037 = vmul.f32 %v3023, 0.5
      %v3038 = vmul.f32 %v2964, 0.70710677
      %v3039 = vmul.f32 %v2982, 0.70710677
      %v3040 = vmul.f32 %v3000, 0.70710677
      %v3041 = vmul.f32 %v3018, 0.70710677
      %v3042 = vmul.f32 %v2966, 0.70710677
      %v3043 = vmul.f32 %v2984, 0.70710677
      %v3044 = vmul.f32 %v3002, 0.70710677
      %v3045 = vmul.f32 %v3020, 0.70710677
      %v3046 = vmul.f32 %v2969, 0.70710677
      %v3047 = vmul.f32 %v2987, 0.70710677
      %v3048 = vmul.f32 %v3005, 0.70710677
      %v3049 = vmul.f32 %v3023, 0.70710677
      %v3050 = vmul.f32 %v3038, %v3038
      %v3051 = vmin.f32 16.0, %v3050
      %v3052 = vmul.f32 %v3051, 2.1237322e-06
      %v3053 = vadd.f32 %v3052, 0.00028619796
      %v3054 = vmul.f32 %v3051, %v3053
      %v3055 = vadd.f32 %v3054, 0.0036580483
      %v3056 = vmul.f32 %v3051, %v3055
      %v3057 = vadd.f32 %v3056, 0.05243302
      %v3058 = vmul.f32 %v3051, %v3057
      %v3059 = vadd.f32 %v3058, 0.18741608
      %v3060 = vmul.f32 %v3051, %v3059
      %v3061 = vadd.f32 %v3060, 1.1283791
      %v3062 = vmul.f32 %v3038, %v3061
      %v3063 = vmul.f32 %v3051, 3.8918573e-05
      %v3064 = vadd.f32 %v3063, 0.001143296
      %v3065 = vmul.f32 %v3051, %v3064
      %v3066 = vadd.f32 %v3065, 0.014752088
      %v3067 = vmul.f32 %v3051, %v3066
      %v3068 = vadd.f32 %v3067, 0.112945676
      %v3069 = vmul.f32 %v3051, %v3068
      %v3070 = vadd.f32 %v3069, 0.4994258
      %v3071 = vmul.f32 %v3051, %v3070
      %v3072 = vadd.f32 %v3071, 1.0
      %v3073 = vrcp.pop %v3072
      %v3074 = vmul.f32 %v3072, %v3073
      %v3075 = vsub.f32 1.0, %v3074
      %v3076 = vmul.f32 %v3073, %v3075
      %v3077 = vadd.f32 %v3073, %v3076
      %vm3078 = vweird.f32 %v3072
      %vm3079 = vweird.f32 %v3073
      %vm3080 = vmor %vm3078, %vm3079
      %v3081 = vsel %vm3080, %v3073, %v3077
      %v3082 = vand.u32 2147483647, %v3072
      %vm3083 = vcmp.eq.f32.partialorder %v3082, 8.507059e+37
      %v3084 = vand.u32 %v3072, 2147483648
      %v3085 = vor.u32 1.1754944e-38, %v3084
      %v3086 = vsel %vm3083, %v3085, %v3081
      %v3087 = vmul.f32 %v3062, %v3086
      %v3088 = vmin.f32 %v3087, 1.0
      %v3089 = vmax.f32 %v3088, -1.0
      %v3090 = vmul.f32 %v3039, %v3039
      %v3091 = vmin.f32 16.0, %v3090
      %v3092 = vmul.f32 %v3091, 2.1237322e-06
      %v3093 = vadd.f32 %v3092, 0.00028619796
      %v3094 = vmul.f32 %v3091, %v3093
      %v3095 = vadd.f32 %v3094, 0.0036580483
      %v3096 = vmul.f32 %v3091, %v3095
      %v3097 = vadd.f32 %v3096, 0.05243302
      %v3098 = vmul.f32 %v3091, %v3097
      %v3099 = vadd.f32 %v3098, 0.18741608
      %v3100 = vmul.f32 %v3091, %v3099
      %v3101 = vadd.f32 %v3100, 1.1283791
      %v3102 = vmul.f32 %v3039, %v3101
      %v3103 = vmul.f32 %v3091, 3.8918573e-05
      %v3104 = vadd.f32 %v3103, 0.001143296
      %v3105 = vmul.f32 %v3091, %v3104
      %v3106 = vadd.f32 %v3105, 0.014752088
      %v3107 = vmul.f32 %v3091, %v3106
      %v3108 = vadd.f32 %v3107, 0.112945676
      %v3109 = vmul.f32 %v3091, %v3108
      %v3110 = vadd.f32 %v3109, 0.4994258
      %v3111 = vmul.f32 %v3091, %v3110
      %v3112 = vadd.f32 %v3111, 1.0
      %v3113 = vrcp.pop %v3112
      %v3114 = vmul.f32 %v3112, %v3113
      %v3115 = vsub.f32 1.0, %v3114
      %v3116 = vmul.f32 %v3113, %v3115
      %v3117 = vadd.f32 %v3113, %v3116
      %vm3118 = vweird.f32 %v3112
      %vm3119 = vweird.f32 %v3113
      %vm3120 = vmor %vm3118, %vm3119
      %v3121 = vsel %vm3120, %v3113, %v3117
      %v3122 = vand.u32 2147483647, %v3112
      %vm3123 = vcmp.eq.f32.partialorder %v3122, 8.507059e+37
      %v3124 = vand.u32 %v3112, 2147483648
      %v3125 = vor.u32 1.1754944e-38, %v3124
      %v3126 = vsel %vm3123, %v3125, %v3121
      %v3127 = vmul.f32 %v3102, %v3126
      %v3128 = vmin.f32 %v3127, 1.0
      %v3129 = vmax.f32 %v3128, -1.0
      %v3130 = vmul.f32 %v3040, %v3040
      %v3131 = vmin.f32 16.0, %v3130
      %v3132 = vmul.f32 %v3131, 2.1237322e-06
      %v3133 = vadd.f32 %v3132, 0.00028619796
      %v3134 = vmul.f32 %v3131, %v3133
      %v3135 = vadd.f32 %v3134, 0.0036580483
      %v3136 = vmul.f32 %v3131, %v3135
      %v3137 = vadd.f32 %v3136, 0.05243302
      %v3138 = vmul.f32 %v3131, %v3137
      %v3139 = vadd.f32 %v3138, 0.18741608
      %v3140 = vmul.f32 %v3131, %v3139
      %v3141 = vadd.f32 %v3140, 1.1283791
      %v3142 = vmul.f32 %v3040, %v3141
      %v3143 = vmul.f32 %v3131, 3.8918573e-05
      %v3144 = vadd.f32 %v3143, 0.001143296
      %v3145 = vmul.f32 %v3131, %v3144
      %v3146 = vadd.f32 %v3145, 0.014752088
      %v3147 = vmul.f32 %v3131, %v3146
      %v3148 = vadd.f32 %v3147, 0.112945676
      %v3149 = vmul.f32 %v3131, %v3148
      %v3150 = vadd.f32 %v3149, 0.4994258
      %v3151 = vmul.f32 %v3131, %v3150
      %v3152 = vadd.f32 %v3151, 1.0
      %v3153 = vrcp.pop %v3152
      %v3154 = vmul.f32 %v3152, %v3153
      %v3155 = vsub.f32 1.0, %v3154
      %v3156 = vmul.f32 %v3153, %v3155
      %v3157 = vadd.f32 %v3153, %v3156
      %vm3158 = vweird.f32 %v3152
      %vm3159 = vweird.f32 %v3153
      %vm3160 = vmor %vm3158, %vm3159
      %v3161 = vsel %vm3160, %v3153, %v3157
      %v3162 = vand.u32 2147483647, %v3152
      %vm3163 = vcmp.eq.f32.partialorder %v3162, 8.507059e+37
      %v3164 = vand.u32 %v3152, 2147483648
      %v3165 = vor.u32 1.1754944e-38, %v3164
      %v3166 = vsel %vm3163, %v3165, %v3161
      %v3167 = vmul.f32 %v3142, %v3166
      %v3168 = vmin.f32 %v3167, 1.0
      %v3169 = vmax.f32 %v3168, -1.0
      %v3170 = vmul.f32 %v3041, %v3041
      %v3171 = vmin.f32 16.0, %v3170
      %v3172 = vmul.f32 %v3171, 2.1237322e-06
      %v3173 = vadd.f32 %v3172, 0.00028619796
      %v3174 = vmul.f32 %v3171, %v3173
      %v3175 = vadd.f32 %v3174, 0.0036580483
      %v3176 = vmul.f32 %v3171, %v3175
      %v3177 = vadd.f32 %v3176, 0.05243302
      %v3178 = vmul.f32 %v3171, %v3177
      %v3179 = vadd.f32 %v3178, 0.18741608
      %v3180 = vmul.f32 %v3171, %v3179
      %v3181 = vadd.f32 %v3180, 1.1283791
      %v3182 = vmul.f32 %v3041, %v3181
      %v3183 = vmul.f32 %v3171, 3.8918573e-05
      %v3184 = vadd.f32 %v3183, 0.001143296
      %v3185 = vmul.f32 %v3171, %v3184
      %v3186 = vadd.f32 %v3185, 0.014752088
      %v3187 = vmul.f32 %v3171, %v3186
      %v3188 = vadd.f32 %v3187, 0.112945676
      %v3189 = vmul.f32 %v3171, %v3188
      %v3190 = vadd.f32 %v3189, 0.4994258
      %v3191 = vmul.f32 %v3171, %v3190
      %v3192 = vadd.f32 %v3191, 1.0
      %v3193 = vrcp.pop %v3192
      %v3194 = vmul.f32 %v3192, %v3193
      %v3195 = vsub.f32 1.0, %v3194
      %v3196 = vmul.f32 %v3193, %v3195
      %v3197 = vadd.f32 %v3193, %v3196
      %vm3198 = vweird.f32 %v3192
      %vm3199 = vweird.f32 %v3193
      %vm3200 = vmor %vm3198, %vm3199
      %v3201 = vsel %vm3200, %v3193, %v3197
      %v3202 = vand.u32 2147483647, %v3192
      %vm3203 = vcmp.eq.f32.partialorder %v3202, 8.507059e+37
      %v3204 = vand.u32 %v3192, 2147483648
      %v3205 = vor.u32 1.1754944e-38, %v3204
      %v3206 = vsel %vm3203, %v3205, %v3201
      %v3207 = vmul.f32 %v3182, %v3206
      %v3208 = vmin.f32 %v3207, 1.0
      %v3209 = vmax.f32 %v3208, -1.0
      %v3210 = vmul.f32 %v3042, %v3042
      %v3211 = vmin.f32 16.0, %v3210
      %v3212 = vmul.f32 %v3211, 2.1237322e-06
      %v3213 = vadd.f32 %v3212, 0.00028619796
      %v3214 = vmul.f32 %v3211, %v3213
      %v3215 = vadd.f32 %v3214, 0.0036580483
      %v3216 = vmul.f32 %v3211, %v3215
      %v3217 = vadd.f32 %v3216, 0.05243302
      %v3218 = vmul.f32 %v3211, %v3217
      %v3219 = vadd.f32 %v3218, 0.18741608
      %v3220 = vmul.f32 %v3211, %v3219
      %v3221 = vadd.f32 %v3220, 1.1283791
      %v3222 = vmul.f32 %v3042, %v3221
      %v3223 = vmul.f32 %v3211, 3.8918573e-05
      %v3224 = vadd.f32 %v3223, 0.001143296
      %v3225 = vmul.f32 %v3211, %v3224
      %v3226 = vadd.f32 %v3225, 0.014752088
      %v3227 = vmul.f32 %v3211, %v3226
      %v3228 = vadd.f32 %v3227, 0.112945676
      %v3229 = vmul.f32 %v3211, %v3228
      %v3230 = vadd.f32 %v3229, 0.4994258
      %v3231 = vmul.f32 %v3211, %v3230
      %v3232 = vadd.f32 %v3231, 1.0
      %v3233 = vrcp.pop %v3232
      %v3234 = vmul.f32 %v3232, %v3233
      %v3235 = vsub.f32 1.0, %v3234
      %v3236 = vmul.f32 %v3233, %v3235
      %v3237 = vadd.f32 %v3233, %v3236
      %vm3238 = vweird.f32 %v3232
      %vm3239 = vweird.f32 %v3233
      %vm3240 = vmor %vm3238, %vm3239
      %v3241 = vsel %vm3240, %v3233, %v3237
      %v3242 = vand.u32 2147483647, %v3232
      %vm3243 = vcmp.eq.f32.partialorder %v3242, 8.507059e+37
      %v3244 = vand.u32 %v3232, 2147483648
      %v3245 = vor.u32 1.1754944e-38, %v3244
      %v3246 = vsel %vm3243, %v3245, %v3241
      %v3247 = vmul.f32 %v3222, %v3246
      %v3248 = vmin.f32 %v3247, 1.0
      %v3249 = vmax.f32 %v3248, -1.0
      %v3250 = vmul.f32 %v3043, %v3043
      %v3251 = vmin.f32 16.0, %v3250
      %v3252 = vmul.f32 %v3251, 2.1237322e-06
      %v3253 = vadd.f32 %v3252, 0.00028619796
      %v3254 = vmul.f32 %v3251, %v3253
      %v3255 = vadd.f32 %v3254, 0.0036580483
      %v3256 = vmul.f32 %v3251, %v3255
      %v3257 = vadd.f32 %v3256, 0.05243302
      %v3258 = vmul.f32 %v3251, %v3257
      %v3259 = vadd.f32 %v3258, 0.18741608
      %v3260 = vmul.f32 %v3251, %v3259
      %v3261 = vadd.f32 %v3260, 1.1283791
      %v3262 = vmul.f32 %v3043, %v3261
      %v3263 = vmul.f32 %v3251, 3.8918573e-05
      %v3264 = vadd.f32 %v3263, 0.001143296
      %v3265 = vmul.f32 %v3251, %v3264
      %v3266 = vadd.f32 %v3265, 0.014752088
      %v3267 = vmul.f32 %v3251, %v3266
      %v3268 = vadd.f32 %v3267, 0.112945676
      %v3269 = vmul.f32 %v3251, %v3268
      %v3270 = vadd.f32 %v3269, 0.4994258
      %v3271 = vmul.f32 %v3251, %v3270
      %v3272 = vadd.f32 %v3271, 1.0
      %v3273 = vrcp.pop %v3272
      %v3274 = vmul.f32 %v3272, %v3273
      %v3275 = vsub.f32 1.0, %v3274
      %v3276 = vmul.f32 %v3273, %v3275
      %v3277 = vadd.f32 %v3273, %v3276
      %vm3278 = vweird.f32 %v3272
      %vm3279 = vweird.f32 %v3273
      %vm3280 = vmor %vm3278, %vm3279
      %v3281 = vsel %vm3280, %v3273, %v3277
      %v3282 = vand.u32 2147483647, %v3272
      %vm3283 = vcmp.eq.f32.partialorder %v3282, 8.507059e+37
      %v3284 = vand.u32 %v3272, 2147483648
      %v3285 = vor.u32 1.1754944e-38, %v3284
      %v3286 = vsel %vm3283, %v3285, %v3281
      %v3287 = vmul.f32 %v3262, %v3286
      %v3288 = vmin.f32 %v3287, 1.0
      %v3289 = vmax.f32 %v3288, -1.0
      %v3290 = vmul.f32 %v3044, %v3044
      %v3291 = vmin.f32 16.0, %v3290
      %v3292 = vmul.f32 %v3291, 2.1237322e-06
      %v3293 = vadd.f32 %v3292, 0.00028619796
      %v3294 = vmul.f32 %v3291, %v3293
      %v3295 = vadd.f32 %v3294, 0.0036580483
      %v3296 = vmul.f32 %v3291, %v3295
      %v3297 = vadd.f32 %v3296, 0.05243302
      %v3298 = vmul.f32 %v3291, %v3297
      %v3299 = vadd.f32 %v3298, 0.18741608
      %v3300 = vmul.f32 %v3291, %v3299
      %v3301 = vadd.f32 %v3300, 1.1283791
      %v3302 = vmul.f32 %v3044, %v3301
      %v3303 = vmul.f32 %v3291, 3.8918573e-05
      %v3304 = vadd.f32 %v3303, 0.001143296
      %v3305 = vmul.f32 %v3291, %v3304
      %v3306 = vadd.f32 %v3305, 0.014752088
      %v3307 = vmul.f32 %v3291, %v3306
      %v3308 = vadd.f32 %v3307, 0.112945676
      %v3309 = vmul.f32 %v3291, %v3308
      %v3310 = vadd.f32 %v3309, 0.4994258
      %v3311 = vmul.f32 %v3291, %v3310
      %v3312 = vadd.f32 %v3311, 1.0
      %v3313 = vrcp.pop %v3312
      %v3314 = vmul.f32 %v3312, %v3313
      %v3315 = vsub.f32 1.0, %v3314
      %v3316 = vmul.f32 %v3313, %v3315
      %v3317 = vadd.f32 %v3313, %v3316
      %vm3318 = vweird.f32 %v3312
      %vm3319 = vweird.f32 %v3313
      %vm3320 = vmor %vm3318, %vm3319
      %v3321 = vsel %vm3320, %v3313, %v3317
      %v3322 = vand.u32 2147483647, %v3312
      %vm3323 = vcmp.eq.f32.partialorder %v3322, 8.507059e+37
      %v3324 = vand.u32 %v3312, 2147483648
      %v3325 = vor.u32 1.1754944e-38, %v3324
      %v3326 = vsel %vm3323, %v3325, %v3321
      %v3327 = vmul.f32 %v3302, %v3326
      %v3328 = vmin.f32 %v3327, 1.0
      %v3329 = vmax.f32 %v3328, -1.0
      %v3330 = vmul.f32 %v3045, %v3045
      %v3331 = vmin.f32 16.0, %v3330
      %v3332 = vmul.f32 %v3331, 2.1237322e-06
      %v3333 = vadd.f32 %v3332, 0.00028619796
      %v3334 = vmul.f32 %v3331, %v3333
      %v3335 = vadd.f32 %v3334, 0.0036580483
      %v3336 = vmul.f32 %v3331, %v3335
      %v3337 = vadd.f32 %v3336, 0.05243302
      %v3338 = vmul.f32 %v3331, %v3337
      %v3339 = vadd.f32 %v3338, 0.18741608
      %v3340 = vmul.f32 %v3331, %v3339
      %v3341 = vadd.f32 %v3340, 1.1283791
      %v3342 = vmul.f32 %v3045, %v3341
      %v3343 = vmul.f32 %v3331, 3.8918573e-05
      %v3344 = vadd.f32 %v3343, 0.001143296
      %v3345 = vmul.f32 %v3331, %v3344
      %v3346 = vadd.f32 %v3345, 0.014752088
      %v3347 = vmul.f32 %v3331, %v3346
      %v3348 = vadd.f32 %v3347, 0.112945676
      %v3349 = vmul.f32 %v3331, %v3348
      %v3350 = vadd.f32 %v3349, 0.4994258
      %v3351 = vmul.f32 %v3331, %v3350
      %v3352 = vadd.f32 %v3351, 1.0
      %v3353 = vrcp.pop %v3352
      %v3354 = vmul.f32 %v3352, %v3353
      %v3355 = vsub.f32 1.0, %v3354
      %v3356 = vmul.f32 %v3353, %v3355
      %v3357 = vadd.f32 %v3353, %v3356
      %vm3358 = vweird.f32 %v3352
      %vm3359 = vweird.f32 %v3353
      %vm3360 = vmor %vm3358, %vm3359
      %v3361 = vsel %vm3360, %v3353, %v3357
      %v3362 = vand.u32 2147483647, %v3352
      %vm3363 = vcmp.eq.f32.partialorder %v3362, 8.507059e+37
      %v3364 = vand.u32 %v3352, 2147483648
      %v3365 = vor.u32 1.1754944e-38, %v3364
      %v3366 = vsel %vm3363, %v3365, %v3361
      %v3367 = vmul.f32 %v3342, %v3366
      %v3368 = vmin.f32 %v3367, 1.0
      %v3369 = vmax.f32 %v3368, -1.0
      %v3370 = vmul.f32 %v3046, %v3046
      %v3371 = vmin.f32 16.0, %v3370
      %v3372 = vmul.f32 %v3371, 2.1237322e-06
      %v3373 = vadd.f32 %v3372, 0.00028619796
      %v3374 = vmul.f32 %v3371, %v3373
      %v3375 = vadd.f32 %v3374, 0.0036580483
      %v3376 = vmul.f32 %v3371, %v3375
      %v3377 = vadd.f32 %v3376, 0.05243302
      %v3378 = vmul.f32 %v3371, %v3377
      %v3379 = vadd.f32 %v3378, 0.18741608
      %v3380 = vmul.f32 %v3371, %v3379
      %v3381 = vadd.f32 %v3380, 1.1283791
      %v3382 = vmul.f32 %v3046, %v3381
      %v3383 = vmul.f32 %v3371, 3.8918573e-05
      %v3384 = vadd.f32 %v3383, 0.001143296
      %v3385 = vmul.f32 %v3371, %v3384
      %v3386 = vadd.f32 %v3385, 0.014752088
      %v3387 = vmul.f32 %v3371, %v3386
      %v3388 = vadd.f32 %v3387, 0.112945676
      %v3389 = vmul.f32 %v3371, %v3388
      %v3390 = vadd.f32 %v3389, 0.4994258
      %v3391 = vmul.f32 %v3371, %v3390
      %v3392 = vadd.f32 %v3391, 1.0
      %v3393 = vrcp.pop %v3392
      %v3394 = vmul.f32 %v3392, %v3393
      %v3395 = vsub.f32 1.0, %v3394
      %v3396 = vmul.f32 %v3393, %v3395
      %v3397 = vadd.f32 %v3393, %v3396
      %vm3398 = vweird.f32 %v3392
      %vm3399 = vweird.f32 %v3393
      %vm3400 = vmor %vm3398, %vm3399
      %v3401 = vsel %vm3400, %v3393, %v3397
      %v3402 = vand.u32 2147483647, %v3392
      %vm3403 = vcmp.eq.f32.partialorder %v3402, 8.507059e+37
      %v3404 = vand.u32 %v3392, 2147483648
      %v3405 = vor.u32 1.1754944e-38, %v3404
      %v3406 = vsel %vm3403, %v3405, %v3401
      %v3407 = vmul.f32 %v3382, %v3406
      %v3408 = vmin.f32 %v3407, 1.0
      %v3409 = vmax.f32 %v3408, -1.0
      %v3410 = vmul.f32 %v3047, %v3047
      %v3411 = vmin.f32 16.0, %v3410
      %v3412 = vmul.f32 %v3411, 2.1237322e-06
      %v3413 = vadd.f32 %v3412, 0.00028619796
      %v3414 = vmul.f32 %v3411, %v3413
      %v3415 = vadd.f32 %v3414, 0.0036580483
      %v3416 = vmul.f32 %v3411, %v3415
      %v3417 = vadd.f32 %v3416, 0.05243302
      %v3418 = vmul.f32 %v3411, %v3417
      %v3419 = vadd.f32 %v3418, 0.18741608
      %v3420 = vmul.f32 %v3411, %v3419
      %v3421 = vadd.f32 %v3420, 1.1283791
      %v3422 = vmul.f32 %v3047, %v3421
      %v3423 = vmul.f32 %v3411, 3.8918573e-05
      %v3424 = vadd.f32 %v3423, 0.001143296
      %v3425 = vmul.f32 %v3411, %v3424
      %v3426 = vadd.f32 %v3425, 0.014752088
      %v3427 = vmul.f32 %v3411, %v3426
      %v3428 = vadd.f32 %v3427, 0.112945676
      %v3429 = vmul.f32 %v3411, %v3428
      %v3430 = vadd.f32 %v3429, 0.4994258
      %v3431 = vmul.f32 %v3411, %v3430
      %v3432 = vadd.f32 %v3431, 1.0
      %v3433 = vrcp.pop %v3432
      %v3434 = vmul.f32 %v3432, %v3433
      %v3435 = vsub.f32 1.0, %v3434
      %v3436 = vmul.f32 %v3433, %v3435
      %v3437 = vadd.f32 %v3433, %v3436
      %vm3438 = vweird.f32 %v3432
      %vm3439 = vweird.f32 %v3433
      %vm3440 = vmor %vm3438, %vm3439
      %v3441 = vsel %vm3440, %v3433, %v3437
      %v3442 = vand.u32 2147483647, %v3432
      %vm3443 = vcmp.eq.f32.partialorder %v3442, 8.507059e+37
      %v3444 = vand.u32 %v3432, 2147483648
      %v3445 = vor.u32 1.1754944e-38, %v3444
      %v3446 = vsel %vm3443, %v3445, %v3441
      %v3447 = vmul.f32 %v3422, %v3446
      %v3448 = vmin.f32 %v3447, 1.0
      %v3449 = vmax.f32 %v3448, -1.0
      %v3450 = vmul.f32 %v3048, %v3048
      %v3451 = vmin.f32 16.0, %v3450
      %v3452 = vmul.f32 %v3451, 2.1237322e-06
      %v3453 = vadd.f32 %v3452, 0.00028619796
      %v3454 = vmul.f32 %v3451, %v3453
      %v3455 = vadd.f32 %v3454, 0.0036580483
      %v3456 = vmul.f32 %v3451, %v3455
      %v3457 = vadd.f32 %v3456, 0.05243302
      %v3458 = vmul.f32 %v3451, %v3457
      %v3459 = vadd.f32 %v3458, 0.18741608
      %v3460 = vmul.f32 %v3451, %v3459
      %v3461 = vadd.f32 %v3460, 1.1283791
      %v3462 = vmul.f32 %v3048, %v3461
      %v3463 = vmul.f32 %v3451, 3.8918573e-05
      %v3464 = vadd.f32 %v3463, 0.001143296
      %v3465 = vmul.f32 %v3451, %v3464
      %v3466 = vadd.f32 %v3465, 0.014752088
      %v3467 = vmul.f32 %v3451, %v3466
      %v3468 = vadd.f32 %v3467, 0.112945676
      %v3469 = vmul.f32 %v3451, %v3468
      %v3470 = vadd.f32 %v3469, 0.4994258
      %v3471 = vmul.f32 %v3451, %v3470
      %v3472 = vadd.f32 %v3471, 1.0
      %v3473 = vrcp.pop %v3472
      %v3474 = vmul.f32 %v3472, %v3473
      %v3475 = vsub.f32 1.0, %v3474
      %v3476 = vmul.f32 %v3473, %v3475
      %v3477 = vadd.f32 %v3473, %v3476
      %vm3478 = vweird.f32 %v3472
      %vm3479 = vweird.f32 %v3473
      %vm3480 = vmor %vm3478, %vm3479
      %v3481 = vsel %vm3480, %v3473, %v3477
      %v3482 = vand.u32 2147483647, %v3472
      %vm3483 = vcmp.eq.f32.partialorder %v3482, 8.507059e+37
      %v3484 = vand.u32 %v3472, 2147483648
      %v3485 = vor.u32 1.1754944e-38, %v3484
      %v3486 = vsel %vm3483, %v3485, %v3481
      %v3487 = vmul.f32 %v3462, %v3486
      %v3488 = vmin.f32 %v3487, 1.0
      %v3489 = vmax.f32 %v3488, -1.0
      %v3490 = vmul.f32 %v3049, %v3049
      %v3491 = vmin.f32 16.0, %v3490
      %v3492 = vmul.f32 %v3491, 2.1237322e-06
      %v3493 = vadd.f32 %v3492, 0.00028619796
      %v3494 = vmul.f32 %v3491, %v3493
      %v3495 = vadd.f32 %v3494, 0.0036580483
      %v3496 = vmul.f32 %v3491, %v3495
      %v3497 = vadd.f32 %v3496, 0.05243302
      %v3498 = vmul.f32 %v3491, %v3497
      %v3499 = vadd.f32 %v3498, 0.18741608
      %v3500 = vmul.f32 %v3491, %v3499
      %v3501 = vadd.f32 %v3500, 1.1283791
      %v3502 = vmul.f32 %v3049, %v3501
      %v3503 = vmul.f32 %v3491, 3.8918573e-05
      %v3504 = vadd.f32 %v3503, 0.001143296
      %v3505 = vmul.f32 %v3491, %v3504
      %v3506 = vadd.f32 %v3505, 0.014752088
      %v3507 = vmul.f32 %v3491, %v3506
      %v3508 = vadd.f32 %v3507, 0.112945676
      %v3509 = vmul.f32 %v3491, %v3508
      %v3510 = vadd.f32 %v3509, 0.4994258
      %v3511 = vmul.f32 %v3491, %v3510
      %v3512 = vadd.f32 %v3511, 1.0
      %v3513 = vrcp.pop %v3512
      %v3514 = vmul.f32 %v3512, %v3513
      %v3515 = vsub.f32 1.0, %v3514
      %v3516 = vmul.f32 %v3513, %v3515
      %v3517 = vadd.f32 %v3513, %v3516
      %vm3518 = vweird.f32 %v3512
      %vm3519 = vweird.f32 %v3513
      %vm3520 = vmor %vm3518, %vm3519
      %v3521 = vsel %vm3520, %v3513, %v3517
      %v3522 = vand.u32 2147483647, %v3512
      %vm3523 = vcmp.eq.f32.partialorder %v3522, 8.507059e+37
      %v3524 = vand.u32 %v3512, 2147483648
      %v3525 = vor.u32 1.1754944e-38, %v3524
      %v3526 = vsel %vm3523, %v3525, %v3521
      %v3527 = vmul.f32 %v3502, %v3526
      %v3528 = vmin.f32 %v3527, 1.0
      %v3529 = vmax.f32 %v3528, -1.0
      %v3530 = vadd.f32 %v3089, 1.0
      %v3531 = vadd.f32 %v3129, 1.0
      %v3532 = vadd.f32 %v3169, 1.0
      %v3533 = vadd.f32 %v3209, 1.0
      %v3534 = vadd.f32 %v3249, 1.0
      %v3535 = vadd.f32 %v3289, 1.0
      %v3536 = vadd.f32 %v3329, 1.0
      %v3537 = vadd.f32 %v3369, 1.0
      %v3538 = vadd.f32 %v3409, 1.0
      %v3539 = vadd.f32 %v3449, 1.0
      %v3540 = vadd.f32 %v3489, 1.0
      %v3541 = vadd.f32 %v3529, 1.0
      %v3542 = vmul.f32 %v3026, %v3530
      %v3543 = vmul.f32 %v3027, %v3531
      %v3544 = vmul.f32 %v3028, %v3532
      %v3545 = vmul.f32 %v3029, %v3533
      %v3546 = vmul.f32 %v3030, %v3534
      %v3547 = vmul.f32 %v3031, %v3535
      %v3548 = vmul.f32 %v3032, %v3536
      %v3549 = vmul.f32 %v3033, %v3537
      %v3550 = vmul.f32 %v3034, %v3538
      %v3551 = vmul.f32 %v3035, %v3539
      %v3552 = vmul.f32 %v3036, %v3540
      %v3553 = vmul.f32 %v3037, %v3541
      %v3554 = vpack.c.bf16 %v3546, %v3542
      %v3555 = vpack.c.bf16 %v3547, %v3543
      %v3556 = vpack.c.bf16 %v3548, %v3544
      %v3557 = vpack.c.bf16 %v3549, %v3545
      %v3558 = vpack.c.bf16 %v3550, %v3550
      %v3559 = vpack.c.bf16 %v3551, %v3551
      %v3560 = vpack.c.bf16 %v3552, %v3552
      %v3561 = vpack.c.bf16 %v3553, %v3553
      %v3562 = vld [vmem:[%s31] sm:$0xf]
      %v3563 = vld [vmem:[%s31 + $0x4] sm:$0xf]
      %v3564 = vld [vmem:[%s31 + $0x8] sm:$0xf]
      %v3565 = vld [vmem:[%s31 + $0xc] sm:$0xf]
      %v3566 = vld [vmem:[%s31 + $0x10] sm:$0xf]
      %v3567 = vld [vmem:[%s31 + $0x14] sm:$0xf]
      %v3568 = vld [vmem:[%s31 + $0x18] sm:$0xf]
      %v3569 = vld [vmem:[%s31 + $0x1c] sm:$0xf]
      %v3570 = vld [vmem:[%s31 + $0x20] sm:$0xf]
      %v3571 = vld [vmem:[%s31 + $0x24] sm:$0xf]
      %v3572 = vld [vmem:[%s31 + $0x28] sm:$0xf]
      %v3573 = vld [vmem:[%s31 + $0x2c] sm:$0xf]
      %v3574 = vld [vmem:[%s31 + $0x30] sm:$0xf]
      %v3575 = vld [vmem:[%s31 + $0x34] sm:$0xf]
      %v3576 = vld [vmem:[%s31 + $0x38] sm:$0xf]
      %v3577 = vld [vmem:[%s31 + $0x3c] sm:$0xf]
      %v3578 = vld [vmem:[%s31 + $0x40] sm:$0xf]
      %v3579 = vld [vmem:[%s31 + $0x44] sm:$0xf]
      %v3580 = vld [vmem:[%s31 + $0x48] sm:$0xf]
      %v3581 = vld [vmem:[%s31 + $0x4c] sm:$0xf]
      %v3582 = vld [vmem:[%s31 + $0x50] sm:$0xf]
      %v3583 = vld [vmem:[%s31 + $0x54] sm:$0xf]
      %v3584 = vld [vmem:[%s31 + $0x58] sm:$0xf]
      %v3585 = vld [vmem:[%s31 + $0x5c] sm:$0xf]
      %v3586 = vld [vmem:[%s31 + $0x60] sm:$0xf]
      %v3587 = vld [vmem:[%s31 + $0x64] sm:$0xf]
      %v3588 = vld [vmem:[%s31 + $0x68] sm:$0xf]
      %v3589 = vld [vmem:[%s31 + $0x6c] sm:$0xf]
      %v3590 = vld [vmem:[%s31 + $0x70] sm:$0xf]
      %v3591 = vld [vmem:[%s31 + $0x74] sm:$0xf]
      %v3592 = vld [vmem:[%s31 + $0x78] sm:$0xf]
      %v3593 = vld [vmem:[%s31 + $0x7c] sm:$0xf]
      %v3594 = vld [vmem:[%s31 + $0x80] sm:$0xf]
      %v3595 = vld [vmem:[%s31 + $0x84] sm:$0xf]
      %v3596 = vld [vmem:[%s31 + $0x88] sm:$0xf]
      %v3597 = vld [vmem:[%s31 + $0x8c] sm:$0xf]
      %v3598 = vld [vmem:[%s31 + $0x90] sm:$0xf]
      %v3599 = vld [vmem:[%s31 + $0x94] sm:$0xf]
      %v3600 = vld [vmem:[%s31 + $0x98] sm:$0xf]
      %v3601 = vld [vmem:[%s31 + $0x9c] sm:$0xf]
      %v3602 = vld [vmem:[%s31 + $0xa0] sm:$0xf]
      %v3603 = vld [vmem:[%s31 + $0xa4] sm:$0xf]
      %v3604 = vld [vmem:[%s31 + $0xa8] sm:$0xf]
      %v3605 = vld [vmem:[%s31 + $0xac] sm:$0xf]
      %v3606 = vld [vmem:[%s31 + $0xb0] sm:$0xf]
      %v3607 = vld [vmem:[%s31 + $0xb4] sm:$0xf]
      %v3608 = vld [vmem:[%s31 + $0xb8] sm:$0xf]
      %v3609 = vld [vmem:[%s31 + $0xbc] sm:$0xf]
      %v3610 = vld [vmem:[%s31 + $0xc0] sm:$0xf]
      %v3611 = vld [vmem:[%s31 + $0xc4] sm:$0xf]
      %v3612 = vld [vmem:[%s31 + $0xc8] sm:$0xf]
      %v3613 = vld [vmem:[%s31 + $0xcc] sm:$0xf]
      %v3614 = vld [vmem:[%s31 + $0xd0] sm:$0xf]
      %v3615 = vld [vmem:[%s31 + $0xd4] sm:$0xf]
      %v3616 = vld [vmem:[%s31 + $0xd8] sm:$0xf]
      %v3617 = vld [vmem:[%s31 + $0xdc] sm:$0xf]
      %v3618 = vld [vmem:[%s31 + $0xe0] sm:$0xf]
      %v3619 = vld [vmem:[%s31 + $0xe4] sm:$0xf]
      %v3620 = vld [vmem:[%s31 + $0xe8] sm:$0xf]
      %v3621 = vld [vmem:[%s31 + $0xec] sm:$0xf]
      %v3622 = vld [vmem:[%s31 + $0xf0] sm:$0xf]
      %v3623 = vld [vmem:[%s31 + $0xf4] sm:$0xf]
      %v3624 = vld [vmem:[%s31 + $0xf8] sm:$0xf]
      %v3625 = vld [vmem:[%s31 + $0xfc] sm:$0xf]
      %v3626 = vld [vmem:[%s33] sm:$0x1]
      %v3628 = vperm.slane %v3626, 0
      %v3694 = vunpack.c.l.b16 %v3562
      %v3695 = vunpack.c.l.b16 %v3563
      %v3696 = vunpack.c.l.b16 %v3564
      %v3697 = vunpack.c.l.b16 %v3565
      %v3698 = vunpack.c.l.b16 %v3566
      %v3699 = vunpack.c.l.b16 %v3567
      %v3700 = vunpack.c.l.b16 %v3568
      %v3701 = vunpack.c.l.b16 %v3569
      %v3702 = vunpack.c.l.b16 %v3570
      %v3703 = vunpack.c.l.b16 %v3571
      %v3704 = vunpack.c.l.b16 %v3572
      %v3705 = vunpack.c.l.b16 %v3573
      %v3706 = vunpack.c.l.b16 %v3574
      %v3707 = vunpack.c.l.b16 %v3575
      %v3708 = vunpack.c.l.b16 %v3576
      %v3709 = vunpack.c.l.b16 %v3577
      %v3710 = vunpack.c.l.b16 %v3578
      %v3711 = vunpack.c.l.b16 %v3579
      %v3712 = vunpack.c.l.b16 %v3580
      %v3713 = vunpack.c.l.b16 %v3581
      %v3714 = vunpack.c.l.b16 %v3582
      %v3715 = vunpack.c.l.b16 %v3583
      %v3716 = vunpack.c.l.b16 %v3584
      %v3717 = vunpack.c.l.b16 %v3585
      %v3718 = vunpack.c.l.b16 %v3586
      %v3719 = vunpack.c.l.b16 %v3587
      %v3720 = vunpack.c.l.b16 %v3588
      %v3721 = vunpack.c.l.b16 %v3589
      %v3722 = vunpack.c.l.b16 %v3590
      %v3723 = vunpack.c.l.b16 %v3591
      %v3724 = vunpack.c.l.b16 %v3592
      %v3725 = vunpack.c.l.b16 %v3593
      %v3726 = vunpack.c.l.b16 %v3594
      %v3727 = vunpack.c.l.b16 %v3595
      %v3728 = vunpack.c.l.b16 %v3596
      %v3729 = vunpack.c.l.b16 %v3597
      %v3730 = vunpack.c.l.b16 %v3598
      %v3731 = vunpack.c.l.b16 %v3599
      %v3732 = vunpack.c.l.b16 %v3600
      %v3733 = vunpack.c.l.b16 %v3601
      %v3734 = vunpack.c.l.b16 %v3602
      %v3735 = vunpack.c.l.b16 %v3603
      %v3736 = vunpack.c.l.b16 %v3604
      %v3737 = vunpack.c.l.b16 %v3605
      %v3738 = vunpack.c.l.b16 %v3606
      %v3739 = vunpack.c.l.b16 %v3607
      %v3740 = vunpack.c.l.b16 %v3608
      %v3741 = vunpack.c.l.b16 %v3609
      %v3742 = vunpack.c.l.b16 %v3610
      %v3743 = vunpack.c.l.b16 %v3611
      %v3744 = vunpack.c.l.b16 %v3612
      %v3745 = vunpack.c.l.b16 %v3613
      %v3746 = vunpack.c.l.b16 %v3614
      %v3747 = vunpack.c.l.b16 %v3615
      %v3748 = vunpack.c.l.b16 %v3616
      %v3749 = vunpack.c.l.b16 %v3617
      %v3750 = vunpack.c.l.b16 %v3618
      %v3751 = vunpack.c.l.b16 %v3619
      %v3752 = vunpack.c.l.b16 %v3620
      %v3753 = vunpack.c.l.b16 %v3621
      %v3754 = vunpack.c.l.b16 %v3622
      %v3755 = vunpack.c.l.b16 %v3623
      %v3756 = vunpack.c.l.b16 %v3624
      %v3757 = vunpack.c.l.b16 %v3625
      %v3758 = vpack.c.b16 %v3695, %v3694
      %v3759 = vpack.c.b16 %v3697, %v3696
      %v3760 = vpack.c.b16 %v3699, %v3698
      %v3761 = vpack.c.b16 %v3701, %v3700
      %v3762 = vpack.c.b16 %v3703, %v3702
      %v3763 = vpack.c.b16 %v3705, %v3704
      %v3764 = vpack.c.b16 %v3707, %v3706
      %v3765 = vpack.c.b16 %v3709, %v3708
      %v3766 = vpack.c.b16 %v3711, %v3710
      %v3767 = vpack.c.b16 %v3713, %v3712
      %v3768 = vpack.c.b16 %v3715, %v3714
      %v3769 = vpack.c.b16 %v3717, %v3716
      %v3770 = vpack.c.b16 %v3719, %v3718
      %v3771 = vpack.c.b16 %v3721, %v3720
      %v3772 = vpack.c.b16 %v3723, %v3722
      %v3773 = vpack.c.b16 %v3725, %v3724
      %v3774 = vpack.c.b16 %v3727, %v3726
      %v3775 = vpack.c.b16 %v3729, %v3728
      %v3776 = vpack.c.b16 %v3731, %v3730
      %v3777 = vpack.c.b16 %v3733, %v3732
      %v3778 = vpack.c.b16 %v3735, %v3734
      %v3779 = vpack.c.b16 %v3737, %v3736
      %v3780 = vpack.c.b16 %v3739, %v3738
      %v3781 = vpack.c.b16 %v3741, %v3740
      %v3782 = vpack.c.b16 %v3743, %v3742
      %v3783 = vpack.c.b16 %v3745, %v3744
      %v3784 = vpack.c.b16 %v3747, %v3746
      %v3785 = vpack.c.b16 %v3749, %v3748
      %v3786 = vpack.c.b16 %v3751, %v3750
      %v3787 = vpack.c.b16 %v3753, %v3752
      %v3788 = vpack.c.b16 %v3755, %v3754
      %v3789 = vpack.c.b16 %v3757, %v3756
      %3822 = vmatpush.bf16.msra.mxu0 %v3765
      %3823 = vmatpush.bf16.msra.mxu0 %v3764
      %3824 = vmatpush.bf16.msra.mxu0 %v3763
      %3825 = vmatpush.bf16.msra.mxu0 %v3762
      %3826 = vmatpush.bf16.msra.mxu0 %v3761
      %3827 = vmatpush.bf16.msra.mxu0 %v3760
      %3828 = vmatpush.bf16.msra.mxu0 %v3759
      %3829 = vmatpush.bf16.msra.mxu0 %v3758
      %3830 = vmatmul.bf16.gmra.mxu0 %v3554
      %v3831 = vpop.f32.mrf.mxu0
      %v3832 = vadd.f32 %v3628, %v3831
      %v3833 = vpop.f32.mrf.mxu0
      %v3834 = vadd.f32 %v3628, %v3833
      %3835 = vmatmul.bf16.gmra.mxu0 %v3558
      %v3836 = vpop.f32.mrf.mxu0
      %v3837 = vadd.f32 %v3628, %v3836
      %v3838 = vpop.f32.mrf.mxu0
      %3839 = vdwg.mxu0
      %3840 = vmatpush.bf16.msra.mxu0 %v3773
      %3841 = vmatpush.bf16.msra.mxu0 %v3772
      %3842 = vmatpush.bf16.msra.mxu0 %v3771
      %3843 = vmatpush.bf16.msra.mxu0 %v3770
      %3844 = vmatpush.bf16.msra.mxu0 %v3769
      %3845 = vmatpush.bf16.msra.mxu0 %v3768
      %3846 = vmatpush.bf16.msra.mxu0 %v3767
      %3847 = vmatpush.bf16.msra.mxu0 %v3766
      %3848 = vmatmul.bf16.gmra.mxu0 %v3555
      %v3849 = vpop.f32.mrf.mxu0
      %v3850 = vadd.f32 %v3832, %v3849
      %v3851 = vpop.f32.mrf.mxu0
      %v3852 = vadd.f32 %v3834, %v3851
      %3853 = vmatmul.bf16.gmra.mxu0 %v3559
      %v3854 = vpop.f32.mrf.mxu0
      %v3855 = vadd.f32 %v3837, %v3854
      %v3856 = vpop.f32.mrf.mxu0
      %3857 = vdwg.mxu0
      %3858 = vmatpush.bf16.msra.mxu0 %v3781
      %3859 = vmatpush.bf16.msra.mxu0 %v3780
      %3860 = vmatpush.bf16.msra.mxu0 %v3779
      %3861 = vmatpush.bf16.msra.mxu0 %v3778
      %3862 = vmatpush.bf16.msra.mxu0 %v3777
      %3863 = vmatpush.bf16.msra.mxu0 %v3776
      %3864 = vmatpush.bf16.msra.mxu0 %v3775
      %3865 = vmatpush.bf16.msra.mxu0 %v3774
      %3866 = vmatmul.bf16.gmra.mxu0 %v3556
      %v3867 = vpop.f32.mrf.mxu0
      %v3868 = vadd.f32 %v3850, %v3867
      %v3869 = vpop.f32.mrf.mxu0
      %v3870 = vadd.f32 %v3852, %v3869
      %3871 = vmatmul.bf16.gmra.mxu0 %v3560
      %v3872 = vpop.f32.mrf.mxu0
      %v3873 = vadd.f32 %v3855, %v3872
      %v3874 = vpop.f32.mrf.mxu0
      %3875 = vdwg.mxu0
      %3876 = vmatpush.bf16.msra.mxu0 %v3789
      %3877 = vmatpush.bf16.msra.mxu0 %v3788
      %3878 = vmatpush.bf16.msra.mxu0 %v3787
      %3879 = vmatpush.bf16.msra.mxu0 %v3786
      %3880 = vmatpush.bf16.msra.mxu0 %v3785
      %3881 = vmatpush.bf16.msra.mxu0 %v3784
      %3882 = vmatpush.bf16.msra.mxu0 %v3783
      %3883 = vmatpush.bf16.msra.mxu0 %v3782
      %3884 = vmatmul.bf16.gmra.mxu0 %v3557
      %v3885 = vpop.f32.mrf.mxu0
      %v3886 = vadd.f32 %v3868, %v3885
      %v3887 = vpop.f32.mrf.mxu0
      %v3888 = vadd.f32 %v3870, %v3887
      %3889 = vmatmul.bf16.gmra.mxu0 %v3561
      %v3890 = vpop.f32.mrf.mxu0
      %v3891 = vadd.f32 %v3873, %v3890
      %v3892 = vpop.f32.mrf.mxu0
      %3893 = vdwg.mxu0
      %v3894 = vadd.f32 %v2673, %v3886
      %v3895 = vadd.f32 %v2674, %v3888
      %v3896 = vadd.f32 %v2675, %v3891
      %3897 = vst [vmem:[%s919] sm:$0xff] %v3894
      %3898 = vst [vmem:[%s919 + $0x8] sm:$0xff] %v3895
      %3899 = vst [vmem:[%s919 + $0x10] sm:$0xff] %v3896
      %v3900 = vld [vmem:[%s35] sm:$0x1]
      %v3901 = vld [vmem:[%s37] sm:$0x1]
      %3902 = vadd.xlane.f32.xlu0 %v3894
      %v3903 = vpop.xlane.xlu0 %3902
      %3904 = vadd.xlane.f32.xlu0 %v3895
      %v3905 = vpop.xlane.xlu0 %3904
      %3906 = vadd.xlane.f32.xlu0 %v3896
      %v3907 = vpop.xlane.xlu0 %3906
      %v3908 = vmul.f32 %v3903, %v948
      %v3909 = vmul.f32 %v3905, %v948
      %v3910 = vmul.f32 %v3907, %v948
      %v3911 = vsub.f32 %v3894, %v3908
      %v3912 = vsub.f32 %v3895, %v3909
      %v3913 = vsub.f32 %v3896, %v3910
      %v3914 = vmul.f32 %v3911, %v3911
      %v3915 = vmul.f32 %v3912, %v3912
      %v3916 = vmul.f32 %v3913, %v3913
      %3917 = vadd.xlane.f32.xlu0 %v3914
      %v3918 = vpop.xlane.xlu0 %3917
      %3919 = vadd.xlane.f32.xlu0 %v3915
      %v3920 = vpop.xlane.xlu0 %3919
      %3921 = vadd.xlane.f32.xlu0 %v3916
      %v3922 = vpop.xlane.xlu0 %3921
      %v3923 = vmul.f32 %v3918, %v948
      %v3924 = vmul.f32 %v3920, %v948
      %v3925 = vmul.f32 %v3922, %v948
      %v3926 = vadd.f32 %v3923, 1e-06
      %v3927 = vadd.f32 %v3924, 1e-06
      %v3928 = vadd.f32 %v3925, 1e-06
      %v3929 = vrsqrt.pop %v3926
      %v3930 = vmul.f32 %v3929, %v3926
      %v3931 = vmul.f32 %v3930, %v3929
      %v3932 = vmul.f32 0.5, %v3931
      %v3933 = vsub.f32 1.5, %v3932
      %v3934 = vmul.f32 %v3929, %v3933
      %vm3935 = vweird.f32 %v3926
      %vm3936 = vweird.f32 %v3929
      %vm3937 = vmor %vm3935, %vm3936
      %v3938 = vsel %vm3937, %v3929, %v3934
      %v3939 = vrsqrt.pop %v3927
      %v3940 = vmul.f32 %v3939, %v3927
      %v3941 = vmul.f32 %v3940, %v3939
      %v3942 = vmul.f32 0.5, %v3941
      %v3943 = vsub.f32 1.5, %v3942
      %v3944 = vmul.f32 %v3939, %v3943
      %vm3945 = vweird.f32 %v3927
      %vm3946 = vweird.f32 %v3939
      %vm3947 = vmor %vm3945, %vm3946
      %v3948 = vsel %vm3947, %v3939, %v3944
      %v3949 = vrsqrt.pop %v3928
      %v3950 = vmul.f32 %v3949, %v3928
      %v3951 = vmul.f32 %v3950, %v3949
      %v3952 = vmul.f32 0.5, %v3951
      %v3953 = vsub.f32 1.5, %v3952
      %v3954 = vmul.f32 %v3949, %v3953
      %vm3955 = vweird.f32 %v3928
      %vm3956 = vweird.f32 %v3949
      %vm3957 = vmor %vm3955, %vm3956
      %v3958 = vsel %vm3957, %v3949, %v3954
      %v3959 = vmul.f32 %v3911, %v3938
      %v3960 = vmul.f32 %v3912, %v3948
      %v3961 = vmul.f32 %v3913, %v3958
      %v3963 = vperm.slane %v3900, 0
      %v3965 = vmul.f32 %v3959, %v3963
      %v3966 = vmul.f32 %v3960, %v3963
      %v3967 = vmul.f32 %v3961, %v3963
      %v3969 = vperm.slane %v3901, 0
      %v3971 = vadd.f32 %v3965, %v3969
      %v3972 = vadd.f32 %v3966, %v3969
      %v3973 = vadd.f32 %v3967, %v3969
      %v3974 = vpack.c.bf16 %v3972, %v3971
      %v3975 = vpack.c.bf16 %v3973, %v3973
      %v3976 = vld [vmem:[%s39] sm:$0xf]
      %v3977 = vld [vmem:[%s39 + $0x4] sm:$0xf]
      %v3978 = vld [vmem:[%s39 + $0x8] sm:$0xf]
      %v3979 = vld [vmem:[%s39 + $0xc] sm:$0xf]
      %v3980 = vld [vmem:[%s39 + $0x10] sm:$0xf]
      %v3981 = vld [vmem:[%s39 + $0x14] sm:$0xf]
      %v3982 = vld [vmem:[%s39 + $0x18] sm:$0xf]
      %v3983 = vld [vmem:[%s39 + $0x1c] sm:$0xf]
      %v3984 = vld [vmem:[%s39 + $0x20] sm:$0xf]
      %v3985 = vld [vmem:[%s39 + $0x24] sm:$0xf]
      %v3986 = vld [vmem:[%s39 + $0x28] sm:$0xf]
      %v3987 = vld [vmem:[%s39 + $0x2c] sm:$0xf]
      %v3988 = vld [vmem:[%s39 + $0x30] sm:$0xf]
      %v3989 = vld [vmem:[%s39 + $0x34] sm:$0xf]
      %v3990 = vld [vmem:[%s39 + $0x38] sm:$0xf]
      %v3991 = vld [vmem:[%s39 + $0x3c] sm:$0xf]
      %v3992 = vld [vmem:[%s41] sm:$0x1]
      %v3994 = vperm.slane %v3992, 0
      %v4012 = vunpack.c.l.b16 %v3976
      %v4013 = vunpack.c.l.b16 %v3977
      %v4014 = vunpack.c.l.b16 %v3978
      %v4015 = vunpack.c.l.b16 %v3979
      %v4016 = vunpack.c.l.b16 %v3980
      %v4017 = vunpack.c.l.b16 %v3981
      %v4018 = vunpack.c.l.b16 %v3982
      %v4019 = vunpack.c.l.b16 %v3983
      %v4020 = vunpack.c.l.b16 %v3984
      %v4021 = vunpack.c.l.b16 %v3985
      %v4022 = vunpack.c.l.b16 %v3986
      %v4023 = vunpack.c.l.b16 %v3987
      %v4024 = vunpack.c.l.b16 %v3988
      %v4025 = vunpack.c.l.b16 %v3989
      %v4026 = vunpack.c.l.b16 %v3990
      %v4027 = vunpack.c.l.b16 %v3991
      %v4028 = vpack.c.b16 %v4013, %v4012
      %v4029 = vpack.c.b16 %v4015, %v4014
      %v4030 = vpack.c.b16 %v4017, %v4016
      %v4031 = vpack.c.b16 %v4019, %v4018
      %v4032 = vpack.c.b16 %v4021, %v4020
      %v4033 = vpack.c.b16 %v4023, %v4022
      %v4034 = vpack.c.b16 %v4025, %v4024
      %v4035 = vpack.c.b16 %v4027, %v4026
      %4044 = vmatpush.bf16.msra.mxu0 %v4035
      %4045 = vmatpush.bf16.msra.mxu0 %v4034
      %4046 = vmatpush.bf16.msra.mxu0 %v4033
      %4047 = vmatpush.bf16.msra.mxu0 %v4032
      %4048 = vmatpush.bf16.msra.mxu0 %v4031
      %4049 = vmatpush.bf16.msra.mxu0 %v4030
      %4050 = vmatpush.bf16.msra.mxu0 %v4029
      %4051 = vmatpush.bf16.msra.mxu0 %v4028
      %4052 = vmatmul.bf16.gmra.mxu0 %v3974
      %v4053 = vpop.f32.mrf.mxu0
      %v4054 = vadd.f32 %v3994, %v4053
      %v4055 = vpop.f32.mrf.mxu0
      %v4056 = vadd.f32 %v3994, %v4055
      %4057 = vmatmul.bf16.gmra.mxu0 %v3975
      %v4058 = vpop.f32.mrf.mxu0
      %v4059 = vadd.f32 %v3994, %v4058
      %v4060 = vpop.f32.mrf.mxu0
      %4061 = vdwg.mxu0
      %v4062 = vmul.f32 %v4054, 0.5
      %v4063 = vmul.f32 %v4056, 0.5
      %v4064 = vmul.f32 %v4059, 0.5
      %v4065 = vmul.f32 %v4054, 0.70710677
      %v4066 = vmul.f32 %v4056, 0.70710677
      %v4067 = vmul.f32 %v4059, 0.70710677
      %v4068 = vmul.f32 %v4065, %v4065
      %v4069 = vmin.f32 16.0, %v4068
      %v4070 = vmul.f32 %v4069, 2.1237322e-06
      %v4071 = vadd.f32 %v4070, 0.00028619796
      %v4072 = vmul.f32 %v4069, %v4071
      %v4073 = vadd.f32 %v4072, 0.0036580483
      %v4074 = vmul.f32 %v4069, %v4073
      %v4075 = vadd.f32 %v4074, 0.05243302
      %v4076 = vmul.f32 %v4069, %v4075
      %v4077 = vadd.f32 %v4076, 0.18741608
      %v4078 = vmul.f32 %v4069, %v4077
      %v4079 = vadd.f32 %v4078, 1.1283791
      %v4080 = vmul.f32 %v4065, %v4079
      %v4081 = vmul.f32 %v4069, 3.8918573e-05
      %v4082 = vadd.f32 %v4081, 0.001143296
      %v4083 = vmul.f32 %v4069, %v4082
      %v4084 = vadd.f32 %v4083, 0.014752088
      %v4085 = vmul.f32 %v4069, %v4084
      %v4086 = vadd.f32 %v4085, 0.112945676
      %v4087 = vmul.f32 %v4069, %v4086
      %v4088 = vadd.f32 %v4087, 0.4994258
      %v4089 = vmul.f32 %v4069, %v4088
      %v4090 = vadd.f32 %v4089, 1.0
      %v4091 = vrcp.pop %v4090
      %v4092 = vmul.f32 %v4090, %v4091
      %v4093 = vsub.f32 1.0, %v4092
      %v4094 = vmul.f32 %v4091, %v4093
      %v4095 = vadd.f32 %v4091, %v4094
      %vm4096 = vweird.f32 %v4090
      %vm4097 = vweird.f32 %v4091
      %vm4098 = vmor %vm4096, %vm4097
      %v4099 = vsel %vm4098, %v4091, %v4095
      %v4100 = vand.u32 2147483647, %v4090
      %vm4101 = vcmp.eq.f32.partialorder %v4100, 8.507059e+37
      %v4102 = vand.u32 %v4090, 2147483648
      %v4103 = vor.u32 1.1754944e-38, %v4102
      %v4104 = vsel %vm4101, %v4103, %v4099
      %v4105 = vmul.f32 %v4080, %v4104
      %v4106 = vmin.f32 %v4105, 1.0
      %v4107 = vmax.f32 %v4106, -1.0
      %v4108 = vmul.f32 %v4066, %v4066
      %v4109 = vmin.f32 16.0, %v4108
      %v4110 = vmul.f32 %v4109, 2.1237322e-06
      %v4111 = vadd.f32 %v4110, 0.00028619796
      %v4112 = vmul.f32 %v4109, %v4111
      %v4113 = vadd.f32 %v4112, 0.0036580483
      %v4114 = vmul.f32 %v4109, %v4113
      %v4115 = vadd.f32 %v4114, 0.05243302
      %v4116 = vmul.f32 %v4109, %v4115
      %v4117 = vadd.f32 %v4116, 0.18741608
      %v4118 = vmul.f32 %v4109, %v4117
      %v4119 = vadd.f32 %v4118, 1.1283791
      %v4120 = vmul.f32 %v4066, %v4119
      %v4121 = vmul.f32 %v4109, 3.8918573e-05
      %v4122 = vadd.f32 %v4121, 0.001143296
      %v4123 = vmul.f32 %v4109, %v4122
      %v4124 = vadd.f32 %v4123, 0.014752088
      %v4125 = vmul.f32 %v4109, %v4124
      %v4126 = vadd.f32 %v4125, 0.112945676
      %v4127 = vmul.f32 %v4109, %v4126
      %v4128 = vadd.f32 %v4127, 0.4994258
      %v4129 = vmul.f32 %v4109, %v4128
      %v4130 = vadd.f32 %v4129, 1.0
      %v4131 = vrcp.pop %v4130
      %v4132 = vmul.f32 %v4130, %v4131
      %v4133 = vsub.f32 1.0, %v4132
      %v4134 = vmul.f32 %v4131, %v4133
      %v4135 = vadd.f32 %v4131, %v4134
      %vm4136 = vweird.f32 %v4130
      %vm4137 = vweird.f32 %v4131
      %vm4138 = vmor %vm4136, %vm4137
      %v4139 = vsel %vm4138, %v4131, %v4135
      %v4140 = vand.u32 2147483647, %v4130
      %vm4141 = vcmp.eq.f32.partialorder %v4140, 8.507059e+37
      %v4142 = vand.u32 %v4130, 2147483648
      %v4143 = vor.u32 1.1754944e-38, %v4142
      %v4144 = vsel %vm4141, %v4143, %v4139
      %v4145 = vmul.f32 %v4120, %v4144
      %v4146 = vmin.f32 %v4145, 1.0
      %v4147 = vmax.f32 %v4146, -1.0
      %v4148 = vmul.f32 %v4067, %v4067
      %v4149 = vmin.f32 16.0, %v4148
      %v4150 = vmul.f32 %v4149, 2.1237322e-06
      %v4151 = vadd.f32 %v4150, 0.00028619796
      %v4152 = vmul.f32 %v4149, %v4151
      %v4153 = vadd.f32 %v4152, 0.0036580483
      %v4154 = vmul.f32 %v4149, %v4153
      %v4155 = vadd.f32 %v4154, 0.05243302
      %v4156 = vmul.f32 %v4149, %v4155
      %v4157 = vadd.f32 %v4156, 0.18741608
      %v4158 = vmul.f32 %v4149, %v4157
      %v4159 = vadd.f32 %v4158, 1.1283791
      %v4160 = vmul.f32 %v4067, %v4159
      %v4161 = vmul.f32 %v4149, 3.8918573e-05
      %v4162 = vadd.f32 %v4161, 0.001143296
      %v4163 = vmul.f32 %v4149, %v4162
      %v4164 = vadd.f32 %v4163, 0.014752088
      %v4165 = vmul.f32 %v4149, %v4164
      %v4166 = vadd.f32 %v4165, 0.112945676
      %v4167 = vmul.f32 %v4149, %v4166
      %v4168 = vadd.f32 %v4167, 0.4994258
      %v4169 = vmul.f32 %v4149, %v4168
      %v4170 = vadd.f32 %v4169, 1.0
      %v4171 = vrcp.pop %v4170
      %v4172 = vmul.f32 %v4170, %v4171
      %v4173 = vsub.f32 1.0, %v4172
      %v4174 = vmul.f32 %v4171, %v4173
      %v4175 = vadd.f32 %v4171, %v4174
      %vm4176 = vweird.f32 %v4170
      %vm4177 = vweird.f32 %v4171
      %vm4178 = vmor %vm4176, %vm4177
      %v4179 = vsel %vm4178, %v4171, %v4175
      %v4180 = vand.u32 2147483647, %v4170
      %vm4181 = vcmp.eq.f32.partialorder %v4180, 8.507059e+37
      %v4182 = vand.u32 %v4170, 2147483648
      %v4183 = vor.u32 1.1754944e-38, %v4182
      %v4184 = vsel %vm4181, %v4183, %v4179
      %v4185 = vmul.f32 %v4160, %v4184
      %v4186 = vmin.f32 %v4185, 1.0
      %v4187 = vmax.f32 %v4186, -1.0
      %v4188 = vadd.f32 %v4107, 1.0
      %v4189 = vadd.f32 %v4147, 1.0
      %v4190 = vadd.f32 %v4187, 1.0
      %v4191 = vmul.f32 %v4062, %v4188
      %v4192 = vmul.f32 %v4063, %v4189
      %v4193 = vmul.f32 %v4064, %v4190
      %v4194 = vpack.c.bf16 %v4192, %v4191
      %v4195 = vpack.c.bf16 %v4193, %v4193
      %v4196 = vld [vmem:[%s43] sm:$0xf]
      %v4197 = vld [vmem:[%s43 + $0x4] sm:$0xf]
      %v4198 = vld [vmem:[%s43 + $0x8] sm:$0xf]
      %v4199 = vld [vmem:[%s43 + $0xc] sm:$0xf]
      %v4200 = vld [vmem:[%s43 + $0x10] sm:$0xf]
      %v4201 = vld [vmem:[%s43 + $0x14] sm:$0xf]
      %v4202 = vld [vmem:[%s43 + $0x18] sm:$0xf]
      %v4203 = vld [vmem:[%s43 + $0x1c] sm:$0xf]
      %v4204 = vld [vmem:[%s45] sm:$0x1]
      %v4206 = vperm.slane %v4204, 0
      %v4216 = vunpack.c.l.b16 %v4196
      %v4217 = vunpack.c.l.b16 %v4197
      %v4218 = vunpack.c.l.b16 %v4198
      %v4219 = vunpack.c.l.b16 %v4199
      %v4220 = vunpack.c.l.b16 %v4200
      %v4221 = vunpack.c.l.b16 %v4201
      %v4222 = vunpack.c.l.b16 %v4202
      %v4223 = vunpack.c.l.b16 %v4203
      %v4224 = vpack.c.b16 %v4217, %v4216
      %v4225 = vpack.c.b16 %v4219, %v4218
      %v4226 = vpack.c.b16 %v4221, %v4220
      %v4227 = vpack.c.b16 %v4223, %v4222
      %vm4232 = vcmask 523264
      %v4234 = vsel %vm4232, %v4194, 0
      %v4237 = vsel %vm4232, %v4195, 0
      %4239 = vmatpush.bf16.msra.mxu0 0
      %4240 = vmatpush.bf16.msra.mxu0 0
      %4241 = vmatpush.bf16.msra.mxu0 0
      %4242 = vmatpush.bf16.msra.mxu0 0
      %4243 = vmatpush.bf16.msra.mxu0 %v4227
      %4244 = vmatpush.bf16.msra.mxu0 %v4226
      %4245 = vmatpush.bf16.msra.mxu0 %v4225
      %4246 = vmatpush.bf16.msra.mxu0 %v4224
      %4247 = vmatmul.bf16.gmra.mxu0 %v4234
      %v4248 = vpop.f32.mrf.mxu0
      %v4249 = vadd.f32 %v4206, %v4248
      %v4250 = vpop.f32.mrf.mxu0
      %v4251 = vadd.f32 %v4206, %v4250
      %4252 = vmatmul.bf16.gmra.mxu0 %v4237
      %v4253 = vpop.f32.mrf.mxu0
      %v4254 = vadd.f32 %v4206, %v4253
      %v4255 = vpop.f32.mrf.mxu0
      %4256 = vdwg.mxu0
      %v4257 = vmul.f32 %v4249, 0.5
      %v4258 = vmul.f32 %v4251, 0.5
      %v4259 = vmul.f32 %v4254, 0.5
      %v4260 = vmul.f32 %v4249, 0.70710677
      %v4261 = vmul.f32 %v4251, 0.70710677
      %v4262 = vmul.f32 %v4254, 0.70710677
      %v4263 = vmul.f32 %v4260, %v4260
      %v4264 = vmin.f32 16.0, %v4263
      %v4265 = vmul.f32 %v4264, 2.1237322e-06
      %v4266 = vadd.f32 %v4265, 0.00028619796
      %v4267 = vmul.f32 %v4264, %v4266
      %v4268 = vadd.f32 %v4267, 0.0036580483
      %v4269 = vmul.f32 %v4264, %v4268
      %v4270 = vadd.f32 %v4269, 0.05243302
      %v4271 = vmul.f32 %v4264, %v4270
      %v4272 = vadd.f32 %v4271, 0.18741608
      %v4273 = vmul.f32 %v4264, %v4272
      %v4274 = vadd.f32 %v4273, 1.1283791
      %v4275 = vmul.f32 %v4260, %v4274
      %v4276 = vmul.f32 %v4264, 3.8918573e-05
      %v4277 = vadd.f32 %v4276, 0.001143296
      %v4278 = vmul.f32 %v4264, %v4277
      %v4279 = vadd.f32 %v4278, 0.014752088
      %v4280 = vmul.f32 %v4264, %v4279
      %v4281 = vadd.f32 %v4280, 0.112945676
      %v4282 = vmul.f32 %v4264, %v4281
      %v4283 = vadd.f32 %v4282, 0.4994258
      %v4284 = vmul.f32 %v4264, %v4283
      %v4285 = vadd.f32 %v4284, 1.0
      %v4286 = vrcp.pop %v4285
      %v4287 = vmul.f32 %v4285, %v4286
      %v4288 = vsub.f32 1.0, %v4287
      %v4289 = vmul.f32 %v4286, %v4288
      %v4290 = vadd.f32 %v4286, %v4289
      %vm4291 = vweird.f32 %v4285
      %vm4292 = vweird.f32 %v4286
      %vm4293 = vmor %vm4291, %vm4292
      %v4294 = vsel %vm4293, %v4286, %v4290
      %v4295 = vand.u32 2147483647, %v4285
      %vm4296 = vcmp.eq.f32.partialorder %v4295, 8.507059e+37
      %v4297 = vand.u32 %v4285, 2147483648
      %v4298 = vor.u32 1.1754944e-38, %v4297
      %v4299 = vsel %vm4296, %v4298, %v4294
      %v4300 = vmul.f32 %v4275, %v4299
      %v4301 = vmin.f32 %v4300, 1.0
      %v4302 = vmax.f32 %v4301, -1.0
      %v4303 = vmul.f32 %v4261, %v4261
      %v4304 = vmin.f32 16.0, %v4303
      %v4305 = vmul.f32 %v4304, 2.1237322e-06
      %v4306 = vadd.f32 %v4305, 0.00028619796
      %v4307 = vmul.f32 %v4304, %v4306
      %v4308 = vadd.f32 %v4307, 0.0036580483
      %v4309 = vmul.f32 %v4304, %v4308
      %v4310 = vadd.f32 %v4309, 0.05243302
      %v4311 = vmul.f32 %v4304, %v4310
      %v4312 = vadd.f32 %v4311, 0.18741608
      %v4313 = vmul.f32 %v4304, %v4312
      %v4314 = vadd.f32 %v4313, 1.1283791
      %v4315 = vmul.f32 %v4261, %v4314
      %v4316 = vmul.f32 %v4304, 3.8918573e-05
      %v4317 = vadd.f32 %v4316, 0.001143296
      %v4318 = vmul.f32 %v4304, %v4317
      %v4319 = vadd.f32 %v4318, 0.014752088
      %v4320 = vmul.f32 %v4304, %v4319
      %v4321 = vadd.f32 %v4320, 0.112945676
      %v4322 = vmul.f32 %v4304, %v4321
      %v4323 = vadd.f32 %v4322, 0.4994258
      %v4324 = vmul.f32 %v4304, %v4323
      %v4325 = vadd.f32 %v4324, 1.0
      %v4326 = vrcp.pop %v4325
      %v4327 = vmul.f32 %v4325, %v4326
      %v4328 = vsub.f32 1.0, %v4327
      %v4329 = vmul.f32 %v4326, %v4328
      %v4330 = vadd.f32 %v4326, %v4329
      %vm4331 = vweird.f32 %v4325
      %vm4332 = vweird.f32 %v4326
      %vm4333 = vmor %vm4331, %vm4332
      %v4334 = vsel %vm4333, %v4326, %v4330
      %v4335 = vand.u32 2147483647, %v4325
      %vm4336 = vcmp.eq.f32.partialorder %v4335, 8.507059e+37
      %v4337 = vand.u32 %v4325, 2147483648
      %v4338 = vor.u32 1.1754944e-38, %v4337
      %v4339 = vsel %vm4336, %v4338, %v4334
      %v4340 = vmul.f32 %v4315, %v4339
      %v4341 = vmin.f32 %v4340, 1.0
      %v4342 = vmax.f32 %v4341, -1.0
      %v4343 = vmul.f32 %v4262, %v4262
      %v4344 = vmin.f32 16.0, %v4343
      %v4345 = vmul.f32 %v4344, 2.1237322e-06
      %v4346 = vadd.f32 %v4345, 0.00028619796
      %v4347 = vmul.f32 %v4344, %v4346
      %v4348 = vadd.f32 %v4347, 0.0036580483
      %v4349 = vmul.f32 %v4344, %v4348
      %v4350 = vadd.f32 %v4349, 0.05243302
      %v4351 = vmul.f32 %v4344, %v4350
      %v4352 = vadd.f32 %v4351, 0.18741608
      %v4353 = vmul.f32 %v4344, %v4352
      %v4354 = vadd.f32 %v4353, 1.1283791
      %v4355 = vmul.f32 %v4262, %v4354
      %v4356 = vmul.f32 %v4344, 3.8918573e-05
      %v4357 = vadd.f32 %v4356, 0.001143296
      %v4358 = vmul.f32 %v4344, %v4357
      %v4359 = vadd.f32 %v4358, 0.014752088
      %v4360 = vmul.f32 %v4344, %v4359
      %v4361 = vadd.f32 %v4360, 0.112945676
      %v4362 = vmul.f32 %v4344, %v4361
      %v4363 = vadd.f32 %v4362, 0.4994258
      %v4364 = vmul.f32 %v4344, %v4363
      %v4365 = vadd.f32 %v4364, 1.0
      %v4366 = vrcp.pop %v4365
      %v4367 = vmul.f32 %v4365, %v4366
      %v4368 = vsub.f32 1.0, %v4367
      %v4369 = vmul.f32 %v4366, %v4368
      %v4370 = vadd.f32 %v4366, %v4369
      %vm4371 = vweird.f32 %v4365
      %vm4372 = vweird.f32 %v4366
      %vm4373 = vmor %vm4371, %vm4372
      %v4374 = vsel %vm4373, %v4366, %v4370
      %v4375 = vand.u32 2147483647, %v4365
      %vm4376 = vcmp.eq.f32.partialorder %v4375, 8.507059e+37
      %v4377 = vand.u32 %v4365, 2147483648
      %v4378 = vor.u32 1.1754944e-38, %v4377
      %v4379 = vsel %vm4376, %v4378, %v4374
      %v4380 = vmul.f32 %v4355, %v4379
      %v4381 = vmin.f32 %v4380, 1.0
      %v4382 = vmax.f32 %v4381, -1.0
      %v4383 = vadd.f32 %v4302, 1.0
      %v4384 = vadd.f32 %v4342, 1.0
      %v4385 = vadd.f32 %v4382, 1.0
      %v4386 = vmul.f32 %v4257, %v4383
      %v4387 = vmul.f32 %v4258, %v4384
      %v4388 = vmul.f32 %v4259, %v4385
      %v4389 = vld [vmem:[%s47] sm:$0x1]
      %v4391 = vperm.slane %v4389, 0
      %v4393 = vmul.f32 %v4386, %v4391
      %v4394 = vmul.f32 %v4387, %v4391
      %v4395 = vmul.f32 %v4388, %v4391
      %v4396 = vsel %vm1282, %v4393, 0.0
      %4397 = vadd.xlane.f32.xlu0 %v4396
      %v4398 = vpop.xlane.xlu0 %4397
      %v4399 = vsel %vm1282, %v4394, 0.0
      %4400 = vadd.xlane.f32.xlu0 %v4399
      %v4401 = vpop.xlane.xlu0 %4400
      %v4402 = vsel %vm1282, %v4395, 0.0
      %4403 = vadd.xlane.f32.xlu0 %v4402
      %v4404 = vpop.xlane.xlu0 %4403
      %v4405 = vld [vmem:[#allocation2] sm:$0x1]
      %v4407 = vperm.slane %v4405, 0
      %v4409 = vadd.f32 %v4398, %v4407
      %v4410 = vadd.f32 %v4401, %v4407
      %v4411 = vadd.f32 %v4404, %v4407
      %vm4412 = vcmask 7168
      %4413 = vst.msk [vmem:[%s924] sm:$0xff] %vm4412, %v4409
      %4414 = vst.msk [vmem:[%s924 + $0x8] sm:$0xff] %vm4412, %v4410
      %4415 = vst.msk [vmem:[%s924 + $0x10] sm:$0xff] %vm4412, %v4411
      %v4416 = vld [vmem:[%s51] sm:$0x1]
      %v4417 = vld [vmem:[%s53] sm:$0x1]
      %v4419 = vperm.slane %v4416, 0
      %v4421 = vmul.f32 %v3959, %v4419
      %v4422 = vmul.f32 %v3960, %v4419
      %v4423 = vmul.f32 %v3961, %v4419
      %v4425 = vperm.slane %v4417, 0
      %v4427 = vadd.f32 %v4421, %v4425
      %v4428 = vadd.f32 %v4422, %v4425
      %v4429 = vadd.f32 %v4423, %v4425
      %4430 = vst [vmem:[%s929] sm:$0xff] %v4427
      %4431 = vst [vmem:[%s929 + $0x8] sm:$0xff] %v4428
      %4432 = vst [vmem:[%s929 + $0x10] sm:$0xff] %v4429
      %p4433 = scmp.lt.s32.totalorder %s73, 1
      %s4434 = scalar_select %p4433, %s73, 1
      %s4435 = smul.addr %s4434, 3
      %s4436 = smul.addr %s4435, 8
      %s4437 = scalar_lea.vmem %s55, %s4436
      %p4438 = scmp.lt.s32.totalorder %s73, 1
      %s4439 = scalar_select %p4438, %s73, 1
      %s4440 = smul.addr %s4439, 3
      %s4441 = smul.addr %s4440, 8
      %s4442 = scalar_lea.vmem %s57, %s4441
      %p4443 = scmp.lt.s32.totalorder %s73, 1
      %s4444 = scalar_select %p4443, %s73, 1
      %s4445 = smul.addr %s4444, 3
      %s4446 = smul.addr %s4445, 8
      %s4447 = scalar_lea.vmem %s59, %s4446
      // Predicated region
      $region129: #{forward.4} parent=127 // pred_check
        %p4448 = pneg %p663
      $region130: #{forward.4} parent=127 // pred_check_branch
        %4450 = sbr.rel (%p4448) target = $region132
      $region131: #{forward.4} parent=127 // pred_region
        _
      $region132: #{forward.4} parent=127 // pred_fallthru
        _
      // Predicated region
      $region133: #{forward.4} parent=127 // pred_check
        %p4451 = pneg %p689
      $region134: #{forward.4} parent=127 // pred_check_branch
        %4453 = sbr.rel (%p4451) target = $region136
      $region135: #{forward.4} parent=127 // pred_region
        _
      $region136: #{forward.4} parent=127 // pred_fallthru
        _
      // Predicated region
      $region137: #{forward.4} parent=127 // pred_check
        %p4454 = pneg %p715
      $region138: #{forward.4} parent=127 // pred_check_branch
        %4456 = sbr.rel (%p4454) target = $region140
      $region139: #{forward.4} parent=127 // pred_region
        _
      $region140: #{forward.4} parent=127 // pred_fallthru
        _
    $region128: #{forward.4} parent=5 // pred_fallthru
      _
    %p4457 = scmp.le.s32.totalorder 2, %s68
    // Predicated region
    $region141: #{forward.4} parent=5 // pred_check
      %p4458 = pneg %p4457
    $region142: #{forward.4} parent=5 // pred_check_branch
      %4460 = sbr.rel (%p4458) target = $region144
    $region143: #{forward.4} parent=5 // pred_region
      %s4461 = ssub.s32 %s68, 2
      // Predicated region
      $region145: #{forward.4} parent=143 // pred_check
        %p4462 = pneg %p669
      $region146: #{forward.4} parent=143 // pred_check_branch
        %4464 = sbr.rel (%p4462) target = $region148
      $region147: #{forward.4} parent=143 // pred_region
        %p4465 = scmp.lt.s32.totalorder %s74, 1
        %s4466 = scalar_select %p4465, %s74, 1
        %s4467 = smul.addr %s4466, 3
        %s4468 = smul.addr %s4467, 8
        %s4469 = scalar_lea.vmem %s55, %s4468
      $region148: #{forward.4} parent=143 // pred_fallthru
        _
      // Predicated region
      $region149: #{forward.4} parent=143 // pred_check
        %p4470 = pneg %p695
      $region150: #{forward.4} parent=143 // pred_check_branch
        %4472 = sbr.rel (%p4470) target = $region152
      $region151: #{forward.4} parent=143 // pred_region
        %p4473 = scmp.lt.s32.totalorder %s74, 1
        %s4474 = scalar_select %p4473, %s74, 1
        %s4475 = smul.addr %s4474, 3
        %s4476 = smul.addr %s4475, 8
        %s4477 = scalar_lea.vmem %s57, %s4476
      $region152: #{forward.4} parent=143 // pred_fallthru
        _
      // Predicated region
      $region153: #{forward.4} parent=143 // pred_check
        %p4478 = pneg %p721
      $region154: #{forward.4} parent=143 // pred_check_branch
        %4480 = sbr.rel (%p4478) target = $region156
      $region155: #{forward.4} parent=143 // pred_region
        %p4481 = scmp.lt.s32.totalorder %s74, 1
        %s4482 = scalar_select %p4481, %s74, 1
        %s4483 = smul.addr %s4482, 3
        %s4484 = smul.addr %s4483, 8
        %s4485 = scalar_lea.vmem %s59, %s4484
      $region156: #{forward.4} parent=143 // pred_fallthru
        _
    $region144: #{forward.4} parent=5 // pred_fallthru
      _
  $region6: #{forward.4} parent=0 // loop_footer
    %s72 = sadd.s32 1, %s68
  $region7: #{forward.4} parent=0 // loop_footer_branch
    %67 = sbr.rel target = $region3
  $region8: #{forward.4} parent=0 // loop_exit
    _

// kernel: forward.5
$region0: #{forward.5}
  #allocation0 [shape = 'u32[]', space=smem, size = 0x4, offset = 0x4, fixed_abs, tag = 'smem constant byte address 0x4 - core index']
  #allocation1 [shape = 'u32[72,128]{1,0:T(1,128)}', space=vmem, size = 0x9000, scoped, tag = 'internal scratch']
  %s0 = inlined_call_operand.vmem [shape: f32[2,16,128], index: 0, kind: input, shape index: {}]
  %s1 = inlined_call_operand.vmem [shape: f32[1,128], index: 1, kind: input, shape index: {}]
  %s2 = inlined_call_operand.vmem [shape: f32[1,128], index: 2, kind: input, shape index: {}]
  %s3 = inlined_call_operand.vmem [shape: bf16[4,128,32], index: 3, kind: input, shape index: {}]
  %s4 = inlined_call_operand.vmem [shape: bf16[4,128,32], index: 4, kind: input, shape index: {}]
  %s5 = inlined_call_operand.vmem [shape: bf16[4,128,32], index: 5, kind: input, shape index: {}]
  %s6 = inlined_call_operand.vmem [shape: f32[4,1,32], index: 6, kind: input, shape index: {}]
  %s7 = inlined_call_operand.vmem [shape: f32[4,1,32], index: 7, kind: input, shape index: {}]
  %s8 = inlined_call_operand.vmem [shape: f32[4,1,32], index: 8, kind: input, shape index: {}]
  %s9 = inlined_call_operand.vmem [shape: bf16[4,32,128], index: 9, kind: input, shape index: {}]
  %s10 = inlined_call_operand.vmem [shape: f32[1,128], index: 10, kind: input, shape index: {}]
  %s11 = inlined_call_operand.vmem [shape: f32[1,128], index: 11, kind: input, shape index: {}]
  %s12 = inlined_call_operand.vmem [shape: f32[1,128], index: 12, kind: input, shape index: {}]
  %s13 = inlined_call_operand.vmem [shape: bf16[128,512], index: 13, kind: input, shape index: {}]
  %s14 = inlined_call_operand.vmem [shape: f32[1,512], index: 14, kind: input, shape index: {}]
  %s15 = inlined_call_operand.vmem [shape: bf16[512,128], index: 15, kind: input, shape index: {}]
  %s16 = inlined_call_operand.vmem [shape: f32[1,128], index: 16, kind: input, shape index: {}]
  %s17 = inlined_call_operand.vmem [shape: f32[1,128], index: 17, kind: input, shape index: {}]
  %s18 = inlined_call_operand.vmem [shape: f32[1,128], index: 18, kind: input, shape index: {}]
  %s19 = inlined_call_operand.vmem [shape: f32[2,16,128], index: 19, kind: output, shape index: {}]
  %s20 = sld [smem:[#allocation0]]
  $region109: #{forward.5} parent=0
    _
  %s22 = ssub.s32 1, %s20
  %s23 = scalar_select 0, %s22, %s20
  loop: start=0, step=1, limit=4
  $region2: #{forward.5} parent=0 // loop_pre_header
    _
  $region3: #{forward.5} parent=0 // loop_header
    %s25 = sphi 0, %s29
    %p26 = scmp.ge.s32.totalorder %s25, 4
    %s35 = sphi 0, %s37
    %s38 = sphi 0, %s35
    %s39 = sphi 0, %s38
    %s55 = sphi 0, %s39
    %s59 = sphi 0, %s59
    %s61 = sphi 0, %s59
    %s62 = sphi 0, %s61
    %s76 = sphi 0, %s62
    %s80 = sphi 0, %s80
    %s82 = sphi 0, %s80
    %s83 = sphi 0, %s82
    %s97 = sphi 0, %s83
    %s101 = sphi 0, %s101
    %s103 = sphi 0, %s101
    %s104 = sphi 0, %s103
    %s118 = sphi 0, %s104
    %s122 = sphi 0, %s122
    %s124 = sphi 0, %s122
    %s125 = sphi 0, %s124
    %s139 = sphi 0, %s125
    %s143 = sphi 0, %s143
    %s145 = sphi 0, %s143
    %s146 = sphi 0, %s145
    %s160 = sphi 0, %s146
    %s164 = sphi 0, %s164
    %s166 = sphi 0, %s164
    %s167 = sphi 0, %s166
    %s181 = sphi 0, %s167
    %s185 = sphi 0, %s185
    %s187 = sphi 0, %s185
    %s188 = sphi 0, %s187
    %s202 = sphi 0, %s188
    %s206 = sphi 0, %s206
    %s208 = sphi 0, %s206
    %s209 = sphi 0, %s208
    %s223 = sphi 0, %s209
    %s227 = sphi 0, %s227
    %s229 = sphi 0, %s227
    %s230 = sphi 0, %s229
    %s244 = sphi 0, %s230
    %s248 = sphi 0, %s248
    %s250 = sphi 0, %s248
    %s251 = sphi 0, %s250
    %s265 = sphi 0, %s251
    %s269 = sphi 0, %s269
    %s271 = sphi 0, %s269
    %s272 = sphi 0, %s271
    %s286 = sphi 0, %s272
    %s290 = sphi 0, %s290
    %s292 = sphi 0, %s290
    %s293 = sphi 0, %s292
    %s307 = sphi 0, %s293
    %s311 = sphi 0, %s311
    %s313 = sphi 0, %s311
    %s314 = sphi 0, %s313
    %s328 = sphi 0, %s314
    %s332 = sphi 0, %s332
    %s334 = sphi 0, %s332
    %s335 = sphi 0, %s334
    %s349 = sphi 0, %s335
    %s353 = sphi 0, %s353
    %s355 = sphi 0, %s353
    %s356 = sphi 0, %s355
    %s370 = sphi 0, %s356
    %s374 = sphi 0, %s374
    %s376 = sphi 0, %s374
    %s377 = sphi 0, %s376
    %s391 = sphi 0, %s377
    %s395 = sphi 0, %s395
    %s397 = sphi 0, %s395
    %s398 = sphi 0, %s397
    %s412 = sphi 0, %s398
    %s416 = sphi 0, %s416
    %s418 = sphi 0, %s416
    %s419 = sphi 0, %s418
    %s433 = sphi 0, %s419
    %s439 = sphi 0, %s441
    %s442 = sphi 0, %s439
    %s443 = sphi 0, %s442
    %s459 = sphi 0, %s443
  $region4: #{forward.5} parent=0 // loop_header_branch
    %28 = sbr.rel (%p26) target = $region8
  $region5: #{forward.5} parent=0 // loop_body
    %s30 = ssub.s32 %s25, 1
    %s31 = ssub.s32 %s25, 2
    %s32 = sadd.s32 %s25, 1
    %s33 = ssub.s32 %s25, %s32
    %p34 = scmp.eq.s32.totalorder %s33, 0
    %s36 = sadd.s32 %s35, 1
    %s37 = scalar_select %p34, %s35, %s36
    %p40 = pneg %p34
    %p41 = scmp.eq.s32.totalorder %s25, 1
    %p42 = por %p40, %p41
    %p43 = scmp.ne.s32.totalorder %s35, %s38
    %p44 = scmp.eq.s32.totalorder %s25, 0
    %p45 = por %p43, %p44
    %p46 = scmp.ne.s32.totalorder %s35, %s38
    %p47 = scmp.eq.s32.totalorder %s30, 1
    %p48 = por %p46, %p47
    %p49 = scmp.ne.s32.totalorder %s38, %s39
    %p50 = scmp.eq.s32.totalorder %s30, 0
    %p51 = por %p49, %p50
    %p52 = scmp.ne.s32.totalorder %s38, %s39
    %p53 = scmp.eq.s32.totalorder %s31, 1
    %p54 = por %p52, %p53
    %p56 = scmp.ne.s32.totalorder %s39, %s55
    %p57 = scmp.eq.s32.totalorder %s31, 0
    %p58 = por %p56, %p57
    %s60 = sadd.s32 %s59, 1
    %p63 = scmp.eq.s32.totalorder %s25, 1
    %p64 = scmp.ne.s32.totalorder %s59, %s61
    %p65 = scmp.eq.s32.totalorder %s25, 0
    %p66 = por %p64, %p65
    %p67 = scmp.ne.s32.totalorder %s59, %s61
    %p68 = scmp.eq.s32.totalorder %s30, 1
    %p69 = por %p67, %p68
    %p70 = scmp.ne.s32.totalorder %s61, %s62
    %p71 = scmp.eq.s32.totalorder %s30, 0
    %p72 = por %p70, %p71
    %p73 = scmp.ne.s32.totalorder %s61, %s62
    %p74 = scmp.eq.s32.totalorder %s31, 1
    %p75 = por %p73, %p74
    %p77 = scmp.ne.s32.totalorder %s62, %s76
    %p78 = scmp.eq.s32.totalorder %s31, 0
    %p79 = por %p77, %p78
    %s81 = sadd.s32 %s80, 1
    %p84 = scmp.eq.s32.totalorder %s25, 1
    %p85 = scmp.ne.s32.totalorder %s80, %s82
    %p86 = scmp.eq.s32.totalorder %s25, 0
    %p87 = por %p85, %p86
    %p88 = scmp.ne.s32.totalorder %s80, %s82
    %p89 = scmp.eq.s32.totalorder %s30, 1
    %p90 = por %p88, %p89
    %p91 = scmp.ne.s32.totalorder %s82, %s83
    %p92 = scmp.eq.s32.totalorder %s30, 0
    %p93 = por %p91, %p92
    %p94 = scmp.ne.s32.totalorder %s82, %s83
    %p95 = scmp.eq.s32.totalorder %s31, 1
    %p96 = por %p94, %p95
    %p98 = scmp.ne.s32.totalorder %s83, %s97
    %p99 = scmp.eq.s32.totalorder %s31, 0
    %p100 = por %p98, %p99
    %s102 = sadd.s32 %s101, 1
    %p105 = scmp.eq.s32.totalorder %s25, 1
    %p106 = scmp.ne.s32.totalorder %s101, %s103
    %p107 = scmp.eq.s32.totalorder %s25, 0
    %p108 = por %p106, %p107
    %p109 = scmp.ne.s32.totalorder %s101, %s103
    %p110 = scmp.eq.s32.totalorder %s30, 1
    %p111 = por %p109, %p110
    %p112 = scmp.ne.s32.totalorder %s103, %s104
    %p113 = scmp.eq.s32.totalorder %s30, 0
    %p114 = por %p112, %p113
    %p115 = scmp.ne.s32.totalorder %s103, %s104
    %p116 = scmp.eq.s32.totalorder %s31, 1
    %p117 = por %p115, %p116
    %p119 = scmp.ne.s32.totalorder %s104, %s118
    %p120 = scmp.eq.s32.totalorder %s31, 0
    %p121 = por %p119, %p120
    %s123 = sadd.s32 %s122, 1
    %p126 = scmp.eq.s32.totalorder %s25, 1
    %p127 = scmp.ne.s32.totalorder %s122, %s124
    %p128 = scmp.eq.s32.totalorder %s25, 0
    %p129 = por %p127, %p128
    %p130 = scmp.ne.s32.totalorder %s122, %s124
    %p131 = scmp.eq.s32.totalorder %s30, 1
    %p132 = por %p130, %p131
    %p133 = scmp.ne.s32.totalorder %s124, %s125
    %p134 = scmp.eq.s32.totalorder %s30, 0
    %p135 = por %p133, %p134
    %p136 = scmp.ne.s32.totalorder %s124, %s125
    %p137 = scmp.eq.s32.totalorder %s31, 1
    %p138 = por %p136, %p137
    %p140 = scmp.ne.s32.totalorder %s125, %s139
    %p141 = scmp.eq.s32.totalorder %s31, 0
    %p142 = por %p140, %p141
    %s144 = sadd.s32 %s143, 1
    %p147 = scmp.eq.s32.totalorder %s25, 1
    %p148 = scmp.ne.s32.totalorder %s143, %s145
    %p149 = scmp.eq.s32.totalorder %s25, 0
    %p150 = por %p148, %p149
    %p151 = scmp.ne.s32.totalorder %s143, %s145
    %p152 = scmp.eq.s32.totalorder %s30, 1
    %p153 = por %p151, %p152
    %p154 = scmp.ne.s32.totalorder %s145, %s146
    %p155 = scmp.eq.s32.totalorder %s30, 0
    %p156 = por %p154, %p155
    %p157 = scmp.ne.s32.totalorder %s145, %s146
    %p158 = scmp.eq.s32.totalorder %s31, 1
    %p159 = por %p157, %p158
    %p161 = scmp.ne.s32.totalorder %s146, %s160
    %p162 = scmp.eq.s32.totalorder %s31, 0
    %p163 = por %p161, %p162
    %s165 = sadd.s32 %s164, 1
    %p168 = scmp.eq.s32.totalorder %s25, 1
    %p169 = scmp.ne.s32.totalorder %s164, %s166
    %p170 = scmp.eq.s32.totalorder %s25, 0
    %p171 = por %p169, %p170
    %p172 = scmp.ne.s32.totalorder %s164, %s166
    %p173 = scmp.eq.s32.totalorder %s30, 1
    %p174 = por %p172, %p173
    %p175 = scmp.ne.s32.totalorder %s166, %s167
    %p176 = scmp.eq.s32.totalorder %s30, 0
    %p177 = por %p175, %p176
    %p178 = scmp.ne.s32.totalorder %s166, %s167
    %p179 = scmp.eq.s32.totalorder %s31, 1
    %p180 = por %p178, %p179
    %p182 = scmp.ne.s32.totalorder %s167, %s181
    %p183 = scmp.eq.s32.totalorder %s31, 0
    %p184 = por %p182, %p183
    %s186 = sadd.s32 %s185, 1
    %p189 = scmp.eq.s32.totalorder %s25, 1
    %p190 = scmp.ne.s32.totalorder %s185, %s187
    %p191 = scmp.eq.s32.totalorder %s25, 0
    %p192 = por %p190, %p191
    %p193 = scmp.ne.s32.totalorder %s185, %s187
    %p194 = scmp.eq.s32.totalorder %s30, 1
    %p195 = por %p193, %p194
    %p196 = scmp.ne.s32.totalorder %s187, %s188
    %p197 = scmp.eq.s32.totalorder %s30, 0
    %p198 = por %p196, %p197
    %p199 = scmp.ne.s32.totalorder %s187, %s188
    %p200 = scmp.eq.s32.totalorder %s31, 1
    %p201 = por %p199, %p200
    %p203 = scmp.ne.s32.totalorder %s188, %s202
    %p204 = scmp.eq.s32.totalorder %s31, 0
    %p205 = por %p203, %p204
    %s207 = sadd.s32 %s206, 1
    %p210 = scmp.eq.s32.totalorder %s25, 1
    %p211 = scmp.ne.s32.totalorder %s206, %s208
    %p212 = scmp.eq.s32.totalorder %s25, 0
    %p213 = por %p211, %p212
    %p214 = scmp.ne.s32.totalorder %s206, %s208
    %p215 = scmp.eq.s32.totalorder %s30, 1
    %p216 = por %p214, %p215
    %p217 = scmp.ne.s32.totalorder %s208, %s209
    %p218 = scmp.eq.s32.totalorder %s30, 0
    %p219 = por %p217, %p218
    %p220 = scmp.ne.s32.totalorder %s208, %s209
    %p221 = scmp.eq.s32.totalorder %s31, 1
    %p222 = por %p220, %p221
    %p224 = scmp.ne.s32.totalorder %s209, %s223
    %p225 = scmp.eq.s32.totalorder %s31, 0
    %p226 = por %p224, %p225
    %s228 = sadd.s32 %s227, 1
    %p231 = scmp.eq.s32.totalorder %s25, 1
    %p232 = scmp.ne.s32.totalorder %s227, %s229
    %p233 = scmp.eq.s32.totalorder %s25, 0
    %p234 = por %p232, %p233
    %p235 = scmp.ne.s32.totalorder %s227, %s229
    %p236 = scmp.eq.s32.totalorder %s30, 1
    %p237 = por %p235, %p236
    %p238 = scmp.ne.s32.totalorder %s229, %s230
    %p239 = scmp.eq.s32.totalorder %s30, 0
    %p240 = por %p238, %p239
    %p241 = scmp.ne.s32.totalorder %s229, %s230
    %p242 = scmp.eq.s32.totalorder %s31, 1
    %p243 = por %p241, %p242
    %p245 = scmp.ne.s32.totalorder %s230, %s244
    %p246 = scmp.eq.s32.totalorder %s31, 0
    %p247 = por %p245, %p246
    %s249 = sadd.s32 %s248, 1
    %p252 = scmp.eq.s32.totalorder %s25, 1
    %p253 = scmp.ne.s32.totalorder %s248, %s250
    %p254 = scmp.eq.s32.totalorder %s25, 0
    %p255 = por %p253, %p254
    %p256 = scmp.ne.s32.totalorder %s248, %s250
    %p257 = scmp.eq.s32.totalorder %s30, 1
    %p258 = por %p256, %p257
    %p259 = scmp.ne.s32.totalorder %s250, %s251
    %p260 = scmp.eq.s32.totalorder %s30, 0
    %p261 = por %p259, %p260
    %p262 = scmp.ne.s32.totalorder %s250, %s251
    %p263 = scmp.eq.s32.totalorder %s31, 1
    %p264 = por %p262, %p263
    %p266 = scmp.ne.s32.totalorder %s251, %s265
    %p267 = scmp.eq.s32.totalorder %s31, 0
    %p268 = por %p266, %p267
    %s270 = sadd.s32 %s269, 1
    %p273 = scmp.eq.s32.totalorder %s25, 1
    %p274 = scmp.ne.s32.totalorder %s269, %s271
    %p275 = scmp.eq.s32.totalorder %s25, 0
    %p276 = por %p274, %p275
    %p277 = scmp.ne.s32.totalorder %s269, %s271
    %p278 = scmp.eq.s32.totalorder %s30, 1
    %p279 = por %p277, %p278
    %p280 = scmp.ne.s32.totalorder %s271, %s272
    %p281 = scmp.eq.s32.totalorder %s30, 0
    %p282 = por %p280, %p281
    %p283 = scmp.ne.s32.totalorder %s271, %s272
    %p284 = scmp.eq.s32.totalorder %s31, 1
    %p285 = por %p283, %p284
    %p287 = scmp.ne.s32.totalorder %s272, %s286
    %p288 = scmp.eq.s32.totalorder %s31, 0
    %p289 = por %p287, %p288
    %s291 = sadd.s32 %s290, 1
    %p294 = scmp.eq.s32.totalorder %s25, 1
    %p295 = scmp.ne.s32.totalorder %s290, %s292
    %p296 = scmp.eq.s32.totalorder %s25, 0
    %p297 = por %p295, %p296
    %p298 = scmp.ne.s32.totalorder %s290, %s292
    %p299 = scmp.eq.s32.totalorder %s30, 1
    %p300 = por %p298, %p299
    %p301 = scmp.ne.s32.totalorder %s292, %s293
    %p302 = scmp.eq.s32.totalorder %s30, 0
    %p303 = por %p301, %p302
    %p304 = scmp.ne.s32.totalorder %s292, %s293
    %p305 = scmp.eq.s32.totalorder %s31, 1
    %p306 = por %p304, %p305
    %p308 = scmp.ne.s32.totalorder %s293, %s307
    %p309 = scmp.eq.s32.totalorder %s31, 0
    %p310 = por %p308, %p309
    %s312 = sadd.s32 %s311, 1
    %p315 = scmp.eq.s32.totalorder %s25, 1
    %p316 = scmp.ne.s32.totalorder %s311, %s313
    %p317 = scmp.eq.s32.totalorder %s25, 0
    %p318 = por %p316, %p317
    %p319 = scmp.ne.s32.totalorder %s311, %s313
    %p320 = scmp.eq.s32.totalorder %s30, 1
    %p321 = por %p319, %p320
    %p322 = scmp.ne.s32.totalorder %s313, %s314
    %p323 = scmp.eq.s32.totalorder %s30, 0
    %p324 = por %p322, %p323
    %p325 = scmp.ne.s32.totalorder %s313, %s314
    %p326 = scmp.eq.s32.totalorder %s31, 1
    %p327 = por %p325, %p326
    %p329 = scmp.ne.s32.totalorder %s314, %s328
    %p330 = scmp.eq.s32.totalorder %s31, 0
    %p331 = por %p329, %p330
    %s333 = sadd.s32 %s332, 1
    %p336 = scmp.eq.s32.totalorder %s25, 1
    %p337 = scmp.ne.s32.totalorder %s332, %s334
    %p338 = scmp.eq.s32.totalorder %s25, 0
    %p339 = por %p337, %p338
    %p340 = scmp.ne.s32.totalorder %s332, %s334
    %p341 = scmp.eq.s32.totalorder %s30, 1
    %p342 = por %p340, %p341
    %p343 = scmp.ne.s32.totalorder %s334, %s335
    %p344 = scmp.eq.s32.totalorder %s30, 0
    %p345 = por %p343, %p344
    %p346 = scmp.ne.s32.totalorder %s334, %s335
    %p347 = scmp.eq.s32.totalorder %s31, 1
    %p348 = por %p346, %p347
    %p350 = scmp.ne.s32.totalorder %s335, %s349
    %p351 = scmp.eq.s32.totalorder %s31, 0
    %p352 = por %p350, %p351
    %s354 = sadd.s32 %s353, 1
    %p357 = scmp.eq.s32.totalorder %s25, 1
    %p358 = scmp.ne.s32.totalorder %s353, %s355
    %p359 = scmp.eq.s32.totalorder %s25, 0
    %p360 = por %p358, %p359
    %p361 = scmp.ne.s32.totalorder %s353, %s355
    %p362 = scmp.eq.s32.totalorder %s30, 1
    %p363 = por %p361, %p362
    %p364 = scmp.ne.s32.totalorder %s355, %s356
    %p365 = scmp.eq.s32.totalorder %s30, 0
    %p366 = por %p364, %p365
    %p367 = scmp.ne.s32.totalorder %s355, %s356
    %p368 = scmp.eq.s32.totalorder %s31, 1
    %p369 = por %p367, %p368
    %p371 = scmp.ne.s32.totalorder %s356, %s370
    %p372 = scmp.eq.s32.totalorder %s31, 0
    %p373 = por %p371, %p372
    %s375 = sadd.s32 %s374, 1
    %p378 = scmp.eq.s32.totalorder %s25, 1
    %p379 = scmp.ne.s32.totalorder %s374, %s376
    %p380 = scmp.eq.s32.totalorder %s25, 0
    %p381 = por %p379, %p380
    %p382 = scmp.ne.s32.totalorder %s374, %s376
    %p383 = scmp.eq.s32.totalorder %s30, 1
    %p384 = por %p382, %p383
    %p385 = scmp.ne.s32.totalorder %s376, %s377
    %p386 = scmp.eq.s32.totalorder %s30, 0
    %p387 = por %p385, %p386
    %p388 = scmp.ne.s32.totalorder %s376, %s377
    %p389 = scmp.eq.s32.totalorder %s31, 1
    %p390 = por %p388, %p389
    %p392 = scmp.ne.s32.totalorder %s377, %s391
    %p393 = scmp.eq.s32.totalorder %s31, 0
    %p394 = por %p392, %p393
    %s396 = sadd.s32 %s395, 1
    %p399 = scmp.eq.s32.totalorder %s25, 1
    %p400 = scmp.ne.s32.totalorder %s395, %s397
    %p401 = scmp.eq.s32.totalorder %s25, 0
    %p402 = por %p400, %p401
    %p403 = scmp.ne.s32.totalorder %s395, %s397
    %p404 = scmp.eq.s32.totalorder %s30, 1
    %p405 = por %p403, %p404
    %p406 = scmp.ne.s32.totalorder %s397, %s398
    %p407 = scmp.eq.s32.totalorder %s30, 0
    %p408 = por %p406, %p407
    %p409 = scmp.ne.s32.totalorder %s397, %s398
    %p410 = scmp.eq.s32.totalorder %s31, 1
    %p411 = por %p409, %p410
    %p413 = scmp.ne.s32.totalorder %s398, %s412
    %p414 = scmp.eq.s32.totalorder %s31, 0
    %p415 = por %p413, %p414
    %s417 = sadd.s32 %s416, 1
    %p420 = scmp.eq.s32.totalorder %s25, 1
    %p421 = scmp.ne.s32.totalorder %s416, %s418
    %p422 = scmp.eq.s32.totalorder %s25, 0
    %p423 = por %p421, %p422
    %p424 = scmp.ne.s32.totalorder %s416, %s418
    %p425 = scmp.eq.s32.totalorder %s30, 1
    %p426 = por %p424, %p425
    %p427 = scmp.ne.s32.totalorder %s418, %s419
    %p428 = scmp.eq.s32.totalorder %s30, 0
    %p429 = por %p427, %p428
    %p430 = scmp.ne.s32.totalorder %s418, %s419
    %p431 = scmp.eq.s32.totalorder %s31, 1
    %p432 = por %p430, %p431
    %p434 = scmp.ne.s32.totalorder %s419, %s433
    %p435 = scmp.eq.s32.totalorder %s31, 0
    %p436 = por %p434, %p435
    %s437 = ssub.s32 %s25, %s32
    %p438 = scmp.eq.s32.totalorder %s437, 0
    %s440 = sadd.s32 %s439, 1
    %s441 = scalar_select %p438, %s439, %s440
    %p444 = pneg %p438
    %p445 = scmp.eq.s32.totalorder %s25, 1
    %p446 = por %p444, %p445
    %p447 = scmp.ne.s32.totalorder %s439, %s442
    %p448 = scmp.eq.s32.totalorder %s25, 0
    %p449 = por %p447, %p448
    %p450 = scmp.ne.s32.totalorder %s439, %s442
    %p451 = scmp.eq.s32.totalorder %s30, 1
    %p452 = por %p450, %p451
    %p453 = scmp.ne.s32.totalorder %s442, %s443
    %p454 = scmp.eq.s32.totalorder %s30, 0
    %p455 = por %p453, %p454
    %p456 = scmp.ne.s32.totalorder %s442, %s443
    %p457 = scmp.eq.s32.totalorder %s31, 1
    %p458 = por %p456, %p457
    %p460 = scmp.ne.s32.totalorder %s443, %s459
    %p461 = scmp.eq.s32.totalorder %s31, 0
    %p462 = por %p460, %p461
    %p463 = scmp.le.s32.totalorder 1, %s25
    %p464 = scmp.lt.s32.totalorder %s25, 3
    %p465 = pnand %p463, %p464
    %p466 = pneg %p465
    // Predicated region
    $region9: #{forward.5} parent=5 // pred_check
      _
    $region10: #{forward.5} parent=5 // pred_check_branch
      %468 = sbr.rel (%p465) target = $region12
    $region11: #{forward.5} parent=5 // pred_region
      %s469 = ssub.s32 %s25, 1
      // Predicated region
      $region13: #{forward.5} parent=11 // pred_check
        %p470 = pneg %p72
      $region14: #{forward.5} parent=11 // pred_check_branch
        %472 = sbr.rel (%p470) target = $region16
      $region15: #{forward.5} parent=11 // pred_region
        _
      $region16: #{forward.5} parent=11 // pred_fallthru
        _
      // Predicated region
      $region17: #{forward.5} parent=11 // pred_check
        %p473 = pneg %p93
      $region18: #{forward.5} parent=11 // pred_check_branch
        %475 = sbr.rel (%p473) target = $region20
      $region19: #{forward.5} parent=11 // pred_region
        _
      $region20: #{forward.5} parent=11 // pred_fallthru
        _
      // Predicated region
      $region21: #{forward.5} parent=11 // pred_check
        %p476 = pneg %p114
      $region22: #{forward.5} parent=11 // pred_check_branch
        %478 = sbr.rel (%p476) target = $region24
      $region23: #{forward.5} parent=11 // pred_region
        _
      $region24: #{forward.5} parent=11 // pred_fallthru
        _
      // Predicated region
      $region25: #{forward.5} parent=11 // pred_check
        %p479 = pneg %p135
      $region26: #{forward.5} parent=11 // pred_check_branch
        %481 = sbr.rel (%p479) target = $region28
      $region27: #{forward.5} parent=11 // pred_region
        _
      $region28: #{forward.5} parent=11 // pred_fallthru
        _
      // Predicated region
      $region29: #{forward.5} parent=11 // pred_check
        %p482 = pneg %p156
      $region30: #{forward.5} parent=11 // pred_check_branch
        %484 = sbr.rel (%p482) target = $region32
      $region31: #{forward.5} parent=11 // pred_region
        _
      $region32: #{forward.5} parent=11 // pred_fallthru
        _
      // Predicated region
      $region33: #{forward.5} parent=11 // pred_check
        %p485 = pneg %p177
      $region34: #{forward.5} parent=11 // pred_check_branch
        %487 = sbr.rel (%p485) target = $region36
      $region35: #{forward.5} parent=11 // pred_region
        _
      $region36: #{forward.5} parent=11 // pred_fallthru
        _
      // Predicated region
      $region37: #{forward.5} parent=11 // pred_check
        %p488 = pneg %p198
      $region38: #{forward.5} parent=11 // pred_check_branch
        %490 = sbr.rel (%p488) target = $region40
      $region39: #{forward.5} parent=11 // pred_region
        _
      $region40: #{forward.5} parent=11 // pred_fallthru
        _
      // Predicated region
      $region41: #{forward.5} parent=11 // pred_check
        %p491 = pneg %p219
      $region42: #{forward.5} parent=11 // pred_check_branch
        %493 = sbr.rel (%p491) target = $region44
      $region43: #{forward.5} parent=11 // pred_region
        _
      $region44: #{forward.5} parent=11 // pred_fallthru
        _
      // Predicated region
      $region45: #{forward.5} parent=11 // pred_check
        %p494 = pneg %p240
      $region46: #{forward.5} parent=11 // pred_check_branch
        %496 = sbr.rel (%p494) target = $region48
      $region47: #{forward.5} parent=11 // pred_region
        _
      $region48: #{forward.5} parent=11 // pred_fallthru
        _
      // Predicated region
      $region49: #{forward.5} parent=11 // pred_check
        %p497 = pneg %p261
      $region50: #{forward.5} parent=11 // pred_check_branch
        %499 = sbr.rel (%p497) target = $region52
      $region51: #{forward.5} parent=11 // pred_region
        _
      $region52: #{forward.5} parent=11 // pred_fallthru
        _
      // Predicated region
      $region53: #{forward.5} parent=11 // pred_check
        %p500 = pneg %p282
      $region54: #{forward.5} parent=11 // pred_check_branch
        %502 = sbr.rel (%p500) target = $region56
      $region55: #{forward.5} parent=11 // pred_region
        _
      $region56: #{forward.5} parent=11 // pred_fallthru
        _
      // Predicated region
      $region57: #{forward.5} parent=11 // pred_check
        %p503 = pneg %p303
      $region58: #{forward.5} parent=11 // pred_check_branch
        %505 = sbr.rel (%p503) target = $region60
      $region59: #{forward.5} parent=11 // pred_region
        _
      $region60: #{forward.5} parent=11 // pred_fallthru
        _
      // Predicated region
      $region61: #{forward.5} parent=11 // pred_check
        %p506 = pneg %p324
      $region62: #{forward.5} parent=11 // pred_check_branch
        %508 = sbr.rel (%p506) target = $region64
      $region63: #{forward.5} parent=11 // pred_region
        _
      $region64: #{forward.5} parent=11 // pred_fallthru
        _
      // Predicated region
      $region65: #{forward.5} parent=11 // pred_check
        %p509 = pneg %p345
      $region66: #{forward.5} parent=11 // pred_check_branch
        %511 = sbr.rel (%p509) target = $region68
      $region67: #{forward.5} parent=11 // pred_region
        _
      $region68: #{forward.5} parent=11 // pred_fallthru
        _
      // Predicated region
      $region69: #{forward.5} parent=11 // pred_check
        %p512 = pneg %p366
      $region70: #{forward.5} parent=11 // pred_check_branch
        %514 = sbr.rel (%p512) target = $region72
      $region71: #{forward.5} parent=11 // pred_region
        _
      $region72: #{forward.5} parent=11 // pred_fallthru
        _
      // Predicated region
      $region73: #{forward.5} parent=11 // pred_check
        %p515 = pneg %p387
      $region74: #{forward.5} parent=11 // pred_check_branch
        %517 = sbr.rel (%p515) target = $region76
      $region75: #{forward.5} parent=11 // pred_region
        _
      $region76: #{forward.5} parent=11 // pred_fallthru
        _
      // Predicated region
      $region77: #{forward.5} parent=11 // pred_check
        %p518 = pneg %p408
      $region78: #{forward.5} parent=11 // pred_check_branch
        %520 = sbr.rel (%p518) target = $region80
      $region79: #{forward.5} parent=11 // pred_region
        _
      $region80: #{forward.5} parent=11 // pred_fallthru
        _
      // Predicated region
      $region81: #{forward.5} parent=11 // pred_check
        %p521 = pneg %p429
      $region82: #{forward.5} parent=11 // pred_check_branch
        %523 = sbr.rel (%p521) target = $region84
      $region83: #{forward.5} parent=11 // pred_region
        _
      $region84: #{forward.5} parent=11 // pred_fallthru
        _
    $region12: #{forward.5} parent=5 // pred_fallthru
      _
    %p524 = scmp.lt.s32.totalorder %s25, 2
    // Predicated region
    $region85: #{forward.5} parent=5 // pred_check
      %p525 = pneg %p524
    $region86: #{forward.5} parent=5 // pred_check_branch
      %527 = sbr.rel (%p525) target = $region88
    $region87: #{forward.5} parent=5 // pred_region
      // Predicated region
      $region89: #{forward.5} parent=87 // pred_check
        %p528 = pneg %p45
      $region90: #{forward.5} parent=87 // pred_check_branch
        %530 = sbr.rel (%p528) target = $region92
      $region91: #{forward.5} parent=87 // pred_region
        %p531 = scmp.lt.s32.totalorder %s25, 1
        %s532 = scalar_select %p531, %s25, 1
        %s533 = smul.addr %s532, 2
        %s534 = smul.addr %s533, 8
        %s535 = scalar_lea.vmem %s0, %s534
      $region92: #{forward.5} parent=87 // pred_fallthru
        _
    $region88: #{forward.5} parent=5 // pred_fallthru
      _
    %p536 = scmp.le.s32.totalorder 1, %s25
    %p537 = scmp.lt.s32.totalorder %s25, 3
    %p538 = pnand %p536, %p537
    %p539 = pneg %p538
    // Predicated region
    $region93: #{forward.5} parent=5 // pred_check
      _
    $region94: #{forward.5} parent=5 // pred_check_branch
      %541 = sbr.rel (%p538) target = $region96
    $region95: #{forward.5} parent=5 // pred_region
      %s542 = ssub.s32 %s25, 1
      %p543 = scmp.lt.s32.totalorder %s30, 1
      %s544 = scalar_select %p543, %s30, 1
      %s545 = smul.addr %s544, 2
      %s546 = smul.addr %s545, 8
      %s547 = scalar_lea.vmem %s0, %s546
      %p548 = pneg %p51
      %p549 = pneg %p48
      %p550 = pneg %p72
      %p551 = pneg %p69
      %p552 = pneg %p93
      %p553 = pneg %p90
      %p554 = pneg %p114
      %p555 = pneg %p111
      %p556 = pneg %p135
      %p557 = pneg %p132
      %p558 = pneg %p156
      %p559 = pneg %p153
      %p560 = pneg %p177
      %p561 = pneg %p174
      %p562 = pneg %p198
      %p563 = pneg %p195
      %p564 = pneg %p219
      %p565 = pneg %p216
      %p566 = pneg %p240
      %p567 = pneg %p237
      %p568 = pneg %p261
      %p569 = pneg %p258
      %p570 = pneg %p282
      %p571 = pneg %p279
      %p572 = pneg %p303
      %p573 = pneg %p300
      %p574 = pneg %p324
      %p575 = pneg %p321
      %p576 = pneg %p345
      %p577 = pneg %p342
      %p578 = pneg %p366
      %p579 = pneg %p363
      %p580 = pneg %p387
      %p581 = pneg %p384
      %p582 = pneg %p408
      %p583 = pneg %p405
      %p584 = pneg %p429
      %p585 = pneg %p426
      %p586 = pneg %p455
      %p587 = pneg %p452
      %p588 = scmp.lt.s32.totalorder %s30, 1
      %s589 = scalar_select %p588, %s30, 1
      %s590 = smul.addr %s589, 2
      %s591 = smul.addr %s590, 8
      %s592 = scalar_lea.vmem %s19, %s591
      %p593 = scmp.lt.s32.totalorder %s30, 1
      %s594 = scalar_select %p593, %s30, 1
      %s595 = smul.addr %s594, 2
      %s596 = smul.addr %s595, 8
      %s597 = scalar_lea.vmem %s0, %s596
      %p598 = scmp.lt.s32.totalorder %s30, 1
      %s599 = scalar_select %p598, %s30, 1
      %s600 = smul.addr %s599, 2
      %s601 = smul.addr %s600, 8
      %s602 = scalar_lea.vmem %s19, %s601
      %v604 = vld [vmem:[%s597] sm:$0xff]
      %v605 = vld [vmem:[%s597 + $0x8] sm:$0xff]
      %v606 = vld [vmem:[%s1] sm:$0x1]
      %v607 = vld [vmem:[%s2] sm:$0x1]
      %608 = vadd.xlane.f32.xlu0 %v604
      %v609 = vpop.xlane.xlu0 %608
      %610 = vadd.xlane.f32.xlu0 %v605
      %v611 = vpop.xlane.xlu0 %610
      %v612 = vrcp.pop 128.0
      %v613 = vmul.f32 128.0, %v612
      %v614 = vsub.f32 1.0, %v613
      %v615 = vmul.f32 %v612, %v614
      %v616 = vadd.f32 %v612, %v615
      %vm617 = vweird.f32 %v612
      %v618 = vsel %vm617, %v612, %v616
      %v619 = vmul.f32 %v609, %v618
      %v620 = vmul.f32 %v611, %v618
      %v621 = vsub.f32 %v604, %v619
      %v622 = vsub.f32 %v605, %v620
      %v623 = vmul.f32 %v621, %v621
      %v624 = vmul.f32 %v622, %v622
      %625 = vadd.xlane.f32.xlu0 %v623
      %v626 = vpop.xlane.xlu0 %625
      %627 = vadd.xlane.f32.xlu0 %v624
      %v628 = vpop.xlane.xlu0 %627
      %v629 = vmul.f32 %v626, %v618
      %v630 = vmul.f32 %v628, %v618
      %v631 = vadd.f32 %v629, 1e-06
      %v632 = vadd.f32 %v630, 1e-06
      %v633 = vrsqrt.pop %v631
      %v634 = vmul.f32 %v633, %v631
      %v635 = vmul.f32 %v634, %v633
      %v636 = vmul.f32 0.5, %v635
      %v637 = vsub.f32 1.5, %v636
      %v638 = vmul.f32 %v633, %v637
      %vm639 = vweird.f32 %v631
      %vm640 = vweird.f32 %v633
      %vm641 = vmor %vm639, %vm640
      %v642 = vsel %vm641, %v633, %v638
      %v643 = vrsqrt.pop %v632
      %v644 = vmul.f32 %v643, %v632
      %v645 = vmul.f32 %v644, %v643
      %v646 = vmul.f32 0.5, %v645
      %v647 = vsub.f32 1.5, %v646
      %v648 = vmul.f32 %v643, %v647
      %vm649 = vweird.f32 %v632
      %vm650 = vweird.f32 %v643
      %vm651 = vmor %vm649, %vm650
      %v652 = vsel %vm651, %v643, %v648
      %v653 = vmul.f32 %v621, %v642
      %v654 = vmul.f32 %v622, %v652
      %v656 = vperm.slane %v606, 0
      %v658 = vmul.f32 %v653, %v656
      %v659 = vmul.f32 %v654, %v656
      %v661 = vperm.slane %v607, 0
      %v663 = vadd.f32 %v658, %v661
      %v664 = vadd.f32 %v659, %v661
      %v665 = vpack.c.bf16 %v664, %v663
      %v666 = vlaneseq
      %v667 = vand.u32 %v666, 127
      %vm668 = vcmp.lt.s32.totalorder %v667, 9
      %v669 = vld [vmem:[%s3] sm:$0xf]
      %v670 = vld [vmem:[%s3 + $0x4] sm:$0xf]
      %v671 = vld [vmem:[%s3 + $0x8] sm:$0xf]
      %v672 = vld [vmem:[%s3 + $0xc] sm:$0xf]
      %v673 = vld [vmem:[%s3 + $0x10] sm:$0xf]
      %v674 = vld [vmem:[%s3 + $0x14] sm:$0xf]
      %v675 = vld [vmem:[%s3 + $0x18] sm:$0xf]
      %v676 = vld [vmem:[%s3 + $0x1c] sm:$0xf]
      %v677 = vld [vmem:[%s3 + $0x20] sm:$0xf]
      %v678 = vld [vmem:[%s3 + $0x24] sm:$0xf]
      %v679 = vld [vmem:[%s3 + $0x28] sm:$0xf]
      %v680 = vld [vmem:[%s3 + $0x2c] sm:$0xf]
      %v681 = vld [vmem:[%s3 + $0x30] sm:$0xf]
      %v682 = vld [vmem:[%s3 + $0x34] sm:$0xf]
      %v683 = vld [vmem:[%s3 + $0x38] sm:$0xf]
      %v684 = vld [vmem:[%s3 + $0x3c] sm:$0xf]
      %v685 = vld [vmem:[%s6] sm:$0x1]
      %v687 = vperm.slane %v685, 0
      %v705 = vunpack.c.l.b16 %v669
      %v706 = vunpack.c.l.b16 %v670
      %v707 = vunpack.c.l.b16 %v671
      %v708 = vunpack.c.l.b16 %v672
      %v709 = vunpack.c.l.b16 %v673
      %v710 = vunpack.c.l.b16 %v674
      %v711 = vunpack.c.l.b16 %v675
      %v712 = vunpack.c.l.b16 %v676
      %v713 = vunpack.c.l.b16 %v677
      %v714 = vunpack.c.l.b16 %v678
      %v715 = vunpack.c.l.b16 %v679
      %v716 = vunpack.c.l.b16 %v680
      %v717 = vunpack.c.l.b16 %v681
      %v718 = vunpack.c.l.b16 %v682
      %v719 = vunpack.c.l.b16 %v683
      %v720 = vunpack.c.l.b16 %v684
      %v721 = vpack.c.b16 %v706, %v705
      %v722 = vpack.c.b16 %v708, %v707
      %v723 = vpack.c.b16 %v710, %v709
      %v724 = vpack.c.b16 %v712, %v711
      %v725 = vpack.c.b16 %v714, %v713
      %v726 = vpack.c.b16 %v716, %v715
      %v727 = vpack.c.b16 %v718, %v717
      %v728 = vpack.c.b16 %v720, %v719
      %737 = vmatpush.bf16.msra.mxu0 %v728
      %738 = vmatpush.bf16.msra.mxu0 %v727
      %739 = vmatpush.bf16.msra.mxu0 %v726
      %740 = vmatpush.bf16.msra.mxu0 %v725
      %741 = vmatpush.bf16.msra.mxu0 %v724
      %742 = vmatpush.bf16.msra.mxu0 %v723
      %743 = vmatpush.bf16.msra.mxu0 %v722
      %744 = vmatpush.bf16.msra.mxu0 %v721
      %745 = vmatmul.bf16.gmra.mxu0 %v665
      %v746 = vpop.f32.mrf.mxu0
      %v747 = vadd.f32 %v687, %v746
      %v748 = vpop.f32.mrf.mxu0
      %v749 = vadd.f32 %v687, %v748
      %750 = vdwg.mxu0
      %v751 = vld [vmem:[%s4] sm:$0xf]
      %v752 = vld [vmem:[%s4 + $0x4] sm:$0xf]
      %v753 = vld [vmem:[%s4 + $0x8] sm:$0xf]
      %v754 = vld [vmem:[%s4 + $0xc] sm:$0xf]
      %v755 = vld [vmem:[%s4 + $0x10] sm:$0xf]
      %v756 = vld [vmem:[%s4 + $0x14] sm:$0xf]
      %v757 = vld [vmem:[%s4 + $0x18] sm:$0xf]
      %v758 = vld [vmem:[%s4 + $0x1c] sm:$0xf]
      %v759 = vld [vmem:[%s4 + $0x20] sm:$0xf]
      %v760 = vld [vmem:[%s4 + $0x24] sm:$0xf]
      %v761 = vld [vmem:[%s4 + $0x28] sm:$0xf]
      %v762 = vld [vmem:[%s4 + $0x2c] sm:$0xf]
      %v763 = vld [vmem:[%s4 + $0x30] sm:$0xf]
      %v764 = vld [vmem:[%s4 + $0x34] sm:$0xf]
      %v765 = vld [vmem:[%s4 + $0x38] sm:$0xf]
      %v766 = vld [vmem:[%s4 + $0x3c] sm:$0xf]
      %v767 = vld [vmem:[%s7] sm:$0x1]
      %v769 = vperm.slane %v767, 0
      %v787 = vunpack.c.l.b16 %v751
      %v788 = vunpack.c.l.b16 %v752
      %v789 = vunpack.c.l.b16 %v753
      %v790 = vunpack.c.l.b16 %v754
      %v791 = vunpack.c.l.b16 %v755
      %v792 = vunpack.c.l.b16 %v756
      %v793 = vunpack.c.l.b16 %v757
      %v794 = vunpack.c.l.b16 %v758
      %v795 = vunpack.c.l.b16 %v759
      %v796 = vunpack.c.l.b16 %v760
      %v797 = vunpack.c.l.b16 %v761
      %v798 = vunpack.c.l.b16 %v762
      %v799 = vunpack.c.l.b16 %v763
      %v800 = vunpack.c.l.b16 %v764
      %v801 = vunpack.c.l.b16 %v765
      %v802 = vunpack.c.l.b16 %v766
      %v803 = vpack.c.b16 %v788, %v787
      %v804 = vpack.c.b16 %v790, %v789
      %v805 = vpack.c.b16 %v792, %v791
      %v806 = vpack.c.b16 %v794, %v793
      %v807 = vpack.c.b16 %v796, %v795
      %v808 = vpack.c.b16 %v798, %v797
      %v809 = vpack.c.b16 %v800, %v799
      %v810 = vpack.c.b16 %v802, %v801
      %819 = vmatpush.bf16.msra.mxu0 %v810
      %820 = vmatpush.bf16.msra.mxu0 %v809
      %821 = vmatpush.bf16.msra.mxu0 %v808
      %822 = vmatpush.bf16.msra.mxu0 %v807
      %823 = vmatpush.bf16.msra.mxu0 %v806
      %824 = vmatpush.bf16.msra.mxu0 %v805
      %825 = vmatpush.bf16.msra.mxu0 %v804
      %826 = vmatpush.bf16.msra.mxu0 %v803
      %827 = vmatmul.bf16.gmra.mxu0 %v665
      %v828 = vpop.f32.mrf.mxu0
      %v829 = vadd.f32 %v769, %v828
      %v830 = vpop.f32.mrf.mxu0
      %v831 = vadd.f32 %v769, %v830
      %832 = vdwg.mxu0
      %v833 = vld [vmem:[%s5] sm:$0xf]
      %v834 = vld [vmem:[%s5 + $0x4] sm:$0xf]
      %v835 = vld [vmem:[%s5 + $0x8] sm:$0xf]
      %v836 = vld [vmem:[%s5 + $0xc] sm:$0xf]
      %v837 = vld [vmem:[%s5 + $0x10] sm:$0xf]
      %v838 = vld [vmem:[%s5 + $0x14] sm:$0xf]
      %v839 = vld [vmem:[%s5 + $0x18] sm:$0xf]
      %v840 = vld [vmem:[%s5 + $0x1c] sm:$0xf]
      %v841 = vld [vmem:[%s5 + $0x20] sm:$0xf]
      %v842 = vld [vmem:[%s5 + $0x24] sm:$0xf]
      %v843 = vld [vmem:[%s5 + $0x28] sm:$0xf]
      %v844 = vld [vmem:[%s5 + $0x2c] sm:$0xf]
      %v845 = vld [vmem:[%s5 + $0x30] sm:$0xf]
      %v846 = vld [vmem:[%s5 + $0x34] sm:$0xf]
      %v847 = vld [vmem:[%s5 + $0x38] sm:$0xf]
      %v848 = vld [vmem:[%s5 + $0x3c] sm:$0xf]
      %v849 = vld [vmem:[%s8] sm:$0x1]
      %v851 = vperm.slane %v849, 0
      %v869 = vunpack.c.l.b16 %v833
      %v870 = vunpack.c.l.b16 %v834
      %v871 = vunpack.c.l.b16 %v835
      %v872 = vunpack.c.l.b16 %v836
      %v873 = vunpack.c.l.b16 %v837
      %v874 = vunpack.c.l.b16 %v838
      %v875 = vunpack.c.l.b16 %v839
      %v876 = vunpack.c.l.b16 %v840
      %v877 = vunpack.c.l.b16 %v841
      %v878 = vunpack.c.l.b16 %v842
      %v879 = vunpack.c.l.b16 %v843
      %v880 = vunpack.c.l.b16 %v844
      %v881 = vunpack.c.l.b16 %v845
      %v882 = vunpack.c.l.b16 %v846
      %v883 = vunpack.c.l.b16 %v847
      %v884 = vunpack.c.l.b16 %v848
      %v885 = vpack.c.b16 %v870, %v869
      %v886 = vpack.c.b16 %v872, %v871
      %v887 = vpack.c.b16 %v874, %v873
      %v888 = vpack.c.b16 %v876, %v875
      %v889 = vpack.c.b16 %v878, %v877
      %v890 = vpack.c.b16 %v880, %v879
      %v891 = vpack.c.b16 %v882, %v881
      %v892 = vpack.c.b16 %v884, %v883
      %901 = vmatpush.bf16.msra.mxu0 %v892
      %902 = vmatpush.bf16.msra.mxu0 %v891
      %903 = vmatpush.bf16.msra.mxu0 %v890
      %904 = vmatpush.bf16.msra.mxu0 %v889
      %905 = vmatpush.bf16.msra.mxu0 %v888
      %906 = vmatpush.bf16.msra.mxu0 %v887
      %907 = vmatpush.bf16.msra.mxu0 %v886
      %908 = vmatpush.bf16.msra.mxu0 %v885
      %909 = vmatmul.bf16.gmra.mxu0 %v665
      %v910 = vpop.f32.mrf.mxu0
      %v911 = vadd.f32 %v851, %v910
      %v912 = vpop.f32.mrf.mxu0
      %v913 = vadd.f32 %v851, %v912
      %914 = vdwg.mxu0
      %v915 = vpack.c.bf16 %v749, %v747
      %v916 = vpack.c.bf16 %v831, %v829
      %vm917 = vcmask 261120
      %v919 = vsel %vm917, %v915, 0
      %v922 = vsel %vm917, %v916, 0
      %924 = vmatpush.bf16.xpose.msra.mxu0 0
      %925 = vmatpush.bf16.xpose.msra.mxu0 0
      %926 = vmatpush.bf16.xpose.msra.mxu0 0
      %927 = vmatpush.bf16.xpose.msra.mxu0 0
      %928 = vmatpush.bf16.xpose.msra.mxu0 0
      %929 = vmatpush.bf16.xpose.msra.mxu0 0
      %930 = vmatpush.bf16.xpose.msra.mxu0 0
      %931 = vmatpush.bf16.xpose.msra.mxu0 %v922
      %932 = vmatmul.bf16.gmra.mxu0 %v919
      %v933 = vpop.f32.mrf.mxu0
      %v934 = vadd.f32 0.0, %v933
      %v935 = vpop.f32.mrf.mxu0
      %v936 = vadd.f32 0.0, %v935
      %937 = vdwg.mxu0
      %v938 = vmul.f32 %v934, 0.17677669
      %v939 = vmul.f32 %v936, 0.17677669
      %v940 = vsel %vm668, %v938, -1e+30
      %v941 = vsel %vm668, %v939, -1e+30
      %vm942 = vcmask 130048
      %v943 = vsel %vm942, %v940, -inf
      %944 = vmax.xlane.f32.xlu0 %v943
      %v945 = vpop.xlane.xlu0 %944
      %v946 = vsel %vm942, %v941, -inf
      %947 = vmax.xlane.f32.xlu0 %v946
      %v948 = vpop.xlane.xlu0 %947
      %v949 = vsub.f32 %v940, %v945
      %v950 = vsub.f32 %v941, %v948
      %v951 = vmul.f32 %v949, 1.442695
      %v952 = vpow.pop %v951
      %v953 = vmul.f32 %v950, 1.442695
      %v954 = vpow.pop %v953
      %v955 = vsel %vm942, %v952, 0.0
      %956 = vadd.xlane.f32.xlu0 %v955
      %v957 = vpop.xlane.xlu0 %956
      %v958 = vsel %vm942, %v954, 0.0
      %959 = vadd.xlane.f32.xlu0 %v958
      %v960 = vpop.xlane.xlu0 %959
      %v961 = vrcp.pop %v957
      %v962 = vrcp.pop %v960
      %v963 = vmul.f32 %v952, %v961
      %v964 = vmul.f32 %v954, %v962
      %v965 = vpack.c.bf16 %v964, %v963
      %v966 = vpack.c.bf16 %v913, %v911
      %v968 = vsel %vm942, %v965, 0
      %970 = vmatpush.bf16.msra.mxu0 0
      %971 = vmatpush.bf16.msra.mxu0 0
      %972 = vmatpush.bf16.msra.mxu0 0
      %973 = vmatpush.bf16.msra.mxu0 0
      %974 = vmatpush.bf16.msra.mxu0 0
      %975 = vmatpush.bf16.msra.mxu0 0
      %976 = vmatpush.bf16.msra.mxu0 0
      %977 = vmatpush.bf16.msra.mxu0 %v966
      %978 = vmatmul.bf16.gmra.mxu0 %v968
      %v979 = vpop.f32.mrf.mxu0
      %v980 = vadd.f32 0.0, %v979
      %v981 = vpop.f32.mrf.mxu0
      %v982 = vadd.f32 0.0, %v981
      %983 = vdwg.mxu0
      %v984 = vpack.c.bf16 %v982, %v980
      %v985 = vld [vmem:[%s9] sm:$0xf]
      %v986 = vld [vmem:[%s9 + $0x4] sm:$0xf]
      %v987 = vld [vmem:[%s9 + $0x8] sm:$0xf]
      %v988 = vld [vmem:[%s9 + $0xc] sm:$0xf]
      %s989 = scalar_lea.vmem %s3, 64
      %v990 = vld [vmem:[%s989] sm:$0xf]
      %v991 = vld [vmem:[%s989 + $0x4] sm:$0xf]
      %v992 = vld [vmem:[%s989 + $0x8] sm:$0xf]
      %v993 = vld [vmem:[%s989 + $0xc] sm:$0xf]
      %v994 = vld [vmem:[%s989 + $0x10] sm:$0xf]
      %v995 = vld [vmem:[%s989 + $0x14] sm:$0xf]
      %v996 = vld [vmem:[%s989 + $0x18] sm:$0xf]
      %v997 = vld [vmem:[%s989 + $0x1c] sm:$0xf]
      %v998 = vld [vmem:[%s989 + $0x20] sm:$0xf]
      %v999 = vld [vmem:[%s989 + $0x24] sm:$0xf]
      %v1000 = vld [vmem:[%s989 + $0x28] sm:$0xf]
      %v1001 = vld [vmem:[%s989 + $0x2c] sm:$0xf]
      %v1002 = vld [vmem:[%s989 + $0x30] sm:$0xf]
      %v1003 = vld [vmem:[%s989 + $0x34] sm:$0xf]
      %v1004 = vld [vmem:[%s989 + $0x38] sm:$0xf]
      %v1005 = vld [vmem:[%s989 + $0x3c] sm:$0xf]
      %s1006 = scalar_lea.vmem %s6, 1
      %v1007 = vld [vmem:[%s1006] sm:$0x1]
      %v1009 = vperm.slane %v1007, 0
      %v1027 = vunpack.c.l.b16 %v990
      %v1028 = vunpack.c.l.b16 %v991
      %v1029 = vunpack.c.l.b16 %v992
      %v1030 = vunpack.c.l.b16 %v993
      %v1031 = vunpack.c.l.b16 %v994
      %v1032 = vunpack.c.l.b16 %v995
      %v1033 = vunpack.c.l.b16 %v996
      %v1034 = vunpack.c.l.b16 %v997
      %v1035 = vunpack.c.l.b16 %v998
      %v1036 = vunpack.c.l.b16 %v999
      %v1037 = vunpack.c.l.b16 %v1000
      %v1038 = vunpack.c.l.b16 %v1001
      %v1039 = vunpack.c.l.b16 %v1002
      %v1040 = vunpack.c.l.b16 %v1003
      %v1041 = vunpack.c.l.b16 %v1004
      %v1042 = vunpack.c.l.b16 %v1005
      %v1043 = vpack.c.b16 %v1028, %v1027
      %v1044 = vpack.c.b16 %v1030, %v1029
      %v1045 = vpack.c.b16 %v1032, %v1031
      %v1046 = vpack.c.b16 %v1034, %v1033
      %v1047 = vpack.c.b16 %v1036, %v1035
      %v1048 = vpack.c.b16 %v1038, %v1037
      %v1049 = vpack.c.b16 %v1040, %v1039
      %v1050 = vpack.c.b16 %v1042, %v1041
      %1059 = vmatpush.bf16.msra.mxu0 %v1050
      %1060 = vmatpush.bf16.msra.mxu0 %v1049
      %1061 = vmatpush.bf16.msra.mxu0 %v1048
      %1062 = vmatpush.bf16.msra.mxu0 %v1047
      %1063 = vmatpush.bf16.msra.mxu0 %v1046
      %1064 = vmatpush.bf16.msra.mxu0 %v1045
      %1065 = vmatpush.bf16.msra.mxu0 %v1044
      %1066 = vmatpush.bf16.msra.mxu0 %v1043
      %1067 = vmatmul.bf16.gmra.mxu0 %v665
      %v1068 = vpop.f32.mrf.mxu0
      %v1069 = vadd.f32 %v1009, %v1068
      %v1070 = vpop.f32.mrf.mxu0
      %v1071 = vadd.f32 %v1009, %v1070
      %1072 = vdwg.mxu0
      %s1073 = scalar_lea.vmem %s4, 64
      %v1074 = vld [vmem:[%s1073] sm:$0xf]
      %v1075 = vld [vmem:[%s1073 + $0x4] sm:$0xf]
      %v1076 = vld [vmem:[%s1073 + $0x8] sm:$0xf]
      %v1077 = vld [vmem:[%s1073 + $0xc] sm:$0xf]
      %v1078 = vld [vmem:[%s1073 + $0x10] sm:$0xf]
      %v1079 = vld [vmem:[%s1073 + $0x14] sm:$0xf]
      %v1080 = vld [vmem:[%s1073 + $0x18] sm:$0xf]
      %v1081 = vld [vmem:[%s1073 + $0x1c] sm:$0xf]
      %v1082 = vld [vmem:[%s1073 + $0x20] sm:$0xf]
      %v1083 = vld [vmem:[%s1073 + $0x24] sm:$0xf]
      %v1084 = vld [vmem:[%s1073 + $0x28] sm:$0xf]
      %v1085 = vld [vmem:[%s1073 + $0x2c] sm:$0xf]
      %v1086 = vld [vmem:[%s1073 + $0x30] sm:$0xf]
      %v1087 = vld [vmem:[%s1073 + $0x34] sm:$0xf]
      %v1088 = vld [vmem:[%s1073 + $0x38] sm:$0xf]
      %v1089 = vld [vmem:[%s1073 + $0x3c] sm:$0xf]
      %s1090 = scalar_lea.vmem %s7, 1
      %v1091 = vld [vmem:[%s1090] sm:$0x1]
      %v1093 = vperm.slane %v1091, 0
      %v1111 = vunpack.c.l.b16 %v1074
      %v1112 = vunpack.c.l.b16 %v1075
      %v1113 = vunpack.c.l.b16 %v1076
      %v1114 = vunpack.c.l.b16 %v1077
      %v1115 = vunpack.c.l.b16 %v1078
      %v1116 = vunpack.c.l.b16 %v1079
      %v1117 = vunpack.c.l.b16 %v1080
      %v1118 = vunpack.c.l.b16 %v1081
      %v1119 = vunpack.c.l.b16 %v1082
      %v1120 = vunpack.c.l.b16 %v1083
      %v1121 = vunpack.c.l.b16 %v1084
      %v1122 = vunpack.c.l.b16 %v1085
      %v1123 = vunpack.c.l.b16 %v1086
      %v1124 = vunpack.c.l.b16 %v1087
      %v1125 = vunpack.c.l.b16 %v1088
      %v1126 = vunpack.c.l.b16 %v1089
      %v1127 = vpack.c.b16 %v1112, %v1111
      %v1128 = vpack.c.b16 %v1114, %v1113
      %v1129 = vpack.c.b16 %v1116, %v1115
      %v1130 = vpack.c.b16 %v1118, %v1117
      %v1131 = vpack.c.b16 %v1120, %v1119
      %v1132 = vpack.c.b16 %v1122, %v1121
      %v1133 = vpack.c.b16 %v1124, %v1123
      %v1134 = vpack.c.b16 %v1126, %v1125
      %1143 = vmatpush.bf16.msra.mxu0 %v1134
      %1144 = vmatpush.bf16.msra.mxu0 %v1133
      %1145 = vmatpush.bf16.msra.mxu0 %v1132
      %1146 = vmatpush.bf16.msra.mxu0 %v1131
      %1147 = vmatpush.bf16.msra.mxu0 %v1130
      %1148 = vmatpush.bf16.msra.mxu0 %v1129
      %1149 = vmatpush.bf16.msra.mxu0 %v1128
      %1150 = vmatpush.bf16.msra.mxu0 %v1127
      %1151 = vmatmul.bf16.gmra.mxu0 %v665
      %v1152 = vpop.f32.mrf.mxu0
      %v1153 = vadd.f32 %v1093, %v1152
      %v1154 = vpop.f32.mrf.mxu0
      %v1155 = vadd.f32 %v1093, %v1154
      %1156 = vdwg.mxu0
      %s1157 = scalar_lea.vmem %s5, 64
      %v1158 = vld [vmem:[%s1157] sm:$0xf]
      %v1159 = vld [vmem:[%s1157 + $0x4] sm:$0xf]
      %v1160 = vld [vmem:[%s1157 + $0x8] sm:$0xf]
      %v1161 = vld [vmem:[%s1157 + $0xc] sm:$0xf]
      %v1162 = vld [vmem:[%s1157 + $0x10] sm:$0xf]
      %v1163 = vld [vmem:[%s1157 + $0x14] sm:$0xf]
      %v1164 = vld [vmem:[%s1157 + $0x18] sm:$0xf]
      %v1165 = vld [vmem:[%s1157 + $0x1c] sm:$0xf]
      %v1166 = vld [vmem:[%s1157 + $0x20] sm:$0xf]
      %v1167 = vld [vmem:[%s1157 + $0x24] sm:$0xf]
      %v1168 = vld [vmem:[%s1157 + $0x28] sm:$0xf]
      %v1169 = vld [vmem:[%s1157 + $0x2c] sm:$0xf]
      %v1170 = vld [vmem:[%s1157 + $0x30] sm:$0xf]
      %v1171 = vld [vmem:[%s1157 + $0x34] sm:$0xf]
      %v1172 = vld [vmem:[%s1157 + $0x38] sm:$0xf]
      %v1173 = vld [vmem:[%s1157 + $0x3c] sm:$0xf]
      %s1174 = scalar_lea.vmem %s8, 1
      %v1175 = vld [vmem:[%s1174] sm:$0x1]
      %v1177 = vperm.slane %v1175, 0
      %v1195 = vunpack.c.l.b16 %v1158
      %v1196 = vunpack.c.l.b16 %v1159
      %v1197 = vunpack.c.l.b16 %v1160
      %v1198 = vunpack.c.l.b16 %v1161
      %v1199 = vunpack.c.l.b16 %v1162
      %v1200 = vunpack.c.l.b16 %v1163
      %v1201 = vunpack.c.l.b16 %v1164
      %v1202 = vunpack.c.l.b16 %v1165
      %v1203 = vunpack.c.l.b16 %v1166
      %v1204 = vunpack.c.l.b16 %v1167
      %v1205 = vunpack.c.l.b16 %v1168
      %v1206 = vunpack.c.l.b16 %v1169
      %v1207 = vunpack.c.l.b16 %v1170
      %v1208 = vunpack.c.l.b16 %v1171
      %v1209 = vunpack.c.l.b16 %v1172
      %v1210 = vunpack.c.l.b16 %v1173
      %v1211 = vpack.c.b16 %v1196, %v1195
      %v1212 = vpack.c.b16 %v1198, %v1197
      %v1213 = vpack.c.b16 %v1200, %v1199
      %v1214 = vpack.c.b16 %v1202, %v1201
      %v1215 = vpack.c.b16 %v1204, %v1203
      %v1216 = vpack.c.b16 %v1206, %v1205
      %v1217 = vpack.c.b16 %v1208, %v1207
      %v1218 = vpack.c.b16 %v1210, %v1209
      %1227 = vmatpush.bf16.msra.mxu0 %v1218
      %1228 = vmatpush.bf16.msra.mxu0 %v1217
      %1229 = vmatpush.bf16.msra.mxu0 %v1216
      %1230 = vmatpush.bf16.msra.mxu0 %v1215
      %1231 = vmatpush.bf16.msra.mxu0 %v1214
      %1232 = vmatpush.bf16.msra.mxu0 %v1213
      %1233 = vmatpush.bf16.msra.mxu0 %v1212
      %1234 = vmatpush.bf16.msra.mxu0 %v1211
      %1235 = vmatmul.bf16.gmra.mxu0 %v665
      %v1236 = vpop.f32.mrf.mxu0
      %v1237 = vadd.f32 %v1177, %v1236
      %v1238 = vpop.f32.mrf.mxu0
      %v1239 = vadd.f32 %v1177, %v1238
      %1240 = vdwg.mxu0
      %v1241 = vpack.c.bf16 %v1071, %v1069
      %v1242 = vpack.c.bf16 %v1155, %v1153
      %v1244 = vsel %vm917, %v1241, 0
      %v1247 = vsel %vm917, %v1242, 0
      %1249 = vmatpush.bf16.xpose.msra.mxu0 0
      %1250 = vmatpush.bf16.xpose.msra.mxu0 0
      %1251 = vmatpush.bf16.xpose.msra.mxu0 0
      %1252 = vmatpush.bf16.xpose.msra.mxu0 0
      %1253 = vmatpush.bf16.xpose.msra.mxu0 0
      %1254 = vmatpush.bf16.xpose.msra.mxu0 0
      %1255 = vmatpush.bf16.xpose.msra.mxu0 0
      %1256 = vmatpush.bf16.xpose.msra.mxu0 %v1247
      %1257 = vmatmul.bf16.gmra.mxu0 %v1244
      %v1258 = vpop.f32.mrf.mxu0
      %v1259 = vadd.f32 0.0, %v1258
      %v1260 = vpop.f32.mrf.mxu0
      %v1261 = vadd.f32 0.0, %v1260
      %1262 = vdwg.mxu0
      %v1263 = vmul.f32 %v1259, 0.17677669
      %v1264 = vmul.f32 %v1261, 0.17677669
      %v1265 = vsel %vm668, %v1263, -1e+30
      %v1266 = vsel %vm668, %v1264, -1e+30
      %v1267 = vsel %vm942, %v1265, -inf
      %1268 = vmax.xlane.f32.xlu0 %v1267
      %v1269 = vpop.xlane.xlu0 %1268
      %v1270 = vsel %vm942, %v1266, -inf
      %1271 = vmax.xlane.f32.xlu0 %v1270
      %v1272 = vpop.xlane.xlu0 %1271
      %v1273 = vsub.f32 %v1265, %v1269
      %v1274 = vsub.f32 %v1266, %v1272
      %v1275 = vmul.f32 %v1273, 1.442695
      %v1276 = vpow.pop %v1275
      %v1277 = vmul.f32 %v1274, 1.442695
      %v1278 = vpow.pop %v1277
      %v1279 = vsel %vm942, %v1276, 0.0
      %1280 = vadd.xlane.f32.xlu0 %v1279
      %v1281 = vpop.xlane.xlu0 %1280
      %v1282 = vsel %vm942, %v1278, 0.0
      %1283 = vadd.xlane.f32.xlu0 %v1282
      %v1284 = vpop.xlane.xlu0 %1283
      %v1285 = vrcp.pop %v1281
      %v1286 = vrcp.pop %v1284
      %v1287 = vmul.f32 %v1276, %v1285
      %v1288 = vmul.f32 %v1278, %v1286
      %v1289 = vpack.c.bf16 %v1288, %v1287
      %v1290 = vpack.c.bf16 %v1239, %v1237
      %v1292 = vsel %vm942, %v1289, 0
      %1294 = vmatpush.bf16.msra.mxu0 0
      %1295 = vmatpush.bf16.msra.mxu0 0
      %1296 = vmatpush.bf16.msra.mxu0 0
      %1297 = vmatpush.bf16.msra.mxu0 0
      %1298 = vmatpush.bf16.msra.mxu0 0
      %1299 = vmatpush.bf16.msra.mxu0 0
      %1300 = vmatpush.bf16.msra.mxu0 0
      %1301 = vmatpush.bf16.msra.mxu0 %v1290
      %1302 = vmatmul.bf16.gmra.mxu0 %v1292
      %v1303 = vpop.f32.mrf.mxu0
      %v1304 = vadd.f32 0.0, %v1303
      %v1305 = vpop.f32.mrf.mxu0
      %v1306 = vadd.f32 0.0, %v1305
      %1307 = vdwg.mxu0
      %v1308 = vpack.c.bf16 %v1306, %v1304
      %s1309 = scalar_lea.vmem %s9, 16
      %v1310 = vld [vmem:[%s1309] sm:$0xf]
      %v1311 = vld [vmem:[%s1309 + $0x4] sm:$0xf]
      %v1312 = vld [vmem:[%s1309 + $0x8] sm:$0xf]
      %v1313 = vld [vmem:[%s1309 + $0xc] sm:$0xf]
      %v1318 = vunpack.c.l.b16 %v1310
      %v1319 = vunpack.c.l.b16 %v1311
      %v1320 = vunpack.c.l.b16 %v1312
      %v1321 = vunpack.c.l.b16 %v1313
      %v1322 = vpack.c.b16 %v1319, %v1318
      %v1323 = vpack.c.b16 %v1321, %v1320
      %v1327 = vsel %vm917, %v1308, 0
      %1329 = vmatpush.bf16.msra.mxu0 0
      %1330 = vmatpush.bf16.msra.mxu0 0
      %1331 = vmatpush.bf16.msra.mxu0 0
      %1332 = vmatpush.bf16.msra.mxu0 0
      %1333 = vmatpush.bf16.msra.mxu0 0
      %1334 = vmatpush.bf16.msra.mxu0 0
      %1335 = vmatpush.bf16.msra.mxu0 %v1323
      %1336 = vmatpush.bf16.msra.mxu0 %v1322
      %1337 = vmatmul.bf16.gmra.mxu0 %v1327
      %v1338 = vpop.f32.mrf.mxu0
      %v1339 = vadd.f32 0.0, %v1338
      %v1340 = vpop.f32.mrf.mxu0
      %v1341 = vadd.f32 0.0, %v1340
      %1342 = vdwg.mxu0
      %v1347 = vunpack.c.l.b16 %v985
      %v1348 = vunpack.c.l.b16 %v986
      %v1349 = vunpack.c.l.b16 %v987
      %v1350 = vunpack.c.l.b16 %v988
      %v1351 = vpack.c.b16 %v1348, %v1347
      %v1352 = vpack.c.b16 %v1350, %v1349
      %v1356 = vsel %vm917, %v984, 0
      %1358 = vmatpush.bf16.msra.mxu0 0
      %1359 = vmatpush.bf16.msra.mxu0 0
      %1360 = vmatpush.bf16.msra.mxu0 0
      %1361 = vmatpush.bf16.msra.mxu0 0
      %1362 = vmatpush.bf16.msra.mxu0 0
      %1363 = vmatpush.bf16.msra.mxu0 0
      %1364 = vmatpush.bf16.msra.mxu0 %v1352
      %1365 = vmatpush.bf16.msra.mxu0 %v1351
      %1366 = vmatmul.bf16.gmra.mxu0 %v1356
      %v1367 = vpop.f32.mrf.mxu0
      %v1368 = vadd.f32 %v1339, %v1367
      %v1369 = vpop.f32.mrf.mxu0
      %v1370 = vadd.f32 %v1341, %v1369
      %1371 = vdwg.mxu0
      %s1372 = scalar_lea.vmem %s3, 128
      %v1373 = vld [vmem:[%s1372] sm:$0xf]
      %v1374 = vld [vmem:[%s1372 + $0x4] sm:$0xf]
      %v1375 = vld [vmem:[%s1372 + $0x8] sm:$0xf]
      %v1376 = vld [vmem:[%s1372 + $0xc] sm:$0xf]
      %v1377 = vld [vmem:[%s1372 + $0x10] sm:$0xf]
      %v1378 = vld [vmem:[%s1372 + $0x14] sm:$0xf]
      %v1379 = vld [vmem:[%s1372 + $0x18] sm:$0xf]
      %v1380 = vld [vmem:[%s1372 + $0x1c] sm:$0xf]
      %v1381 = vld [vmem:[%s1372 + $0x20] sm:$0xf]
      %v1382 = vld [vmem:[%s1372 + $0x24] sm:$0xf]
      %v1383 = vld [vmem:[%s1372 + $0x28] sm:$0xf]
      %v1384 = vld [vmem:[%s1372 + $0x2c] sm:$0xf]
      %v1385 = vld [vmem:[%s1372 + $0x30] sm:$0xf]
      %v1386 = vld [vmem:[%s1372 + $0x34] sm:$0xf]
      %v1387 = vld [vmem:[%s1372 + $0x38] sm:$0xf]
      %v1388 = vld [vmem:[%s1372 + $0x3c] sm:$0xf]
      %s1389 = scalar_lea.vmem %s6, 2
      %v1390 = vld [vmem:[%s1389] sm:$0x1]
      %v1392 = vperm.slane %v1390, 0
      %v1410 = vunpack.c.l.b16 %v1373
      %v1411 = vunpack.c.l.b16 %v1374
      %v1412 = vunpack.c.l.b16 %v1375
      %v1413 = vunpack.c.l.b16 %v1376
      %v1414 = vunpack.c.l.b16 %v1377
      %v1415 = vunpack.c.l.b16 %v1378
      %v1416 = vunpack.c.l.b16 %v1379
      %v1417 = vunpack.c.l.b16 %v1380
      %v1418 = vunpack.c.l.b16 %v1381
      %v1419 = vunpack.c.l.b16 %v1382
      %v1420 = vunpack.c.l.b16 %v1383
      %v1421 = vunpack.c.l.b16 %v1384
      %v1422 = vunpack.c.l.b16 %v1385
      %v1423 = vunpack.c.l.b16 %v1386
      %v1424 = vunpack.c.l.b16 %v1387
      %v1425 = vunpack.c.l.b16 %v1388
      %v1426 = vpack.c.b16 %v1411, %v1410
      %v1427 = vpack.c.b16 %v1413, %v1412
      %v1428 = vpack.c.b16 %v1415, %v1414
      %v1429 = vpack.c.b16 %v1417, %v1416
      %v1430 = vpack.c.b16 %v1419, %v1418
      %v1431 = vpack.c.b16 %v1421, %v1420
      %v1432 = vpack.c.b16 %v1423, %v1422
      %v1433 = vpack.c.b16 %v1425, %v1424
      %1442 = vmatpush.bf16.msra.mxu0 %v1433
      %1443 = vmatpush.bf16.msra.mxu0 %v1432
      %1444 = vmatpush.bf16.msra.mxu0 %v1431
      %1445 = vmatpush.bf16.msra.mxu0 %v1430
      %1446 = vmatpush.bf16.msra.mxu0 %v1429
      %1447 = vmatpush.bf16.msra.mxu0 %v1428
      %1448 = vmatpush.bf16.msra.mxu0 %v1427
      %1449 = vmatpush.bf16.msra.mxu0 %v1426
      %1450 = vmatmul.bf16.gmra.mxu0 %v665
      %v1451 = vpop.f32.mrf.mxu0
      %v1452 = vadd.f32 %v1392, %v1451
      %v1453 = vpop.f32.mrf.mxu0
      %v1454 = vadd.f32 %v1392, %v1453
      %1455 = vdwg.mxu0
      %s1456 = scalar_lea.vmem %s4, 128
      %v1457 = vld [vmem:[%s1456] sm:$0xf]
      %v1458 = vld [vmem:[%s1456 + $0x4] sm:$0xf]
      %v1459 = vld [vmem:[%s1456 + $0x8] sm:$0xf]
      %v1460 = vld [vmem:[%s1456 + $0xc] sm:$0xf]
      %v1461 = vld [vmem:[%s1456 + $0x10] sm:$0xf]
      %v1462 = vld [vmem:[%s1456 + $0x14] sm:$0xf]
      %v1463 = vld [vmem:[%s1456 + $0x18] sm:$0xf]
      %v1464 = vld [vmem:[%s1456 + $0x1c] sm:$0xf]
      %v1465 = vld [vmem:[%s1456 + $0x20] sm:$0xf]
      %v1466 = vld [vmem:[%s1456 + $0x24] sm:$0xf]
      %v1467 = vld [vmem:[%s1456 + $0x28] sm:$0xf]
      %v1468 = vld [vmem:[%s1456 + $0x2c] sm:$0xf]
      %v1469 = vld [vmem:[%s1456 + $0x30] sm:$0xf]
      %v1470 = vld [vmem:[%s1456 + $0x34] sm:$0xf]
      %v1471 = vld [vmem:[%s1456 + $0x38] sm:$0xf]
      %v1472 = vld [vmem:[%s1456 + $0x3c] sm:$0xf]
      %s1473 = scalar_lea.vmem %s7, 2
      %v1474 = vld [vmem:[%s1473] sm:$0x1]
      %v1476 = vperm.slane %v1474, 0
      %v1494 = vunpack.c.l.b16 %v1457
      %v1495 = vunpack.c.l.b16 %v1458
      %v1496 = vunpack.c.l.b16 %v1459
      %v1497 = vunpack.c.l.b16 %v1460
      %v1498 = vunpack.c.l.b16 %v1461
      %v1499 = vunpack.c.l.b16 %v1462
      %v1500 = vunpack.c.l.b16 %v1463
      %v1501 = vunpack.c.l.b16 %v1464
      %v1502 = vunpack.c.l.b16 %v1465
      %v1503 = vunpack.c.l.b16 %v1466
      %v1504 = vunpack.c.l.b16 %v1467
      %v1505 = vunpack.c.l.b16 %v1468
      %v1506 = vunpack.c.l.b16 %v1469
      %v1507 = vunpack.c.l.b16 %v1470
      %v1508 = vunpack.c.l.b16 %v1471
      %v1509 = vunpack.c.l.b16 %v1472
      %v1510 = vpack.c.b16 %v1495, %v1494
      %v1511 = vpack.c.b16 %v1497, %v1496
      %v1512 = vpack.c.b16 %v1499, %v1498
      %v1513 = vpack.c.b16 %v1501, %v1500
      %v1514 = vpack.c.b16 %v1503, %v1502
      %v1515 = vpack.c.b16 %v1505, %v1504
      %v1516 = vpack.c.b16 %v1507, %v1506
      %v1517 = vpack.c.b16 %v1509, %v1508
      %1526 = vmatpush.bf16.msra.mxu0 %v1517
      %1527 = vmatpush.bf16.msra.mxu0 %v1516
      %1528 = vmatpush.bf16.msra.mxu0 %v1515
      %1529 = vmatpush.bf16.msra.mxu0 %v1514
      %1530 = vmatpush.bf16.msra.mxu0 %v1513
      %1531 = vmatpush.bf16.msra.mxu0 %v1512
      %1532 = vmatpush.bf16.msra.mxu0 %v1511
      %1533 = vmatpush.bf16.msra.mxu0 %v1510
      %1534 = vmatmul.bf16.gmra.mxu0 %v665
      %v1535 = vpop.f32.mrf.mxu0
      %v1536 = vadd.f32 %v1476, %v1535
      %v1537 = vpop.f32.mrf.mxu0
      %v1538 = vadd.f32 %v1476, %v1537
      %1539 = vdwg.mxu0
      %s1540 = scalar_lea.vmem %s5, 128
      %v1541 = vld [vmem:[%s1540] sm:$0xf]
      %v1542 = vld [vmem:[%s1540 + $0x4] sm:$0xf]
      %v1543 = vld [vmem:[%s1540 + $0x8] sm:$0xf]
      %v1544 = vld [vmem:[%s1540 + $0xc] sm:$0xf]
      %v1545 = vld [vmem:[%s1540 + $0x10] sm:$0xf]
      %v1546 = vld [vmem:[%s1540 + $0x14] sm:$0xf]
      %v1547 = vld [vmem:[%s1540 + $0x18] sm:$0xf]
      %v1548 = vld [vmem:[%s1540 + $0x1c] sm:$0xf]
      %v1549 = vld [vmem:[%s1540 + $0x20] sm:$0xf]
      %v1550 = vld [vmem:[%s1540 + $0x24] sm:$0xf]
      %v1551 = vld [vmem:[%s1540 + $0x28] sm:$0xf]
      %v1552 = vld [vmem:[%s1540 + $0x2c] sm:$0xf]
      %v1553 = vld [vmem:[%s1540 + $0x30] sm:$0xf]
      %v1554 = vld [vmem:[%s1540 + $0x34] sm:$0xf]
      %v1555 = vld [vmem:[%s1540 + $0x38] sm:$0xf]
      %v1556 = vld [vmem:[%s1540 + $0x3c] sm:$0xf]
      %s1557 = scalar_lea.vmem %s8, 2
      %v1558 = vld [vmem:[%s1557] sm:$0x1]
      %v1560 = vperm.slane %v1558, 0
      %v1578 = vunpack.c.l.b16 %v1541
      %v1579 = vunpack.c.l.b16 %v1542
      %v1580 = vunpack.c.l.b16 %v1543
      %v1581 = vunpack.c.l.b16 %v1544
      %v1582 = vunpack.c.l.b16 %v1545
      %v1583 = vunpack.c.l.b16 %v1546
      %v1584 = vunpack.c.l.b16 %v1547
      %v1585 = vunpack.c.l.b16 %v1548
      %v1586 = vunpack.c.l.b16 %v1549
      %v1587 = vunpack.c.l.b16 %v1550
      %v1588 = vunpack.c.l.b16 %v1551
      %v1589 = vunpack.c.l.b16 %v1552
      %v1590 = vunpack.c.l.b16 %v1553
      %v1591 = vunpack.c.l.b16 %v1554
      %v1592 = vunpack.c.l.b16 %v1555
      %v1593 = vunpack.c.l.b16 %v1556
      %v1594 = vpack.c.b16 %v1579, %v1578
      %v1595 = vpack.c.b16 %v1581, %v1580
      %v1596 = vpack.c.b16 %v1583, %v1582
      %v1597 = vpack.c.b16 %v1585, %v1584
      %v1598 = vpack.c.b16 %v1587, %v1586
      %v1599 = vpack.c.b16 %v1589, %v1588
      %v1600 = vpack.c.b16 %v1591, %v1590
      %v1601 = vpack.c.b16 %v1593, %v1592
      %1610 = vmatpush.bf16.msra.mxu0 %v1601
      %1611 = vmatpush.bf16.msra.mxu0 %v1600
      %1612 = vmatpush.bf16.msra.mxu0 %v1599
      %1613 = vmatpush.bf16.msra.mxu0 %v1598
      %1614 = vmatpush.bf16.msra.mxu0 %v1597
      %1615 = vmatpush.bf16.msra.mxu0 %v1596
      %1616 = vmatpush.bf16.msra.mxu0 %v1595
      %1617 = vmatpush.bf16.msra.mxu0 %v1594
      %1618 = vmatmul.bf16.gmra.mxu0 %v665
      %v1619 = vpop.f32.mrf.mxu0
      %v1620 = vadd.f32 %v1560, %v1619
      %v1621 = vpop.f32.mrf.mxu0
      %v1622 = vadd.f32 %v1560, %v1621
      %1623 = vdwg.mxu0
      %v1624 = vpack.c.bf16 %v1454, %v1452
      %v1625 = vpack.c.bf16 %v1538, %v1536
      %v1627 = vsel %vm917, %v1624, 0
      %v1630 = vsel %vm917, %v1625, 0
      %1632 = vmatpush.bf16.xpose.msra.mxu0 0
      %1633 = vmatpush.bf16.xpose.msra.mxu0 0
      %1634 = vmatpush.bf16.xpose.msra.mxu0 0
      %1635 = vmatpush.bf16.xpose.msra.mxu0 0
      %1636 = vmatpush.bf16.xpose.msra.mxu0 0
      %1637 = vmatpush.bf16.xpose.msra.mxu0 0
      %1638 = vmatpush.bf16.xpose.msra.mxu0 0
      %1639 = vmatpush.bf16.xpose.msra.mxu0 %v1630
      %1640 = vmatmul.bf16.gmra.mxu0 %v1627
      %v1641 = vpop.f32.mrf.mxu0
      %v1642 = vadd.f32 0.0, %v1641
      %v1643 = vpop.f32.mrf.mxu0
      %v1644 = vadd.f32 0.0, %v1643
      %1645 = vdwg.mxu0
      %v1646 = vmul.f32 %v1642, 0.17677669
      %v1647 = vmul.f32 %v1644, 0.17677669
      %v1648 = vsel %vm668, %v1646, -1e+30
      %v1649 = vsel %vm668, %v1647, -1e+30
      %v1650 = vsel %vm942, %v1648, -inf
      %1651 = vmax.xlane.f32.xlu0 %v1650
      %v1652 = vpop.xlane.xlu0 %1651
      %v1653 = vsel %vm942, %v1649, -inf
      %1654 = vmax.xlane.f32.xlu0 %v1653
      %v1655 = vpop.xlane.xlu0 %1654
      %v1656 = vsub.f32 %v1648, %v1652
      %v1657 = vsub.f32 %v1649, %v1655
      %v1658 = vmul.f32 %v1656, 1.442695
      %v1659 = vpow.pop %v1658
      %v1660 = vmul.f32 %v1657, 1.442695
      %v1661 = vpow.pop %v1660
      %v1662 = vsel %vm942, %v1659, 0.0
      %1663 = vadd.xlane.f32.xlu0 %v1662
      %v1664 = vpop.xlane.xlu0 %1663
      %v1665 = vsel %vm942, %v1661, 0.0
      %1666 = vadd.xlane.f32.xlu0 %v1665
      %v1667 = vpop.xlane.xlu0 %1666
      %v1668 = vrcp.pop %v1664
      %v1669 = vrcp.pop %v1667
      %v1670 = vmul.f32 %v1659, %v1668
      %v1671 = vmul.f32 %v1661, %v1669
      %v1672 = vpack.c.bf16 %v1671, %v1670
      %v1673 = vpack.c.bf16 %v1622, %v1620
      %v1675 = vsel %vm942, %v1672, 0
      %1677 = vmatpush.bf16.msra.mxu0 0
      %1678 = vmatpush.bf16.msra.mxu0 0
      %1679 = vmatpush.bf16.msra.mxu0 0
      %1680 = vmatpush.bf16.msra.mxu0 0
      %1681 = vmatpush.bf16.msra.mxu0 0
      %1682 = vmatpush.bf16.msra.mxu0 0
      %1683 = vmatpush.bf16.msra.mxu0 0
      %1684 = vmatpush.bf16.msra.mxu0 %v1673
      %1685 = vmatmul.bf16.gmra.mxu0 %v1675
      %v1686 = vpop.f32.mrf.mxu0
      %v1687 = vadd.f32 0.0, %v1686
      %v1688 = vpop.f32.mrf.mxu0
      %v1689 = vadd.f32 0.0, %v1688
      %1690 = vdwg.mxu0
      %v1691 = vpack.c.bf16 %v1689, %v1687
      %s1692 = scalar_lea.vmem %s9, 32
      %v1693 = vld [vmem:[%s1692] sm:$0xf]
      %v1694 = vld [vmem:[%s1692 + $0x4] sm:$0xf]
      %v1695 = vld [vmem:[%s1692 + $0x8] sm:$0xf]
      %v1696 = vld [vmem:[%s1692 + $0xc] sm:$0xf]
      %v1701 = vunpack.c.l.b16 %v1693
      %v1702 = vunpack.c.l.b16 %v1694
      %v1703 = vunpack.c.l.b16 %v1695
      %v1704 = vunpack.c.l.b16 %v1696
      %v1705 = vpack.c.b16 %v1702, %v1701
      %v1706 = vpack.c.b16 %v1704, %v1703
      %v1710 = vsel %vm917, %v1691, 0
      %1712 = vmatpush.bf16.msra.mxu0 0
      %1713 = vmatpush.bf16.msra.mxu0 0
      %1714 = vmatpush.bf16.msra.mxu0 0
      %1715 = vmatpush.bf16.msra.mxu0 0
      %1716 = vmatpush.bf16.msra.mxu0 0
      %1717 = vmatpush.bf16.msra.mxu0 0
      %1718 = vmatpush.bf16.msra.mxu0 %v1706
      %1719 = vmatpush.bf16.msra.mxu0 %v1705
      %1720 = vmatmul.bf16.gmra.mxu0 %v1710
      %v1721 = vpop.f32.mrf.mxu0
      %v1722 = vadd.f32 0.0, %v1721
      %v1723 = vpop.f32.mrf.mxu0
      %v1724 = vadd.f32 0.0, %v1723
      %1725 = vdwg.mxu0
      %v1726 = vadd.f32 %v1368, %v1722
      %v1727 = vadd.f32 %v1370, %v1724
      %s1728 = scalar_lea.vmem %s3, 192
      %v1729 = vld [vmem:[%s1728] sm:$0xf]
      %v1730 = vld [vmem:[%s1728 + $0x4] sm:$0xf]
      %v1731 = vld [vmem:[%s1728 + $0x8] sm:$0xf]
      %v1732 = vld [vmem:[%s1728 + $0xc] sm:$0xf]
      %v1733 = vld [vmem:[%s1728 + $0x10] sm:$0xf]
      %v1734 = vld [vmem:[%s1728 + $0x14] sm:$0xf]
      %v1735 = vld [vmem:[%s1728 + $0x18] sm:$0xf]
      %v1736 = vld [vmem:[%s1728 + $0x1c] sm:$0xf]
      %v1737 = vld [vmem:[%s1728 + $0x20] sm:$0xf]
      %v1738 = vld [vmem:[%s1728 + $0x24] sm:$0xf]
      %v1739 = vld [vmem:[%s1728 + $0x28] sm:$0xf]
      %v1740 = vld [vmem:[%s1728 + $0x2c] sm:$0xf]
      %v1741 = vld [vmem:[%s1728 + $0x30] sm:$0xf]
      %v1742 = vld [vmem:[%s1728 + $0x34] sm:$0xf]
      %v1743 = vld [vmem:[%s1728 + $0x38] sm:$0xf]
      %v1744 = vld [vmem:[%s1728 + $0x3c] sm:$0xf]
      %s1745 = scalar_lea.vmem %s6, 3
      %v1746 = vld [vmem:[%s1745] sm:$0x1]
      %v1748 = vperm.slane %v1746, 0
      %v1766 = vunpack.c.l.b16 %v1729
      %v1767 = vunpack.c.l.b16 %v1730
      %v1768 = vunpack.c.l.b16 %v1731
      %v1769 = vunpack.c.l.b16 %v1732
      %v1770 = vunpack.c.l.b16 %v1733
      %v1771 = vunpack.c.l.b16 %v1734
      %v1772 = vunpack.c.l.b16 %v1735
      %v1773 = vunpack.c.l.b16 %v1736
      %v1774 = vunpack.c.l.b16 %v1737
      %v1775 = vunpack.c.l.b16 %v1738
      %v1776 = vunpack.c.l.b16 %v1739
      %v1777 = vunpack.c.l.b16 %v1740
      %v1778 = vunpack.c.l.b16 %v1741
      %v1779 = vunpack.c.l.b16 %v1742
      %v1780 = vunpack.c.l.b16 %v1743
      %v1781 = vunpack.c.l.b16 %v1744
      %v1782 = vpack.c.b16 %v1767, %v1766
      %v1783 = vpack.c.b16 %v1769, %v1768
      %v1784 = vpack.c.b16 %v1771, %v1770
      %v1785 = vpack.c.b16 %v1773, %v1772
      %v1786 = vpack.c.b16 %v1775, %v1774
      %v1787 = vpack.c.b16 %v1777, %v1776
      %v1788 = vpack.c.b16 %v1779, %v1778
      %v1789 = vpack.c.b16 %v1781, %v1780
      %1798 = vmatpush.bf16.msra.mxu0 %v1789
      %1799 = vmatpush.bf16.msra.mxu0 %v1788
      %1800 = vmatpush.bf16.msra.mxu0 %v1787
      %1801 = vmatpush.bf16.msra.mxu0 %v1786
      %1802 = vmatpush.bf16.msra.mxu0 %v1785
      %1803 = vmatpush.bf16.msra.mxu0 %v1784
      %1804 = vmatpush.bf16.msra.mxu0 %v1783
      %1805 = vmatpush.bf16.msra.mxu0 %v1782
      %1806 = vmatmul.bf16.gmra.mxu0 %v665
      %v1807 = vpop.f32.mrf.mxu0
      %v1808 = vadd.f32 %v1748, %v1807
      %v1809 = vpop.f32.mrf.mxu0
      %v1810 = vadd.f32 %v1748, %v1809
      %1811 = vdwg.mxu0
      %s1812 = scalar_lea.vmem %s4, 192
      %v1813 = vld [vmem:[%s1812] sm:$0xf]
      %v1814 = vld [vmem:[%s1812 + $0x4] sm:$0xf]
      %v1815 = vld [vmem:[%s1812 + $0x8] sm:$0xf]
      %v1816 = vld [vmem:[%s1812 + $0xc] sm:$0xf]
      %v1817 = vld [vmem:[%s1812 + $0x10] sm:$0xf]
      %v1818 = vld [vmem:[%s1812 + $0x14] sm:$0xf]
      %v1819 = vld [vmem:[%s1812 + $0x18] sm:$0xf]
      %v1820 = vld [vmem:[%s1812 + $0x1c] sm:$0xf]
      %v1821 = vld [vmem:[%s1812 + $0x20] sm:$0xf]
      %v1822 = vld [vmem:[%s1812 + $0x24] sm:$0xf]
      %v1823 = vld [vmem:[%s1812 + $0x28] sm:$0xf]
      %v1824 = vld [vmem:[%s1812 + $0x2c] sm:$0xf]
      %v1825 = vld [vmem:[%s1812 + $0x30] sm:$0xf]
      %v1826 = vld [vmem:[%s1812 + $0x34] sm:$0xf]
      %v1827 = vld [vmem:[%s1812 + $0x38] sm:$0xf]
      %v1828 = vld [vmem:[%s1812 + $0x3c] sm:$0xf]
      %s1829 = scalar_lea.vmem %s7, 3
      %v1830 = vld [vmem:[%s1829] sm:$0x1]
      %v1832 = vperm.slane %v1830, 0
      %v1850 = vunpack.c.l.b16 %v1813
      %v1851 = vunpack.c.l.b16 %v1814
      %v1852 = vunpack.c.l.b16 %v1815
      %v1853 = vunpack.c.l.b16 %v1816
      %v1854 = vunpack.c.l.b16 %v1817
      %v1855 = vunpack.c.l.b16 %v1818
      %v1856 = vunpack.c.l.b16 %v1819
      %v1857 = vunpack.c.l.b16 %v1820
      %v1858 = vunpack.c.l.b16 %v1821
      %v1859 = vunpack.c.l.b16 %v1822
      %v1860 = vunpack.c.l.b16 %v1823
      %v1861 = vunpack.c.l.b16 %v1824
      %v1862 = vunpack.c.l.b16 %v1825
      %v1863 = vunpack.c.l.b16 %v1826
      %v1864 = vunpack.c.l.b16 %v1827
      %v1865 = vunpack.c.l.b16 %v1828
      %v1866 = vpack.c.b16 %v1851, %v1850
      %v1867 = vpack.c.b16 %v1853, %v1852
      %v1868 = vpack.c.b16 %v1855, %v1854
      %v1869 = vpack.c.b16 %v1857, %v1856
      %v1870 = vpack.c.b16 %v1859, %v1858
      %v1871 = vpack.c.b16 %v1861, %v1860
      %v1872 = vpack.c.b16 %v1863, %v1862
      %v1873 = vpack.c.b16 %v1865, %v1864
      %1882 = vmatpush.bf16.msra.mxu0 %v1873
      %1883 = vmatpush.bf16.msra.mxu0 %v1872
      %1884 = vmatpush.bf16.msra.mxu0 %v1871
      %1885 = vmatpush.bf16.msra.mxu0 %v1870
      %1886 = vmatpush.bf16.msra.mxu0 %v1869
      %1887 = vmatpush.bf16.msra.mxu0 %v1868
      %1888 = vmatpush.bf16.msra.mxu0 %v1867
      %1889 = vmatpush.bf16.msra.mxu0 %v1866
      %1890 = vmatmul.bf16.gmra.mxu0 %v665
      %v1891 = vpop.f32.mrf.mxu0
      %v1892 = vadd.f32 %v1832, %v1891
      %v1893 = vpop.f32.mrf.mxu0
      %v1894 = vadd.f32 %v1832, %v1893
      %1895 = vdwg.mxu0
      %s1896 = scalar_lea.vmem %s5, 192
      %v1897 = vld [vmem:[%s1896] sm:$0xf]
      %v1898 = vld [vmem:[%s1896 + $0x4] sm:$0xf]
      %v1899 = vld [vmem:[%s1896 + $0x8] sm:$0xf]
      %v1900 = vld [vmem:[%s1896 + $0xc] sm:$0xf]
      %v1901 = vld [vmem:[%s1896 + $0x10] sm:$0xf]
      %v1902 = vld [vmem:[%s1896 + $0x14] sm:$0xf]
      %v1903 = vld [vmem:[%s1896 + $0x18] sm:$0xf]
      %v1904 = vld [vmem:[%s1896 + $0x1c] sm:$0xf]
      %v1905 = vld [vmem:[%s1896 + $0x20] sm:$0xf]
      %v1906 = vld [vmem:[%s1896 + $0x24] sm:$0xf]
      %v1907 = vld [vmem:[%s1896 + $0x28] sm:$0xf]
      %v1908 = vld [vmem:[%s1896 + $0x2c] sm:$0xf]
      %v1909 = vld [vmem:[%s1896 + $0x30] sm:$0xf]
      %v1910 = vld [vmem:[%s1896 + $0x34] sm:$0xf]
      %v1911 = vld [vmem:[%s1896 + $0x38] sm:$0xf]
      %v1912 = vld [vmem:[%s1896 + $0x3c] sm:$0xf]
      %s1913 = scalar_lea.vmem %s8, 3
      %v1914 = vld [vmem:[%s1913] sm:$0x1]
      %v1916 = vperm.slane %v1914, 0
      %v1934 = vunpack.c.l.b16 %v1897
      %v1935 = vunpack.c.l.b16 %v1898
      %v1936 = vunpack.c.l.b16 %v1899
      %v1937 = vunpack.c.l.b16 %v1900
      %v1938 = vunpack.c.l.b16 %v1901
      %v1939 = vunpack.c.l.b16 %v1902
      %v1940 = vunpack.c.l.b16 %v1903
      %v1941 = vunpack.c.l.b16 %v1904
      %v1942 = vunpack.c.l.b16 %v1905
      %v1943 = vunpack.c.l.b16 %v1906
      %v1944 = vunpack.c.l.b16 %v1907
      %v1945 = vunpack.c.l.b16 %v1908
      %v1946 = vunpack.c.l.b16 %v1909
      %v1947 = vunpack.c.l.b16 %v1910
      %v1948 = vunpack.c.l.b16 %v1911
      %v1949 = vunpack.c.l.b16 %v1912
      %v1950 = vpack.c.b16 %v1935, %v1934
      %v1951 = vpack.c.b16 %v1937, %v1936
      %v1952 = vpack.c.b16 %v1939, %v1938
      %v1953 = vpack.c.b16 %v1941, %v1940
      %v1954 = vpack.c.b16 %v1943, %v1942
      %v1955 = vpack.c.b16 %v1945, %v1944
      %v1956 = vpack.c.b16 %v1947, %v1946
      %v1957 = vpack.c.b16 %v1949, %v1948
      %1966 = vmatpush.bf16.msra.mxu0 %v1957
      %1967 = vmatpush.bf16.msra.mxu0 %v1956
      %1968 = vmatpush.bf16.msra.mxu0 %v1955
      %1969 = vmatpush.bf16.msra.mxu0 %v1954
      %1970 = vmatpush.bf16.msra.mxu0 %v1953
      %1971 = vmatpush.bf16.msra.mxu0 %v1952
      %1972 = vmatpush.bf16.msra.mxu0 %v1951
      %1973 = vmatpush.bf16.msra.mxu0 %v1950
      %1974 = vmatmul.bf16.gmra.mxu0 %v665
      %v1975 = vpop.f32.mrf.mxu0
      %v1976 = vadd.f32 %v1916, %v1975
      %v1977 = vpop.f32.mrf.mxu0
      %v1978 = vadd.f32 %v1916, %v1977
      %1979 = vdwg.mxu0
      %v1980 = vpack.c.bf16 %v1810, %v1808
      %v1981 = vpack.c.bf16 %v1894, %v1892
      %v1983 = vsel %vm917, %v1980, 0
      %v1986 = vsel %vm917, %v1981, 0
      %1988 = vmatpush.bf16.xpose.msra.mxu0 0
      %1989 = vmatpush.bf16.xpose.msra.mxu0 0
      %1990 = vmatpush.bf16.xpose.msra.mxu0 0
      %1991 = vmatpush.bf16.xpose.msra.mxu0 0
      %1992 = vmatpush.bf16.xpose.msra.mxu0 0
      %1993 = vmatpush.bf16.xpose.msra.mxu0 0
      %1994 = vmatpush.bf16.xpose.msra.mxu0 0
      %1995 = vmatpush.bf16.xpose.msra.mxu0 %v1986
      %1996 = vmatmul.bf16.gmra.mxu0 %v1983
      %v1997 = vpop.f32.mrf.mxu0
      %v1998 = vadd.f32 0.0, %v1997
      %v1999 = vpop.f32.mrf.mxu0
      %v2000 = vadd.f32 0.0, %v1999
      %2001 = vdwg.mxu0
      %v2002 = vmul.f32 %v1998, 0.17677669
      %v2003 = vmul.f32 %v2000, 0.17677669
      %v2004 = vsel %vm668, %v2002, -1e+30
      %v2005 = vsel %vm668, %v2003, -1e+30
      %v2006 = vsel %vm942, %v2004, -inf
      %2007 = vmax.xlane.f32.xlu0 %v2006
      %v2008 = vpop.xlane.xlu0 %2007
      %v2009 = vsel %vm942, %v2005, -inf
      %2010 = vmax.xlane.f32.xlu0 %v2009
      %v2011 = vpop.xlane.xlu0 %2010
      %v2012 = vsub.f32 %v2004, %v2008
      %v2013 = vsub.f32 %v2005, %v2011
      %v2014 = vmul.f32 %v2012, 1.442695
      %v2015 = vpow.pop %v2014
      %v2016 = vmul.f32 %v2013, 1.442695
      %v2017 = vpow.pop %v2016
      %v2018 = vsel %vm942, %v2015, 0.0
      %2019 = vadd.xlane.f32.xlu0 %v2018
      %v2020 = vpop.xlane.xlu0 %2019
      %v2021 = vsel %vm942, %v2017, 0.0
      %2022 = vadd.xlane.f32.xlu0 %v2021
      %v2023 = vpop.xlane.xlu0 %2022
      %v2024 = vrcp.pop %v2020
      %v2025 = vrcp.pop %v2023
      %v2026 = vmul.f32 %v2015, %v2024
      %v2027 = vmul.f32 %v2017, %v2025
      %v2028 = vpack.c.bf16 %v2027, %v2026
      %v2029 = vpack.c.bf16 %v1978, %v1976
      %v2031 = vsel %vm942, %v2028, 0
      %2033 = vmatpush.bf16.msra.mxu0 0
      %2034 = vmatpush.bf16.msra.mxu0 0
      %2035 = vmatpush.bf16.msra.mxu0 0
      %2036 = vmatpush.bf16.msra.mxu0 0
      %2037 = vmatpush.bf16.msra.mxu0 0
      %2038 = vmatpush.bf16.msra.mxu0 0
      %2039 = vmatpush.bf16.msra.mxu0 0
      %2040 = vmatpush.bf16.msra.mxu0 %v2029
      %2041 = vmatmul.bf16.gmra.mxu0 %v2031
      %v2042 = vpop.f32.mrf.mxu0
      %v2043 = vadd.f32 0.0, %v2042
      %v2044 = vpop.f32.mrf.mxu0
      %v2045 = vadd.f32 0.0, %v2044
      %2046 = vdwg.mxu0
      %v2047 = vpack.c.bf16 %v2045, %v2043
      %s2048 = scalar_lea.vmem %s9, 48
      %v2049 = vld [vmem:[%s2048] sm:$0xf]
      %v2050 = vld [vmem:[%s2048 + $0x4] sm:$0xf]
      %v2051 = vld [vmem:[%s2048 + $0x8] sm:$0xf]
      %v2052 = vld [vmem:[%s2048 + $0xc] sm:$0xf]
      %v2057 = vunpack.c.l.b16 %v2049
      %v2058 = vunpack.c.l.b16 %v2050
      %v2059 = vunpack.c.l.b16 %v2051
      %v2060 = vunpack.c.l.b16 %v2052
      %v2061 = vpack.c.b16 %v2058, %v2057
      %v2062 = vpack.c.b16 %v2060, %v2059
      %v2066 = vsel %vm917, %v2047, 0
      %2068 = vmatpush.bf16.msra.mxu0 0
      %2069 = vmatpush.bf16.msra.mxu0 0
      %2070 = vmatpush.bf16.msra.mxu0 0
      %2071 = vmatpush.bf16.msra.mxu0 0
      %2072 = vmatpush.bf16.msra.mxu0 0
      %2073 = vmatpush.bf16.msra.mxu0 0
      %2074 = vmatpush.bf16.msra.mxu0 %v2062
      %2075 = vmatpush.bf16.msra.mxu0 %v2061
      %2076 = vmatmul.bf16.gmra.mxu0 %v2066
      %v2077 = vpop.f32.mrf.mxu0
      %v2078 = vadd.f32 0.0, %v2077
      %v2079 = vpop.f32.mrf.mxu0
      %v2080 = vadd.f32 0.0, %v2079
      %2081 = vdwg.mxu0
      %v2082 = vadd.f32 %v1726, %v2078
      %v2083 = vadd.f32 %v1727, %v2080
      %v2084 = vadd.f32 %v604, %v2082
      %v2085 = vadd.f32 %v605, %v2083
      %v2086 = vld [vmem:[%s10] sm:$0x1]
      %v2088 = vperm.slane %v2086, 0
      %v2090 = vadd.f32 %v2084, %v2088
      %v2091 = vadd.f32 %v2085, %v2088
      %v2092 = vld [vmem:[%s11] sm:$0x1]
      %v2093 = vld [vmem:[%s12] sm:$0x1]
      %2094 = vadd.xlane.f32.xlu0 %v2090
      %v2095 = vpop.xlane.xlu0 %2094
      %2096 = vadd.xlane.f32.xlu0 %v2091
      %v2097 = vpop.xlane.xlu0 %2096
      %v2098 = vmul.f32 %v2095, %v618
      %v2099 = vmul.f32 %v2097, %v618
      %v2100 = vsub.f32 %v2090, %v2098
      %v2101 = vsub.f32 %v2091, %v2099
      %v2102 = vmul.f32 %v2100, %v2100
      %v2103 = vmul.f32 %v2101, %v2101
      %2104 = vadd.xlane.f32.xlu0 %v2102
      %v2105 = vpop.xlane.xlu0 %2104
      %2106 = vadd.xlane.f32.xlu0 %v2103
      %v2107 = vpop.xlane.xlu0 %2106
      %v2108 = vmul.f32 %v2105, %v618
      %v2109 = vmul.f32 %v2107, %v618
      %v2110 = vadd.f32 %v2108, 1e-06
      %v2111 = vadd.f32 %v2109, 1e-06
      %v2112 = vrsqrt.pop %v2110
      %v2113 = vmul.f32 %v2112, %v2110
      %v2114 = vmul.f32 %v2113, %v2112
      %v2115 = vmul.f32 0.5, %v2114
      %v2116 = vsub.f32 1.5, %v2115
      %v2117 = vmul.f32 %v2112, %v2116
      %vm2118 = vweird.f32 %v2110
      %vm2119 = vweird.f32 %v2112
      %vm2120 = vmor %vm2118, %vm2119
      %v2121 = vsel %vm2120, %v2112, %v2117
      %v2122 = vrsqrt.pop %v2111
      %v2123 = vmul.f32 %v2122, %v2111
      %v2124 = vmul.f32 %v2123, %v2122
      %v2125 = vmul.f32 0.5, %v2124
      %v2126 = vsub.f32 1.5, %v2125
      %v2127 = vmul.f32 %v2122, %v2126
      %vm2128 = vweird.f32 %v2111
      %vm2129 = vweird.f32 %v2122
      %vm2130 = vmor %vm2128, %vm2129
      %v2131 = vsel %vm2130, %v2122, %v2127
      %v2132 = vmul.f32 %v2100, %v2121
      %v2133 = vmul.f32 %v2101, %v2131
      %v2135 = vperm.slane %v2092, 0
      %v2137 = vmul.f32 %v2132, %v2135
      %v2138 = vmul.f32 %v2133, %v2135
      %v2140 = vperm.slane %v2093, 0
      %v2142 = vadd.f32 %v2137, %v2140
      %v2143 = vadd.f32 %v2138, %v2140
      %v2144 = vpack.c.bf16 %v2143, %v2142
      %v2145 = vld [vmem:[%s13] sm:$0xff]
      %v2146 = vld [vmem:[%s13 + $0x8] sm:$0xff]
      %v2147 = vld [vmem:[%s13 + $0x10] sm:$0xff]
      %v2148 = vld [vmem:[%s13 + $0x18] sm:$0xff]
      %v2149 = vld [vmem:[%s13 + $0x20] sm:$0xff]
      %v2150 = vld [vmem:[%s13 + $0x28] sm:$0xff]
      %v2151 = vld [vmem:[%s13 + $0x30] sm:$0xff]
      %v2152 = vld [vmem:[%s13 + $0x38] sm:$0xff]
      %v2153 = vld [vmem:[%s13 + $0x40] sm:$0xff]
      %v2154 = vld [vmem:[%s13 + $0x48] sm:$0xff]
      %v2155 = vld [vmem:[%s13 + $0x50] sm:$0xff]
      %v2156 = vld [vmem:[%s13 + $0x58] sm:$0xff]
      %v2157 = vld [vmem:[%s13 + $0x60] sm:$0xff]
      %v2158 = vld [vmem:[%s13 + $0x68] sm:$0xff]
      %v2159 = vld [vmem:[%s13 + $0x70] sm:$0xff]
      %v2160 = vld [vmem:[%s13 + $0x78] sm:$0xff]
      %v2161 = vld [vmem:[%s13 + $0x80] sm:$0xff]
      %v2162 = vld [vmem:[%s13 + $0x88] sm:$0xff]
      %v2163 = vld [vmem:[%s13 + $0x90] sm:$0xff]
      %v2164 = vld [vmem:[%s13 + $0x98] sm:$0xff]
      %v2165 = vld [vmem:[%s13 + $0xa0] sm:$0xff]
      %v2166 = vld [vmem:[%s13 + $0xa8] sm:$0xff]
      %v2167 = vld [vmem:[%s13 + $0xb0] sm:$0xff]
      %v2168 = vld [vmem:[%s13 + $0xb8] sm:$0xff]
      %v2169 = vld [vmem:[%s13 + $0xc0] sm:$0xff]
      %v2170 = vld [vmem:[%s13 + $0xc8] sm:$0xff]
      %v2171 = vld [vmem:[%s13 + $0xd0] sm:$0xff]
      %v2172 = vld [vmem:[%s13 + $0xd8] sm:$0xff]
      %v2173 = vld [vmem:[%s13 + $0xe0] sm:$0xff]
      %v2174 = vld [vmem:[%s13 + $0xe8] sm:$0xff]
      %v2175 = vld [vmem:[%s13 + $0xf0] sm:$0xff]
      %v2176 = vld [vmem:[%s13 + $0xf8] sm:$0xff]
      %v2177 = vld [vmem:[%s14] sm:$0xf]
      %v2179 = vperm.slane %v2177, 0
      %v2180 = vperm.slane %v2177, 1
      %v2181 = vperm.slane %v2177, 2
      %v2182 = vperm.slane %v2177, 3
      %v2219 = vunpack.c.l.b16 %v2145
      %v2220 = vunpack.c.h.b16 %v2145
      %v2221 = vunpack.c.l.b16 %v2146
      %v2222 = vunpack.c.h.b16 %v2146
      %v2223 = vunpack.c.l.b16 %v2147
      %v2224 = vunpack.c.h.b16 %v2147
      %v2225 = vunpack.c.l.b16 %v2148
      %v2226 = vunpack.c.h.b16 %v2148
      %v2227 = vunpack.c.l.b16 %v2149
      %v2228 = vunpack.c.h.b16 %v2149
      %v2229 = vunpack.c.l.b16 %v2150
      %v2230 = vunpack.c.h.b16 %v2150
      %v2231 = vunpack.c.l.b16 %v2151
      %v2232 = vunpack.c.h.b16 %v2151
      %v2233 = vunpack.c.l.b16 %v2152
      %v2234 = vunpack.c.h.b16 %v2152
      %v2235 = vunpack.c.l.b16 %v2153
      %v2236 = vunpack.c.h.b16 %v2153
      %v2237 = vunpack.c.l.b16 %v2154
      %v2238 = vunpack.c.h.b16 %v2154
      %v2239 = vunpack.c.l.b16 %v2155
      %v2240 = vunpack.c.h.b16 %v2155
      %v2241 = vunpack.c.l.b16 %v2156
      %v2242 = vunpack.c.h.b16 %v2156
      %v2243 = vunpack.c.l.b16 %v2157
      %v2244 = vunpack.c.h.b16 %v2157
      %v2245 = vunpack.c.l.b16 %v2158
      %v2246 = vunpack.c.h.b16 %v2158
      %v2247 = vunpack.c.l.b16 %v2159
      %v2248 = vunpack.c.h.b16 %v2159
      %v2249 = vunpack.c.l.b16 %v2160
      %v2250 = vunpack.c.h.b16 %v2160
      %v2251 = vunpack.c.l.b16 %v2161
      %v2252 = vunpack.c.h.b16 %v2161
      %v2253 = vunpack.c.l.b16 %v2162
      %v2254 = vunpack.c.h.b16 %v2162
      %v2255 = vunpack.c.l.b16 %v2163
      %v2256 = vunpack.c.h.b16 %v2163
      %v2257 = vunpack.c.l.b16 %v2164
      %v2258 = vunpack.c.h.b16 %v2164
      %v2259 = vunpack.c.l.b16 %v2165
      %v2260 = vunpack.c.h.b16 %v2165
      %v2261 = vunpack.c.l.b16 %v2166
      %v2262 = vunpack.c.h.b16 %v2166
      %v2263 = vunpack.c.l.b16 %v2167
      %v2264 = vunpack.c.h.b16 %v2167
      %v2265 = vunpack.c.l.b16 %v2168
      %v2266 = vunpack.c.h.b16 %v2168
      %v2267 = vunpack.c.l.b16 %v2169
      %v2268 = vunpack.c.h.b16 %v2169
      %v2269 = vunpack.c.l.b16 %v2170
      %v2270 = vunpack.c.h.b16 %v2170
      %v2271 = vunpack.c.l.b16 %v2171
      %v2272 = vunpack.c.h.b16 %v2171
      %v2273 = vunpack.c.l.b16 %v2172
      %v2274 = vunpack.c.h.b16 %v2172
      %v2275 = vunpack.c.l.b16 %v2173
      %v2276 = vunpack.c.h.b16 %v2173
      %v2277 = vunpack.c.l.b16 %v2174
      %v2278 = vunpack.c.h.b16 %v2174
      %v2279 = vunpack.c.l.b16 %v2175
      %v2280 = vunpack.c.h.b16 %v2175
      %v2281 = vunpack.c.l.b16 %v2176
      %v2282 = vunpack.c.h.b16 %v2176
      %v2283 = vpack.c.b16 %v2223, %v2219
      %v2284 = vpack.c.b16 %v2224, %v2220
      %v2285 = vpack.c.b16 %v2225, %v2221
      %v2286 = vpack.c.b16 %v2226, %v2222
      %v2287 = vpack.c.b16 %v2231, %v2227
      %v2288 = vpack.c.b16 %v2232, %v2228
      %v2289 = vpack.c.b16 %v2233, %v2229
      %v2290 = vpack.c.b16 %v2234, %v2230
      %v2291 = vpack.c.b16 %v2239, %v2235
      %v2292 = vpack.c.b16 %v2240, %v2236
      %v2293 = vpack.c.b16 %v2241, %v2237
      %v2294 = vpack.c.b16 %v2242, %v2238
      %v2295 = vpack.c.b16 %v2247, %v2243
      %v2296 = vpack.c.b16 %v2248, %v2244
      %v2297 = vpack.c.b16 %v2249, %v2245
      %v2298 = vpack.c.b16 %v2250, %v2246
      %v2299 = vpack.c.b16 %v2255, %v2251
      %v2300 = vpack.c.b16 %v2256, %v2252
      %v2301 = vpack.c.b16 %v2257, %v2253
      %v2302 = vpack.c.b16 %v2258, %v2254
      %v2303 = vpack.c.b16 %v2263, %v2259
      %v2304 = vpack.c.b16 %v2264, %v2260
      %v2305 = vpack.c.b16 %v2265, %v2261
      %v2306 = vpack.c.b16 %v2266, %v2262
      %v2307 = vpack.c.b16 %v2271, %v2267
      %v2308 = vpack.c.b16 %v2272, %v2268
      %v2309 = vpack.c.b16 %v2273, %v2269
      %v2310 = vpack.c.b16 %v2274, %v2270
      %v2311 = vpack.c.b16 %v2279, %v2275
      %v2312 = vpack.c.b16 %v2280, %v2276
      %v2313 = vpack.c.b16 %v2281, %v2277
      %v2314 = vpack.c.b16 %v2282, %v2278
      %2347 = vmatpush.bf16.msra.mxu0 %v2311
      %2348 = vmatpush.bf16.msra.mxu0 %v2307
      %2349 = vmatpush.bf16.msra.mxu0 %v2303
      %2350 = vmatpush.bf16.msra.mxu0 %v2299
      %2351 = vmatpush.bf16.msra.mxu0 %v2295
      %2352 = vmatpush.bf16.msra.mxu0 %v2291
      %2353 = vmatpush.bf16.msra.mxu0 %v2287
      %2354 = vmatpush.bf16.msra.mxu0 %v2283
      %2355 = vmatmul.bf16.gmra.mxu0 %v2144
      %v2356 = vpop.f32.mrf.mxu0
      %v2357 = vadd.f32 %v2179, %v2356
      %v2358 = vpop.f32.mrf.mxu0
      %v2359 = vadd.f32 %v2179, %v2358
      %2360 = vdwg.mxu0
      %2361 = vmatpush.bf16.msra.mxu0 %v2312
      %2362 = vmatpush.bf16.msra.mxu0 %v2308
      %2363 = vmatpush.bf16.msra.mxu0 %v2304
      %2364 = vmatpush.bf16.msra.mxu0 %v2300
      %2365 = vmatpush.bf16.msra.mxu0 %v2296
      %2366 = vmatpush.bf16.msra.mxu0 %v2292
      %2367 = vmatpush.bf16.msra.mxu0 %v2288
      %2368 = vmatpush.bf16.msra.mxu0 %v2284
      %2369 = vmatmul.bf16.gmra.mxu0 %v2144
      %v2370 = vpop.f32.mrf.mxu0
      %v2371 = vadd.f32 %v2180, %v2370
      %v2372 = vpop.f32.mrf.mxu0
      %v2373 = vadd.f32 %v2180, %v2372
      %2374 = vdwg.mxu0
      %2375 = vmatpush.bf16.msra.mxu0 %v2313
      %2376 = vmatpush.bf16.msra.mxu0 %v2309
      %2377 = vmatpush.bf16.msra.mxu0 %v2305
      %2378 = vmatpush.bf16.msra.mxu0 %v2301
      %2379 = vmatpush.bf16.msra.mxu0 %v2297
      %2380 = vmatpush.bf16.msra.mxu0 %v2293
      %2381 = vmatpush.bf16.msra.mxu0 %v2289
      %2382 = vmatpush.bf16.msra.mxu0 %v2285
      %2383 = vmatmul.bf16.gmra.mxu0 %v2144
      %v2384 = vpop.f32.mrf.mxu0
      %v2385 = vadd.f32 %v2181, %v2384
      %v2386 = vpop.f32.mrf.mxu0
      %v2387 = vadd.f32 %v2181, %v2386
      %2388 = vdwg.mxu0
      %2389 = vmatpush.bf16.msra.mxu0 %v2314
      %2390 = vmatpush.bf16.msra.mxu0 %v2310
      %2391 = vmatpush.bf16.msra.mxu0 %v2306
      %2392 = vmatpush.bf16.msra.mxu0 %v2302
      %2393 = vmatpush.bf16.msra.mxu0 %v2298
      %2394 = vmatpush.bf16.msra.mxu0 %v2294
      %2395 = vmatpush.bf16.msra.mxu0 %v2290
      %2396 = vmatpush.bf16.msra.mxu0 %v2286
      %2397 = vmatmul.bf16.gmra.mxu0 %v2144
      %v2398 = vpop.f32.mrf.mxu0
      %v2399 = vadd.f32 %v2182, %v2398
      %v2400 = vpop.f32.mrf.mxu0
      %v2401 = vadd.f32 %v2182, %v2400
      %2402 = vdwg.mxu0
      %v2403 = vmul.f32 %v2357, 0.5
      %v2404 = vmul.f32 %v2371, 0.5
      %v2405 = vmul.f32 %v2385, 0.5
      %v2406 = vmul.f32 %v2399, 0.5
      %v2407 = vmul.f32 %v2359, 0.5
      %v2408 = vmul.f32 %v2373, 0.5
      %v2409 = vmul.f32 %v2387, 0.5
      %v2410 = vmul.f32 %v2401, 0.5
      %v2411 = vmul.f32 %v2357, 0.70710677
      %v2412 = vmul.f32 %v2371, 0.70710677
      %v2413 = vmul.f32 %v2385, 0.70710677
      %v2414 = vmul.f32 %v2399, 0.70710677
      %v2415 = vmul.f32 %v2359, 0.70710677
      %v2416 = vmul.f32 %v2373, 0.70710677
      %v2417 = vmul.f32 %v2387, 0.70710677
      %v2418 = vmul.f32 %v2401, 0.70710677
      %v2419 = vmul.f32 %v2411, %v2411
      %v2420 = vmin.f32 16.0, %v2419
      %v2421 = vmul.f32 %v2420, 2.1237322e-06
      %v2422 = vadd.f32 %v2421, 0.00028619796
      %v2423 = vmul.f32 %v2420, %v2422
      %v2424 = vadd.f32 %v2423, 0.0036580483
      %v2425 = vmul.f32 %v2420, %v2424
      %v2426 = vadd.f32 %v2425, 0.05243302
      %v2427 = vmul.f32 %v2420, %v2426
      %v2428 = vadd.f32 %v2427, 0.18741608
      %v2429 = vmul.f32 %v2420, %v2428
      %v2430 = vadd.f32 %v2429, 1.1283791
      %v2431 = vmul.f32 %v2411, %v2430
      %v2432 = vmul.f32 %v2420, 3.8918573e-05
      %v2433 = vadd.f32 %v2432, 0.001143296
      %v2434 = vmul.f32 %v2420, %v2433
      %v2435 = vadd.f32 %v2434, 0.014752088
      %v2436 = vmul.f32 %v2420, %v2435
      %v2437 = vadd.f32 %v2436, 0.112945676
      %v2438 = vmul.f32 %v2420, %v2437
      %v2439 = vadd.f32 %v2438, 0.4994258
      %v2440 = vmul.f32 %v2420, %v2439
      %v2441 = vadd.f32 %v2440, 1.0
      %v2442 = vrcp.pop %v2441
      %v2443 = vmul.f32 %v2441, %v2442
      %v2444 = vsub.f32 1.0, %v2443
      %v2445 = vmul.f32 %v2442, %v2444
      %v2446 = vadd.f32 %v2442, %v2445
      %vm2447 = vweird.f32 %v2441
      %vm2448 = vweird.f32 %v2442
      %vm2449 = vmor %vm2447, %vm2448
      %v2450 = vsel %vm2449, %v2442, %v2446
      %v2451 = vand.u32 2147483647, %v2441
      %vm2452 = vcmp.eq.f32.partialorder %v2451, 8.507059e+37
      %v2453 = vand.u32 %v2441, 2147483648
      %v2454 = vor.u32 1.1754944e-38, %v2453
      %v2455 = vsel %vm2452, %v2454, %v2450
      %v2456 = vmul.f32 %v2431, %v2455
      %v2457 = vmin.f32 %v2456, 1.0
      %v2458 = vmax.f32 %v2457, -1.0
      %v2459 = vmul.f32 %v2412, %v2412
      %v2460 = vmin.f32 16.0, %v2459
      %v2461 = vmul.f32 %v2460, 2.1237322e-06
      %v2462 = vadd.f32 %v2461, 0.00028619796
      %v2463 = vmul.f32 %v2460, %v2462
      %v2464 = vadd.f32 %v2463, 0.0036580483
      %v2465 = vmul.f32 %v2460, %v2464
      %v2466 = vadd.f32 %v2465, 0.05243302
      %v2467 = vmul.f32 %v2460, %v2466
      %v2468 = vadd.f32 %v2467, 0.18741608
      %v2469 = vmul.f32 %v2460, %v2468
      %v2470 = vadd.f32 %v2469, 1.1283791
      %v2471 = vmul.f32 %v2412, %v2470
      %v2472 = vmul.f32 %v2460, 3.8918573e-05
      %v2473 = vadd.f32 %v2472, 0.001143296
      %v2474 = vmul.f32 %v2460, %v2473
      %v2475 = vadd.f32 %v2474, 0.014752088
      %v2476 = vmul.f32 %v2460, %v2475
      %v2477 = vadd.f32 %v2476, 0.112945676
      %v2478 = vmul.f32 %v2460, %v2477
      %v2479 = vadd.f32 %v2478, 0.4994258
      %v2480 = vmul.f32 %v2460, %v2479
      %v2481 = vadd.f32 %v2480, 1.0
      %v2482 = vrcp.pop %v2481
      %v2483 = vmul.f32 %v2481, %v2482
      %v2484 = vsub.f32 1.0, %v2483
      %v2485 = vmul.f32 %v2482, %v2484
      %v2486 = vadd.f32 %v2482, %v2485
      %vm2487 = vweird.f32 %v2481
      %vm2488 = vweird.f32 %v2482
      %vm2489 = vmor %vm2487, %vm2488
      %v2490 = vsel %vm2489, %v2482, %v2486
      %v2491 = vand.u32 2147483647, %v2481
      %vm2492 = vcmp.eq.f32.partialorder %v2491, 8.507059e+37
      %v2493 = vand.u32 %v2481, 2147483648
      %v2494 = vor.u32 1.1754944e-38, %v2493
      %v2495 = vsel %vm2492, %v2494, %v2490
      %v2496 = vmul.f32 %v2471, %v2495
      %v2497 = vmin.f32 %v2496, 1.0
      %v2498 = vmax.f32 %v2497, -1.0
      %v2499 = vmul.f32 %v2413, %v2413
      %v2500 = vmin.f32 16.0, %v2499
      %v2501 = vmul.f32 %v2500, 2.1237322e-06
      %v2502 = vadd.f32 %v2501, 0.00028619796
      %v2503 = vmul.f32 %v2500, %v2502
      %v2504 = vadd.f32 %v2503, 0.0036580483
      %v2505 = vmul.f32 %v2500, %v2504
      %v2506 = vadd.f32 %v2505, 0.05243302
      %v2507 = vmul.f32 %v2500, %v2506
      %v2508 = vadd.f32 %v2507, 0.18741608
      %v2509 = vmul.f32 %v2500, %v2508
      %v2510 = vadd.f32 %v2509, 1.1283791
      %v2511 = vmul.f32 %v2413, %v2510
      %v2512 = vmul.f32 %v2500, 3.8918573e-05
      %v2513 = vadd.f32 %v2512, 0.001143296
      %v2514 = vmul.f32 %v2500, %v2513
      %v2515 = vadd.f32 %v2514, 0.014752088
      %v2516 = vmul.f32 %v2500, %v2515
      %v2517 = vadd.f32 %v2516, 0.112945676
      %v2518 = vmul.f32 %v2500, %v2517
      %v2519 = vadd.f32 %v2518, 0.4994258
      %v2520 = vmul.f32 %v2500, %v2519
      %v2521 = vadd.f32 %v2520, 1.0
      %v2522 = vrcp.pop %v2521
      %v2523 = vmul.f32 %v2521, %v2522
      %v2524 = vsub.f32 1.0, %v2523
      %v2525 = vmul.f32 %v2522, %v2524
      %v2526 = vadd.f32 %v2522, %v2525
      %vm2527 = vweird.f32 %v2521
      %vm2528 = vweird.f32 %v2522
      %vm2529 = vmor %vm2527, %vm2528
      %v2530 = vsel %vm2529, %v2522, %v2526
      %v2531 = vand.u32 2147483647, %v2521
      %vm2532 = vcmp.eq.f32.partialorder %v2531, 8.507059e+37
      %v2533 = vand.u32 %v2521, 2147483648
      %v2534 = vor.u32 1.1754944e-38, %v2533
      %v2535 = vsel %vm2532, %v2534, %v2530
      %v2536 = vmul.f32 %v2511, %v2535
      %v2537 = vmin.f32 %v2536, 1.0
      %v2538 = vmax.f32 %v2537, -1.0
      %v2539 = vmul.f32 %v2414, %v2414
      %v2540 = vmin.f32 16.0, %v2539
      %v2541 = vmul.f32 %v2540, 2.1237322e-06
      %v2542 = vadd.f32 %v2541, 0.00028619796
      %v2543 = vmul.f32 %v2540, %v2542
      %v2544 = vadd.f32 %v2543, 0.0036580483
      %v2545 = vmul.f32 %v2540, %v2544
      %v2546 = vadd.f32 %v2545, 0.05243302
      %v2547 = vmul.f32 %v2540, %v2546
      %v2548 = vadd.f32 %v2547, 0.18741608
      %v2549 = vmul.f32 %v2540, %v2548
      %v2550 = vadd.f32 %v2549, 1.1283791
      %v2551 = vmul.f32 %v2414, %v2550
      %v2552 = vmul.f32 %v2540, 3.8918573e-05
      %v2553 = vadd.f32 %v2552, 0.001143296
      %v2554 = vmul.f32 %v2540, %v2553
      %v2555 = vadd.f32 %v2554, 0.014752088
      %v2556 = vmul.f32 %v2540, %v2555
      %v2557 = vadd.f32 %v2556, 0.112945676
      %v2558 = vmul.f32 %v2540, %v2557
      %v2559 = vadd.f32 %v2558, 0.4994258
      %v2560 = vmul.f32 %v2540, %v2559
      %v2561 = vadd.f32 %v2560, 1.0
      %v2562 = vrcp.pop %v2561
      %v2563 = vmul.f32 %v2561, %v2562
      %v2564 = vsub.f32 1.0, %v2563
      %v2565 = vmul.f32 %v2562, %v2564
      %v2566 = vadd.f32 %v2562, %v2565
      %vm2567 = vweird.f32 %v2561
      %vm2568 = vweird.f32 %v2562
      %vm2569 = vmor %vm2567, %vm2568
      %v2570 = vsel %vm2569, %v2562, %v2566
      %v2571 = vand.u32 2147483647, %v2561
      %vm2572 = vcmp.eq.f32.partialorder %v2571, 8.507059e+37
      %v2573 = vand.u32 %v2561, 2147483648
      %v2574 = vor.u32 1.1754944e-38, %v2573
      %v2575 = vsel %vm2572, %v2574, %v2570
      %v2576 = vmul.f32 %v2551, %v2575
      %v2577 = vmin.f32 %v2576, 1.0
      %v2578 = vmax.f32 %v2577, -1.0
      %v2579 = vmul.f32 %v2415, %v2415
      %v2580 = vmin.f32 16.0, %v2579
      %v2581 = vmul.f32 %v2580, 2.1237322e-06
      %v2582 = vadd.f32 %v2581, 0.00028619796
      %v2583 = vmul.f32 %v2580, %v2582
      %v2584 = vadd.f32 %v2583, 0.0036580483
      %v2585 = vmul.f32 %v2580, %v2584
      %v2586 = vadd.f32 %v2585, 0.05243302
      %v2587 = vmul.f32 %v2580, %v2586
      %v2588 = vadd.f32 %v2587, 0.18741608
      %v2589 = vmul.f32 %v2580, %v2588
      %v2590 = vadd.f32 %v2589, 1.1283791
      %v2591 = vmul.f32 %v2415, %v2590
      %v2592 = vmul.f32 %v2580, 3.8918573e-05
      %v2593 = vadd.f32 %v2592, 0.001143296
      %v2594 = vmul.f32 %v2580, %v2593
      %v2595 = vadd.f32 %v2594, 0.014752088
      %v2596 = vmul.f32 %v2580, %v2595
      %v2597 = vadd.f32 %v2596, 0.112945676
      %v2598 = vmul.f32 %v2580, %v2597
      %v2599 = vadd.f32 %v2598, 0.4994258
      %v2600 = vmul.f32 %v2580, %v2599
      %v2601 = vadd.f32 %v2600, 1.0
      %v2602 = vrcp.pop %v2601
      %v2603 = vmul.f32 %v2601, %v2602
      %v2604 = vsub.f32 1.0, %v2603
      %v2605 = vmul.f32 %v2602, %v2604
      %v2606 = vadd.f32 %v2602, %v2605
      %vm2607 = vweird.f32 %v2601
      %vm2608 = vweird.f32 %v2602
      %vm2609 = vmor %vm2607, %vm2608
      %v2610 = vsel %vm2609, %v2602, %v2606
      %v2611 = vand.u32 2147483647, %v2601
      %vm2612 = vcmp.eq.f32.partialorder %v2611, 8.507059e+37
      %v2613 = vand.u32 %v2601, 2147483648
      %v2614 = vor.u32 1.1754944e-38, %v2613
      %v2615 = vsel %vm2612, %v2614, %v2610
      %v2616 = vmul.f32 %v2591, %v2615
      %v2617 = vmin.f32 %v2616, 1.0
      %v2618 = vmax.f32 %v2617, -1.0
      %v2619 = vmul.f32 %v2416, %v2416
      %v2620 = vmin.f32 16.0, %v2619
      %v2621 = vmul.f32 %v2620, 2.1237322e-06
      %v2622 = vadd.f32 %v2621, 0.00028619796
      %v2623 = vmul.f32 %v2620, %v2622
      %v2624 = vadd.f32 %v2623, 0.0036580483
      %v2625 = vmul.f32 %v2620, %v2624
      %v2626 = vadd.f32 %v2625, 0.05243302
      %v2627 = vmul.f32 %v2620, %v2626
      %v2628 = vadd.f32 %v2627, 0.18741608
      %v2629 = vmul.f32 %v2620, %v2628
      %v2630 = vadd.f32 %v2629, 1.1283791
      %v2631 = vmul.f32 %v2416, %v2630
      %v2632 = vmul.f32 %v2620, 3.8918573e-05
      %v2633 = vadd.f32 %v2632, 0.001143296
      %v2634 = vmul.f32 %v2620, %v2633
      %v2635 = vadd.f32 %v2634, 0.014752088
      %v2636 = vmul.f32 %v2620, %v2635
      %v2637 = vadd.f32 %v2636, 0.112945676
      %v2638 = vmul.f32 %v2620, %v2637
      %v2639 = vadd.f32 %v2638, 0.4994258
      %v2640 = vmul.f32 %v2620, %v2639
      %v2641 = vadd.f32 %v2640, 1.0
      %v2642 = vrcp.pop %v2641
      %v2643 = vmul.f32 %v2641, %v2642
      %v2644 = vsub.f32 1.0, %v2643
      %v2645 = vmul.f32 %v2642, %v2644
      %v2646 = vadd.f32 %v2642, %v2645
      %vm2647 = vweird.f32 %v2641
      %vm2648 = vweird.f32 %v2642
      %vm2649 = vmor %vm2647, %vm2648
      %v2650 = vsel %vm2649, %v2642, %v2646
      %v2651 = vand.u32 2147483647, %v2641
      %vm2652 = vcmp.eq.f32.partialorder %v2651, 8.507059e+37
      %v2653 = vand.u32 %v2641, 2147483648
      %v2654 = vor.u32 1.1754944e-38, %v2653
      %v2655 = vsel %vm2652, %v2654, %v2650
      %v2656 = vmul.f32 %v2631, %v2655
      %v2657 = vmin.f32 %v2656, 1.0
      %v2658 = vmax.f32 %v2657, -1.0
      %v2659 = vmul.f32 %v2417, %v2417
      %v2660 = vmin.f32 16.0, %v2659
      %v2661 = vmul.f32 %v2660, 2.1237322e-06
      %v2662 = vadd.f32 %v2661, 0.00028619796
      %v2663 = vmul.f32 %v2660, %v2662
      %v2664 = vadd.f32 %v2663, 0.0036580483
      %v2665 = vmul.f32 %v2660, %v2664
      %v2666 = vadd.f32 %v2665, 0.05243302
      %v2667 = vmul.f32 %v2660, %v2666
      %v2668 = vadd.f32 %v2667, 0.18741608
      %v2669 = vmul.f32 %v2660, %v2668
      %v2670 = vadd.f32 %v2669, 1.1283791
      %v2671 = vmul.f32 %v2417, %v2670
      %v2672 = vmul.f32 %v2660, 3.8918573e-05
      %v2673 = vadd.f32 %v2672, 0.001143296
      %v2674 = vmul.f32 %v2660, %v2673
      %v2675 = vadd.f32 %v2674, 0.014752088
      %v2676 = vmul.f32 %v2660, %v2675
      %v2677 = vadd.f32 %v2676, 0.112945676
      %v2678 = vmul.f32 %v2660, %v2677
      %v2679 = vadd.f32 %v2678, 0.4994258
      %v2680 = vmul.f32 %v2660, %v2679
      %v2681 = vadd.f32 %v2680, 1.0
      %v2682 = vrcp.pop %v2681
      %v2683 = vmul.f32 %v2681, %v2682
      %v2684 = vsub.f32 1.0, %v2683
      %v2685 = vmul.f32 %v2682, %v2684
      %v2686 = vadd.f32 %v2682, %v2685
      %vm2687 = vweird.f32 %v2681
      %vm2688 = vweird.f32 %v2682
      %vm2689 = vmor %vm2687, %vm2688
      %v2690 = vsel %vm2689, %v2682, %v2686
      %v2691 = vand.u32 2147483647, %v2681
      %vm2692 = vcmp.eq.f32.partialorder %v2691, 8.507059e+37
      %v2693 = vand.u32 %v2681, 2147483648
      %v2694 = vor.u32 1.1754944e-38, %v2693
      %v2695 = vsel %vm2692, %v2694, %v2690
      %v2696 = vmul.f32 %v2671, %v2695
      %v2697 = vmin.f32 %v2696, 1.0
      %v2698 = vmax.f32 %v2697, -1.0
      %v2699 = vmul.f32 %v2418, %v2418
      %v2700 = vmin.f32 16.0, %v2699
      %v2701 = vmul.f32 %v2700, 2.1237322e-06
      %v2702 = vadd.f32 %v2701, 0.00028619796
      %v2703 = vmul.f32 %v2700, %v2702
      %v2704 = vadd.f32 %v2703, 0.0036580483
      %v2705 = vmul.f32 %v2700, %v2704
      %v2706 = vadd.f32 %v2705, 0.05243302
      %v2707 = vmul.f32 %v2700, %v2706
      %v2708 = vadd.f32 %v2707, 0.18741608
      %v2709 = vmul.f32 %v2700, %v2708
      %v2710 = vadd.f32 %v2709, 1.1283791
      %v2711 = vmul.f32 %v2418, %v2710
      %v2712 = vmul.f32 %v2700, 3.8918573e-05
      %v2713 = vadd.f32 %v2712, 0.001143296
      %v2714 = vmul.f32 %v2700, %v2713
      %v2715 = vadd.f32 %v2714, 0.014752088
      %v2716 = vmul.f32 %v2700, %v2715
      %v2717 = vadd.f32 %v2716, 0.112945676
      %v2718 = vmul.f32 %v2700, %v2717
      %v2719 = vadd.f32 %v2718, 0.4994258
      %v2720 = vmul.f32 %v2700, %v2719
      %v2721 = vadd.f32 %v2720, 1.0
      %v2722 = vrcp.pop %v2721
      %v2723 = vmul.f32 %v2721, %v2722
      %v2724 = vsub.f32 1.0, %v2723
      %v2725 = vmul.f32 %v2722, %v2724
      %v2726 = vadd.f32 %v2722, %v2725
      %vm2727 = vweird.f32 %v2721
      %vm2728 = vweird.f32 %v2722
      %vm2729 = vmor %vm2727, %vm2728
      %v2730 = vsel %vm2729, %v2722, %v2726
      %v2731 = vand.u32 2147483647, %v2721
      %vm2732 = vcmp.eq.f32.partialorder %v2731, 8.507059e+37
      %v2733 = vand.u32 %v2721, 2147483648
      %v2734 = vor.u32 1.1754944e-38, %v2733
      %v2735 = vsel %vm2732, %v2734, %v2730
      %v2736 = vmul.f32 %v2711, %v2735
      %v2737 = vmin.f32 %v2736, 1.0
      %v2738 = vmax.f32 %v2737, -1.0
      %v2739 = vadd.f32 %v2458, 1.0
      %v2740 = vadd.f32 %v2498, 1.0
      %v2741 = vadd.f32 %v2538, 1.0
      %v2742 = vadd.f32 %v2578, 1.0
      %v2743 = vadd.f32 %v2618, 1.0
      %v2744 = vadd.f32 %v2658, 1.0
      %v2745 = vadd.f32 %v2698, 1.0
      %v2746 = vadd.f32 %v2738, 1.0
      %v2747 = vmul.f32 %v2403, %v2739
      %v2748 = vmul.f32 %v2404, %v2740
      %v2749 = vmul.f32 %v2405, %v2741
      %v2750 = vmul.f32 %v2406, %v2742
      %v2751 = vmul.f32 %v2407, %v2743
      %v2752 = vmul.f32 %v2408, %v2744
      %v2753 = vmul.f32 %v2409, %v2745
      %v2754 = vmul.f32 %v2410, %v2746
      %v2755 = vpack.c.bf16 %v2751, %v2747
      %v2756 = vpack.c.bf16 %v2752, %v2748
      %v2757 = vpack.c.bf16 %v2753, %v2749
      %v2758 = vpack.c.bf16 %v2754, %v2750
      %v2759 = vld [vmem:[%s15] sm:$0xf]
      %v2760 = vld [vmem:[%s15 + $0x4] sm:$0xf]
      %v2761 = vld [vmem:[%s15 + $0x8] sm:$0xf]
      %v2762 = vld [vmem:[%s15 + $0xc] sm:$0xf]
      %v2763 = vld [vmem:[%s15 + $0x10] sm:$0xf]
      %v2764 = vld [vmem:[%s15 + $0x14] sm:$0xf]
      %v2765 = vld [vmem:[%s15 + $0x18] sm:$0xf]
      %v2766 = vld [vmem:[%s15 + $0x1c] sm:$0xf]
      %v2767 = vld [vmem:[%s15 + $0x20] sm:$0xf]
      %v2768 = vld [vmem:[%s15 + $0x24] sm:$0xf]
      %v2769 = vld [vmem:[%s15 + $0x28] sm:$0xf]
      %v2770 = vld [vmem:[%s15 + $0x2c] sm:$0xf]
      %v2771 = vld [vmem:[%s15 + $0x30] sm:$0xf]
      %v2772 = vld [vmem:[%s15 + $0x34] sm:$0xf]
      %v2773 = vld [vmem:[%s15 + $0x38] sm:$0xf]
      %v2774 = vld [vmem:[%s15 + $0x3c] sm:$0xf]
      %v2775 = vld [vmem:[%s15 + $0x40] sm:$0xf]
      %v2776 = vld [vmem:[%s15 + $0x44] sm:$0xf]
      %v2777 = vld [vmem:[%s15 + $0x48] sm:$0xf]
      %v2778 = vld [vmem:[%s15 + $0x4c] sm:$0xf]
      %v2779 = vld [vmem:[%s15 + $0x50] sm:$0xf]
      %v2780 = vld [vmem:[%s15 + $0x54] sm:$0xf]
      %v2781 = vld [vmem:[%s15 + $0x58] sm:$0xf]
      %v2782 = vld [vmem:[%s15 + $0x5c] sm:$0xf]
      %v2783 = vld [vmem:[%s15 + $0x60] sm:$0xf]
      %v2784 = vld [vmem:[%s15 + $0x64] sm:$0xf]
      %v2785 = vld [vmem:[%s15 + $0x68] sm:$0xf]
      %v2786 = vld [vmem:[%s15 + $0x6c] sm:$0xf]
      %v2787 = vld [vmem:[%s15 + $0x70] sm:$0xf]
      %v2788 = vld [vmem:[%s15 + $0x74] sm:$0xf]
      %v2789 = vld [vmem:[%s15 + $0x78] sm:$0xf]
      %v2790 = vld [vmem:[%s15 + $0x7c] sm:$0xf]
      %v2791 = vld [vmem:[%s15 + $0x80] sm:$0xf]
      %v2792 = vld [vmem:[%s15 + $0x84] sm:$0xf]
      %v2793 = vld [vmem:[%s15 + $0x88] sm:$0xf]
      %v2794 = vld [vmem:[%s15 + $0x8c] sm:$0xf]
      %v2795 = vld [vmem:[%s15 + $0x90] sm:$0xf]
      %v2796 = vld [vmem:[%s15 + $0x94] sm:$0xf]
      %v2797 = vld [vmem:[%s15 + $0x98] sm:$0xf]
      %v2798 = vld [vmem:[%s15 + $0x9c] sm:$0xf]
      %v2799 = vld [vmem:[%s15 + $0xa0] sm:$0xf]
      %v2800 = vld [vmem:[%s15 + $0xa4] sm:$0xf]
      %v2801 = vld [vmem:[%s15 + $0xa8] sm:$0xf]
      %v2802 = vld [vmem:[%s15 + $0xac] sm:$0xf]
      %v2803 = vld [vmem:[%s15 + $0xb0] sm:$0xf]
      %v2804 = vld [vmem:[%s15 + $0xb4] sm:$0xf]
      %v2805 = vld [vmem:[%s15 + $0xb8] sm:$0xf]
      %v2806 = vld [vmem:[%s15 + $0xbc] sm:$0xf]
      %v2807 = vld [vmem:[%s15 + $0xc0] sm:$0xf]
      %v2808 = vld [vmem:[%s15 + $0xc4] sm:$0xf]
      %v2809 = vld [vmem:[%s15 + $0xc8] sm:$0xf]
      %v2810 = vld [vmem:[%s15 + $0xcc] sm:$0xf]
      %v2811 = vld [vmem:[%s15 + $0xd0] sm:$0xf]
      %v2812 = vld [vmem:[%s15 + $0xd4] sm:$0xf]
      %v2813 = vld [vmem:[%s15 + $0xd8] sm:$0xf]
      %v2814 = vld [vmem:[%s15 + $0xdc] sm:$0xf]
      %v2815 = vld [vmem:[%s15 + $0xe0] sm:$0xf]
      %v2816 = vld [vmem:[%s15 + $0xe4] sm:$0xf]
      %v2817 = vld [vmem:[%s15 + $0xe8] sm:$0xf]
      %v2818 = vld [vmem:[%s15 + $0xec] sm:$0xf]
      %v2819 = vld [vmem:[%s15 + $0xf0] sm:$0xf]
      %v2820 = vld [vmem:[%s15 + $0xf4] sm:$0xf]
      %v2821 = vld [vmem:[%s15 + $0xf8] sm:$0xf]
      %v2822 = vld [vmem:[%s15 + $0xfc] sm:$0xf]
      %v2823 = vld [vmem:[%s16] sm:$0x1]
      %v2825 = vperm.slane %v2823, 0
      %v2891 = vunpack.c.l.b16 %v2759
      %v2892 = vunpack.c.l.b16 %v2760
      %v2893 = vunpack.c.l.b16 %v2761
      %v2894 = vunpack.c.l.b16 %v2762
      %v2895 = vunpack.c.l.b16 %v2763
      %v2896 = vunpack.c.l.b16 %v2764
      %v2897 = vunpack.c.l.b16 %v2765
      %v2898 = vunpack.c.l.b16 %v2766
      %v2899 = vunpack.c.l.b16 %v2767
      %v2900 = vunpack.c.l.b16 %v2768
      %v2901 = vunpack.c.l.b16 %v2769
      %v2902 = vunpack.c.l.b16 %v2770
      %v2903 = vunpack.c.l.b16 %v2771
      %v2904 = vunpack.c.l.b16 %v2772
      %v2905 = vunpack.c.l.b16 %v2773
      %v2906 = vunpack.c.l.b16 %v2774
      %v2907 = vunpack.c.l.b16 %v2775
      %v2908 = vunpack.c.l.b16 %v2776
      %v2909 = vunpack.c.l.b16 %v2777
      %v2910 = vunpack.c.l.b16 %v2778
      %v2911 = vunpack.c.l.b16 %v2779
      %v2912 = vunpack.c.l.b16 %v2780
      %v2913 = vunpack.c.l.b16 %v2781
      %v2914 = vunpack.c.l.b16 %v2782
      %v2915 = vunpack.c.l.b16 %v2783
      %v2916 = vunpack.c.l.b16 %v2784
      %v2917 = vunpack.c.l.b16 %v2785
      %v2918 = vunpack.c.l.b16 %v2786
      %v2919 = vunpack.c.l.b16 %v2787
      %v2920 = vunpack.c.l.b16 %v2788
      %v2921 = vunpack.c.l.b16 %v2789
      %v2922 = vunpack.c.l.b16 %v2790
      %v2923 = vunpack.c.l.b16 %v2791
      %v2924 = vunpack.c.l.b16 %v2792
      %v2925 = vunpack.c.l.b16 %v2793
      %v2926 = vunpack.c.l.b16 %v2794
      %v2927 = vunpack.c.l.b16 %v2795
      %v2928 = vunpack.c.l.b16 %v2796
      %v2929 = vunpack.c.l.b16 %v2797
      %v2930 = vunpack.c.l.b16 %v2798
      %v2931 = vunpack.c.l.b16 %v2799
      %v2932 = vunpack.c.l.b16 %v2800
      %v2933 = vunpack.c.l.b16 %v2801
      %v2934 = vunpack.c.l.b16 %v2802
      %v2935 = vunpack.c.l.b16 %v2803
      %v2936 = vunpack.c.l.b16 %v2804
      %v2937 = vunpack.c.l.b16 %v2805
      %v2938 = vunpack.c.l.b16 %v2806
      %v2939 = vunpack.c.l.b16 %v2807
      %v2940 = vunpack.c.l.b16 %v2808
      %v2941 = vunpack.c.l.b16 %v2809
      %v2942 = vunpack.c.l.b16 %v2810
      %v2943 = vunpack.c.l.b16 %v2811
      %v2944 = vunpack.c.l.b16 %v2812
      %v2945 = vunpack.c.l.b16 %v2813
      %v2946 = vunpack.c.l.b16 %v2814
      %v2947 = vunpack.c.l.b16 %v2815
      %v2948 = vunpack.c.l.b16 %v2816
      %v2949 = vunpack.c.l.b16 %v2817
      %v2950 = vunpack.c.l.b16 %v2818
      %v2951 = vunpack.c.l.b16 %v2819
      %v2952 = vunpack.c.l.b16 %v2820
      %v2953 = vunpack.c.l.b16 %v2821
      %v2954 = vunpack.c.l.b16 %v2822
      %v2955 = vpack.c.b16 %v2892, %v2891
      %v2956 = vpack.c.b16 %v2894, %v2893
      %v2957 = vpack.c.b16 %v2896, %v2895
      %v2958 = vpack.c.b16 %v2898, %v2897
      %v2959 = vpack.c.b16 %v2900, %v2899
      %v2960 = vpack.c.b16 %v2902, %v2901
      %v2961 = vpack.c.b16 %v2904, %v2903
      %v2962 = vpack.c.b16 %v2906, %v2905
      %v2963 = vpack.c.b16 %v2908, %v2907
      %v2964 = vpack.c.b16 %v2910, %v2909
      %v2965 = vpack.c.b16 %v2912, %v2911
      %v2966 = vpack.c.b16 %v2914, %v2913
      %v2967 = vpack.c.b16 %v2916, %v2915
      %v2968 = vpack.c.b16 %v2918, %v2917
      %v2969 = vpack.c.b16 %v2920, %v2919
      %v2970 = vpack.c.b16 %v2922, %v2921
      %v2971 = vpack.c.b16 %v2924, %v2923
      %v2972 = vpack.c.b16 %v2926, %v2925
      %v2973 = vpack.c.b16 %v2928, %v2927
      %v2974 = vpack.c.b16 %v2930, %v2929
      %v2975 = vpack.c.b16 %v2932, %v2931
      %v2976 = vpack.c.b16 %v2934, %v2933
      %v2977 = vpack.c.b16 %v2936, %v2935
      %v2978 = vpack.c.b16 %v2938, %v2937
      %v2979 = vpack.c.b16 %v2940, %v2939
      %v2980 = vpack.c.b16 %v2942, %v2941
      %v2981 = vpack.c.b16 %v2944, %v2943
      %v2982 = vpack.c.b16 %v2946, %v2945
      %v2983 = vpack.c.b16 %v2948, %v2947
      %v2984 = vpack.c.b16 %v2950, %v2949
      %v2985 = vpack.c.b16 %v2952, %v2951
      %v2986 = vpack.c.b16 %v2954, %v2953
      %3019 = vmatpush.bf16.msra.mxu0 %v2962
      %3020 = vmatpush.bf16.msra.mxu0 %v2961
      %3021 = vmatpush.bf16.msra.mxu0 %v2960
      %3022 = vmatpush.bf16.msra.mxu0 %v2959
      %3023 = vmatpush.bf16.msra.mxu0 %v2958
      %3024 = vmatpush.bf16.msra.mxu0 %v2957
      %3025 = vmatpush.bf16.msra.mxu0 %v2956
      %3026 = vmatpush.bf16.msra.mxu0 %v2955
      %3027 = vmatmul.bf16.gmra.mxu0 %v2755
      %v3028 = vpop.f32.mrf.mxu0
      %v3029 = vadd.f32 %v2825, %v3028
      %v3030 = vpop.f32.mrf.mxu0
      %v3031 = vadd.f32 %v2825, %v3030
      %3032 = vdwg.mxu0
      %3033 = vmatpush.bf16.msra.mxu0 %v2970
      %3034 = vmatpush.bf16.msra.mxu0 %v2969
      %3035 = vmatpush.bf16.msra.mxu0 %v2968
      %3036 = vmatpush.bf16.msra.mxu0 %v2967
      %3037 = vmatpush.bf16.msra.mxu0 %v2966
      %3038 = vmatpush.bf16.msra.mxu0 %v2965
      %3039 = vmatpush.bf16.msra.mxu0 %v2964
      %3040 = vmatpush.bf16.msra.mxu0 %v2963
      %3041 = vmatmul.bf16.gmra.mxu0 %v2756
      %v3042 = vpop.f32.mrf.mxu0
      %v3043 = vadd.f32 %v3029, %v3042
      %v3044 = vpop.f32.mrf.mxu0
      %v3045 = vadd.f32 %v3031, %v3044
      %3046 = vdwg.mxu0
      %3047 = vmatpush.bf16.msra.mxu0 %v2978
      %3048 = vmatpush.bf16.msra.mxu0 %v2977
      %3049 = vmatpush.bf16.msra.mxu0 %v2976
      %3050 = vmatpush.bf16.msra.mxu0 %v2975
      %3051 = vmatpush.bf16.msra.mxu0 %v2974
      %3052 = vmatpush.bf16.msra.mxu0 %v2973
      %3053 = vmatpush.bf16.msra.mxu0 %v2972
      %3054 = vmatpush.bf16.msra.mxu0 %v2971
      %3055 = vmatmul.bf16.gmra.mxu0 %v2757
      %v3056 = vpop.f32.mrf.mxu0
      %v3057 = vadd.f32 %v3043, %v3056
      %v3058 = vpop.f32.mrf.mxu0
      %v3059 = vadd.f32 %v3045, %v3058
      %3060 = vdwg.mxu0
      %3061 = vmatpush.bf16.msra.mxu0 %v2986
      %3062 = vmatpush.bf16.msra.mxu0 %v2985
      %3063 = vmatpush.bf16.msra.mxu0 %v2984
      %3064 = vmatpush.bf16.msra.mxu0 %v2983
      %3065 = vmatpush.bf16.msra.mxu0 %v2982
      %3066 = vmatpush.bf16.msra.mxu0 %v2981
      %3067 = vmatpush.bf16.msra.mxu0 %v2980
      %3068 = vmatpush.bf16.msra.mxu0 %v2979
      %3069 = vmatmul.bf16.gmra.mxu0 %v2758
      %v3070 = vpop.f32.mrf.mxu0
      %v3071 = vadd.f32 %v3057, %v3070
      %v3072 = vpop.f32.mrf.mxu0
      %v3073 = vadd.f32 %v3059, %v3072
      %3074 = vdwg.mxu0
      %v3075 = vadd.f32 %v2090, %v3071
      %v3076 = vadd.f32 %v2091, %v3073
      %v3077 = vld [vmem:[%s17] sm:$0x1]
      %v3078 = vld [vmem:[%s18] sm:$0x1]
      %3079 = vadd.xlane.f32.xlu0 %v3075
      %v3080 = vpop.xlane.xlu0 %3079
      %3081 = vadd.xlane.f32.xlu0 %v3076
      %v3082 = vpop.xlane.xlu0 %3081
      %v3083 = vmul.f32 %v3080, %v618
      %v3084 = vmul.f32 %v3082, %v618
      %v3085 = vsub.f32 %v3075, %v3083
      %v3086 = vsub.f32 %v3076, %v3084
      %v3087 = vmul.f32 %v3085, %v3085
      %v3088 = vmul.f32 %v3086, %v3086
      %3089 = vadd.xlane.f32.xlu0 %v3087
      %v3090 = vpop.xlane.xlu0 %3089
      %3091 = vadd.xlane.f32.xlu0 %v3088
      %v3092 = vpop.xlane.xlu0 %3091
      %v3093 = vmul.f32 %v3090, %v618
      %v3094 = vmul.f32 %v3092, %v618
      %v3095 = vadd.f32 %v3093, 1e-06
      %v3096 = vadd.f32 %v3094, 1e-06
      %v3097 = vrsqrt.pop %v3095
      %v3098 = vmul.f32 %v3097, %v3095
      %v3099 = vmul.f32 %v3098, %v3097
      %v3100 = vmul.f32 0.5, %v3099
      %v3101 = vsub.f32 1.5, %v3100
      %v3102 = vmul.f32 %v3097, %v3101
      %vm3103 = vweird.f32 %v3095
      %vm3104 = vweird.f32 %v3097
      %vm3105 = vmor %vm3103, %vm3104
      %v3106 = vsel %vm3105, %v3097, %v3102
      %v3107 = vrsqrt.pop %v3096
      %v3108 = vmul.f32 %v3107, %v3096
      %v3109 = vmul.f32 %v3108, %v3107
      %v3110 = vmul.f32 0.5, %v3109
      %v3111 = vsub.f32 1.5, %v3110
      %v3112 = vmul.f32 %v3107, %v3111
      %vm3113 = vweird.f32 %v3096
      %vm3114 = vweird.f32 %v3107
      %vm3115 = vmor %vm3113, %vm3114
      %v3116 = vsel %vm3115, %v3107, %v3112
      %v3117 = vmul.f32 %v3085, %v3106
      %v3118 = vmul.f32 %v3086, %v3116
      %v3120 = vperm.slane %v3077, 0
      %v3122 = vmul.f32 %v3117, %v3120
      %v3123 = vmul.f32 %v3118, %v3120
      %v3125 = vperm.slane %v3078, 0
      %v3127 = vadd.f32 %v3122, %v3125
      %v3128 = vadd.f32 %v3123, %v3125
      %3129 = vst [vmem:[%s602] sm:$0xff] %v3127
      %3130 = vst [vmem:[%s602 + $0x8] sm:$0xff] %v3128
      %p3131 = scmp.lt.s32.totalorder %s30, 1
      %s3132 = scalar_select %p3131, %s30, 1
      %s3133 = smul.addr %s3132, 2
      %s3134 = smul.addr %s3133, 8
      %s3135 = scalar_lea.vmem %s19, %s3134
      // Predicated region
      $region97: #{forward.5} parent=95 // pred_check
        %p3136 = pneg %p452
      $region98: #{forward.5} parent=95 // pred_check_branch
        %3138 = sbr.rel (%p3136) target = $region100
      $region99: #{forward.5} parent=95 // pred_region
        _
      $region100: #{forward.5} parent=95 // pred_fallthru
        _
    $region96: #{forward.5} parent=5 // pred_fallthru
      _
    %p3139 = scmp.le.s32.totalorder 2, %s25
    // Predicated region
    $region101: #{forward.5} parent=5 // pred_check
      %p3140 = pneg %p3139
    $region102: #{forward.5} parent=5 // pred_check_branch
      %3142 = sbr.rel (%p3140) target = $region104
    $region103: #{forward.5} parent=5 // pred_region
      %s3143 = ssub.s32 %s25, 2
      // Predicated region
      $region105: #{forward.5} parent=103 // pred_check
        %p3144 = pneg %p458
      $region106: #{forward.5} parent=103 // pred_check_branch
        %3146 = sbr.rel (%p3144) target = $region108
      $region107: #{forward.5} parent=103 // pred_region
        %p3147 = scmp.lt.s32.totalorder %s31, 1
        %s3148 = scalar_select %p3147, %s31, 1
        %s3149 = smul.addr %s3148, 2
        %s3150 = smul.addr %s3149, 8
        %s3151 = scalar_lea.vmem %s19, %s3150
      $region108: #{forward.5} parent=103 // pred_fallthru
        _
    $region104: #{forward.5} parent=5 // pred_fallthru
      _
  $region6: #{forward.5} parent=0 // loop_footer
    %s29 = sadd.s32 1, %s25
  $region7: #{forward.5} parent=0 // loop_footer_branch
    %24 = sbr.rel target = $region3
  $region8: #{forward.5} parent=0 // loop_exit
    _

</llo_original>
